<compile_context>
chip_gen: v5e
topology: v5e:2x2
jax: 0.10.0
libtpu: 0.0.40
codegen_flags: <defaults>
</compile_context>

<pallas_src>
import functools

import jax
import jax.numpy as jnp
from jax import lax
from jax.experimental import pallas as pl
from jax.experimental.pallas import tpu as pltpu

INPUT_SIZE = 90
HIDDEN = 90
NUM_LAYERS = 2
NUM_GATES = 4          # PyTorch gate order: i, f, g, o

HP = 128               # hidden size padded to lane width
FP = 128               # input size padded to lane width
GP = NUM_GATES * HP    # fused gate width (512)
OP = 128               # Linear(90, 1) output padded to lane width (lane 0 real)


def _lstm_net_kernel(x_ref, h0_ref, c0_ref,
                     wih0_ref, whh0_ref, b0_ref,
                     w1_ref, b1_ref, wout_ref, bout_ref,
                     pred_ref, hn_ref, cn_ref,
                     h_scr, c_scr, xproj_scr, h1seq_scr,
                     *, seq_len):
    chunk = pl.program_id(0)
    tt, bp, _ = x_ref.shape          # time-tile and padded batch (static)

    # Initialize carried state from (h0, c0) on the first time chunk.
    @pl.when(chunk == 0)
    def _():
        h_scr[...] = h0_ref[...]
        c_scr[...] = c0_ref[...]

    # Zero the per-chunk hidden-sequence buffer so padded timesteps of a
    # partial last chunk never feed garbage into the output projection.
    h1seq_scr[...] = jnp.zeros_like(h1seq_scr)

    # ---- layer-0 input projection for the whole chunk: one MXU matmul ----
    x_flat = x_ref[...].reshape(tt * bp, FP)
    xproj = jnp.dot(x_flat, wih0_ref[...], preferred_element_type=jnp.float32)
    xproj = xproj + b0_ref[...]
    xproj_scr[...] = xproj.reshape(tt, bp, GP)

    def step(t, carry):
        h0p = h_scr[0]
        c0p = c_scr[0]
        h1p = h_scr[1]
        c1p = c_scr[1]

        # ----- layer 0: only the recurrent matmul remains per step -----
        g0 = xproj_scr[t] + jnp.dot(h0p, whh0_ref[...],
                                    preferred_element_type=jnp.float32)
        i0 = jax.nn.sigmoid(g0[:, 0 * HP:1 * HP])
        f0 = jax.nn.sigmoid(g0[:, 1 * HP:2 * HP])
        gg0 = jnp.tanh(g0[:, 2 * HP:3 * HP])
        o0 = jax.nn.sigmoid(g0[:, 3 * HP:4 * HP])
        c0n = f0 * c0p + i0 * gg0
        h0n = o0 * jnp.tanh(c0n)

        # ----- layer 1: one fused matmul on [layer0_out, h1_prev] -----
        inp1 = jnp.concatenate([h0n, h1p], axis=-1)            # (bp, 2*HP)
        g1 = jnp.dot(inp1, w1_ref[...],
                     preferred_element_type=jnp.float32) + b1_ref[...]
        i1 = jax.nn.sigmoid(g1[:, 0 * HP:1 * HP])
        f1 = jax.nn.sigmoid(g1[:, 1 * HP:2 * HP])
        gg1 = jnp.tanh(g1[:, 2 * HP:3 * HP])
        o1 = jax.nn.sigmoid(g1[:, 3 * HP:4 * HP])
        c1n = f1 * c1p + i1 * gg1
        h1n = o1 * jnp.tanh(c1n)

        h_scr[0] = h0n
        c_scr[0] = c0n
        h_scr[1] = h1n
        c_scr[1] = c1n
        h1seq_scr[t] = h1n
        return carry

    if seq_len % tt == 0:
        # All chunks are full: static trip count (unroll small loops).
        lax.fori_loop(0, tt, step, 0, unroll=(tt <= 16))
    else:
        # Possibly-partial last chunk: dynamic trip count.
        steps = jnp.minimum(tt, seq_len - chunk * tt)
        lax.fori_loop(0, steps, step, 0)

    # ---- Linear(90, 1) for the whole chunk: one lane-dense matmul/store ----
    h1_flat = h1seq_scr[...].reshape(tt * bp, HP)
    pred = jnp.dot(h1_flat, wout_ref[...], preferred_element_type=jnp.float32)
    pred = pred + bout_ref[...]
    pred_ref[...] = pred.reshape(tt, bp, OP)

    # (h_n, c_n) live in a resident (constant-index) output block.
    hn_ref[...] = h_scr[...]
    cn_ref[...] = c_scr[...]


def pack_params(params):
    """Pad & fuse the per-gate (PyTorch-equivalent) params into kernel layout."""
    w_ih, w_hh, b, w_out, b_out = params

    def fuse_w(w_l):                       # (4, in_dim, H) -> (128, 4*HP)
        in_dim = w_l.shape[1]
        out = jnp.zeros((HP, GP), jnp.float32)
        for g in range(NUM_GATES):
            out = out.at[:in_dim, g * HP:g * HP + HIDDEN].set(w_l[g])
        return out

    def fuse_b(b_l):                       # (4, 1, H) -> (1, 4*HP)
        out = jnp.zeros((1, GP), jnp.float32)
        for g in range(NUM_GATES):
            out = out.at[:, g * HP:g * HP + HIDDEN].set(b_l[g])
        return out

    wih0 = fuse_w(w_ih[0])                                             # (128, 512)
    whh0 = fuse_w(w_hh[0])                                             # (128, 512)
    b0 = fuse_b(b[0])                                                  # (1, 512)
    # Layer 1: rows [0:HP) multiply layer-0 output, rows [HP:2HP) multiply h1_prev.
    w1 = jnp.concatenate([fuse_w(w_ih[1]), fuse_w(w_hh[1])], axis=0)   # (256, 512)
    b1 = fuse_b(b[1])                                                  # (1, 512)
    wout = jnp.zeros((HP, OP), jnp.float32).at[:HIDDEN, 0].set(w_out[:, 0])
    bout = jnp.zeros((1, OP), jnp.float32).at[0, 0].set(b_out[0, 0])
    return wih0, whh0, b0, w1, b1, wout, bout


def net_forward(x, h0, c0, params, *, time_tile=32):
    """Returns (prediction (T,B,1), (h_n (2,B,H), c_n (2,B,H)))."""
    T, B, F = x.shape
    assert F == INPUT_SIZE and T >= 1
    H = HIDDEN

    tt = min(time_tile, T)
    num_chunks = pl.cdiv(T, tt)
    Tp = num_chunks * tt
    BP = ((B + 7) // 8) * 8

    # Zero-pad to hardware tiles. Padded hidden lanes provably stay zero
    # through the LSTM equations (zero weight columns + zero bias); padded
    # batch rows / timesteps are sliced off below.
    x_p = jnp.zeros((Tp, BP, FP), jnp.float32).at[:T, :B, :F].set(x)
    h0_p = jnp.zeros((NUM_LAYERS, BP, HP), jnp.float32).at[:, :B, :H].set(h0)
    c0_p = jnp.zeros((NUM_LAYERS, BP, HP), jnp.float32).at[:, :B, :H].set(c0)

    wih0, whh0, b0, w1, b1, wout, bout = pack_params(params)

    grid_spec = pltpu.PrefetchScalarGridSpec(
        num_scalar_prefetch=0,
        grid=(num_chunks,),
        in_specs=[
            pl.BlockSpec((tt, BP, FP), lambda c: (c, 0, 0)),           # x time-chunk
            pl.BlockSpec((NUM_LAYERS, BP, HP), lambda c: (0, 0, 0)),   # h0
            pl.BlockSpec((NUM_LAYERS, BP, HP), lambda c: (0, 0, 0)),   # c0
            pl.BlockSpec((HP, GP), lambda c: (0, 0)),                  # W_ih layer 0 (fused gates)
            pl.BlockSpec((HP, GP), lambda c: (0, 0)),                  # W_hh layer 0 (fused gates)
            pl.BlockSpec((1, GP), lambda c: (0, 0)),                   # bias layer 0
            pl.BlockSpec((2 * HP, GP), lambda c: (0, 0)),              # [W_ih; W_hh] layer 1
            pl.BlockSpec((1, GP), lambda c: (0, 0)),                   # bias layer 1
            pl.BlockSpec((HP, OP), lambda c: (0, 0)),                  # W_out (lane-padded)
            pl.BlockSpec((1, OP), lambda c: (0, 0)),                   # b_out
        ],
        out_specs=[
            pl.BlockSpec((tt, BP, OP), lambda c: (c, 0, 0)),           # prediction (lane-dense)
            pl.BlockSpec((NUM_LAYERS, BP, HP), lambda c: (0, 0, 0)),   # h_n
            pl.BlockSpec((NUM_LAYERS, BP, HP), lambda c: (0, 0, 0)),   # c_n
        ],
        scratch_shapes=[
            pltpu.VMEM((NUM_LAYERS, BP, HP), jnp.float32),   # carried h
            pltpu.VMEM((NUM_LAYERS, BP, HP), jnp.float32),   # carried c
            pltpu.VMEM((tt, BP, GP), jnp.float32),           # x @ W_ih0 + b0 per chunk
            pltpu.VMEM((tt, BP, HP), jnp.float32),           # top-layer hidden per chunk
        ],
    )

    kernel = functools.partial(_lstm_net_kernel, seq_len=T)

    pred_p, hn_p, cn_p = pl.pallas_call(
        kernel,
        out_shape=(
            jax.ShapeDtypeStruct((Tp, BP, OP), jnp.float32),
            jax.ShapeDtypeStruct((NUM_LAYERS, BP, HP), jnp.float32),
            jax.ShapeDtypeStruct((NUM_LAYERS, BP, HP), jnp.float32),
        ),
        grid_spec=grid_spec,
        compiler_params=pltpu.CompilerParams(
            dimension_semantics=("arbitrary",)),
    )(x_p, h0_p, c0_p, wih0, whh0, b0, w1, b1, wout, bout)

    pred = pred_p[:T, :B, :1]
    h_n = hn_p[:, :B, :H]
    c_n = cn_p[:, :B, :H]
    return pred, (h_n, c_n)


def reference_forward(x, h0, c0, params):
    """Pure-JAX f32 reference with identical semantics (PyTorch LSTM equations)."""
    w_ih, w_hh, b, w_out, b_out = params
    T, _, _ = x.shape
    h = [h0[l] for l in range(NUM_LAYERS)]
    c = [c0[l] for l in range(NUM_LAYERS)]
    preds = []
    dot = lambda a, w: jnp.dot(a, w, precision=lax.Precision.HIGHEST)
    for t in range(T):
        inp = x[t]
        for l in range(NUM_LAYERS):
            i_g = jax.nn.sigmoid(dot(inp, w_ih[l, 0]) + dot(h[l], w_hh[l, 0]) + b[l, 0])
            f_g = jax.nn.sigmoid(dot(inp, w_ih[l, 1]) + dot(h[l], w_hh[l, 1]) + b[l, 1])
            g_g = jnp.tanh(dot(inp, w_ih[l, 2]) + dot(h[l], w_hh[l, 2]) + b[l, 2])
            o_g = jax.nn.sigmoid(dot(inp, w_ih[l, 3]) + dot(h[l], w_hh[l, 3]) + b[l, 3])
            c[l] = f_g * c[l] + i_g * g_g
            h[l] = o_g * jnp.tanh(c[l])
            inp = h[l]
        preds.append(dot(inp, w_out) + b_out)
    return jnp.stack(preds), (jnp.stack(h), jnp.stack(c))


def init_params(key):
    """Deterministic init matching PyTorch's U(-1/sqrt(H), 1/sqrt(H))."""
    k = 1.0 / jnp.sqrt(jnp.float32(HIDDEN))
    ks = jax.random.split(key, 6)
    # Weights stored transposed & per-gate (PyTorch gate order i, f, g, o).
    w_ih = jax.random.uniform(ks[0], (NUM_LAYERS, NUM_GATES, INPUT_SIZE, HIDDEN),
                              jnp.float32, -k, k)
    w_hh = jax.random.uniform(ks[1], (NUM_LAYERS, NUM_GATES, HIDDEN, HIDDEN),
                              jnp.float32, -k, k)
    b_ih = jax.random.uniform(ks[2], (NUM_LAYERS, NUM_GATES, 1, HIDDEN),
                              jnp.float32, -k, k)
    b_hh = jax.random.uniform(ks[3], (NUM_LAYERS, NUM_GATES, 1, HIDDEN),
                              jnp.float32, -k, k)
    b = b_ih + b_hh  # PyTorch adds both biases; fold them together
    w_out = jax.random.uniform(ks[4], (HIDDEN, 1), jnp.float32, -k, k)
    b_out = jax.random.uniform(ks[5], (1, 1), jnp.float32, -k, k)
    return (w_ih, w_hh, b, w_out, b_out)


if __name__ == "__main__":
    key = jax.random.PRNGKey(0)
    k_p, k_x, k_h, k_c = jax.random.split(key, 4)

    T, B = 8, 4  # small seq len / batch
    params = init_params(k_p)
    x = jax.random.normal(k_x, (T, B, INPUT_SIZE), jnp.float32)
    h0 = 0.1 * jax.random.normal(k_h, (NUM_LAYERS, B, HIDDEN), jnp.float32)
    c0 = 0.1 * jax.random.normal(k_c, (NUM_LAYERS, B, HIDDEN), jnp.float32)

    pred, (h_n, c_n) = net_forward(x, h0, c0, params)
    jax.block_until_ready((pred, h_n, c_n))

    # Correctness check. The kernel uses DEFAULT matmul precision (single
    # bf16 MXU pass) per the perf review, so compare against the full-f32
    # reference with a correspondingly loosened tolerance.
    ref_pred, (ref_h, ref_c) = reference_forward(x, h0, c0, params)
    assert jnp.allclose(pred, ref_pred, atol=2e-2, rtol=2e-2)
    assert jnp.allclose(h_n, ref_h, atol=2e-2, rtol=2e-2)
    assert jnp.allclose(c_n, ref_c, atol=2e-2, rtol=2e-2)

    print("KERNEL_OK")
</pallas_src>

<mosaic_0001>
module attributes {stable_mosaic.version = 11 : i64} {
  func.func @_lstm_net_kernel(%arg0: i32, %arg1: memref<8x8x128xf32, #tpu.memory_space<vmem>>, %arg2: memref<2x8x128xf32, #tpu.memory_space<vmem>>, %arg3: memref<2x8x128xf32, #tpu.memory_space<vmem>>, %arg4: memref<128x512xf32, #tpu.memory_space<vmem>>, %arg5: memref<128x512xf32, #tpu.memory_space<vmem>>, %arg6: memref<1x512xf32, #tpu.memory_space<vmem>>, %arg7: memref<256x512xf32, #tpu.memory_space<vmem>>, %arg8: memref<1x512xf32, #tpu.memory_space<vmem>>, %arg9: memref<128x128xf32, #tpu.memory_space<vmem>>, %arg10: memref<1x128xf32, #tpu.memory_space<vmem>>, %arg11: memref<8x8x128xf32, #tpu.memory_space<vmem>>, %arg12: memref<2x8x128xf32, #tpu.memory_space<vmem>>, %arg13: memref<2x8x128xf32, #tpu.memory_space<vmem>>, %arg14: memref<2x8x128xf32, #tpu.memory_space<vmem>>, %arg15: memref<2x8x128xf32, #tpu.memory_space<vmem>>, %arg16: memref<8x8x512xf32, #tpu.memory_space<vmem>>, %arg17: memref<8x8x128xf32, #tpu.memory_space<vmem>>) attributes {dimension_semantics = [#tpu.dimension_semantics<arbitrary>], iteration_bounds = array<i64: 1>, scalar_prefetch = 0 : i64, scratch_operands = 4 : i64, tpu.core_type = #tpu.core_type<tc>, window_params = [{transform_indices = @transform_0, window_bounds = array<i64: 8, 8, 128>}, {pipeline_mode = #tpu.pipeline_mode<synchronous>, transform_indices = @transform_1, window_bounds = array<i64: 2, 8, 128>}, {pipeline_mode = #tpu.pipeline_mode<synchronous>, transform_indices = @transform_2, window_bounds = array<i64: 2, 8, 128>}, {pipeline_mode = #tpu.pipeline_mode<synchronous>, transform_indices = @transform_3, window_bounds = array<i64: 128, 512>}, {pipeline_mode = #tpu.pipeline_mode<synchronous>, transform_indices = @transform_4, window_bounds = array<i64: 128, 512>}, {pipeline_mode = #tpu.pipeline_mode<synchronous>, transform_indices = @transform_5, window_bounds = array<i64: 1, 512>}, {pipeline_mode = #tpu.pipeline_mode<synchronous>, transform_indices = @transform_6, window_bounds = array<i64: 256, 512>}, {pipeline_mode = #tpu.pipeline_mode<synchronous>, transform_indices = @transform_7, window_bounds = array<i64: 1, 512>}, {pipeline_mode = #tpu.pipeline_mode<synchronous>, transform_indices = @transform_8, window_bounds = array<i64: 128, 128>}, {pipeline_mode = #tpu.pipeline_mode<synchronous>, transform_indices = @transform_9, window_bounds = array<i64: 1, 128>}, {transform_indices = @transform_10, window_bounds = array<i64: 8, 8, 128>}, {pipeline_mode = #tpu.pipeline_mode<synchronous>, transform_indices = @transform_11, window_bounds = array<i64: 2, 8, 128>}, {pipeline_mode = #tpu.pipeline_mode<synchronous>, transform_indices = @transform_12, window_bounds = array<i64: 2, 8, 128>}]} {
    %c0_i32 = arith.constant 0 : i32
    %0 = arith.cmpi eq, %arg0, %c0_i32 : i32
    %1 = arith.extui %0 : i1 to i32
    %c0_i32_0 = arith.constant 0 : i32
    %2 = arith.cmpi ne, %1, %c0_i32_0 : i32
    scf.if %2 {
      %c0_373 = arith.constant 0 : index
      %c0_374 = arith.constant 0 : index
      %c0_375 = arith.constant 0 : index
      %715 = vector.load %arg2[%c0_373, %c0_374, %c0_375] : memref<2x8x128xf32, #tpu.memory_space<vmem>>, vector<2x8x128xf32>
      %c0_376 = arith.constant 0 : index
      %c0_377 = arith.constant 0 : index
      %c0_378 = arith.constant 0 : index
      %716 = vector.load %arg14[%c0_376, %c0_377, %c0_378] : memref<2x8x128xf32, #tpu.memory_space<vmem>>, vector<2x8x128xf32>
      tpu.vector_store %arg14[%c0_376, %c0_377, %c0_378], %715 {strides = array<i32>} : memref<2x8x128xf32, #tpu.memory_space<vmem>>, vector<2x8x128xf32>,
      %c0_379 = arith.constant 0 : index
      %c0_380 = arith.constant 0 : index
      %c0_381 = arith.constant 0 : index
      %717 = vector.load %arg3[%c0_379, %c0_380, %c0_381] : memref<2x8x128xf32, #tpu.memory_space<vmem>>, vector<2x8x128xf32>
      %c0_382 = arith.constant 0 : index
      %c0_383 = arith.constant 0 : index
      %c0_384 = arith.constant 0 : index
      %718 = vector.load %arg15[%c0_382, %c0_383, %c0_384] : memref<2x8x128xf32, #tpu.memory_space<vmem>>, vector<2x8x128xf32>
      tpu.vector_store %arg15[%c0_382, %c0_383, %c0_384], %717 {strides = array<i32>} : memref<2x8x128xf32, #tpu.memory_space<vmem>>, vector<2x8x128xf32>,
    } else {
    }
    %cst = arith.constant 0.000000e+00 : f32
    %3 = vector.broadcast %cst : f32 to vector<8x8x128xf32>
    %c0 = arith.constant 0 : index
    %c0_1 = arith.constant 0 : index
    %c0_2 = arith.constant 0 : index
    %4 = vector.load %arg17[%c0, %c0_1, %c0_2] : memref<8x8x128xf32, #tpu.memory_space<vmem>>, vector<8x8x128xf32>
    tpu.vector_store %arg17[%c0, %c0_1, %c0_2], %3 {strides = array<i32>} : memref<8x8x128xf32, #tpu.memory_space<vmem>>, vector<8x8x128xf32>,
    %c0_3 = arith.constant 0 : index
    %c0_4 = arith.constant 0 : index
    %c0_5 = arith.constant 0 : index
    %5 = vector.load %arg1[%c0_3, %c0_4, %c0_5] : memref<8x8x128xf32, #tpu.memory_space<vmem>>, vector<8x8x128xf32>
    %6 = vector.shape_cast %5 : vector<8x8x128xf32> to vector<64x128xf32>
    %c0_6 = arith.constant 0 : index
    %c0_7 = arith.constant 0 : index
    %7 = vector.load %arg4[%c0_6, %c0_7] : memref<128x512xf32, #tpu.memory_space<vmem>>, vector<128x512xf32>
    %cst_8 = arith.constant dense<0.000000e+00> : vector<64x512xf32>
    %8 = tpu.matmul %6, %7, %cst_8 {dimension_numbers = #tpu.dot_dimension_numbers<[1], [0], [0], [1], [0, 0, 1, 1], [], []>} : vector<64x128xf32>, vector<128x512xf32>, vector<64x512xf32> -> vector<64x512xf32>
    %c0_9 = arith.constant 0 : index
    %c0_10 = arith.constant 0 : index
    %9 = vector.load %arg6[%c0_9, %c0_10] : memref<1x512xf32, #tpu.memory_space<vmem>>, vector<1x512xf32>
    %10 = vector.broadcast %9 : vector<1x512xf32> to vector<64x512xf32>
    %11 = arith.addf %8, %10 : vector<64x512xf32>
    %12 = vector.shape_cast %11 : vector<64x512xf32> to vector<8x8x512xf32>
    %c0_11 = arith.constant 0 : index
    %c0_12 = arith.constant 0 : index
    %c0_13 = arith.constant 0 : index
    %13 = vector.load %arg16[%c0_11, %c0_12, %c0_13] : memref<8x8x512xf32, #tpu.memory_space<vmem>>, vector<8x8x512xf32>
    tpu.vector_store %arg16[%c0_11, %c0_12, %c0_13], %12 {strides = array<i32>} : memref<8x8x512xf32, #tpu.memory_space<vmem>>, vector<8x8x512xf32>,
    %c0_i32_14 = arith.constant 0 : i32
    %c0_15 = arith.constant 0 : index
    %c0_16 = arith.constant 0 : index
    %c0_17 = arith.constant 0 : index
    %14 = vector.load %arg14[%c0_15, %c0_16, %c0_17] : memref<2x8x128xf32, #tpu.memory_space<vmem>>, vector<1x8x128xf32>
    %15 = vector.shape_cast %14 : vector<1x8x128xf32> to vector<8x128xf32>
    %c0_18 = arith.constant 0 : index
    %c0_19 = arith.constant 0 : index
    %c0_20 = arith.constant 0 : index
    %16 = vector.load %arg15[%c0_18, %c0_19, %c0_20] : memref<2x8x128xf32, #tpu.memory_space<vmem>>, vector<1x8x128xf32>
    %17 = vector.shape_cast %16 : vector<1x8x128xf32> to vector<8x128xf32>
    %c1 = arith.constant 1 : index
    %c0_21 = arith.constant 0 : index
    %c0_22 = arith.constant 0 : index
    %18 = vector.load %arg14[%c1, %c0_21, %c0_22] : memref<2x8x128xf32, #tpu.memory_space<vmem>>, vector<1x8x128xf32>
    %19 = vector.shape_cast %18 : vector<1x8x128xf32> to vector<8x128xf32>
    %c1_23 = arith.constant 1 : index
    %c0_24 = arith.constant 0 : index
    %c0_25 = arith.constant 0 : index
    %20 = vector.load %arg15[%c1_23, %c0_24, %c0_25] : memref<2x8x128xf32, #tpu.memory_space<vmem>>, vector<1x8x128xf32>
    %21 = vector.shape_cast %20 : vector<1x8x128xf32> to vector<8x128xf32>
    %22 = arith.index_cast %c0_i32_14 : i32 to index
    %c0_26 = arith.constant 0 : index
    %c0_27 = arith.constant 0 : index
    %23 = vector.load %arg16[%22, %c0_26, %c0_27] : memref<8x8x512xf32, #tpu.memory_space<vmem>>, vector<1x8x512xf32>
    %24 = vector.shape_cast %23 : vector<1x8x512xf32> to vector<8x512xf32>
    %c0_28 = arith.constant 0 : index
    %c0_29 = arith.constant 0 : index
    %25 = vector.load %arg5[%c0_28, %c0_29] : memref<128x512xf32, #tpu.memory_space<vmem>>, vector<128x512xf32>
    %cst_30 = arith.constant dense<0.000000e+00> : vector<8x512xf32>
    %26 = tpu.matmul %15, %25, %cst_30 {dimension_numbers = #tpu.dot_dimension_numbers<[1], [0], [0], [1], [0, 0, 1, 1], [], []>} : vector<8x128xf32>, vector<128x512xf32>, vector<8x512xf32> -> vector<8x512xf32>
    %27 = arith.addf %24, %26 : vector<8x512xf32>
    %28 = vector.extract_strided_slice %27 {offsets = [0, 0], sizes = [8, 128], strides = [1, 1]} : vector<8x512xf32> to vector<8x128xf32>
    %29 = arith.negf %28 : vector<8x128xf32>
    %30 = math.exp %29 : vector<8x128xf32>
    %cst_31 = arith.constant 1.000000e+00 : f32
    %31 = vector.broadcast %cst_31 : f32 to vector<8x128xf32>
    %32 = arith.addf %31, %30 : vector<8x128xf32>
    %33 = arith.divf %31, %32 : vector<8x128xf32>
    %34 = vector.extract_strided_slice %27 {offsets = [0, 128], sizes = [8, 128], strides = [1, 1]} : vector<8x512xf32> to vector<8x128xf32>
    %35 = arith.negf %34 : vector<8x128xf32>
    %36 = math.exp %35 : vector<8x128xf32>
    %cst_32 = arith.constant 1.000000e+00 : f32
    %37 = vector.broadcast %cst_32 : f32 to vector<8x128xf32>
    %38 = arith.addf %37, %36 : vector<8x128xf32>
    %39 = arith.divf %37, %38 : vector<8x128xf32>
    %40 = vector.extract_strided_slice %27 {offsets = [0, 256], sizes = [8, 128], strides = [1, 1]} : vector<8x512xf32> to vector<8x128xf32>
    %41 = math.tanh %40 : vector<8x128xf32>
    %42 = vector.extract_strided_slice %27 {offsets = [0, 384], sizes = [8, 128], strides = [1, 1]} : vector<8x512xf32> to vector<8x128xf32>
    %43 = arith.negf %42 : vector<8x128xf32>
    %44 = math.exp %43 : vector<8x128xf32>
    %cst_33 = arith.constant 1.000000e+00 : f32
    %45 = vector.broadcast %cst_33 : f32 to vector<8x128xf32>
    %46 = arith.addf %45, %44 : vector<8x128xf32>
    %47 = arith.divf %45, %46 : vector<8x128xf32>
    %48 = arith.mulf %39, %17 : vector<8x128xf32>
    %49 = arith.mulf %33, %41 : vector<8x128xf32>
    %50 = arith.addf %48, %49 : vector<8x128xf32>
    %51 = math.tanh %50 : vector<8x128xf32>
    %52 = arith.mulf %47, %51 : vector<8x128xf32>
    %53 = tpu.concatenate %52, %19 in 1 : vector<8x128xf32>, vector<8x128xf32> -> vector<8x256xf32>
    %c0_34 = arith.constant 0 : index
    %c0_35 = arith.constant 0 : index
    %54 = vector.load %arg7[%c0_34, %c0_35] : memref<256x512xf32, #tpu.memory_space<vmem>>, vector<256x512xf32>
    %cst_36 = arith.constant dense<0.000000e+00> : vector<8x512xf32>
    %55 = tpu.matmul %53, %54, %cst_36 {dimension_numbers = #tpu.dot_dimension_numbers<[1], [0], [0], [1], [0, 0, 1, 1], [], []>} : vector<8x256xf32>, vector<256x512xf32>, vector<8x512xf32> -> vector<8x512xf32>
    %c0_37 = arith.constant 0 : index
    %c0_38 = arith.constant 0 : index
    %56 = vector.load %arg8[%c0_37, %c0_38] : memref<1x512xf32, #tpu.memory_space<vmem>>, vector<1x512xf32>
    %57 = vector.broadcast %56 : vector<1x512xf32> to vector<8x512xf32>
    %58 = arith.addf %55, %57 : vector<8x512xf32>
    %59 = vector.extract_strided_slice %58 {offsets = [0, 0], sizes = [8, 128], strides = [1, 1]} : vector<8x512xf32> to vector<8x128xf32>
    %60 = arith.negf %59 : vector<8x128xf32>
    %61 = math.exp %60 : vector<8x128xf32>
    %cst_39 = arith.constant 1.000000e+00 : f32
    %62 = vector.broadcast %cst_39 : f32 to vector<8x128xf32>
    %63 = arith.addf %62, %61 : vector<8x128xf32>
    %64 = arith.divf %62, %63 : vector<8x128xf32>
    %65 = vector.extract_strided_slice %58 {offsets = [0, 128], sizes = [8, 128], strides = [1, 1]} : vector<8x512xf32> to vector<8x128xf32>
    %66 = arith.negf %65 : vector<8x128xf32>
    %67 = math.exp %66 : vector<8x128xf32>
    %cst_40 = arith.constant 1.000000e+00 : f32
    %68 = vector.broadcast %cst_40 : f32 to vector<8x128xf32>
    %69 = arith.addf %68, %67 : vector<8x128xf32>
    %70 = arith.divf %68, %69 : vector<8x128xf32>
    %71 = vector.extract_strided_slice %58 {offsets = [0, 256], sizes = [8, 128], strides = [1, 1]} : vector<8x512xf32> to vector<8x128xf32>
    %72 = math.tanh %71 : vector<8x128xf32>
    %73 = vector.extract_strided_slice %58 {offsets = [0, 384], sizes = [8, 128], strides = [1, 1]} : vector<8x512xf32> to vector<8x128xf32>
    %74 = arith.negf %73 : vector<8x128xf32>
    %75 = math.exp %74 : vector<8x128xf32>
    %cst_41 = arith.constant 1.000000e+00 : f32
    %76 = vector.broadcast %cst_41 : f32 to vector<8x128xf32>
    %77 = arith.addf %76, %75 : vector<8x128xf32>
    %78 = arith.divf %76, %77 : vector<8x128xf32>
    %79 = arith.mulf %70, %21 : vector<8x128xf32>
    %80 = arith.mulf %64, %72 : vector<8x128xf32>
    %81 = arith.addf %79, %80 : vector<8x128xf32>
    %82 = math.tanh %81 : vector<8x128xf32>
    %83 = arith.mulf %78, %82 : vector<8x128xf32>
    %c0_42 = arith.constant 0 : index
    %c0_43 = arith.constant 0 : index
    %c0_44 = arith.constant 0 : index
    %84 = vector.load %arg14[%c0_42, %c0_43, %c0_44] : memref<2x8x128xf32, #tpu.memory_space<vmem>>, vector<1x8x128xf32>
    %85 = vector.shape_cast %84 : vector<1x8x128xf32> to vector<8x128xf32>
    %86 = vector.shape_cast %52 : vector<8x128xf32> to vector<1x8x128xf32>
    tpu.vector_store %arg14[%c0_42, %c0_43, %c0_44], %86 {strides = array<i32>} : memref<2x8x128xf32, #tpu.memory_space<vmem>>, vector<1x8x128xf32>,
    %c0_45 = arith.constant 0 : index
    %c0_46 = arith.constant 0 : index
    %c0_47 = arith.constant 0 : index
    %87 = vector.load %arg15[%c0_45, %c0_46, %c0_47] : memref<2x8x128xf32, #tpu.memory_space<vmem>>, vector<1x8x128xf32>
    %88 = vector.shape_cast %87 : vector<1x8x128xf32> to vector<8x128xf32>
    %89 = vector.shape_cast %50 : vector<8x128xf32> to vector<1x8x128xf32>
    tpu.vector_store %arg15[%c0_45, %c0_46, %c0_47], %89 {strides = array<i32>} : memref<2x8x128xf32, #tpu.memory_space<vmem>>, vector<1x8x128xf32>,
    %c1_48 = arith.constant 1 : index
    %c0_49 = arith.constant 0 : index
    %c0_50 = arith.constant 0 : index
    %90 = vector.load %arg14[%c1_48, %c0_49, %c0_50] : memref<2x8x128xf32, #tpu.memory_space<vmem>>, vector<1x8x128xf32>
    %91 = vector.shape_cast %90 : vector<1x8x128xf32> to vector<8x128xf32>
    %92 = vector.shape_cast %83 : vector<8x128xf32> to vector<1x8x128xf32>
    tpu.vector_store %arg14[%c1_48, %c0_49, %c0_50], %92 {strides = array<i32>} : memref<2x8x128xf32, #tpu.memory_space<vmem>>, vector<1x8x128xf32>,
    %c1_51 = arith.constant 1 : index
    %c0_52 = arith.constant 0 : index
    %c0_53 = arith.constant 0 : index
    %93 = vector.load %arg15[%c1_51, %c0_52, %c0_53] : memref<2x8x128xf32, #tpu.memory_space<vmem>>, vector<1x8x128xf32>
    %94 = vector.shape_cast %93 : vector<1x8x128xf32> to vector<8x128xf32>
    %95 = vector.shape_cast %81 : vector<8x128xf32> to vector<1x8x128xf32>
    tpu.vector_store %arg15[%c1_51, %c0_52, %c0_53], %95 {strides = array<i32>} : memref<2x8x128xf32, #tpu.memory_space<vmem>>, vector<1x8x128xf32>,
    %96 = arith.index_cast %c0_i32_14 : i32 to index
    %c0_54 = arith.constant 0 : index
    %c0_55 = arith.constant 0 : index
    %97 = vector.load %arg17[%96, %c0_54, %c0_55] : memref<8x8x128xf32, #tpu.memory_space<vmem>>, vector<1x8x128xf32>
    %98 = vector.shape_cast %97 : vector<1x8x128xf32> to vector<8x128xf32>
    %99 = vector.shape_cast %83 : vector<8x128xf32> to vector<1x8x128xf32>
    tpu.vector_store %arg17[%96, %c0_54, %c0_55], %99 {strides = array<i32>} : memref<8x8x128xf32, #tpu.memory_space<vmem>>, vector<1x8x128xf32>,
    %c1_i32 = arith.constant 1 : i32
    %c0_56 = arith.constant 0 : index
    %c0_57 = arith.constant 0 : index
    %c0_58 = arith.constant 0 : index
    %100 = vector.load %arg14[%c0_56, %c0_57, %c0_58] : memref<2x8x128xf32, #tpu.memory_space<vmem>>, vector<1x8x128xf32>
    %101 = vector.shape_cast %100 : vector<1x8x128xf32> to vector<8x128xf32>
    %c0_59 = arith.constant 0 : index
    %c0_60 = arith.constant 0 : index
    %c0_61 = arith.constant 0 : index
    %102 = vector.load %arg15[%c0_59, %c0_60, %c0_61] : memref<2x8x128xf32, #tpu.memory_space<vmem>>, vector<1x8x128xf32>
    %103 = vector.shape_cast %102 : vector<1x8x128xf32> to vector<8x128xf32>
    %c1_62 = arith.constant 1 : index
    %c0_63 = arith.constant 0 : index
    %c0_64 = arith.constant 0 : index
    %104 = vector.load %arg14[%c1_62, %c0_63, %c0_64] : memref<2x8x128xf32, #tpu.memory_space<vmem>>, vector<1x8x128xf32>
    %105 = vector.shape_cast %104 : vector<1x8x128xf32> to vector<8x128xf32>
    %c1_65 = arith.constant 1 : index
    %c0_66 = arith.constant 0 : index
    %c0_67 = arith.constant 0 : index
    %106 = vector.load %arg15[%c1_65, %c0_66, %c0_67] : memref<2x8x128xf32, #tpu.memory_space<vmem>>, vector<1x8x128xf32>
    %107 = vector.shape_cast %106 : vector<1x8x128xf32> to vector<8x128xf32>
    %108 = arith.index_cast %c1_i32 : i32 to index
    %c0_68 = arith.constant 0 : index
    %c0_69 = arith.constant 0 : index
    %109 = vector.load %arg16[%108, %c0_68, %c0_69] : memref<8x8x512xf32, #tpu.memory_space<vmem>>, vector<1x8x512xf32>
    %110 = vector.shape_cast %109 : vector<1x8x512xf32> to vector<8x512xf32>
    %c0_70 = arith.constant 0 : index
    %c0_71 = arith.constant 0 : index
    %111 = vector.load %arg5[%c0_70, %c0_71] : memref<128x512xf32, #tpu.memory_space<vmem>>, vector<128x512xf32>
    %cst_72 = arith.constant dense<0.000000e+00> : vector<8x512xf32>
    %112 = tpu.matmul %101, %111, %cst_72 {dimension_numbers = #tpu.dot_dimension_numbers<[1], [0], [0], [1], [0, 0, 1, 1], [], []>} : vector<8x128xf32>, vector<128x512xf32>, vector<8x512xf32> -> vector<8x512xf32>
    %113 = arith.addf %110, %112 : vector<8x512xf32>
    %114 = vector.extract_strided_slice %113 {offsets = [0, 0], sizes = [8, 128], strides = [1, 1]} : vector<8x512xf32> to vector<8x128xf32>
    %115 = arith.negf %114 : vector<8x128xf32>
    %116 = math.exp %115 : vector<8x128xf32>
    %cst_73 = arith.constant 1.000000e+00 : f32
    %117 = vector.broadcast %cst_73 : f32 to vector<8x128xf32>
    %118 = arith.addf %117, %116 : vector<8x128xf32>
    %119 = arith.divf %117, %118 : vector<8x128xf32>
    %120 = vector.extract_strided_slice %113 {offsets = [0, 128], sizes = [8, 128], strides = [1, 1]} : vector<8x512xf32> to vector<8x128xf32>
    %121 = arith.negf %120 : vector<8x128xf32>
    %122 = math.exp %121 : vector<8x128xf32>
    %cst_74 = arith.constant 1.000000e+00 : f32
    %123 = vector.broadcast %cst_74 : f32 to vector<8x128xf32>
    %124 = arith.addf %123, %122 : vector<8x128xf32>
    %125 = arith.divf %123, %124 : vector<8x128xf32>
    %126 = vector.extract_strided_slice %113 {offsets = [0, 256], sizes = [8, 128], strides = [1, 1]} : vector<8x512xf32> to vector<8x128xf32>
    %127 = math.tanh %126 : vector<8x128xf32>
    %128 = vector.extract_strided_slice %113 {offsets = [0, 384], sizes = [8, 128], strides = [1, 1]} : vector<8x512xf32> to vector<8x128xf32>
    %129 = arith.negf %128 : vector<8x128xf32>
    %130 = math.exp %129 : vector<8x128xf32>
    %cst_75 = arith.constant 1.000000e+00 : f32
    %131 = vector.broadcast %cst_75 : f32 to vector<8x128xf32>
    %132 = arith.addf %131, %130 : vector<8x128xf32>
    %133 = arith.divf %131, %132 : vector<8x128xf32>
    %134 = arith.mulf %125, %103 : vector<8x128xf32>
    %135 = arith.mulf %119, %127 : vector<8x128xf32>
    %136 = arith.addf %134, %135 : vector<8x128xf32>
    %137 = math.tanh %136 : vector<8x128xf32>
    %138 = arith.mulf %133, %137 : vector<8x128xf32>
    %139 = tpu.concatenate %138, %105 in 1 : vector<8x128xf32>, vector<8x128xf32> -> vector<8x256xf32>
    %c0_76 = arith.constant 0 : index
    %c0_77 = arith.constant 0 : index
    %140 = vector.load %arg7[%c0_76, %c0_77] : memref<256x512xf32, #tpu.memory_space<vmem>>, vector<256x512xf32>
    %cst_78 = arith.constant dense<0.000000e+00> : vector<8x512xf32>
    %141 = tpu.matmul %139, %140, %cst_78 {dimension_numbers = #tpu.dot_dimension_numbers<[1], [0], [0], [1], [0, 0, 1, 1], [], []>} : vector<8x256xf32>, vector<256x512xf32>, vector<8x512xf32> -> vector<8x512xf32>
    %c0_79 = arith.constant 0 : index
    %c0_80 = arith.constant 0 : index
    %142 = vector.load %arg8[%c0_79, %c0_80] : memref<1x512xf32, #tpu.memory_space<vmem>>, vector<1x512xf32>
    %143 = vector.broadcast %142 : vector<1x512xf32> to vector<8x512xf32>
    %144 = arith.addf %141, %143 : vector<8x512xf32>
    %145 = vector.extract_strided_slice %144 {offsets = [0, 0], sizes = [8, 128], strides = [1, 1]} : vector<8x512xf32> to vector<8x128xf32>
    %146 = arith.negf %145 : vector<8x128xf32>
    %147 = math.exp %146 : vector<8x128xf32>
    %cst_81 = arith.constant 1.000000e+00 : f32
    %148 = vector.broadcast %cst_81 : f32 to vector<8x128xf32>
    %149 = arith.addf %148, %147 : vector<8x128xf32>
    %150 = arith.divf %148, %149 : vector<8x128xf32>
    %151 = vector.extract_strided_slice %144 {offsets = [0, 128], sizes = [8, 128], strides = [1, 1]} : vector<8x512xf32> to vector<8x128xf32>
    %152 = arith.negf %151 : vector<8x128xf32>
    %153 = math.exp %152 : vector<8x128xf32>
    %cst_82 = arith.constant 1.000000e+00 : f32
    %154 = vector.broadcast %cst_82 : f32 to vector<8x128xf32>
    %155 = arith.addf %154, %153 : vector<8x128xf32>
    %156 = arith.divf %154, %155 : vector<8x128xf32>
    %157 = vector.extract_strided_slice %144 {offsets = [0, 256], sizes = [8, 128], strides = [1, 1]} : vector<8x512xf32> to vector<8x128xf32>
    %158 = math.tanh %157 : vector<8x128xf32>
    %159 = vector.extract_strided_slice %144 {offsets = [0, 384], sizes = [8, 128], strides = [1, 1]} : vector<8x512xf32> to vector<8x128xf32>
    %160 = arith.negf %159 : vector<8x128xf32>
    %161 = math.exp %160 : vector<8x128xf32>
    %cst_83 = arith.constant 1.000000e+00 : f32
    %162 = vector.broadcast %cst_83 : f32 to vector<8x128xf32>
    %163 = arith.addf %162, %161 : vector<8x128xf32>
    %164 = arith.divf %162, %163 : vector<8x128xf32>
    %165 = arith.mulf %156, %107 : vector<8x128xf32>
    %166 = arith.mulf %150, %158 : vector<8x128xf32>
    %167 = arith.addf %165, %166 : vector<8x128xf32>
    %168 = math.tanh %167 : vector<8x128xf32>
    %169 = arith.mulf %164, %168 : vector<8x128xf32>
    %c0_84 = arith.constant 0 : index
    %c0_85 = arith.constant 0 : index
    %c0_86 = arith.constant 0 : index
    %170 = vector.load %arg14[%c0_84, %c0_85, %c0_86] : memref<2x8x128xf32, #tpu.memory_space<vmem>>, vector<1x8x128xf32>
    %171 = vector.shape_cast %170 : vector<1x8x128xf32> to vector<8x128xf32>
    %172 = vector.shape_cast %138 : vector<8x128xf32> to vector<1x8x128xf32>
    tpu.vector_store %arg14[%c0_84, %c0_85, %c0_86], %172 {strides = array<i32>} : memref<2x8x128xf32, #tpu.memory_space<vmem>>, vector<1x8x128xf32>,
    %c0_87 = arith.constant 0 : index
    %c0_88 = arith.constant 0 : index
    %c0_89 = arith.constant 0 : index
    %173 = vector.load %arg15[%c0_87, %c0_88, %c0_89] : memref<2x8x128xf32, #tpu.memory_space<vmem>>, vector<1x8x128xf32>
    %174 = vector.shape_cast %173 : vector<1x8x128xf32> to vector<8x128xf32>
    %175 = vector.shape_cast %136 : vector<8x128xf32> to vector<1x8x128xf32>
    tpu.vector_store %arg15[%c0_87, %c0_88, %c0_89], %175 {strides = array<i32>} : memref<2x8x128xf32, #tpu.memory_space<vmem>>, vector<1x8x128xf32>,
    %c1_90 = arith.constant 1 : index
    %c0_91 = arith.constant 0 : index
    %c0_92 = arith.constant 0 : index
    %176 = vector.load %arg14[%c1_90, %c0_91, %c0_92] : memref<2x8x128xf32, #tpu.memory_space<vmem>>, vector<1x8x128xf32>
    %177 = vector.shape_cast %176 : vector<1x8x128xf32> to vector<8x128xf32>
    %178 = vector.shape_cast %169 : vector<8x128xf32> to vector<1x8x128xf32>
    tpu.vector_store %arg14[%c1_90, %c0_91, %c0_92], %178 {strides = array<i32>} : memref<2x8x128xf32, #tpu.memory_space<vmem>>, vector<1x8x128xf32>,
    %c1_93 = arith.constant 1 : index
    %c0_94 = arith.constant 0 : index
    %c0_95 = arith.constant 0 : index
    %179 = vector.load %arg15[%c1_93, %c0_94, %c0_95] : memref<2x8x128xf32, #tpu.memory_space<vmem>>, vector<1x8x128xf32>
    %180 = vector.shape_cast %179 : vector<1x8x128xf32> to vector<8x128xf32>
    %181 = vector.shape_cast %167 : vector<8x128xf32> to vector<1x8x128xf32>
    tpu.vector_store %arg15[%c1_93, %c0_94, %c0_95], %181 {strides = array<i32>} : memref<2x8x128xf32, #tpu.memory_space<vmem>>, vector<1x8x128xf32>,
    %182 = arith.index_cast %c1_i32 : i32 to index
    %c0_96 = arith.constant 0 : index
    %c0_97 = arith.constant 0 : index
    %183 = vector.load %arg17[%182, %c0_96, %c0_97] : memref<8x8x128xf32, #tpu.memory_space<vmem>>, vector<1x8x128xf32>
    %184 = vector.shape_cast %183 : vector<1x8x128xf32> to vector<8x128xf32>
    %185 = vector.shape_cast %169 : vector<8x128xf32> to vector<1x8x128xf32>
    tpu.vector_store %arg17[%182, %c0_96, %c0_97], %185 {strides = array<i32>} : memref<8x8x128xf32, #tpu.memory_space<vmem>>, vector<1x8x128xf32>,
    %c2_i32 = arith.constant 2 : i32
    %c0_98 = arith.constant 0 : index
    %c0_99 = arith.constant 0 : index
    %c0_100 = arith.constant 0 : index
    %186 = vector.load %arg14[%c0_98, %c0_99, %c0_100] : memref<2x8x128xf32, #tpu.memory_space<vmem>>, vector<1x8x128xf32>
    %187 = vector.shape_cast %186 : vector<1x8x128xf32> to vector<8x128xf32>
    %c0_101 = arith.constant 0 : index
    %c0_102 = arith.constant 0 : index
    %c0_103 = arith.constant 0 : index
    %188 = vector.load %arg15[%c0_101, %c0_102, %c0_103] : memref<2x8x128xf32, #tpu.memory_space<vmem>>, vector<1x8x128xf32>
    %189 = vector.shape_cast %188 : vector<1x8x128xf32> to vector<8x128xf32>
    %c1_104 = arith.constant 1 : index
    %c0_105 = arith.constant 0 : index
    %c0_106 = arith.constant 0 : index
    %190 = vector.load %arg14[%c1_104, %c0_105, %c0_106] : memref<2x8x128xf32, #tpu.memory_space<vmem>>, vector<1x8x128xf32>
    %191 = vector.shape_cast %190 : vector<1x8x128xf32> to vector<8x128xf32>
    %c1_107 = arith.constant 1 : index
    %c0_108 = arith.constant 0 : index
    %c0_109 = arith.constant 0 : index
    %192 = vector.load %arg15[%c1_107, %c0_108, %c0_109] : memref<2x8x128xf32, #tpu.memory_space<vmem>>, vector<1x8x128xf32>
    %193 = vector.shape_cast %192 : vector<1x8x128xf32> to vector<8x128xf32>
    %194 = arith.index_cast %c2_i32 : i32 to index
    %c0_110 = arith.constant 0 : index
    %c0_111 = arith.constant 0 : index
    %195 = vector.load %arg16[%194, %c0_110, %c0_111] : memref<8x8x512xf32, #tpu.memory_space<vmem>>, vector<1x8x512xf32>
    %196 = vector.shape_cast %195 : vector<1x8x512xf32> to vector<8x512xf32>
    %c0_112 = arith.constant 0 : index
    %c0_113 = arith.constant 0 : index
    %197 = vector.load %arg5[%c0_112, %c0_113] : memref<128x512xf32, #tpu.memory_space<vmem>>, vector<128x512xf32>
    %cst_114 = arith.constant dense<0.000000e+00> : vector<8x512xf32>
    %198 = tpu.matmul %187, %197, %cst_114 {dimension_numbers = #tpu.dot_dimension_numbers<[1], [0], [0], [1], [0, 0, 1, 1], [], []>} : vector<8x128xf32>, vector<128x512xf32>, vector<8x512xf32> -> vector<8x512xf32>
    %199 = arith.addf %196, %198 : vector<8x512xf32>
    %200 = vector.extract_strided_slice %199 {offsets = [0, 0], sizes = [8, 128], strides = [1, 1]} : vector<8x512xf32> to vector<8x128xf32>
    %201 = arith.negf %200 : vector<8x128xf32>
    %202 = math.exp %201 : vector<8x128xf32>
    %cst_115 = arith.constant 1.000000e+00 : f32
    %203 = vector.broadcast %cst_115 : f32 to vector<8x128xf32>
    %204 = arith.addf %203, %202 : vector<8x128xf32>
    %205 = arith.divf %203, %204 : vector<8x128xf32>
    %206 = vector.extract_strided_slice %199 {offsets = [0, 128], sizes = [8, 128], strides = [1, 1]} : vector<8x512xf32> to vector<8x128xf32>
    %207 = arith.negf %206 : vector<8x128xf32>
    %208 = math.exp %207 : vector<8x128xf32>
    %cst_116 = arith.constant 1.000000e+00 : f32
    %209 = vector.broadcast %cst_116 : f32 to vector<8x128xf32>
    %210 = arith.addf %209, %208 : vector<8x128xf32>
    %211 = arith.divf %209, %210 : vector<8x128xf32>
    %212 = vector.extract_strided_slice %199 {offsets = [0, 256], sizes = [8, 128], strides = [1, 1]} : vector<8x512xf32> to vector<8x128xf32>
    %213 = math.tanh %212 : vector<8x128xf32>
    %214 = vector.extract_strided_slice %199 {offsets = [0, 384], sizes = [8, 128], strides = [1, 1]} : vector<8x512xf32> to vector<8x128xf32>
    %215 = arith.negf %214 : vector<8x128xf32>
    %216 = math.exp %215 : vector<8x128xf32>
    %cst_117 = arith.constant 1.000000e+00 : f32
    %217 = vector.broadcast %cst_117 : f32 to vector<8x128xf32>
    %218 = arith.addf %217, %216 : vector<8x128xf32>
    %219 = arith.divf %217, %218 : vector<8x128xf32>
    %220 = arith.mulf %211, %189 : vector<8x128xf32>
    %221 = arith.mulf %205, %213 : vector<8x128xf32>
    %222 = arith.addf %220, %221 : vector<8x128xf32>
    %223 = math.tanh %222 : vector<8x128xf32>
    %224 = arith.mulf %219, %223 : vector<8x128xf32>
    %225 = tpu.concatenate %224, %191 in 1 : vector<8x128xf32>, vector<8x128xf32> -> vector<8x256xf32>
    %c0_118 = arith.constant 0 : index
    %c0_119 = arith.constant 0 : index
    %226 = vector.load %arg7[%c0_118, %c0_119] : memref<256x512xf32, #tpu.memory_space<vmem>>, vector<256x512xf32>
    %cst_120 = arith.constant dense<0.000000e+00> : vector<8x512xf32>
    %227 = tpu.matmul %225, %226, %cst_120 {dimension_numbers = #tpu.dot_dimension_numbers<[1], [0], [0], [1], [0, 0, 1, 1], [], []>} : vector<8x256xf32>, vector<256x512xf32>, vector<8x512xf32> -> vector<8x512xf32>
    %c0_121 = arith.constant 0 : index
    %c0_122 = arith.constant 0 : index
    %228 = vector.load %arg8[%c0_121, %c0_122] : memref<1x512xf32, #tpu.memory_space<vmem>>, vector<1x512xf32>
    %229 = vector.broadcast %228 : vector<1x512xf32> to vector<8x512xf32>
    %230 = arith.addf %227, %229 : vector<8x512xf32>
    %231 = vector.extract_strided_slice %230 {offsets = [0, 0], sizes = [8, 128], strides = [1, 1]} : vector<8x512xf32> to vector<8x128xf32>
    %232 = arith.negf %231 : vector<8x128xf32>
    %233 = math.exp %232 : vector<8x128xf32>
    %cst_123 = arith.constant 1.000000e+00 : f32
    %234 = vector.broadcast %cst_123 : f32 to vector<8x128xf32>
    %235 = arith.addf %234, %233 : vector<8x128xf32>
    %236 = arith.divf %234, %235 : vector<8x128xf32>
    %237 = vector.extract_strided_slice %230 {offsets = [0, 128], sizes = [8, 128], strides = [1, 1]} : vector<8x512xf32> to vector<8x128xf32>
    %238 = arith.negf %237 : vector<8x128xf32>
    %239 = math.exp %238 : vector<8x128xf32>
    %cst_124 = arith.constant 1.000000e+00 : f32
    %240 = vector.broadcast %cst_124 : f32 to vector<8x128xf32>
    %241 = arith.addf %240, %239 : vector<8x128xf32>
    %242 = arith.divf %240, %241 : vector<8x128xf32>
    %243 = vector.extract_strided_slice %230 {offsets = [0, 256], sizes = [8, 128], strides = [1, 1]} : vector<8x512xf32> to vector<8x128xf32>
    %244 = math.tanh %243 : vector<8x128xf32>
    %245 = vector.extract_strided_slice %230 {offsets = [0, 384], sizes = [8, 128], strides = [1, 1]} : vector<8x512xf32> to vector<8x128xf32>
    %246 = arith.negf %245 : vector<8x128xf32>
    %247 = math.exp %246 : vector<8x128xf32>
    %cst_125 = arith.constant 1.000000e+00 : f32
    %248 = vector.broadcast %cst_125 : f32 to vector<8x128xf32>
    %249 = arith.addf %248, %247 : vector<8x128xf32>
    %250 = arith.divf %248, %249 : vector<8x128xf32>
    %251 = arith.mulf %242, %193 : vector<8x128xf32>
    %252 = arith.mulf %236, %244 : vector<8x128xf32>
    %253 = arith.addf %251, %252 : vector<8x128xf32>
    %254 = math.tanh %253 : vector<8x128xf32>
    %255 = arith.mulf %250, %254 : vector<8x128xf32>
    %c0_126 = arith.constant 0 : index
    %c0_127 = arith.constant 0 : index
    %c0_128 = arith.constant 0 : index
    %256 = vector.load %arg14[%c0_126, %c0_127, %c0_128] : memref<2x8x128xf32, #tpu.memory_space<vmem>>, vector<1x8x128xf32>
    %257 = vector.shape_cast %256 : vector<1x8x128xf32> to vector<8x128xf32>
    %258 = vector.shape_cast %224 : vector<8x128xf32> to vector<1x8x128xf32>
    tpu.vector_store %arg14[%c0_126, %c0_127, %c0_128], %258 {strides = array<i32>} : memref<2x8x128xf32, #tpu.memory_space<vmem>>, vector<1x8x128xf32>,
    %c0_129 = arith.constant 0 : index
    %c0_130 = arith.constant 0 : index
    %c0_131 = arith.constant 0 : index
    %259 = vector.load %arg15[%c0_129, %c0_130, %c0_131] : memref<2x8x128xf32, #tpu.memory_space<vmem>>, vector<1x8x128xf32>
    %260 = vector.shape_cast %259 : vector<1x8x128xf32> to vector<8x128xf32>
    %261 = vector.shape_cast %222 : vector<8x128xf32> to vector<1x8x128xf32>
    tpu.vector_store %arg15[%c0_129, %c0_130, %c0_131], %261 {strides = array<i32>} : memref<2x8x128xf32, #tpu.memory_space<vmem>>, vector<1x8x128xf32>,
    %c1_132 = arith.constant 1 : index
    %c0_133 = arith.constant 0 : index
    %c0_134 = arith.constant 0 : index
    %262 = vector.load %arg14[%c1_132, %c0_133, %c0_134] : memref<2x8x128xf32, #tpu.memory_space<vmem>>, vector<1x8x128xf32>
    %263 = vector.shape_cast %262 : vector<1x8x128xf32> to vector<8x128xf32>
    %264 = vector.shape_cast %255 : vector<8x128xf32> to vector<1x8x128xf32>
    tpu.vector_store %arg14[%c1_132, %c0_133, %c0_134], %264 {strides = array<i32>} : memref<2x8x128xf32, #tpu.memory_space<vmem>>, vector<1x8x128xf32>,
    %c1_135 = arith.constant 1 : index
    %c0_136 = arith.constant 0 : index
    %c0_137 = arith.constant 0 : index
    %265 = vector.load %arg15[%c1_135, %c0_136, %c0_137] : memref<2x8x128xf32, #tpu.memory_space<vmem>>, vector<1x8x128xf32>
    %266 = vector.shape_cast %265 : vector<1x8x128xf32> to vector<8x128xf32>
    %267 = vector.shape_cast %253 : vector<8x128xf32> to vector<1x8x128xf32>
    tpu.vector_store %arg15[%c1_135, %c0_136, %c0_137], %267 {strides = array<i32>} : memref<2x8x128xf32, #tpu.memory_space<vmem>>, vector<1x8x128xf32>,
    %268 = arith.index_cast %c2_i32 : i32 to index
    %c0_138 = arith.constant 0 : index
    %c0_139 = arith.constant 0 : index
    %269 = vector.load %arg17[%268, %c0_138, %c0_139] : memref<8x8x128xf32, #tpu.memory_space<vmem>>, vector<1x8x128xf32>
    %270 = vector.shape_cast %269 : vector<1x8x128xf32> to vector<8x128xf32>
    %271 = vector.shape_cast %255 : vector<8x128xf32> to vector<1x8x128xf32>
    tpu.vector_store %arg17[%268, %c0_138, %c0_139], %271 {strides = array<i32>} : memref<8x8x128xf32, #tpu.memory_space<vmem>>, vector<1x8x128xf32>,
    %c3_i32 = arith.constant 3 : i32
    %c0_140 = arith.constant 0 : index
    %c0_141 = arith.constant 0 : index
    %c0_142 = arith.constant 0 : index
    %272 = vector.load %arg14[%c0_140, %c0_141, %c0_142] : memref<2x8x128xf32, #tpu.memory_space<vmem>>, vector<1x8x128xf32>
    %273 = vector.shape_cast %272 : vector<1x8x128xf32> to vector<8x128xf32>
    %c0_143 = arith.constant 0 : index
    %c0_144 = arith.constant 0 : index
    %c0_145 = arith.constant 0 : index
    %274 = vector.load %arg15[%c0_143, %c0_144, %c0_145] : memref<2x8x128xf32, #tpu.memory_space<vmem>>, vector<1x8x128xf32>
    %275 = vector.shape_cast %274 : vector<1x8x128xf32> to vector<8x128xf32>
    %c1_146 = arith.constant 1 : index
    %c0_147 = arith.constant 0 : index
    %c0_148 = arith.constant 0 : index
    %276 = vector.load %arg14[%c1_146, %c0_147, %c0_148] : memref<2x8x128xf32, #tpu.memory_space<vmem>>, vector<1x8x128xf32>
    %277 = vector.shape_cast %276 : vector<1x8x128xf32> to vector<8x128xf32>
    %c1_149 = arith.constant 1 : index
    %c0_150 = arith.constant 0 : index
    %c0_151 = arith.constant 0 : index
    %278 = vector.load %arg15[%c1_149, %c0_150, %c0_151] : memref<2x8x128xf32, #tpu.memory_space<vmem>>, vector<1x8x128xf32>
    %279 = vector.shape_cast %278 : vector<1x8x128xf32> to vector<8x128xf32>
    %280 = arith.index_cast %c3_i32 : i32 to index
    %c0_152 = arith.constant 0 : index
    %c0_153 = arith.constant 0 : index
    %281 = vector.load %arg16[%280, %c0_152, %c0_153] : memref<8x8x512xf32, #tpu.memory_space<vmem>>, vector<1x8x512xf32>
    %282 = vector.shape_cast %281 : vector<1x8x512xf32> to vector<8x512xf32>
    %c0_154 = arith.constant 0 : index
    %c0_155 = arith.constant 0 : index
    %283 = vector.load %arg5[%c0_154, %c0_155] : memref<128x512xf32, #tpu.memory_space<vmem>>, vector<128x512xf32>
    %cst_156 = arith.constant dense<0.000000e+00> : vector<8x512xf32>
    %284 = tpu.matmul %273, %283, %cst_156 {dimension_numbers = #tpu.dot_dimension_numbers<[1], [0], [0], [1], [0, 0, 1, 1], [], []>} : vector<8x128xf32>, vector<128x512xf32>, vector<8x512xf32> -> vector<8x512xf32>
    %285 = arith.addf %282, %284 : vector<8x512xf32>
    %286 = vector.extract_strided_slice %285 {offsets = [0, 0], sizes = [8, 128], strides = [1, 1]} : vector<8x512xf32> to vector<8x128xf32>
    %287 = arith.negf %286 : vector<8x128xf32>
    %288 = math.exp %287 : vector<8x128xf32>
    %cst_157 = arith.constant 1.000000e+00 : f32
    %289 = vector.broadcast %cst_157 : f32 to vector<8x128xf32>
    %290 = arith.addf %289, %288 : vector<8x128xf32>
    %291 = arith.divf %289, %290 : vector<8x128xf32>
    %292 = vector.extract_strided_slice %285 {offsets = [0, 128], sizes = [8, 128], strides = [1, 1]} : vector<8x512xf32> to vector<8x128xf32>
    %293 = arith.negf %292 : vector<8x128xf32>
    %294 = math.exp %293 : vector<8x128xf32>
    %cst_158 = arith.constant 1.000000e+00 : f32
    %295 = vector.broadcast %cst_158 : f32 to vector<8x128xf32>
    %296 = arith.addf %295, %294 : vector<8x128xf32>
    %297 = arith.divf %295, %296 : vector<8x128xf32>
    %298 = vector.extract_strided_slice %285 {offsets = [0, 256], sizes = [8, 128], strides = [1, 1]} : vector<8x512xf32> to vector<8x128xf32>
    %299 = math.tanh %298 : vector<8x128xf32>
    %300 = vector.extract_strided_slice %285 {offsets = [0, 384], sizes = [8, 128], strides = [1, 1]} : vector<8x512xf32> to vector<8x128xf32>
    %301 = arith.negf %300 : vector<8x128xf32>
    %302 = math.exp %301 : vector<8x128xf32>
    %cst_159 = arith.constant 1.000000e+00 : f32
    %303 = vector.broadcast %cst_159 : f32 to vector<8x128xf32>
    %304 = arith.addf %303, %302 : vector<8x128xf32>
    %305 = arith.divf %303, %304 : vector<8x128xf32>
    %306 = arith.mulf %297, %275 : vector<8x128xf32>
    %307 = arith.mulf %291, %299 : vector<8x128xf32>
    %308 = arith.addf %306, %307 : vector<8x128xf32>
    %309 = math.tanh %308 : vector<8x128xf32>
    %310 = arith.mulf %305, %309 : vector<8x128xf32>
    %311 = tpu.concatenate %310, %277 in 1 : vector<8x128xf32>, vector<8x128xf32> -> vector<8x256xf32>
    %c0_160 = arith.constant 0 : index
    %c0_161 = arith.constant 0 : index
    %312 = vector.load %arg7[%c0_160, %c0_161] : memref<256x512xf32, #tpu.memory_space<vmem>>, vector<256x512xf32>
    %cst_162 = arith.constant dense<0.000000e+00> : vector<8x512xf32>
    %313 = tpu.matmul %311, %312, %cst_162 {dimension_numbers = #tpu.dot_dimension_numbers<[1], [0], [0], [1], [0, 0, 1, 1], [], []>} : vector<8x256xf32>, vector<256x512xf32>, vector<8x512xf32> -> vector<8x512xf32>
    %c0_163 = arith.constant 0 : index
    %c0_164 = arith.constant 0 : index
    %314 = vector.load %arg8[%c0_163, %c0_164] : memref<1x512xf32, #tpu.memory_space<vmem>>, vector<1x512xf32>
    %315 = vector.broadcast %314 : vector<1x512xf32> to vector<8x512xf32>
    %316 = arith.addf %313, %315 : vector<8x512xf32>
    %317 = vector.extract_strided_slice %316 {offsets = [0, 0], sizes = [8, 128], strides = [1, 1]} : vector<8x512xf32> to vector<8x128xf32>
    %318 = arith.negf %317 : vector<8x128xf32>
    %319 = math.exp %318 : vector<8x128xf32>
    %cst_165 = arith.constant 1.000000e+00 : f32
    %320 = vector.broadcast %cst_165 : f32 to vector<8x128xf32>
    %321 = arith.addf %320, %319 : vector<8x128xf32>
    %322 = arith.divf %320, %321 : vector<8x128xf32>
    %323 = vector.extract_strided_slice %316 {offsets = [0, 128], sizes = [8, 128], strides = [1, 1]} : vector<8x512xf32> to vector<8x128xf32>
    %324 = arith.negf %323 : vector<8x128xf32>
    %325 = math.exp %324 : vector<8x128xf32>
    %cst_166 = arith.constant 1.000000e+00 : f32
    %326 = vector.broadcast %cst_166 : f32 to vector<8x128xf32>
    %327 = arith.addf %326, %325 : vector<8x128xf32>
    %328 = arith.divf %326, %327 : vector<8x128xf32>
    %329 = vector.extract_strided_slice %316 {offsets = [0, 256], sizes = [8, 128], strides = [1, 1]} : vector<8x512xf32> to vector<8x128xf32>
    %330 = math.tanh %329 : vector<8x128xf32>
    %331 = vector.extract_strided_slice %316 {offsets = [0, 384], sizes = [8, 128], strides = [1, 1]} : vector<8x512xf32> to vector<8x128xf32>
    %332 = arith.negf %331 : vector<8x128xf32>
    %333 = math.exp %332 : vector<8x128xf32>
    %cst_167 = arith.constant 1.000000e+00 : f32
    %334 = vector.broadcast %cst_167 : f32 to vector<8x128xf32>
    %335 = arith.addf %334, %333 : vector<8x128xf32>
    %336 = arith.divf %334, %335 : vector<8x128xf32>
    %337 = arith.mulf %328, %279 : vector<8x128xf32>
    %338 = arith.mulf %322, %330 : vector<8x128xf32>
    %339 = arith.addf %337, %338 : vector<8x128xf32>
    %340 = math.tanh %339 : vector<8x128xf32>
    %341 = arith.mulf %336, %340 : vector<8x128xf32>
    %c0_168 = arith.constant 0 : index
    %c0_169 = arith.constant 0 : index
    %c0_170 = arith.constant 0 : index
    %342 = vector.load %arg14[%c0_168, %c0_169, %c0_170] : memref<2x8x128xf32, #tpu.memory_space<vmem>>, vector<1x8x128xf32>
    %343 = vector.shape_cast %342 : vector<1x8x128xf32> to vector<8x128xf32>
    %344 = vector.shape_cast %310 : vector<8x128xf32> to vector<1x8x128xf32>
    tpu.vector_store %arg14[%c0_168, %c0_169, %c0_170], %344 {strides = array<i32>} : memref<2x8x128xf32, #tpu.memory_space<vmem>>, vector<1x8x128xf32>,
    %c0_171 = arith.constant 0 : index
    %c0_172 = arith.constant 0 : index
    %c0_173 = arith.constant 0 : index
    %345 = vector.load %arg15[%c0_171, %c0_172, %c0_173] : memref<2x8x128xf32, #tpu.memory_space<vmem>>, vector<1x8x128xf32>
    %346 = vector.shape_cast %345 : vector<1x8x128xf32> to vector<8x128xf32>
    %347 = vector.shape_cast %308 : vector<8x128xf32> to vector<1x8x128xf32>
    tpu.vector_store %arg15[%c0_171, %c0_172, %c0_173], %347 {strides = array<i32>} : memref<2x8x128xf32, #tpu.memory_space<vmem>>, vector<1x8x128xf32>,
    %c1_174 = arith.constant 1 : index
    %c0_175 = arith.constant 0 : index
    %c0_176 = arith.constant 0 : index
    %348 = vector.load %arg14[%c1_174, %c0_175, %c0_176] : memref<2x8x128xf32, #tpu.memory_space<vmem>>, vector<1x8x128xf32>
    %349 = vector.shape_cast %348 : vector<1x8x128xf32> to vector<8x128xf32>
    %350 = vector.shape_cast %341 : vector<8x128xf32> to vector<1x8x128xf32>
    tpu.vector_store %arg14[%c1_174, %c0_175, %c0_176], %350 {strides = array<i32>} : memref<2x8x128xf32, #tpu.memory_space<vmem>>, vector<1x8x128xf32>,
    %c1_177 = arith.constant 1 : index
    %c0_178 = arith.constant 0 : index
    %c0_179 = arith.constant 0 : index
    %351 = vector.load %arg15[%c1_177, %c0_178, %c0_179] : memref<2x8x128xf32, #tpu.memory_space<vmem>>, vector<1x8x128xf32>
    %352 = vector.shape_cast %351 : vector<1x8x128xf32> to vector<8x128xf32>
    %353 = vector.shape_cast %339 : vector<8x128xf32> to vector<1x8x128xf32>
    tpu.vector_store %arg15[%c1_177, %c0_178, %c0_179], %353 {strides = array<i32>} : memref<2x8x128xf32, #tpu.memory_space<vmem>>, vector<1x8x128xf32>,
    %354 = arith.index_cast %c3_i32 : i32 to index
    %c0_180 = arith.constant 0 : index
    %c0_181 = arith.constant 0 : index
    %355 = vector.load %arg17[%354, %c0_180, %c0_181] : memref<8x8x128xf32, #tpu.memory_space<vmem>>, vector<1x8x128xf32>
    %356 = vector.shape_cast %355 : vector<1x8x128xf32> to vector<8x128xf32>
    %357 = vector.shape_cast %341 : vector<8x128xf32> to vector<1x8x128xf32>
    tpu.vector_store %arg17[%354, %c0_180, %c0_181], %357 {strides = array<i32>} : memref<8x8x128xf32, #tpu.memory_space<vmem>>, vector<1x8x128xf32>,
    %c4_i32 = arith.constant 4 : i32
    %c0_182 = arith.constant 0 : index
    %c0_183 = arith.constant 0 : index
    %c0_184 = arith.constant 0 : index
    %358 = vector.load %arg14[%c0_182, %c0_183, %c0_184] : memref<2x8x128xf32, #tpu.memory_space<vmem>>, vector<1x8x128xf32>
    %359 = vector.shape_cast %358 : vector<1x8x128xf32> to vector<8x128xf32>
    %c0_185 = arith.constant 0 : index
    %c0_186 = arith.constant 0 : index
    %c0_187 = arith.constant 0 : index
    %360 = vector.load %arg15[%c0_185, %c0_186, %c0_187] : memref<2x8x128xf32, #tpu.memory_space<vmem>>, vector<1x8x128xf32>
    %361 = vector.shape_cast %360 : vector<1x8x128xf32> to vector<8x128xf32>
    %c1_188 = arith.constant 1 : index
    %c0_189 = arith.constant 0 : index
    %c0_190 = arith.constant 0 : index
    %362 = vector.load %arg14[%c1_188, %c0_189, %c0_190] : memref<2x8x128xf32, #tpu.memory_space<vmem>>, vector<1x8x128xf32>
    %363 = vector.shape_cast %362 : vector<1x8x128xf32> to vector<8x128xf32>
    %c1_191 = arith.constant 1 : index
    %c0_192 = arith.constant 0 : index
    %c0_193 = arith.constant 0 : index
    %364 = vector.load %arg15[%c1_191, %c0_192, %c0_193] : memref<2x8x128xf32, #tpu.memory_space<vmem>>, vector<1x8x128xf32>
    %365 = vector.shape_cast %364 : vector<1x8x128xf32> to vector<8x128xf32>
    %366 = arith.index_cast %c4_i32 : i32 to index
    %c0_194 = arith.constant 0 : index
    %c0_195 = arith.constant 0 : index
    %367 = vector.load %arg16[%366, %c0_194, %c0_195] : memref<8x8x512xf32, #tpu.memory_space<vmem>>, vector<1x8x512xf32>
    %368 = vector.shape_cast %367 : vector<1x8x512xf32> to vector<8x512xf32>
    %c0_196 = arith.constant 0 : index
    %c0_197 = arith.constant 0 : index
    %369 = vector.load %arg5[%c0_196, %c0_197] : memref<128x512xf32, #tpu.memory_space<vmem>>, vector<128x512xf32>
    %cst_198 = arith.constant dense<0.000000e+00> : vector<8x512xf32>
    %370 = tpu.matmul %359, %369, %cst_198 {dimension_numbers = #tpu.dot_dimension_numbers<[1], [0], [0], [1], [0, 0, 1, 1], [], []>} : vector<8x128xf32>, vector<128x512xf32>, vector<8x512xf32> -> vector<8x512xf32>
    %371 = arith.addf %368, %370 : vector<8x512xf32>
    %372 = vector.extract_strided_slice %371 {offsets = [0, 0], sizes = [8, 128], strides = [1, 1]} : vector<8x512xf32> to vector<8x128xf32>
    %373 = arith.negf %372 : vector<8x128xf32>
    %374 = math.exp %373 : vector<8x128xf32>
    %cst_199 = arith.constant 1.000000e+00 : f32
    %375 = vector.broadcast %cst_199 : f32 to vector<8x128xf32>
    %376 = arith.addf %375, %374 : vector<8x128xf32>
    %377 = arith.divf %375, %376 : vector<8x128xf32>
    %378 = vector.extract_strided_slice %371 {offsets = [0, 128], sizes = [8, 128], strides = [1, 1]} : vector<8x512xf32> to vector<8x128xf32>
    %379 = arith.negf %378 : vector<8x128xf32>
    %380 = math.exp %379 : vector<8x128xf32>
    %cst_200 = arith.constant 1.000000e+00 : f32
    %381 = vector.broadcast %cst_200 : f32 to vector<8x128xf32>
    %382 = arith.addf %381, %380 : vector<8x128xf32>
    %383 = arith.divf %381, %382 : vector<8x128xf32>
    %384 = vector.extract_strided_slice %371 {offsets = [0, 256], sizes = [8, 128], strides = [1, 1]} : vector<8x512xf32> to vector<8x128xf32>
    %385 = math.tanh %384 : vector<8x128xf32>
    %386 = vector.extract_strided_slice %371 {offsets = [0, 384], sizes = [8, 128], strides = [1, 1]} : vector<8x512xf32> to vector<8x128xf32>
    %387 = arith.negf %386 : vector<8x128xf32>
    %388 = math.exp %387 : vector<8x128xf32>
    %cst_201 = arith.constant 1.000000e+00 : f32
    %389 = vector.broadcast %cst_201 : f32 to vector<8x128xf32>
    %390 = arith.addf %389, %388 : vector<8x128xf32>
    %391 = arith.divf %389, %390 : vector<8x128xf32>
    %392 = arith.mulf %383, %361 : vector<8x128xf32>
    %393 = arith.mulf %377, %385 : vector<8x128xf32>
    %394 = arith.addf %392, %393 : vector<8x128xf32>
    %395 = math.tanh %394 : vector<8x128xf32>
    %396 = arith.mulf %391, %395 : vector<8x128xf32>
    %397 = tpu.concatenate %396, %363 in 1 : vector<8x128xf32>, vector<8x128xf32> -> vector<8x256xf32>
    %c0_202 = arith.constant 0 : index
    %c0_203 = arith.constant 0 : index
    %398 = vector.load %arg7[%c0_202, %c0_203] : memref<256x512xf32, #tpu.memory_space<vmem>>, vector<256x512xf32>
    %cst_204 = arith.constant dense<0.000000e+00> : vector<8x512xf32>
    %399 = tpu.matmul %397, %398, %cst_204 {dimension_numbers = #tpu.dot_dimension_numbers<[1], [0], [0], [1], [0, 0, 1, 1], [], []>} : vector<8x256xf32>, vector<256x512xf32>, vector<8x512xf32> -> vector<8x512xf32>
    %c0_205 = arith.constant 0 : index
    %c0_206 = arith.constant 0 : index
    %400 = vector.load %arg8[%c0_205, %c0_206] : memref<1x512xf32, #tpu.memory_space<vmem>>, vector<1x512xf32>
    %401 = vector.broadcast %400 : vector<1x512xf32> to vector<8x512xf32>
    %402 = arith.addf %399, %401 : vector<8x512xf32>
    %403 = vector.extract_strided_slice %402 {offsets = [0, 0], sizes = [8, 128], strides = [1, 1]} : vector<8x512xf32> to vector<8x128xf32>
    %404 = arith.negf %403 : vector<8x128xf32>
    %405 = math.exp %404 : vector<8x128xf32>
    %cst_207 = arith.constant 1.000000e+00 : f32
    %406 = vector.broadcast %cst_207 : f32 to vector<8x128xf32>
    %407 = arith.addf %406, %405 : vector<8x128xf32>
    %408 = arith.divf %406, %407 : vector<8x128xf32>
    %409 = vector.extract_strided_slice %402 {offsets = [0, 128], sizes = [8, 128], strides = [1, 1]} : vector<8x512xf32> to vector<8x128xf32>
    %410 = arith.negf %409 : vector<8x128xf32>
    %411 = math.exp %410 : vector<8x128xf32>
    %cst_208 = arith.constant 1.000000e+00 : f32
    %412 = vector.broadcast %cst_208 : f32 to vector<8x128xf32>
    %413 = arith.addf %412, %411 : vector<8x128xf32>
    %414 = arith.divf %412, %413 : vector<8x128xf32>
    %415 = vector.extract_strided_slice %402 {offsets = [0, 256], sizes = [8, 128], strides = [1, 1]} : vector<8x512xf32> to vector<8x128xf32>
    %416 = math.tanh %415 : vector<8x128xf32>
    %417 = vector.extract_strided_slice %402 {offsets = [0, 384], sizes = [8, 128], strides = [1, 1]} : vector<8x512xf32> to vector<8x128xf32>
    %418 = arith.negf %417 : vector<8x128xf32>
    %419 = math.exp %418 : vector<8x128xf32>
    %cst_209 = arith.constant 1.000000e+00 : f32
    %420 = vector.broadcast %cst_209 : f32 to vector<8x128xf32>
    %421 = arith.addf %420, %419 : vector<8x128xf32>
    %422 = arith.divf %420, %421 : vector<8x128xf32>
    %423 = arith.mulf %414, %365 : vector<8x128xf32>
    %424 = arith.mulf %408, %416 : vector<8x128xf32>
    %425 = arith.addf %423, %424 : vector<8x128xf32>
    %426 = math.tanh %425 : vector<8x128xf32>
    %427 = arith.mulf %422, %426 : vector<8x128xf32>
    %c0_210 = arith.constant 0 : index
    %c0_211 = arith.constant 0 : index
    %c0_212 = arith.constant 0 : index
    %428 = vector.load %arg14[%c0_210, %c0_211, %c0_212] : memref<2x8x128xf32, #tpu.memory_space<vmem>>, vector<1x8x128xf32>
    %429 = vector.shape_cast %428 : vector<1x8x128xf32> to vector<8x128xf32>
    %430 = vector.shape_cast %396 : vector<8x128xf32> to vector<1x8x128xf32>
    tpu.vector_store %arg14[%c0_210, %c0_211, %c0_212], %430 {strides = array<i32>} : memref<2x8x128xf32, #tpu.memory_space<vmem>>, vector<1x8x128xf32>,
    %c0_213 = arith.constant 0 : index
    %c0_214 = arith.constant 0 : index
    %c0_215 = arith.constant 0 : index
    %431 = vector.load %arg15[%c0_213, %c0_214, %c0_215] : memref<2x8x128xf32, #tpu.memory_space<vmem>>, vector<1x8x128xf32>
    %432 = vector.shape_cast %431 : vector<1x8x128xf32> to vector<8x128xf32>
    %433 = vector.shape_cast %394 : vector<8x128xf32> to vector<1x8x128xf32>
    tpu.vector_store %arg15[%c0_213, %c0_214, %c0_215], %433 {strides = array<i32>} : memref<2x8x128xf32, #tpu.memory_space<vmem>>, vector<1x8x128xf32>,
    %c1_216 = arith.constant 1 : index
    %c0_217 = arith.constant 0 : index
    %c0_218 = arith.constant 0 : index
    %434 = vector.load %arg14[%c1_216, %c0_217, %c0_218] : memref<2x8x128xf32, #tpu.memory_space<vmem>>, vector<1x8x128xf32>
    %435 = vector.shape_cast %434 : vector<1x8x128xf32> to vector<8x128xf32>
    %436 = vector.shape_cast %427 : vector<8x128xf32> to vector<1x8x128xf32>
    tpu.vector_store %arg14[%c1_216, %c0_217, %c0_218], %436 {strides = array<i32>} : memref<2x8x128xf32, #tpu.memory_space<vmem>>, vector<1x8x128xf32>,
    %c1_219 = arith.constant 1 : index
    %c0_220 = arith.constant 0 : index
    %c0_221 = arith.constant 0 : index
    %437 = vector.load %arg15[%c1_219, %c0_220, %c0_221] : memref<2x8x128xf32, #tpu.memory_space<vmem>>, vector<1x8x128xf32>
    %438 = vector.shape_cast %437 : vector<1x8x128xf32> to vector<8x128xf32>
    %439 = vector.shape_cast %425 : vector<8x128xf32> to vector<1x8x128xf32>
    tpu.vector_store %arg15[%c1_219, %c0_220, %c0_221], %439 {strides = array<i32>} : memref<2x8x128xf32, #tpu.memory_space<vmem>>, vector<1x8x128xf32>,
    %440 = arith.index_cast %c4_i32 : i32 to index
    %c0_222 = arith.constant 0 : index
    %c0_223 = arith.constant 0 : index
    %441 = vector.load %arg17[%440, %c0_222, %c0_223] : memref<8x8x128xf32, #tpu.memory_space<vmem>>, vector<1x8x128xf32>
    %442 = vector.shape_cast %441 : vector<1x8x128xf32> to vector<8x128xf32>
    %443 = vector.shape_cast %427 : vector<8x128xf32> to vector<1x8x128xf32>
    tpu.vector_store %arg17[%440, %c0_222, %c0_223], %443 {strides = array<i32>} : memref<8x8x128xf32, #tpu.memory_space<vmem>>, vector<1x8x128xf32>,
    %c5_i32 = arith.constant 5 : i32
    %c0_224 = arith.constant 0 : index
    %c0_225 = arith.constant 0 : index
    %c0_226 = arith.constant 0 : index
    %444 = vector.load %arg14[%c0_224, %c0_225, %c0_226] : memref<2x8x128xf32, #tpu.memory_space<vmem>>, vector<1x8x128xf32>
    %445 = vector.shape_cast %444 : vector<1x8x128xf32> to vector<8x128xf32>
    %c0_227 = arith.constant 0 : index
    %c0_228 = arith.constant 0 : index
    %c0_229 = arith.constant 0 : index
    %446 = vector.load %arg15[%c0_227, %c0_228, %c0_229] : memref<2x8x128xf32, #tpu.memory_space<vmem>>, vector<1x8x128xf32>
    %447 = vector.shape_cast %446 : vector<1x8x128xf32> to vector<8x128xf32>
    %c1_230 = arith.constant 1 : index
    %c0_231 = arith.constant 0 : index
    %c0_232 = arith.constant 0 : index
    %448 = vector.load %arg14[%c1_230, %c0_231, %c0_232] : memref<2x8x128xf32, #tpu.memory_space<vmem>>, vector<1x8x128xf32>
    %449 = vector.shape_cast %448 : vector<1x8x128xf32> to vector<8x128xf32>
    %c1_233 = arith.constant 1 : index
    %c0_234 = arith.constant 0 : index
    %c0_235 = arith.constant 0 : index
    %450 = vector.load %arg15[%c1_233, %c0_234, %c0_235] : memref<2x8x128xf32, #tpu.memory_space<vmem>>, vector<1x8x128xf32>
    %451 = vector.shape_cast %450 : vector<1x8x128xf32> to vector<8x128xf32>
    %452 = arith.index_cast %c5_i32 : i32 to index
    %c0_236 = arith.constant 0 : index
    %c0_237 = arith.constant 0 : index
    %453 = vector.load %arg16[%452, %c0_236, %c0_237] : memref<8x8x512xf32, #tpu.memory_space<vmem>>, vector<1x8x512xf32>
    %454 = vector.shape_cast %453 : vector<1x8x512xf32> to vector<8x512xf32>
    %c0_238 = arith.constant 0 : index
    %c0_239 = arith.constant 0 : index
    %455 = vector.load %arg5[%c0_238, %c0_239] : memref<128x512xf32, #tpu.memory_space<vmem>>, vector<128x512xf32>
    %cst_240 = arith.constant dense<0.000000e+00> : vector<8x512xf32>
    %456 = tpu.matmul %445, %455, %cst_240 {dimension_numbers = #tpu.dot_dimension_numbers<[1], [0], [0], [1], [0, 0, 1, 1], [], []>} : vector<8x128xf32>, vector<128x512xf32>, vector<8x512xf32> -> vector<8x512xf32>
    %457 = arith.addf %454, %456 : vector<8x512xf32>
    %458 = vector.extract_strided_slice %457 {offsets = [0, 0], sizes = [8, 128], strides = [1, 1]} : vector<8x512xf32> to vector<8x128xf32>
    %459 = arith.negf %458 : vector<8x128xf32>
    %460 = math.exp %459 : vector<8x128xf32>
    %cst_241 = arith.constant 1.000000e+00 : f32
    %461 = vector.broadcast %cst_241 : f32 to vector<8x128xf32>
    %462 = arith.addf %461, %460 : vector<8x128xf32>
    %463 = arith.divf %461, %462 : vector<8x128xf32>
    %464 = vector.extract_strided_slice %457 {offsets = [0, 128], sizes = [8, 128], strides = [1, 1]} : vector<8x512xf32> to vector<8x128xf32>
    %465 = arith.negf %464 : vector<8x128xf32>
    %466 = math.exp %465 : vector<8x128xf32>
    %cst_242 = arith.constant 1.000000e+00 : f32
    %467 = vector.broadcast %cst_242 : f32 to vector<8x128xf32>
    %468 = arith.addf %467, %466 : vector<8x128xf32>
    %469 = arith.divf %467, %468 : vector<8x128xf32>
    %470 = vector.extract_strided_slice %457 {offsets = [0, 256], sizes = [8, 128], strides = [1, 1]} : vector<8x512xf32> to vector<8x128xf32>
    %471 = math.tanh %470 : vector<8x128xf32>
    %472 = vector.extract_strided_slice %457 {offsets = [0, 384], sizes = [8, 128], strides = [1, 1]} : vector<8x512xf32> to vector<8x128xf32>
    %473 = arith.negf %472 : vector<8x128xf32>
    %474 = math.exp %473 : vector<8x128xf32>
    %cst_243 = arith.constant 1.000000e+00 : f32
    %475 = vector.broadcast %cst_243 : f32 to vector<8x128xf32>
    %476 = arith.addf %475, %474 : vector<8x128xf32>
    %477 = arith.divf %475, %476 : vector<8x128xf32>
    %478 = arith.mulf %469, %447 : vector<8x128xf32>
    %479 = arith.mulf %463, %471 : vector<8x128xf32>
    %480 = arith.addf %478, %479 : vector<8x128xf32>
    %481 = math.tanh %480 : vector<8x128xf32>
    %482 = arith.mulf %477, %481 : vector<8x128xf32>
    %483 = tpu.concatenate %482, %449 in 1 : vector<8x128xf32>, vector<8x128xf32> -> vector<8x256xf32>
    %c0_244 = arith.constant 0 : index
    %c0_245 = arith.constant 0 : index
    %484 = vector.load %arg7[%c0_244, %c0_245] : memref<256x512xf32, #tpu.memory_space<vmem>>, vector<256x512xf32>
    %cst_246 = arith.constant dense<0.000000e+00> : vector<8x512xf32>
    %485 = tpu.matmul %483, %484, %cst_246 {dimension_numbers = #tpu.dot_dimension_numbers<[1], [0], [0], [1], [0, 0, 1, 1], [], []>} : vector<8x256xf32>, vector<256x512xf32>, vector<8x512xf32> -> vector<8x512xf32>
    %c0_247 = arith.constant 0 : index
    %c0_248 = arith.constant 0 : index
    %486 = vector.load %arg8[%c0_247, %c0_248] : memref<1x512xf32, #tpu.memory_space<vmem>>, vector<1x512xf32>
    %487 = vector.broadcast %486 : vector<1x512xf32> to vector<8x512xf32>
    %488 = arith.addf %485, %487 : vector<8x512xf32>
    %489 = vector.extract_strided_slice %488 {offsets = [0, 0], sizes = [8, 128], strides = [1, 1]} : vector<8x512xf32> to vector<8x128xf32>
    %490 = arith.negf %489 : vector<8x128xf32>
    %491 = math.exp %490 : vector<8x128xf32>
    %cst_249 = arith.constant 1.000000e+00 : f32
    %492 = vector.broadcast %cst_249 : f32 to vector<8x128xf32>
    %493 = arith.addf %492, %491 : vector<8x128xf32>
    %494 = arith.divf %492, %493 : vector<8x128xf32>
    %495 = vector.extract_strided_slice %488 {offsets = [0, 128], sizes = [8, 128], strides = [1, 1]} : vector<8x512xf32> to vector<8x128xf32>
    %496 = arith.negf %495 : vector<8x128xf32>
    %497 = math.exp %496 : vector<8x128xf32>
    %cst_250 = arith.constant 1.000000e+00 : f32
    %498 = vector.broadcast %cst_250 : f32 to vector<8x128xf32>
    %499 = arith.addf %498, %497 : vector<8x128xf32>
    %500 = arith.divf %498, %499 : vector<8x128xf32>
    %501 = vector.extract_strided_slice %488 {offsets = [0, 256], sizes = [8, 128], strides = [1, 1]} : vector<8x512xf32> to vector<8x128xf32>
    %502 = math.tanh %501 : vector<8x128xf32>
    %503 = vector.extract_strided_slice %488 {offsets = [0, 384], sizes = [8, 128], strides = [1, 1]} : vector<8x512xf32> to vector<8x128xf32>
    %504 = arith.negf %503 : vector<8x128xf32>
    %505 = math.exp %504 : vector<8x128xf32>
    %cst_251 = arith.constant 1.000000e+00 : f32
    %506 = vector.broadcast %cst_251 : f32 to vector<8x128xf32>
    %507 = arith.addf %506, %505 : vector<8x128xf32>
    %508 = arith.divf %506, %507 : vector<8x128xf32>
    %509 = arith.mulf %500, %451 : vector<8x128xf32>
    %510 = arith.mulf %494, %502 : vector<8x128xf32>
    %511 = arith.addf %509, %510 : vector<8x128xf32>
    %512 = math.tanh %511 : vector<8x128xf32>
    %513 = arith.mulf %508, %512 : vector<8x128xf32>
    %c0_252 = arith.constant 0 : index
    %c0_253 = arith.constant 0 : index
    %c0_254 = arith.constant 0 : index
    %514 = vector.load %arg14[%c0_252, %c0_253, %c0_254] : memref<2x8x128xf32, #tpu.memory_space<vmem>>, vector<1x8x128xf32>
    %515 = vector.shape_cast %514 : vector<1x8x128xf32> to vector<8x128xf32>
    %516 = vector.shape_cast %482 : vector<8x128xf32> to vector<1x8x128xf32>
    tpu.vector_store %arg14[%c0_252, %c0_253, %c0_254], %516 {strides = array<i32>} : memref<2x8x128xf32, #tpu.memory_space<vmem>>, vector<1x8x128xf32>,
    %c0_255 = arith.constant 0 : index
    %c0_256 = arith.constant 0 : index
    %c0_257 = arith.constant 0 : index
    %517 = vector.load %arg15[%c0_255, %c0_256, %c0_257] : memref<2x8x128xf32, #tpu.memory_space<vmem>>, vector<1x8x128xf32>
    %518 = vector.shape_cast %517 : vector<1x8x128xf32> to vector<8x128xf32>
    %519 = vector.shape_cast %480 : vector<8x128xf32> to vector<1x8x128xf32>
    tpu.vector_store %arg15[%c0_255, %c0_256, %c0_257], %519 {strides = array<i32>} : memref<2x8x128xf32, #tpu.memory_space<vmem>>, vector<1x8x128xf32>,
    %c1_258 = arith.constant 1 : index
    %c0_259 = arith.constant 0 : index
    %c0_260 = arith.constant 0 : index
    %520 = vector.load %arg14[%c1_258, %c0_259, %c0_260] : memref<2x8x128xf32, #tpu.memory_space<vmem>>, vector<1x8x128xf32>
    %521 = vector.shape_cast %520 : vector<1x8x128xf32> to vector<8x128xf32>
    %522 = vector.shape_cast %513 : vector<8x128xf32> to vector<1x8x128xf32>
    tpu.vector_store %arg14[%c1_258, %c0_259, %c0_260], %522 {strides = array<i32>} : memref<2x8x128xf32, #tpu.memory_space<vmem>>, vector<1x8x128xf32>,
    %c1_261 = arith.constant 1 : index
    %c0_262 = arith.constant 0 : index
    %c0_263 = arith.constant 0 : index
    %523 = vector.load %arg15[%c1_261, %c0_262, %c0_263] : memref<2x8x128xf32, #tpu.memory_space<vmem>>, vector<1x8x128xf32>
    %524 = vector.shape_cast %523 : vector<1x8x128xf32> to vector<8x128xf32>
    %525 = vector.shape_cast %511 : vector<8x128xf32> to vector<1x8x128xf32>
    tpu.vector_store %arg15[%c1_261, %c0_262, %c0_263], %525 {strides = array<i32>} : memref<2x8x128xf32, #tpu.memory_space<vmem>>, vector<1x8x128xf32>,
    %526 = arith.index_cast %c5_i32 : i32 to index
    %c0_264 = arith.constant 0 : index
    %c0_265 = arith.constant 0 : index
    %527 = vector.load %arg17[%526, %c0_264, %c0_265] : memref<8x8x128xf32, #tpu.memory_space<vmem>>, vector<1x8x128xf32>
    %528 = vector.shape_cast %527 : vector<1x8x128xf32> to vector<8x128xf32>
    %529 = vector.shape_cast %513 : vector<8x128xf32> to vector<1x8x128xf32>
    tpu.vector_store %arg17[%526, %c0_264, %c0_265], %529 {strides = array<i32>} : memref<8x8x128xf32, #tpu.memory_space<vmem>>, vector<1x8x128xf32>,
    %c6_i32 = arith.constant 6 : i32
    %c0_266 = arith.constant 0 : index
    %c0_267 = arith.constant 0 : index
    %c0_268 = arith.constant 0 : index
    %530 = vector.load %arg14[%c0_266, %c0_267, %c0_268] : memref<2x8x128xf32, #tpu.memory_space<vmem>>, vector<1x8x128xf32>
    %531 = vector.shape_cast %530 : vector<1x8x128xf32> to vector<8x128xf32>
    %c0_269 = arith.constant 0 : index
    %c0_270 = arith.constant 0 : index
    %c0_271 = arith.constant 0 : index
    %532 = vector.load %arg15[%c0_269, %c0_270, %c0_271] : memref<2x8x128xf32, #tpu.memory_space<vmem>>, vector<1x8x128xf32>
    %533 = vector.shape_cast %532 : vector<1x8x128xf32> to vector<8x128xf32>
    %c1_272 = arith.constant 1 : index
    %c0_273 = arith.constant 0 : index
    %c0_274 = arith.constant 0 : index
    %534 = vector.load %arg14[%c1_272, %c0_273, %c0_274] : memref<2x8x128xf32, #tpu.memory_space<vmem>>, vector<1x8x128xf32>
    %535 = vector.shape_cast %534 : vector<1x8x128xf32> to vector<8x128xf32>
    %c1_275 = arith.constant 1 : index
    %c0_276 = arith.constant 0 : index
    %c0_277 = arith.constant 0 : index
    %536 = vector.load %arg15[%c1_275, %c0_276, %c0_277] : memref<2x8x128xf32, #tpu.memory_space<vmem>>, vector<1x8x128xf32>
    %537 = vector.shape_cast %536 : vector<1x8x128xf32> to vector<8x128xf32>
    %538 = arith.index_cast %c6_i32 : i32 to index
    %c0_278 = arith.constant 0 : index
    %c0_279 = arith.constant 0 : index
    %539 = vector.load %arg16[%538, %c0_278, %c0_279] : memref<8x8x512xf32, #tpu.memory_space<vmem>>, vector<1x8x512xf32>
    %540 = vector.shape_cast %539 : vector<1x8x512xf32> to vector<8x512xf32>
    %c0_280 = arith.constant 0 : index
    %c0_281 = arith.constant 0 : index
    %541 = vector.load %arg5[%c0_280, %c0_281] : memref<128x512xf32, #tpu.memory_space<vmem>>, vector<128x512xf32>
    %cst_282 = arith.constant dense<0.000000e+00> : vector<8x512xf32>
    %542 = tpu.matmul %531, %541, %cst_282 {dimension_numbers = #tpu.dot_dimension_numbers<[1], [0], [0], [1], [0, 0, 1, 1], [], []>} : vector<8x128xf32>, vector<128x512xf32>, vector<8x512xf32> -> vector<8x512xf32>
    %543 = arith.addf %540, %542 : vector<8x512xf32>
    %544 = vector.extract_strided_slice %543 {offsets = [0, 0], sizes = [8, 128], strides = [1, 1]} : vector<8x512xf32> to vector<8x128xf32>
    %545 = arith.negf %544 : vector<8x128xf32>
    %546 = math.exp %545 : vector<8x128xf32>
    %cst_283 = arith.constant 1.000000e+00 : f32
    %547 = vector.broadcast %cst_283 : f32 to vector<8x128xf32>
    %548 = arith.addf %547, %546 : vector<8x128xf32>
    %549 = arith.divf %547, %548 : vector<8x128xf32>
    %550 = vector.extract_strided_slice %543 {offsets = [0, 128], sizes = [8, 128], strides = [1, 1]} : vector<8x512xf32> to vector<8x128xf32>
    %551 = arith.negf %550 : vector<8x128xf32>
    %552 = math.exp %551 : vector<8x128xf32>
    %cst_284 = arith.constant 1.000000e+00 : f32
    %553 = vector.broadcast %cst_284 : f32 to vector<8x128xf32>
    %554 = arith.addf %553, %552 : vector<8x128xf32>
    %555 = arith.divf %553, %554 : vector<8x128xf32>
    %556 = vector.extract_strided_slice %543 {offsets = [0, 256], sizes = [8, 128], strides = [1, 1]} : vector<8x512xf32> to vector<8x128xf32>
    %557 = math.tanh %556 : vector<8x128xf32>
    %558 = vector.extract_strided_slice %543 {offsets = [0, 384], sizes = [8, 128], strides = [1, 1]} : vector<8x512xf32> to vector<8x128xf32>
    %559 = arith.negf %558 : vector<8x128xf32>
    %560 = math.exp %559 : vector<8x128xf32>
    %cst_285 = arith.constant 1.000000e+00 : f32
    %561 = vector.broadcast %cst_285 : f32 to vector<8x128xf32>
    %562 = arith.addf %561, %560 : vector<8x128xf32>
    %563 = arith.divf %561, %562 : vector<8x128xf32>
    %564 = arith.mulf %555, %533 : vector<8x128xf32>
    %565 = arith.mulf %549, %557 : vector<8x128xf32>
    %566 = arith.addf %564, %565 : vector<8x128xf32>
    %567 = math.tanh %566 : vector<8x128xf32>
    %568 = arith.mulf %563, %567 : vector<8x128xf32>
    %569 = tpu.concatenate %568, %535 in 1 : vector<8x128xf32>, vector<8x128xf32> -> vector<8x256xf32>
    %c0_286 = arith.constant 0 : index
    %c0_287 = arith.constant 0 : index
    %570 = vector.load %arg7[%c0_286, %c0_287] : memref<256x512xf32, #tpu.memory_space<vmem>>, vector<256x512xf32>
    %cst_288 = arith.constant dense<0.000000e+00> : vector<8x512xf32>
    %571 = tpu.matmul %569, %570, %cst_288 {dimension_numbers = #tpu.dot_dimension_numbers<[1], [0], [0], [1], [0, 0, 1, 1], [], []>} : vector<8x256xf32>, vector<256x512xf32>, vector<8x512xf32> -> vector<8x512xf32>
    %c0_289 = arith.constant 0 : index
    %c0_290 = arith.constant 0 : index
    %572 = vector.load %arg8[%c0_289, %c0_290] : memref<1x512xf32, #tpu.memory_space<vmem>>, vector<1x512xf32>
    %573 = vector.broadcast %572 : vector<1x512xf32> to vector<8x512xf32>
    %574 = arith.addf %571, %573 : vector<8x512xf32>
    %575 = vector.extract_strided_slice %574 {offsets = [0, 0], sizes = [8, 128], strides = [1, 1]} : vector<8x512xf32> to vector<8x128xf32>
    %576 = arith.negf %575 : vector<8x128xf32>
    %577 = math.exp %576 : vector<8x128xf32>
    %cst_291 = arith.constant 1.000000e+00 : f32
    %578 = vector.broadcast %cst_291 : f32 to vector<8x128xf32>
    %579 = arith.addf %578, %577 : vector<8x128xf32>
    %580 = arith.divf %578, %579 : vector<8x128xf32>
    %581 = vector.extract_strided_slice %574 {offsets = [0, 128], sizes = [8, 128], strides = [1, 1]} : vector<8x512xf32> to vector<8x128xf32>
    %582 = arith.negf %581 : vector<8x128xf32>
    %583 = math.exp %582 : vector<8x128xf32>
    %cst_292 = arith.constant 1.000000e+00 : f32
    %584 = vector.broadcast %cst_292 : f32 to vector<8x128xf32>
    %585 = arith.addf %584, %583 : vector<8x128xf32>
    %586 = arith.divf %584, %585 : vector<8x128xf32>
    %587 = vector.extract_strided_slice %574 {offsets = [0, 256], sizes = [8, 128], strides = [1, 1]} : vector<8x512xf32> to vector<8x128xf32>
    %588 = math.tanh %587 : vector<8x128xf32>
    %589 = vector.extract_strided_slice %574 {offsets = [0, 384], sizes = [8, 128], strides = [1, 1]} : vector<8x512xf32> to vector<8x128xf32>
    %590 = arith.negf %589 : vector<8x128xf32>
    %591 = math.exp %590 : vector<8x128xf32>
    %cst_293 = arith.constant 1.000000e+00 : f32
    %592 = vector.broadcast %cst_293 : f32 to vector<8x128xf32>
    %593 = arith.addf %592, %591 : vector<8x128xf32>
    %594 = arith.divf %592, %593 : vector<8x128xf32>
    %595 = arith.mulf %586, %537 : vector<8x128xf32>
    %596 = arith.mulf %580, %588 : vector<8x128xf32>
    %597 = arith.addf %595, %596 : vector<8x128xf32>
    %598 = math.tanh %597 : vector<8x128xf32>
    %599 = arith.mulf %594, %598 : vector<8x128xf32>
    %c0_294 = arith.constant 0 : index
    %c0_295 = arith.constant 0 : index
    %c0_296 = arith.constant 0 : index
    %600 = vector.load %arg14[%c0_294, %c0_295, %c0_296] : memref<2x8x128xf32, #tpu.memory_space<vmem>>, vector<1x8x128xf32>
    %601 = vector.shape_cast %600 : vector<1x8x128xf32> to vector<8x128xf32>
    %602 = vector.shape_cast %568 : vector<8x128xf32> to vector<1x8x128xf32>
    tpu.vector_store %arg14[%c0_294, %c0_295, %c0_296], %602 {strides = array<i32>} : memref<2x8x128xf32, #tpu.memory_space<vmem>>, vector<1x8x128xf32>,
    %c0_297 = arith.constant 0 : index
    %c0_298 = arith.constant 0 : index
    %c0_299 = arith.constant 0 : index
    %603 = vector.load %arg15[%c0_297, %c0_298, %c0_299] : memref<2x8x128xf32, #tpu.memory_space<vmem>>, vector<1x8x128xf32>
    %604 = vector.shape_cast %603 : vector<1x8x128xf32> to vector<8x128xf32>
    %605 = vector.shape_cast %566 : vector<8x128xf32> to vector<1x8x128xf32>
    tpu.vector_store %arg15[%c0_297, %c0_298, %c0_299], %605 {strides = array<i32>} : memref<2x8x128xf32, #tpu.memory_space<vmem>>, vector<1x8x128xf32>,
    %c1_300 = arith.constant 1 : index
    %c0_301 = arith.constant 0 : index
    %c0_302 = arith.constant 0 : index
    %606 = vector.load %arg14[%c1_300, %c0_301, %c0_302] : memref<2x8x128xf32, #tpu.memory_space<vmem>>, vector<1x8x128xf32>
    %607 = vector.shape_cast %606 : vector<1x8x128xf32> to vector<8x128xf32>
    %608 = vector.shape_cast %599 : vector<8x128xf32> to vector<1x8x128xf32>
    tpu.vector_store %arg14[%c1_300, %c0_301, %c0_302], %608 {strides = array<i32>} : memref<2x8x128xf32, #tpu.memory_space<vmem>>, vector<1x8x128xf32>,
    %c1_303 = arith.constant 1 : index
    %c0_304 = arith.constant 0 : index
    %c0_305 = arith.constant 0 : index
    %609 = vector.load %arg15[%c1_303, %c0_304, %c0_305] : memref<2x8x128xf32, #tpu.memory_space<vmem>>, vector<1x8x128xf32>
    %610 = vector.shape_cast %609 : vector<1x8x128xf32> to vector<8x128xf32>
    %611 = vector.shape_cast %597 : vector<8x128xf32> to vector<1x8x128xf32>
    tpu.vector_store %arg15[%c1_303, %c0_304, %c0_305], %611 {strides = array<i32>} : memref<2x8x128xf32, #tpu.memory_space<vmem>>, vector<1x8x128xf32>,
    %612 = arith.index_cast %c6_i32 : i32 to index
    %c0_306 = arith.constant 0 : index
    %c0_307 = arith.constant 0 : index
    %613 = vector.load %arg17[%612, %c0_306, %c0_307] : memref<8x8x128xf32, #tpu.memory_space<vmem>>, vector<1x8x128xf32>
    %614 = vector.shape_cast %613 : vector<1x8x128xf32> to vector<8x128xf32>
    %615 = vector.shape_cast %599 : vector<8x128xf32> to vector<1x8x128xf32>
    tpu.vector_store %arg17[%612, %c0_306, %c0_307], %615 {strides = array<i32>} : memref<8x8x128xf32, #tpu.memory_space<vmem>>, vector<1x8x128xf32>,
    %c7_i32 = arith.constant 7 : i32
    %c0_308 = arith.constant 0 : index
    %c0_309 = arith.constant 0 : index
    %c0_310 = arith.constant 0 : index
    %616 = vector.load %arg14[%c0_308, %c0_309, %c0_310] : memref<2x8x128xf32, #tpu.memory_space<vmem>>, vector<1x8x128xf32>
    %617 = vector.shape_cast %616 : vector<1x8x128xf32> to vector<8x128xf32>
    %c0_311 = arith.constant 0 : index
    %c0_312 = arith.constant 0 : index
    %c0_313 = arith.constant 0 : index
    %618 = vector.load %arg15[%c0_311, %c0_312, %c0_313] : memref<2x8x128xf32, #tpu.memory_space<vmem>>, vector<1x8x128xf32>
    %619 = vector.shape_cast %618 : vector<1x8x128xf32> to vector<8x128xf32>
    %c1_314 = arith.constant 1 : index
    %c0_315 = arith.constant 0 : index
    %c0_316 = arith.constant 0 : index
    %620 = vector.load %arg14[%c1_314, %c0_315, %c0_316] : memref<2x8x128xf32, #tpu.memory_space<vmem>>, vector<1x8x128xf32>
    %621 = vector.shape_cast %620 : vector<1x8x128xf32> to vector<8x128xf32>
    %c1_317 = arith.constant 1 : index
    %c0_318 = arith.constant 0 : index
    %c0_319 = arith.constant 0 : index
    %622 = vector.load %arg15[%c1_317, %c0_318, %c0_319] : memref<2x8x128xf32, #tpu.memory_space<vmem>>, vector<1x8x128xf32>
    %623 = vector.shape_cast %622 : vector<1x8x128xf32> to vector<8x128xf32>
    %624 = arith.index_cast %c7_i32 : i32 to index
    %c0_320 = arith.constant 0 : index
    %c0_321 = arith.constant 0 : index
    %625 = vector.load %arg16[%624, %c0_320, %c0_321] : memref<8x8x512xf32, #tpu.memory_space<vmem>>, vector<1x8x512xf32>
    %626 = vector.shape_cast %625 : vector<1x8x512xf32> to vector<8x512xf32>
    %c0_322 = arith.constant 0 : index
    %c0_323 = arith.constant 0 : index
    %627 = vector.load %arg5[%c0_322, %c0_323] : memref<128x512xf32, #tpu.memory_space<vmem>>, vector<128x512xf32>
    %cst_324 = arith.constant dense<0.000000e+00> : vector<8x512xf32>
    %628 = tpu.matmul %617, %627, %cst_324 {dimension_numbers = #tpu.dot_dimension_numbers<[1], [0], [0], [1], [0, 0, 1, 1], [], []>} : vector<8x128xf32>, vector<128x512xf32>, vector<8x512xf32> -> vector<8x512xf32>
    %629 = arith.addf %626, %628 : vector<8x512xf32>
    %630 = vector.extract_strided_slice %629 {offsets = [0, 0], sizes = [8, 128], strides = [1, 1]} : vector<8x512xf32> to vector<8x128xf32>
    %631 = arith.negf %630 : vector<8x128xf32>
    %632 = math.exp %631 : vector<8x128xf32>
    %cst_325 = arith.constant 1.000000e+00 : f32
    %633 = vector.broadcast %cst_325 : f32 to vector<8x128xf32>
    %634 = arith.addf %633, %632 : vector<8x128xf32>
    %635 = arith.divf %633, %634 : vector<8x128xf32>
    %636 = vector.extract_strided_slice %629 {offsets = [0, 128], sizes = [8, 128], strides = [1, 1]} : vector<8x512xf32> to vector<8x128xf32>
    %637 = arith.negf %636 : vector<8x128xf32>
    %638 = math.exp %637 : vector<8x128xf32>
    %cst_326 = arith.constant 1.000000e+00 : f32
    %639 = vector.broadcast %cst_326 : f32 to vector<8x128xf32>
    %640 = arith.addf %639, %638 : vector<8x128xf32>
    %641 = arith.divf %639, %640 : vector<8x128xf32>
    %642 = vector.extract_strided_slice %629 {offsets = [0, 256], sizes = [8, 128], strides = [1, 1]} : vector<8x512xf32> to vector<8x128xf32>
    %643 = math.tanh %642 : vector<8x128xf32>
    %644 = vector.extract_strided_slice %629 {offsets = [0, 384], sizes = [8, 128], strides = [1, 1]} : vector<8x512xf32> to vector<8x128xf32>
    %645 = arith.negf %644 : vector<8x128xf32>
    %646 = math.exp %645 : vector<8x128xf32>
    %cst_327 = arith.constant 1.000000e+00 : f32
    %647 = vector.broadcast %cst_327 : f32 to vector<8x128xf32>
    %648 = arith.addf %647, %646 : vector<8x128xf32>
    %649 = arith.divf %647, %648 : vector<8x128xf32>
    %650 = arith.mulf %641, %619 : vector<8x128xf32>
    %651 = arith.mulf %635, %643 : vector<8x128xf32>
    %652 = arith.addf %650, %651 : vector<8x128xf32>
    %653 = math.tanh %652 : vector<8x128xf32>
    %654 = arith.mulf %649, %653 : vector<8x128xf32>
    %655 = tpu.concatenate %654, %621 in 1 : vector<8x128xf32>, vector<8x128xf32> -> vector<8x256xf32>
    %c0_328 = arith.constant 0 : index
    %c0_329 = arith.constant 0 : index
    %656 = vector.load %arg7[%c0_328, %c0_329] : memref<256x512xf32, #tpu.memory_space<vmem>>, vector<256x512xf32>
    %cst_330 = arith.constant dense<0.000000e+00> : vector<8x512xf32>
    %657 = tpu.matmul %655, %656, %cst_330 {dimension_numbers = #tpu.dot_dimension_numbers<[1], [0], [0], [1], [0, 0, 1, 1], [], []>} : vector<8x256xf32>, vector<256x512xf32>, vector<8x512xf32> -> vector<8x512xf32>
    %c0_331 = arith.constant 0 : index
    %c0_332 = arith.constant 0 : index
    %658 = vector.load %arg8[%c0_331, %c0_332] : memref<1x512xf32, #tpu.memory_space<vmem>>, vector<1x512xf32>
    %659 = vector.broadcast %658 : vector<1x512xf32> to vector<8x512xf32>
    %660 = arith.addf %657, %659 : vector<8x512xf32>
    %661 = vector.extract_strided_slice %660 {offsets = [0, 0], sizes = [8, 128], strides = [1, 1]} : vector<8x512xf32> to vector<8x128xf32>
    %662 = arith.negf %661 : vector<8x128xf32>
    %663 = math.exp %662 : vector<8x128xf32>
    %cst_333 = arith.constant 1.000000e+00 : f32
    %664 = vector.broadcast %cst_333 : f32 to vector<8x128xf32>
    %665 = arith.addf %664, %663 : vector<8x128xf32>
    %666 = arith.divf %664, %665 : vector<8x128xf32>
    %667 = vector.extract_strided_slice %660 {offsets = [0, 128], sizes = [8, 128], strides = [1, 1]} : vector<8x512xf32> to vector<8x128xf32>
    %668 = arith.negf %667 : vector<8x128xf32>
    %669 = math.exp %668 : vector<8x128xf32>
    %cst_334 = arith.constant 1.000000e+00 : f32
    %670 = vector.broadcast %cst_334 : f32 to vector<8x128xf32>
    %671 = arith.addf %670, %669 : vector<8x128xf32>
    %672 = arith.divf %670, %671 : vector<8x128xf32>
    %673 = vector.extract_strided_slice %660 {offsets = [0, 256], sizes = [8, 128], strides = [1, 1]} : vector<8x512xf32> to vector<8x128xf32>
    %674 = math.tanh %673 : vector<8x128xf32>
    %675 = vector.extract_strided_slice %660 {offsets = [0, 384], sizes = [8, 128], strides = [1, 1]} : vector<8x512xf32> to vector<8x128xf32>
    %676 = arith.negf %675 : vector<8x128xf32>
    %677 = math.exp %676 : vector<8x128xf32>
    %cst_335 = arith.constant 1.000000e+00 : f32
    %678 = vector.broadcast %cst_335 : f32 to vector<8x128xf32>
    %679 = arith.addf %678, %677 : vector<8x128xf32>
    %680 = arith.divf %678, %679 : vector<8x128xf32>
    %681 = arith.mulf %672, %623 : vector<8x128xf32>
    %682 = arith.mulf %666, %674 : vector<8x128xf32>
    %683 = arith.addf %681, %682 : vector<8x128xf32>
    %684 = math.tanh %683 : vector<8x128xf32>
    %685 = arith.mulf %680, %684 : vector<8x128xf32>
    %c0_336 = arith.constant 0 : index
    %c0_337 = arith.constant 0 : index
    %c0_338 = arith.constant 0 : index
    %686 = vector.load %arg14[%c0_336, %c0_337, %c0_338] : memref<2x8x128xf32, #tpu.memory_space<vmem>>, vector<1x8x128xf32>
    %687 = vector.shape_cast %686 : vector<1x8x128xf32> to vector<8x128xf32>
    %688 = vector.shape_cast %654 : vector<8x128xf32> to vector<1x8x128xf32>
    tpu.vector_store %arg14[%c0_336, %c0_337, %c0_338], %688 {strides = array<i32>} : memref<2x8x128xf32, #tpu.memory_space<vmem>>, vector<1x8x128xf32>,
    %c0_339 = arith.constant 0 : index
    %c0_340 = arith.constant 0 : index
    %c0_341 = arith.constant 0 : index
    %689 = vector.load %arg15[%c0_339, %c0_340, %c0_341] : memref<2x8x128xf32, #tpu.memory_space<vmem>>, vector<1x8x128xf32>
    %690 = vector.shape_cast %689 : vector<1x8x128xf32> to vector<8x128xf32>
    %691 = vector.shape_cast %652 : vector<8x128xf32> to vector<1x8x128xf32>
    tpu.vector_store %arg15[%c0_339, %c0_340, %c0_341], %691 {strides = array<i32>} : memref<2x8x128xf32, #tpu.memory_space<vmem>>, vector<1x8x128xf32>,
    %c1_342 = arith.constant 1 : index
    %c0_343 = arith.constant 0 : index
    %c0_344 = arith.constant 0 : index
    %692 = vector.load %arg14[%c1_342, %c0_343, %c0_344] : memref<2x8x128xf32, #tpu.memory_space<vmem>>, vector<1x8x128xf32>
    %693 = vector.shape_cast %692 : vector<1x8x128xf32> to vector<8x128xf32>
    %694 = vector.shape_cast %685 : vector<8x128xf32> to vector<1x8x128xf32>
    tpu.vector_store %arg14[%c1_342, %c0_343, %c0_344], %694 {strides = array<i32>} : memref<2x8x128xf32, #tpu.memory_space<vmem>>, vector<1x8x128xf32>,
    %c1_345 = arith.constant 1 : index
    %c0_346 = arith.constant 0 : index
    %c0_347 = arith.constant 0 : index
    %695 = vector.load %arg15[%c1_345, %c0_346, %c0_347] : memref<2x8x128xf32, #tpu.memory_space<vmem>>, vector<1x8x128xf32>
    %696 = vector.shape_cast %695 : vector<1x8x128xf32> to vector<8x128xf32>
    %697 = vector.shape_cast %683 : vector<8x128xf32> to vector<1x8x128xf32>
    tpu.vector_store %arg15[%c1_345, %c0_346, %c0_347], %697 {strides = array<i32>} : memref<2x8x128xf32, #tpu.memory_space<vmem>>, vector<1x8x128xf32>,
    %698 = arith.index_cast %c7_i32 : i32 to index
    %c0_348 = arith.constant 0 : index
    %c0_349 = arith.constant 0 : index
    %699 = vector.load %arg17[%698, %c0_348, %c0_349] : memref<8x8x128xf32, #tpu.memory_space<vmem>>, vector<1x8x128xf32>
    %700 = vector.shape_cast %699 : vector<1x8x128xf32> to vector<8x128xf32>
    %701 = vector.shape_cast %685 : vector<8x128xf32> to vector<1x8x128xf32>
    tpu.vector_store %arg17[%698, %c0_348, %c0_349], %701 {strides = array<i32>} : memref<8x8x128xf32, #tpu.memory_space<vmem>>, vector<1x8x128xf32>,
    %c8_i32 = arith.constant 8 : i32
    %c0_350 = arith.constant 0 : index
    %c0_351 = arith.constant 0 : index
    %c0_352 = arith.constant 0 : index
    %702 = vector.load %arg17[%c0_350, %c0_351, %c0_352] : memref<8x8x128xf32, #tpu.memory_space<vmem>>, vector<8x8x128xf32>
    %703 = vector.shape_cast %702 : vector<8x8x128xf32> to vector<64x128xf32>
    %c0_353 = arith.constant 0 : index
    %c0_354 = arith.constant 0 : index
    %704 = vector.load %arg9[%c0_353, %c0_354] : memref<128x128xf32, #tpu.memory_space<vmem>>, vector<128x128xf32>
    %cst_355 = arith.constant dense<0.000000e+00> : vector<64x128xf32>
    %705 = tpu.matmul %703, %704, %cst_355 {dimension_numbers = #tpu.dot_dimension_numbers<[1], [0], [0], [1], [0, 0, 1, 1], [], []>} : vector<64x128xf32>, vector<128x128xf32>, vector<64x128xf32> -> vector<64x128xf32>
    %c0_356 = arith.constant 0 : index
    %c0_357 = arith.constant 0 : index
    %706 = vector.load %arg10[%c0_356, %c0_357] : memref<1x128xf32, #tpu.memory_space<vmem>>, vector<1x128xf32>
    %707 = vector.broadcast %706 : vector<1x128xf32> to vector<64x128xf32>
    %708 = arith.addf %705, %707 : vector<64x128xf32>
    %709 = vector.shape_cast %708 : vector<64x128xf32> to vector<8x8x128xf32>
    %c0_358 = arith.constant 0 : index
    %c0_359 = arith.constant 0 : index
    %c0_360 = arith.constant 0 : index
    %710 = vector.load %arg11[%c0_358, %c0_359, %c0_360] : memref<8x8x128xf32, #tpu.memory_space<vmem>>, vector<8x8x128xf32>
    tpu.vector_store %arg11[%c0_358, %c0_359, %c0_360], %709 {strides = array<i32>} : memref<8x8x128xf32, #tpu.memory_space<vmem>>, vector<8x8x128xf32>,
    %c0_361 = arith.constant 0 : index
    %c0_362 = arith.constant 0 : index
    %c0_363 = arith.constant 0 : index
    %711 = vector.load %arg14[%c0_361, %c0_362, %c0_363] : memref<2x8x128xf32, #tpu.memory_space<vmem>>, vector<2x8x128xf32>
    %c0_364 = arith.constant 0 : index
    %c0_365 = arith.constant 0 : index
    %c0_366 = arith.constant 0 : index
    %712 = vector.load %arg12[%c0_364, %c0_365, %c0_366] : memref<2x8x128xf32, #tpu.memory_space<vmem>>, vector<2x8x128xf32>
    tpu.vector_store %arg12[%c0_364, %c0_365, %c0_366], %711 {strides = array<i32>} : memref<2x8x128xf32, #tpu.memory_space<vmem>>, vector<2x8x128xf32>,
    %c0_367 = arith.constant 0 : index
    %c0_368 = arith.constant 0 : index
    %c0_369 = arith.constant 0 : index
    %713 = vector.load %arg15[%c0_367, %c0_368, %c0_369] : memref<2x8x128xf32, #tpu.memory_space<vmem>>, vector<2x8x128xf32>
    %c0_370 = arith.constant 0 : index
    %c0_371 = arith.constant 0 : index
    %c0_372 = arith.constant 0 : index
    %714 = vector.load %arg13[%c0_370, %c0_371, %c0_372] : memref<2x8x128xf32, #tpu.memory_space<vmem>>, vector<2x8x128xf32>
    tpu.vector_store %arg13[%c0_370, %c0_371, %c0_372], %713 {strides = array<i32>} : memref<2x8x128xf32, #tpu.memory_space<vmem>>, vector<2x8x128xf32>,
    return
  }
  func.func @transform_0(%arg0: i32) -> (i32, i32, i32) {
    %c0_i32 = arith.constant 0 : i32
    %c0_i32_0 = arith.constant 0 : i32
    %c0_i32_1 = arith.constant 0 : i32
    return %arg0, %c0_i32, %c0_i32_0 : i32, i32, i32
  }
  func.func @transform_1(%arg0: i32) -> (i32, i32, i32) {
    %c0_i32 = arith.constant 0 : i32
    %c0_i32_0 = arith.constant 0 : i32
    %c0_i32_1 = arith.constant 0 : i32
    %c0_i32_2 = arith.constant 0 : i32
    return %c0_i32, %c0_i32_0, %c0_i32_1 : i32, i32, i32
  }
  func.func @transform_2(%arg0: i32) -> (i32, i32, i32) {
    %c0_i32 = arith.constant 0 : i32
    %c0_i32_0 = arith.constant 0 : i32
    %c0_i32_1 = arith.constant 0 : i32
    %c0_i32_2 = arith.constant 0 : i32
    return %c0_i32, %c0_i32_0, %c0_i32_1 : i32, i32, i32
  }
  func.func @transform_3(%arg0: i32) -> (i32, i32) {
    %c0_i32 = arith.constant 0 : i32
    %c0_i32_0 = arith.constant 0 : i32
    %c0_i32_1 = arith.constant 0 : i32
    return %c0_i32, %c0_i32_0 : i32, i32
  }
  func.func @transform_4(%arg0: i32) -> (i32, i32) {
    %c0_i32 = arith.constant 0 : i32
    %c0_i32_0 = arith.constant 0 : i32
    %c0_i32_1 = arith.constant 0 : i32
    return %c0_i32, %c0_i32_0 : i32, i32
  }
  func.func @transform_5(%arg0: i32) -> (i32, i32) {
    %c0_i32 = arith.constant 0 : i32
    %c0_i32_0 = arith.constant 0 : i32
    %c0_i32_1 = arith.constant 0 : i32
    return %c0_i32, %c0_i32_0 : i32, i32
  }
  func.func @transform_6(%arg0: i32) -> (i32, i32) {
    %c0_i32 = arith.constant 0 : i32
    %c0_i32_0 = arith.constant 0 : i32
    %c0_i32_1 = arith.constant 0 : i32
    return %c0_i32, %c0_i32_0 : i32, i32
  }
  func.func @transform_7(%arg0: i32) -> (i32, i32) {
    %c0_i32 = arith.constant 0 : i32
    %c0_i32_0 = arith.constant 0 : i32
    %c0_i32_1 = arith.constant 0 : i32
    return %c0_i32, %c0_i32_0 : i32, i32
  }
  func.func @transform_8(%arg0: i32) -> (i32, i32) {
    %c0_i32 = arith.constant 0 : i32
    %c0_i32_0 = arith.constant 0 : i32
    %c0_i32_1 = arith.constant 0 : i32
    return %c0_i32, %c0_i32_0 : i32, i32
  }
  func.func @transform_9(%arg0: i32) -> (i32, i32) {
    %c0_i32 = arith.constant 0 : i32
    %c0_i32_0 = arith.constant 0 : i32
    %c0_i32_1 = arith.constant 0 : i32
    return %c0_i32, %c0_i32_0 : i32, i32
  }
  func.func @transform_10(%arg0: i32) -> (i32, i32, i32) {
    %c0_i32 = arith.constant 0 : i32
    %c0_i32_0 = arith.constant 0 : i32
    %c0_i32_1 = arith.constant 0 : i32
    return %arg0, %c0_i32, %c0_i32_0 : i32, i32, i32
  }
  func.func @transform_11(%arg0: i32) -> (i32, i32, i32) {
    %c0_i32 = arith.constant 0 : i32
    %c0_i32_0 = arith.constant 0 : i32
    %c0_i32_1 = arith.constant 0 : i32
    %c0_i32_2 = arith.constant 0 : i32
    return %c0_i32, %c0_i32_0, %c0_i32_1 : i32, i32, i32
  }
  func.func @transform_12(%arg0: i32) -> (i32, i32, i32) {
    %c0_i32 = arith.constant 0 : i32
    %c0_i32_0 = arith.constant 0 : i32
    %c0_i32_1 = arith.constant 0 : i32
    %c0_i32_2 = arith.constant 0 : i32
    return %c0_i32, %c0_i32_0, %c0_i32_1 : i32, i32, i32
  }
}

</mosaic_0001>

<llo_original>
// kernel: tpu_custom_call.1
$region0: #{tpu_custom_call.1}
  #allocation0 [shape = 'u32[]', space=smem, size = 0x4, offset = 0x4, fixed_abs, tag = 'smem constant byte address 0x4 - core index']
  #allocation1 [shape = 'u32[72,128]{1,0:T(1,128)}', space=vmem, size = 0x9000, scoped, tag = 'internal scratch']
  #allocation2 [shape = 'f32[2,8,128]{2,1,0:T(8,128)}', space=vmem, size = 0x2000, scoped, tag = 'scratch operand']
  #allocation3 [shape = 'f32[2,8,128]{2,1,0:T(8,128)}', space=vmem, size = 0x2000, scoped, tag = 'scratch operand']
  #allocation4 [shape = 'f32[8,8,512]{2,1,0:T(8,128)}', space=vmem, size = 0x20000, scoped, tag = 'scratch operand']
  #allocation5 [shape = 'f32[8,8,128]{2,1,0:T(8,128)}', space=vmem, size = 0x8000, scoped, tag = 'scratch operand']
  %s0 = inlined_call_operand.hbm [shape: f32[8,8,128], index: 0, kind: input, shape index: {}]
  %s1 = inlined_call_operand.hbm [shape: f32[2,8,128], index: 1, kind: input, shape index: {}]
  %s2 = inlined_call_operand.hbm [shape: f32[2,8,128], index: 2, kind: input, shape index: {}]
  %s3 = inlined_call_operand.hbm [shape: f32[128,512], index: 3, kind: input, shape index: {}]
  %s4 = inlined_call_operand.hbm [shape: f32[128,512], index: 4, kind: input, shape index: {}]
  %s5 = inlined_call_operand.vmem [shape: f32[1,512], index: 5, kind: input, shape index: {}]
  %s6 = inlined_call_operand.hbm [shape: f32[256,512], index: 6, kind: input, shape index: {}]
  %s7 = inlined_call_operand.hbm [shape: f32[1,512], index: 7, kind: input, shape index: {}]
  %s8 = inlined_call_operand.hbm [shape: f32[128,128], index: 8, kind: input, shape index: {}]
  %s9 = inlined_call_operand.vmem [shape: f32[1,128], index: 9, kind: input, shape index: {}]
  %s10 = inlined_call_operand.hbm [shape: f32[8,8,128], index: 10, kind: output, shape index: {0}]
  %s11 = inlined_call_operand.hbm [shape: f32[2,8,128], index: 11, kind: output, shape index: {1}]
  %s12 = inlined_call_operand.hbm [shape: f32[2,8,128], index: 12, kind: output, shape index: {2}]
  %13 = xla_tuple %s10, %s11, %s12
  %s14 = sld [smem:[#allocation0]]
  $region102: #{tpu_custom_call.1} parent=0
    _
  %s16 = ssub.s32 1, %s14
  %s17 = scalar_select 0, %s16, %s14
  $region1: #{tpu_custom_call.1} parent=0
    #allocation6 [shape = 'u8[32768]{0}', space=vmem, size = 0x8000, scoped, tag = 'input window, operand 0, single buffered']
    #allocation7 [shape = 's32[1]{0}', space=sflag, size = 0x4, scoped, tag = 'scoped memory for tpu_custom_call.1']
    #allocation8 [shape = 's32[1]{0}', space=sflag, size = 0x4, scoped, tag = 'scoped memory for tpu_custom_call.1']
    #allocation9 [shape = 'u8[8192]{0}', space=vmem, size = 0x2000, scoped, tag = 'input window, operand 1, single buffered']
    #allocation10 [shape = 's32[1]{0}', space=sflag, size = 0x4, scoped, tag = 'scoped memory for tpu_custom_call.1']
    #allocation11 [shape = 'u8[8192]{0}', space=vmem, size = 0x2000, scoped, tag = 'input window, operand 2, single buffered']
    #allocation12 [shape = 'u8[262144]{0}', space=vmem, size = 0x40000, scoped, tag = 'input window, operand 3, single buffered']
    #allocation13 [shape = 's32[1]{0}', space=sflag, size = 0x4, scoped, tag = 'scoped memory for tpu_custom_call.1']
    #allocation14 [shape = 'u8[262144]{0}', space=vmem, size = 0x40000, scoped, tag = 'input window, operand 4, single buffered']
    #allocation15 [shape = 'u8[524288]{0}', space=vmem, size = 0x80000, scoped, tag = 'input window, operand 6, single buffered']
    #allocation16 [shape = 's32[1]{0}', space=sflag, size = 0x4, scoped, tag = 'scoped memory for tpu_custom_call.1']
    #allocation17 [shape = 'u8[2048]{0}', space=vmem, size = 0x800, scoped, tag = 'input window, operand 7, single buffered']
    #allocation18 [shape = 'u8[65536]{0}', space=vmem, size = 0x10000, scoped, tag = 'input window, operand 8, single buffered']
    #allocation19 [shape = 's32[1]{0}', space=sflag, size = 0x4, scoped, tag = 'scoped memory for tpu_custom_call.1']
    #allocation20 [shape = 'u8[32768]{0}', space=vmem, size = 0x8000, scoped, tag = 'output window, operand 0, single buffered']
    #allocation21 [shape = 'u8[8192]{0}', space=vmem, size = 0x2000, scoped, tag = 'output window, operand 1, single buffered']
    #allocation22 [shape = 's32[1]{0}', space=sflag, size = 0x4, scoped, tag = 'scoped memory for tpu_custom_call.1']
    #allocation23 [shape = 'u8[8192]{0}', space=vmem, size = 0x2000, scoped, tag = 'output window, operand 2, single buffered']
    %18 = vsyncpa [#allocation7], 0
    %19 = vsyncpa [#allocation10], 0
    %20 = vsyncpa [#allocation13], 0
    %21 = vsyncpa [#allocation16], 0
    %22 = vsyncpa [#allocation19], 0
    %23 = vsyncpa [#allocation8], 0
    %24 = vsyncpa [#allocation22], 0
    // Predicated region
    $region2: #{tpu_custom_call.1} parent=1 // pred_check
      _
    $region3: #{tpu_custom_call.1} parent=1 // pred_check_branch
      %26 = sbr.rel (0) target = $region5
    $region4: #{tpu_custom_call.1} parent=1 // pred_region
      %28 = vsyncadd [#allocation7], 0
      %s29 = sshll.u32 %s0, 4
      %s30 = int_to_ptr.hbm [resolvable:$true] %s29
      %s31 = sshll.u32 [#allocation6], 4
      %s32 = int_to_ptr.vmem [resolvable:$true] %s31
      %37 = dma.hbm_to_vmem [thread:$0]  %s30, 1024, %s32, [#allocation7], 128, 128, 8
    $region5: #{tpu_custom_call.1} parent=1 // pred_fallthru
      _
    // Predicated region
    $region6: #{tpu_custom_call.1} parent=1 // pred_check
      _
    $region7: #{tpu_custom_call.1} parent=1 // pred_check_branch
      %39 = sbr.rel (0) target = $region9
    $region8: #{tpu_custom_call.1} parent=1 // pred_region
      %41 = vsyncadd [#allocation10], 0
      %s42 = sshll.u32 %s1, 4
      %s43 = int_to_ptr.hbm [resolvable:$true] %s42
      %s44 = sshll.u32 [#allocation9], 4
      %s45 = int_to_ptr.vmem [resolvable:$true] %s44
      %50 = dma.hbm_to_vmem [thread:$0]  %s43, 256, %s45, [#allocation10], 128, 128, 8
    $region9: #{tpu_custom_call.1} parent=1 // pred_fallthru
      _
    // Predicated region
    $region10: #{tpu_custom_call.1} parent=1 // pred_check
      _
    $region11: #{tpu_custom_call.1} parent=1 // pred_check_branch
      %52 = sbr.rel (0) target = $region13
    $region12: #{tpu_custom_call.1} parent=1 // pred_region
      %54 = vsyncadd [#allocation10], 0
      %s55 = sshll.u32 %s2, 4
      %s56 = int_to_ptr.hbm [resolvable:$true] %s55
      %s57 = sshll.u32 [#allocation11], 4
      %s58 = int_to_ptr.vmem [resolvable:$true] %s57
      %63 = dma.hbm_to_vmem [thread:$0]  %s56, 256, %s58, [#allocation10], 128, 128, 8
    $region13: #{tpu_custom_call.1} parent=1 // pred_fallthru
      _
    // Predicated region
    $region14: #{tpu_custom_call.1} parent=1 // pred_check
      _
    $region15: #{tpu_custom_call.1} parent=1 // pred_check_branch
      %65 = sbr.rel (0) target = $region17
    $region16: #{tpu_custom_call.1} parent=1 // pred_region
      %67 = vsyncadd [#allocation13], 0
      %s68 = sshll.u32 %s3, 4
      %s69 = int_to_ptr.hbm [resolvable:$true] %s68
      %s70 = sshll.u32 [#allocation12], 4
      %s71 = int_to_ptr.vmem [resolvable:$true] %s70
      %76 = dma.hbm_to_vmem [thread:$0]  %s69, 8192, %s71, [#allocation13], 512, 512, 32
    $region17: #{tpu_custom_call.1} parent=1 // pred_fallthru
      _
    // Predicated region
    $region18: #{tpu_custom_call.1} parent=1 // pred_check
      _
    $region19: #{tpu_custom_call.1} parent=1 // pred_check_branch
      %78 = sbr.rel (0) target = $region21
    $region20: #{tpu_custom_call.1} parent=1 // pred_region
      %80 = vsyncadd [#allocation13], 0
      %s81 = sshll.u32 %s4, 4
      %s82 = int_to_ptr.hbm [resolvable:$true] %s81
      %s83 = sshll.u32 [#allocation14], 4
      %s84 = int_to_ptr.vmem [resolvable:$true] %s83
      %89 = dma.hbm_to_vmem [thread:$0]  %s82, 8192, %s84, [#allocation13], 512, 512, 32
    $region21: #{tpu_custom_call.1} parent=1 // pred_fallthru
      _
    // Predicated region
    $region22: #{tpu_custom_call.1} parent=1 // pred_check
      _
    $region23: #{tpu_custom_call.1} parent=1 // pred_check_branch
      %91 = sbr.rel (0) target = $region25
    $region24: #{tpu_custom_call.1} parent=1 // pred_region
      _
    $region25: #{tpu_custom_call.1} parent=1 // pred_fallthru
      _
    // Predicated region
    $region26: #{tpu_custom_call.1} parent=1 // pred_check
      _
    $region27: #{tpu_custom_call.1} parent=1 // pred_check_branch
      %93 = sbr.rel (0) target = $region29
    $region28: #{tpu_custom_call.1} parent=1 // pred_region
      %95 = vsyncadd [#allocation16], 0
      %s96 = sshll.u32 %s6, 4
      %s97 = int_to_ptr.hbm [resolvable:$true] %s96
      %s98 = sshll.u32 [#allocation15], 4
      %s99 = int_to_ptr.vmem [resolvable:$true] %s98
      %104 = dma.hbm_to_vmem [thread:$0]  %s97, 16384, %s99, [#allocation16], 512, 512, 32
    $region29: #{tpu_custom_call.1} parent=1 // pred_fallthru
      _
    // Predicated region
    $region30: #{tpu_custom_call.1} parent=1 // pred_check
      _
    $region31: #{tpu_custom_call.1} parent=1 // pred_check_branch
      %106 = sbr.rel (0) target = $region33
    $region32: #{tpu_custom_call.1} parent=1 // pred_region
      %108 = vsyncadd [#allocation16], 0
      %s110 = sshll.u32 %s7, 4
      %s111 = int_to_ptr.hbm [resolvable:$true] %s110
      %s112 = sshll.u32 [#allocation17], 4
      %s113 = int_to_ptr.vmem [resolvable:$true] %s112
      %115 = dma.hbm_to_vmem [thread:$0]  %s111, 64, %s113, [#allocation16]
    $region33: #{tpu_custom_call.1} parent=1 // pred_fallthru
      _
    // Predicated region
    $region34: #{tpu_custom_call.1} parent=1 // pred_check
      _
    $region35: #{tpu_custom_call.1} parent=1 // pred_check_branch
      %117 = sbr.rel (0) target = $region37
    $region36: #{tpu_custom_call.1} parent=1 // pred_region
      %119 = vsyncadd [#allocation19], 0
      %s120 = sshll.u32 %s8, 4
      %s121 = int_to_ptr.hbm [resolvable:$true] %s120
      %s122 = sshll.u32 [#allocation18], 4
      %s123 = int_to_ptr.vmem [resolvable:$true] %s122
      %128 = dma.hbm_to_vmem [thread:$0]  %s121, 2048, %s123, [#allocation19], 128, 128, 8
    $region37: #{tpu_custom_call.1} parent=1 // pred_fallthru
      _
    // Predicated region
    $region38: #{tpu_custom_call.1} parent=1 // pred_check
      _
    $region39: #{tpu_custom_call.1} parent=1 // pred_check_branch
      %130 = sbr.rel (0) target = $region41
    $region40: #{tpu_custom_call.1} parent=1 // pred_region
      _
    $region41: #{tpu_custom_call.1} parent=1 // pred_fallthru
      _
    // Predicated region
    $region42: #{tpu_custom_call.1} parent=1 // pred_check
      _
    $region43: #{tpu_custom_call.1} parent=1 // pred_check_branch
      %132 = sbr.rel (0) target = $region45
    $region44: #{tpu_custom_call.1} parent=1 // pred_region
      %134 = dma.done [#allocation7], 1024
    $region45: #{tpu_custom_call.1} parent=1 // pred_fallthru
      _
    // Predicated region
    $region46: #{tpu_custom_call.1} parent=1 // pred_check
      _
    $region47: #{tpu_custom_call.1} parent=1 // pred_check_branch
      %136 = sbr.rel (0) target = $region49
    $region48: #{tpu_custom_call.1} parent=1 // pred_region
      %138 = dma.done [#allocation10], 256
    $region49: #{tpu_custom_call.1} parent=1 // pred_fallthru
      _
    // Predicated region
    $region50: #{tpu_custom_call.1} parent=1 // pred_check
      _
    $region51: #{tpu_custom_call.1} parent=1 // pred_check_branch
      %140 = sbr.rel (0) target = $region53
    $region52: #{tpu_custom_call.1} parent=1 // pred_region
      %142 = dma.done [#allocation10], 256
    $region53: #{tpu_custom_call.1} parent=1 // pred_fallthru
      _
    // Predicated region
    $region54: #{tpu_custom_call.1} parent=1 // pred_check
      _
    $region55: #{tpu_custom_call.1} parent=1 // pred_check_branch
      %144 = sbr.rel (0) target = $region57
    $region56: #{tpu_custom_call.1} parent=1 // pred_region
      %146 = dma.done [#allocation13], 8192
    $region57: #{tpu_custom_call.1} parent=1 // pred_fallthru
      _
    // Predicated region
    $region58: #{tpu_custom_call.1} parent=1 // pred_check
      _
    $region59: #{tpu_custom_call.1} parent=1 // pred_check_branch
      %148 = sbr.rel (0) target = $region61
    $region60: #{tpu_custom_call.1} parent=1 // pred_region
      %150 = dma.done [#allocation13], 8192
    $region61: #{tpu_custom_call.1} parent=1 // pred_fallthru
      _
    // Predicated region
    $region62: #{tpu_custom_call.1} parent=1 // pred_check
      _
    $region63: #{tpu_custom_call.1} parent=1 // pred_check_branch
      %152 = sbr.rel (0) target = $region65
    $region64: #{tpu_custom_call.1} parent=1 // pred_region
      %154 = dma.done [#allocation16], 16384
    $region65: #{tpu_custom_call.1} parent=1 // pred_fallthru
      _
    // Predicated region
    $region66: #{tpu_custom_call.1} parent=1 // pred_check
      _
    $region67: #{tpu_custom_call.1} parent=1 // pred_check_branch
      %156 = sbr.rel (0) target = $region69
    $region68: #{tpu_custom_call.1} parent=1 // pred_region
      %158 = dma.done [#allocation16], 64
    $region69: #{tpu_custom_call.1} parent=1 // pred_fallthru
      _
    // Predicated region
    $region70: #{tpu_custom_call.1} parent=1 // pred_check
      _
    $region71: #{tpu_custom_call.1} parent=1 // pred_check_branch
      %160 = sbr.rel (0) target = $region73
    $region72: #{tpu_custom_call.1} parent=1 // pred_region
      %162 = dma.done [#allocation19], 2048
    $region73: #{tpu_custom_call.1} parent=1 // pred_fallthru
      _
    %p163 = scmp.eq.s32.totalorder 0, 0
    // Predicated region
    $region74: #{tpu_custom_call.1} parent=1 // pred_check
      %p164 = pneg %p163
    $region75: #{tpu_custom_call.1} parent=1 // pred_check_branch
      %166 = sbr.rel (%p164) target = $region77
    $region76: #{tpu_custom_call.1} parent=1 // pred_region
      %v167 = vld [vmem:[#allocation9] sm:$0xff]
      %v168 = vld [vmem:[#allocation9 + $0x8] sm:$0xff]
      %169 = vst [vmem:[#allocation2] sm:$0xff] %v167
      %170 = vst [vmem:[#allocation2 + $0x8] sm:$0xff] %v168
      %v171 = vld [vmem:[#allocation11] sm:$0xff]
      %v172 = vld [vmem:[#allocation11 + $0x8] sm:$0xff]
      %173 = vst [vmem:[#allocation3] sm:$0xff] %v171
      %174 = vst [vmem:[#allocation3 + $0x8] sm:$0xff] %v172
    $region77: #{tpu_custom_call.1} parent=1 // pred_fallthru
      _
    %175 = vst [vmem:[#allocation5] sm:$0xff] 0.0
    %176 = vst [vmem:[#allocation5 + $0x8] sm:$0xff] 0.0
    %177 = vst [vmem:[#allocation5 + $0x10] sm:$0xff] 0.0
    %178 = vst [vmem:[#allocation5 + $0x18] sm:$0xff] 0.0
    %179 = vst [vmem:[#allocation5 + $0x20] sm:$0xff] 0.0
    %180 = vst [vmem:[#allocation5 + $0x28] sm:$0xff] 0.0
    %181 = vst [vmem:[#allocation5 + $0x30] sm:$0xff] 0.0
    %182 = vst [vmem:[#allocation5 + $0x38] sm:$0xff] 0.0
    %v183 = vld [vmem:[#allocation6] sm:$0xff]
    %v184 = vld [vmem:[#allocation6 + $0x8] sm:$0xff]
    %v185 = vld [vmem:[#allocation6 + $0x10] sm:$0xff]
    %v186 = vld [vmem:[#allocation6 + $0x18] sm:$0xff]
    %v187 = vld [vmem:[#allocation6 + $0x20] sm:$0xff]
    %v188 = vld [vmem:[#allocation6 + $0x28] sm:$0xff]
    %v189 = vld [vmem:[#allocation6 + $0x30] sm:$0xff]
    %v190 = vld [vmem:[#allocation6 + $0x38] sm:$0xff]
    %v191 = vld [vmem:[#allocation12] sm:$0xff]
    %v192 = vld [vmem:[#allocation12 + $0x8] sm:$0xff]
    %v193 = vld [vmem:[#allocation12 + $0x10] sm:$0xff]
    %v194 = vld [vmem:[#allocation12 + $0x18] sm:$0xff]
    %v195 = vld [vmem:[#allocation12 + $0x20] sm:$0xff]
    %v196 = vld [vmem:[#allocation12 + $0x28] sm:$0xff]
    %v197 = vld [vmem:[#allocation12 + $0x30] sm:$0xff]
    %v198 = vld [vmem:[#allocation12 + $0x38] sm:$0xff]
    %v199 = vld [vmem:[#allocation12 + $0x40] sm:$0xff]
    %v200 = vld [vmem:[#allocation12 + $0x48] sm:$0xff]
    %v201 = vld [vmem:[#allocation12 + $0x50] sm:$0xff]
    %v202 = vld [vmem:[#allocation12 + $0x58] sm:$0xff]
    %v203 = vld [vmem:[#allocation12 + $0x60] sm:$0xff]
    %v204 = vld [vmem:[#allocation12 + $0x68] sm:$0xff]
    %v205 = vld [vmem:[#allocation12 + $0x70] sm:$0xff]
    %v206 = vld [vmem:[#allocation12 + $0x78] sm:$0xff]
    %v207 = vld [vmem:[#allocation12 + $0x80] sm:$0xff]
    %v208 = vld [vmem:[#allocation12 + $0x88] sm:$0xff]
    %v209 = vld [vmem:[#allocation12 + $0x90] sm:$0xff]
    %v210 = vld [vmem:[#allocation12 + $0x98] sm:$0xff]
    %v211 = vld [vmem:[#allocation12 + $0xa0] sm:$0xff]
    %v212 = vld [vmem:[#allocation12 + $0xa8] sm:$0xff]
    %v213 = vld [vmem:[#allocation12 + $0xb0] sm:$0xff]
    %v214 = vld [vmem:[#allocation12 + $0xb8] sm:$0xff]
    %v215 = vld [vmem:[#allocation12 + $0xc0] sm:$0xff]
    %v216 = vld [vmem:[#allocation12 + $0xc8] sm:$0xff]
    %v217 = vld [vmem:[#allocation12 + $0xd0] sm:$0xff]
    %v218 = vld [vmem:[#allocation12 + $0xd8] sm:$0xff]
    %v219 = vld [vmem:[#allocation12 + $0xe0] sm:$0xff]
    %v220 = vld [vmem:[#allocation12 + $0xe8] sm:$0xff]
    %v221 = vld [vmem:[#allocation12 + $0xf0] sm:$0xff]
    %v222 = vld [vmem:[#allocation12 + $0xf8] sm:$0xff]
    %v223 = vld [vmem:[#allocation12 + $0x100] sm:$0xff]
    %v224 = vld [vmem:[#allocation12 + $0x108] sm:$0xff]
    %v225 = vld [vmem:[#allocation12 + $0x110] sm:$0xff]
    %v226 = vld [vmem:[#allocation12 + $0x118] sm:$0xff]
    %v227 = vld [vmem:[#allocation12 + $0x120] sm:$0xff]
    %v228 = vld [vmem:[#allocation12 + $0x128] sm:$0xff]
    %v229 = vld [vmem:[#allocation12 + $0x130] sm:$0xff]
    %v230 = vld [vmem:[#allocation12 + $0x138] sm:$0xff]
    %v231 = vld [vmem:[#allocation12 + $0x140] sm:$0xff]
    %v232 = vld [vmem:[#allocation12 + $0x148] sm:$0xff]
    %v233 = vld [vmem:[#allocation12 + $0x150] sm:$0xff]
    %v234 = vld [vmem:[#allocation12 + $0x158] sm:$0xff]
    %v235 = vld [vmem:[#allocation12 + $0x160] sm:$0xff]
    %v236 = vld [vmem:[#allocation12 + $0x168] sm:$0xff]
    %v237 = vld [vmem:[#allocation12 + $0x170] sm:$0xff]
    %v238 = vld [vmem:[#allocation12 + $0x178] sm:$0xff]
    %v239 = vld [vmem:[#allocation12 + $0x180] sm:$0xff]
    %v240 = vld [vmem:[#allocation12 + $0x188] sm:$0xff]
    %v241 = vld [vmem:[#allocation12 + $0x190] sm:$0xff]
    %v242 = vld [vmem:[#allocation12 + $0x198] sm:$0xff]
    %v243 = vld [vmem:[#allocation12 + $0x1a0] sm:$0xff]
    %v244 = vld [vmem:[#allocation12 + $0x1a8] sm:$0xff]
    %v245 = vld [vmem:[#allocation12 + $0x1b0] sm:$0xff]
    %v246 = vld [vmem:[#allocation12 + $0x1b8] sm:$0xff]
    %v247 = vld [vmem:[#allocation12 + $0x1c0] sm:$0xff]
    %v248 = vld [vmem:[#allocation12 + $0x1c8] sm:$0xff]
    %v249 = vld [vmem:[#allocation12 + $0x1d0] sm:$0xff]
    %v250 = vld [vmem:[#allocation12 + $0x1d8] sm:$0xff]
    %v251 = vld [vmem:[#allocation12 + $0x1e0] sm:$0xff]
    %v252 = vld [vmem:[#allocation12 + $0x1e8] sm:$0xff]
    %v253 = vld [vmem:[#allocation12 + $0x1f0] sm:$0xff]
    %v254 = vld [vmem:[#allocation12 + $0x1f8] sm:$0xff]
    %v255 = vld [vmem:[%s5] sm:$0xf]
    %v257 = vperm.slane %v255, 0
    %v258 = vperm.slane %v255, 1
    %v259 = vperm.slane %v255, 2
    %v260 = vperm.slane %v255, 3
    %265 = vmatpush.msra.mxu0 %v251
    %266 = vmatpush.msra.mxu0 %v247
    %267 = vmatpush.msra.mxu0 %v243
    %268 = vmatpush.msra.mxu0 %v239
    %269 = vmatpush.msra.mxu0 %v235
    %270 = vmatpush.msra.mxu0 %v231
    %271 = vmatpush.msra.mxu0 %v227
    %272 = vmatpush.msra.mxu0 %v223
    %273 = vmatpush.msra.mxu0 %v219
    %274 = vmatpush.msra.mxu0 %v215
    %275 = vmatpush.msra.mxu0 %v211
    %276 = vmatpush.msra.mxu0 %v207
    %277 = vmatpush.msra.mxu0 %v203
    %278 = vmatpush.msra.mxu0 %v199
    %279 = vmatpush.msra.mxu0 %v195
    %280 = vmatpush.msra.mxu0 %v191
    %281 = vmatmul.f32.gmra.mxu0 %v183
    %v282 = vpop.f32.mrf.mxu0
    %v283 = vadd.f32 %v257, %v282
    %284 = vmatmul.f32.gmra.mxu0 %v184
    %v285 = vpop.f32.mrf.mxu0
    %v286 = vadd.f32 %v257, %v285
    %287 = vmatmul.f32.gmra.mxu0 %v185
    %v288 = vpop.f32.mrf.mxu0
    %v289 = vadd.f32 %v257, %v288
    %290 = vmatmul.f32.gmra.mxu0 %v186
    %v291 = vpop.f32.mrf.mxu0
    %v292 = vadd.f32 %v257, %v291
    %293 = vmatmul.f32.gmra.mxu0 %v187
    %v294 = vpop.f32.mrf.mxu0
    %v295 = vadd.f32 %v257, %v294
    %296 = vmatmul.f32.gmra.mxu0 %v188
    %v297 = vpop.f32.mrf.mxu0
    %v298 = vadd.f32 %v257, %v297
    %299 = vmatmul.f32.gmra.mxu0 %v189
    %v300 = vpop.f32.mrf.mxu0
    %v301 = vadd.f32 %v257, %v300
    %302 = vmatmul.f32.gmra.mxu0 %v190
    %v303 = vpop.f32.mrf.mxu0
    %v304 = vadd.f32 %v257, %v303
    %305 = vdwg.mxu0
    %306 = vmatpush.msra.mxu0 %v252
    %307 = vmatpush.msra.mxu0 %v248
    %308 = vmatpush.msra.mxu0 %v244
    %309 = vmatpush.msra.mxu0 %v240
    %310 = vmatpush.msra.mxu0 %v236
    %311 = vmatpush.msra.mxu0 %v232
    %312 = vmatpush.msra.mxu0 %v228
    %313 = vmatpush.msra.mxu0 %v224
    %314 = vmatpush.msra.mxu0 %v220
    %315 = vmatpush.msra.mxu0 %v216
    %316 = vmatpush.msra.mxu0 %v212
    %317 = vmatpush.msra.mxu0 %v208
    %318 = vmatpush.msra.mxu0 %v204
    %319 = vmatpush.msra.mxu0 %v200
    %320 = vmatpush.msra.mxu0 %v196
    %321 = vmatpush.msra.mxu0 %v192
    %322 = vmatmul.f32.gmra.mxu0 %v183
    %v323 = vpop.f32.mrf.mxu0
    %v324 = vadd.f32 %v258, %v323
    %325 = vmatmul.f32.gmra.mxu0 %v184
    %v326 = vpop.f32.mrf.mxu0
    %v327 = vadd.f32 %v258, %v326
    %328 = vmatmul.f32.gmra.mxu0 %v185
    %v329 = vpop.f32.mrf.mxu0
    %v330 = vadd.f32 %v258, %v329
    %331 = vmatmul.f32.gmra.mxu0 %v186
    %v332 = vpop.f32.mrf.mxu0
    %v333 = vadd.f32 %v258, %v332
    %334 = vmatmul.f32.gmra.mxu0 %v187
    %v335 = vpop.f32.mrf.mxu0
    %v336 = vadd.f32 %v258, %v335
    %337 = vmatmul.f32.gmra.mxu0 %v188
    %v338 = vpop.f32.mrf.mxu0
    %v339 = vadd.f32 %v258, %v338
    %340 = vmatmul.f32.gmra.mxu0 %v189
    %v341 = vpop.f32.mrf.mxu0
    %v342 = vadd.f32 %v258, %v341
    %343 = vmatmul.f32.gmra.mxu0 %v190
    %v344 = vpop.f32.mrf.mxu0
    %v345 = vadd.f32 %v258, %v344
    %346 = vdwg.mxu0
    %347 = vmatpush.msra.mxu0 %v253
    %348 = vmatpush.msra.mxu0 %v249
    %349 = vmatpush.msra.mxu0 %v245
    %350 = vmatpush.msra.mxu0 %v241
    %351 = vmatpush.msra.mxu0 %v237
    %352 = vmatpush.msra.mxu0 %v233
    %353 = vmatpush.msra.mxu0 %v229
    %354 = vmatpush.msra.mxu0 %v225
    %355 = vmatpush.msra.mxu0 %v221
    %356 = vmatpush.msra.mxu0 %v217
    %357 = vmatpush.msra.mxu0 %v213
    %358 = vmatpush.msra.mxu0 %v209
    %359 = vmatpush.msra.mxu0 %v205
    %360 = vmatpush.msra.mxu0 %v201
    %361 = vmatpush.msra.mxu0 %v197
    %362 = vmatpush.msra.mxu0 %v193
    %363 = vmatmul.f32.gmra.mxu0 %v183
    %v364 = vpop.f32.mrf.mxu0
    %v365 = vadd.f32 %v259, %v364
    %366 = vmatmul.f32.gmra.mxu0 %v184
    %v367 = vpop.f32.mrf.mxu0
    %v368 = vadd.f32 %v259, %v367
    %369 = vmatmul.f32.gmra.mxu0 %v185
    %v370 = vpop.f32.mrf.mxu0
    %v371 = vadd.f32 %v259, %v370
    %372 = vmatmul.f32.gmra.mxu0 %v186
    %v373 = vpop.f32.mrf.mxu0
    %v374 = vadd.f32 %v259, %v373
    %375 = vmatmul.f32.gmra.mxu0 %v187
    %v376 = vpop.f32.mrf.mxu0
    %v377 = vadd.f32 %v259, %v376
    %378 = vmatmul.f32.gmra.mxu0 %v188
    %v379 = vpop.f32.mrf.mxu0
    %v380 = vadd.f32 %v259, %v379
    %381 = vmatmul.f32.gmra.mxu0 %v189
    %v382 = vpop.f32.mrf.mxu0
    %v383 = vadd.f32 %v259, %v382
    %384 = vmatmul.f32.gmra.mxu0 %v190
    %v385 = vpop.f32.mrf.mxu0
    %v386 = vadd.f32 %v259, %v385
    %387 = vdwg.mxu0
    %388 = vmatpush.msra.mxu0 %v254
    %389 = vmatpush.msra.mxu0 %v250
    %390 = vmatpush.msra.mxu0 %v246
    %391 = vmatpush.msra.mxu0 %v242
    %392 = vmatpush.msra.mxu0 %v238
    %393 = vmatpush.msra.mxu0 %v234
    %394 = vmatpush.msra.mxu0 %v230
    %395 = vmatpush.msra.mxu0 %v226
    %396 = vmatpush.msra.mxu0 %v222
    %397 = vmatpush.msra.mxu0 %v218
    %398 = vmatpush.msra.mxu0 %v214
    %399 = vmatpush.msra.mxu0 %v210
    %400 = vmatpush.msra.mxu0 %v206
    %401 = vmatpush.msra.mxu0 %v202
    %402 = vmatpush.msra.mxu0 %v198
    %403 = vmatpush.msra.mxu0 %v194
    %404 = vmatmul.f32.gmra.mxu0 %v183
    %v405 = vpop.f32.mrf.mxu0
    %v406 = vadd.f32 %v260, %v405
    %407 = vmatmul.f32.gmra.mxu0 %v184
    %v408 = vpop.f32.mrf.mxu0
    %v409 = vadd.f32 %v260, %v408
    %410 = vmatmul.f32.gmra.mxu0 %v185
    %v411 = vpop.f32.mrf.mxu0
    %v412 = vadd.f32 %v260, %v411
    %413 = vmatmul.f32.gmra.mxu0 %v186
    %v414 = vpop.f32.mrf.mxu0
    %v415 = vadd.f32 %v260, %v414
    %416 = vmatmul.f32.gmra.mxu0 %v187
    %v417 = vpop.f32.mrf.mxu0
    %v418 = vadd.f32 %v260, %v417
    %419 = vmatmul.f32.gmra.mxu0 %v188
    %v420 = vpop.f32.mrf.mxu0
    %v421 = vadd.f32 %v260, %v420
    %422 = vmatmul.f32.gmra.mxu0 %v189
    %v423 = vpop.f32.mrf.mxu0
    %v424 = vadd.f32 %v260, %v423
    %425 = vmatmul.f32.gmra.mxu0 %v190
    %v426 = vpop.f32.mrf.mxu0
    %v427 = vadd.f32 %v260, %v426
    %428 = vdwg.mxu0
    %429 = vst [vmem:[#allocation4] sm:$0xff] %v283
    %430 = vst [vmem:[#allocation4 + $0x8] sm:$0xff] %v324
    %431 = vst [vmem:[#allocation4 + $0x10] sm:$0xff] %v365
    %432 = vst [vmem:[#allocation4 + $0x18] sm:$0xff] %v406
    %433 = vst [vmem:[#allocation4 + $0x20] sm:$0xff] %v286
    %434 = vst [vmem:[#allocation4 + $0x28] sm:$0xff] %v327
    %435 = vst [vmem:[#allocation4 + $0x30] sm:$0xff] %v368
    %436 = vst [vmem:[#allocation4 + $0x38] sm:$0xff] %v409
    %437 = vst [vmem:[#allocation4 + $0x40] sm:$0xff] %v289
    %438 = vst [vmem:[#allocation4 + $0x48] sm:$0xff] %v330
    %439 = vst [vmem:[#allocation4 + $0x50] sm:$0xff] %v371
    %440 = vst [vmem:[#allocation4 + $0x58] sm:$0xff] %v412
    %441 = vst [vmem:[#allocation4 + $0x60] sm:$0xff] %v292
    %442 = vst [vmem:[#allocation4 + $0x68] sm:$0xff] %v333
    %443 = vst [vmem:[#allocation4 + $0x70] sm:$0xff] %v374
    %444 = vst [vmem:[#allocation4 + $0x78] sm:$0xff] %v415
    %445 = vst [vmem:[#allocation4 + $0x80] sm:$0xff] %v295
    %446 = vst [vmem:[#allocation4 + $0x88] sm:$0xff] %v336
    %447 = vst [vmem:[#allocation4 + $0x90] sm:$0xff] %v377
    %448 = vst [vmem:[#allocation4 + $0x98] sm:$0xff] %v418
    %449 = vst [vmem:[#allocation4 + $0xa0] sm:$0xff] %v298
    %450 = vst [vmem:[#allocation4 + $0xa8] sm:$0xff] %v339
    %451 = vst [vmem:[#allocation4 + $0xb0] sm:$0xff] %v380
    %452 = vst [vmem:[#allocation4 + $0xb8] sm:$0xff] %v421
    %453 = vst [vmem:[#allocation4 + $0xc0] sm:$0xff] %v301
    %454 = vst [vmem:[#allocation4 + $0xc8] sm:$0xff] %v342
    %455 = vst [vmem:[#allocation4 + $0xd0] sm:$0xff] %v383
    %456 = vst [vmem:[#allocation4 + $0xd8] sm:$0xff] %v424
    %457 = vst [vmem:[#allocation4 + $0xe0] sm:$0xff] %v304
    %458 = vst [vmem:[#allocation4 + $0xe8] sm:$0xff] %v345
    %459 = vst [vmem:[#allocation4 + $0xf0] sm:$0xff] %v386
    %460 = vst [vmem:[#allocation4 + $0xf8] sm:$0xff] %v427
    %v461 = vld [vmem:[#allocation2] sm:$0xff]
    %v462 = vld [vmem:[#allocation3] sm:$0xff]
    %s463 = scalar_lea.vmem [#allocation2], 8
    %v464 = vld [vmem:[%s463] sm:$0xff]
    %s465 = scalar_lea.vmem [#allocation3], 8
    %v466 = vld [vmem:[%s465] sm:$0xff]
    %v467 = vld [vmem:[#allocation4] sm:$0xff]
    %v468 = vld [vmem:[#allocation4 + $0x8] sm:$0xff]
    %v469 = vld [vmem:[#allocation4 + $0x10] sm:$0xff]
    %v470 = vld [vmem:[#allocation4 + $0x18] sm:$0xff]
    %v471 = vld [vmem:[#allocation14] sm:$0xff]
    %v472 = vld [vmem:[#allocation14 + $0x8] sm:$0xff]
    %v473 = vld [vmem:[#allocation14 + $0x10] sm:$0xff]
    %v474 = vld [vmem:[#allocation14 + $0x18] sm:$0xff]
    %v475 = vld [vmem:[#allocation14 + $0x20] sm:$0xff]
    %v476 = vld [vmem:[#allocation14 + $0x28] sm:$0xff]
    %v477 = vld [vmem:[#allocation14 + $0x30] sm:$0xff]
    %v478 = vld [vmem:[#allocation14 + $0x38] sm:$0xff]
    %v479 = vld [vmem:[#allocation14 + $0x40] sm:$0xff]
    %v480 = vld [vmem:[#allocation14 + $0x48] sm:$0xff]
    %v481 = vld [vmem:[#allocation14 + $0x50] sm:$0xff]
    %v482 = vld [vmem:[#allocation14 + $0x58] sm:$0xff]
    %v483 = vld [vmem:[#allocation14 + $0x60] sm:$0xff]
    %v484 = vld [vmem:[#allocation14 + $0x68] sm:$0xff]
    %v485 = vld [vmem:[#allocation14 + $0x70] sm:$0xff]
    %v486 = vld [vmem:[#allocation14 + $0x78] sm:$0xff]
    %v487 = vld [vmem:[#allocation14 + $0x80] sm:$0xff]
    %v488 = vld [vmem:[#allocation14 + $0x88] sm:$0xff]
    %v489 = vld [vmem:[#allocation14 + $0x90] sm:$0xff]
    %v490 = vld [vmem:[#allocation14 + $0x98] sm:$0xff]
    %v491 = vld [vmem:[#allocation14 + $0xa0] sm:$0xff]
    %v492 = vld [vmem:[#allocation14 + $0xa8] sm:$0xff]
    %v493 = vld [vmem:[#allocation14 + $0xb0] sm:$0xff]
    %v494 = vld [vmem:[#allocation14 + $0xb8] sm:$0xff]
    %v495 = vld [vmem:[#allocation14 + $0xc0] sm:$0xff]
    %v496 = vld [vmem:[#allocation14 + $0xc8] sm:$0xff]
    %v497 = vld [vmem:[#allocation14 + $0xd0] sm:$0xff]
    %v498 = vld [vmem:[#allocation14 + $0xd8] sm:$0xff]
    %v499 = vld [vmem:[#allocation14 + $0xe0] sm:$0xff]
    %v500 = vld [vmem:[#allocation14 + $0xe8] sm:$0xff]
    %v501 = vld [vmem:[#allocation14 + $0xf0] sm:$0xff]
    %v502 = vld [vmem:[#allocation14 + $0xf8] sm:$0xff]
    %v503 = vld [vmem:[#allocation14 + $0x100] sm:$0xff]
    %v504 = vld [vmem:[#allocation14 + $0x108] sm:$0xff]
    %v505 = vld [vmem:[#allocation14 + $0x110] sm:$0xff]
    %v506 = vld [vmem:[#allocation14 + $0x118] sm:$0xff]
    %v507 = vld [vmem:[#allocation14 + $0x120] sm:$0xff]
    %v508 = vld [vmem:[#allocation14 + $0x128] sm:$0xff]
    %v509 = vld [vmem:[#allocation14 + $0x130] sm:$0xff]
    %v510 = vld [vmem:[#allocation14 + $0x138] sm:$0xff]
    %v511 = vld [vmem:[#allocation14 + $0x140] sm:$0xff]
    %v512 = vld [vmem:[#allocation14 + $0x148] sm:$0xff]
    %v513 = vld [vmem:[#allocation14 + $0x150] sm:$0xff]
    %v514 = vld [vmem:[#allocation14 + $0x158] sm:$0xff]
    %v515 = vld [vmem:[#allocation14 + $0x160] sm:$0xff]
    %v516 = vld [vmem:[#allocation14 + $0x168] sm:$0xff]
    %v517 = vld [vmem:[#allocation14 + $0x170] sm:$0xff]
    %v518 = vld [vmem:[#allocation14 + $0x178] sm:$0xff]
    %v519 = vld [vmem:[#allocation14 + $0x180] sm:$0xff]
    %v520 = vld [vmem:[#allocation14 + $0x188] sm:$0xff]
    %v521 = vld [vmem:[#allocation14 + $0x190] sm:$0xff]
    %v522 = vld [vmem:[#allocation14 + $0x198] sm:$0xff]
    %v523 = vld [vmem:[#allocation14 + $0x1a0] sm:$0xff]
    %v524 = vld [vmem:[#allocation14 + $0x1a8] sm:$0xff]
    %v525 = vld [vmem:[#allocation14 + $0x1b0] sm:$0xff]
    %v526 = vld [vmem:[#allocation14 + $0x1b8] sm:$0xff]
    %v527 = vld [vmem:[#allocation14 + $0x1c0] sm:$0xff]
    %v528 = vld [vmem:[#allocation14 + $0x1c8] sm:$0xff]
    %v529 = vld [vmem:[#allocation14 + $0x1d0] sm:$0xff]
    %v530 = vld [vmem:[#allocation14 + $0x1d8] sm:$0xff]
    %v531 = vld [vmem:[#allocation14 + $0x1e0] sm:$0xff]
    %v532 = vld [vmem:[#allocation14 + $0x1e8] sm:$0xff]
    %v533 = vld [vmem:[#allocation14 + $0x1f0] sm:$0xff]
    %v534 = vld [vmem:[#allocation14 + $0x1f8] sm:$0xff]
    %535 = vmatpush.msra.mxu0 %v531
    %536 = vmatpush.msra.mxu0 %v527
    %537 = vmatpush.msra.mxu0 %v523
    %538 = vmatpush.msra.mxu0 %v519
    %539 = vmatpush.msra.mxu0 %v515
    %540 = vmatpush.msra.mxu0 %v511
    %541 = vmatpush.msra.mxu0 %v507
    %542 = vmatpush.msra.mxu0 %v503
    %543 = vmatpush.msra.mxu0 %v499
    %544 = vmatpush.msra.mxu0 %v495
    %545 = vmatpush.msra.mxu0 %v491
    %546 = vmatpush.msra.mxu0 %v487
    %547 = vmatpush.msra.mxu0 %v483
    %548 = vmatpush.msra.mxu0 %v479
    %549 = vmatpush.msra.mxu0 %v475
    %550 = vmatpush.msra.mxu0 %v471
    %551 = vmatmul.f32.gmra.mxu0 %v461
    %v552 = vpop.f32.mrf.mxu0
    %v553 = vadd.f32 0.0, %v552
    %554 = vdwg.mxu0
    %555 = vmatpush.msra.mxu0 %v532
    %556 = vmatpush.msra.mxu0 %v528
    %557 = vmatpush.msra.mxu0 %v524
    %558 = vmatpush.msra.mxu0 %v520
    %559 = vmatpush.msra.mxu0 %v516
    %560 = vmatpush.msra.mxu0 %v512
    %561 = vmatpush.msra.mxu0 %v508
    %562 = vmatpush.msra.mxu0 %v504
    %563 = vmatpush.msra.mxu0 %v500
    %564 = vmatpush.msra.mxu0 %v496
    %565 = vmatpush.msra.mxu0 %v492
    %566 = vmatpush.msra.mxu0 %v488
    %567 = vmatpush.msra.mxu0 %v484
    %568 = vmatpush.msra.mxu0 %v480
    %569 = vmatpush.msra.mxu0 %v476
    %570 = vmatpush.msra.mxu0 %v472
    %571 = vmatmul.f32.gmra.mxu0 %v461
    %v572 = vpop.f32.mrf.mxu0
    %v573 = vadd.f32 0.0, %v572
    %574 = vdwg.mxu0
    %575 = vmatpush.msra.mxu0 %v533
    %576 = vmatpush.msra.mxu0 %v529
    %577 = vmatpush.msra.mxu0 %v525
    %578 = vmatpush.msra.mxu0 %v521
    %579 = vmatpush.msra.mxu0 %v517
    %580 = vmatpush.msra.mxu0 %v513
    %581 = vmatpush.msra.mxu0 %v509
    %582 = vmatpush.msra.mxu0 %v505
    %583 = vmatpush.msra.mxu0 %v501
    %584 = vmatpush.msra.mxu0 %v497
    %585 = vmatpush.msra.mxu0 %v493
    %586 = vmatpush.msra.mxu0 %v489
    %587 = vmatpush.msra.mxu0 %v485
    %588 = vmatpush.msra.mxu0 %v481
    %589 = vmatpush.msra.mxu0 %v477
    %590 = vmatpush.msra.mxu0 %v473
    %591 = vmatmul.f32.gmra.mxu0 %v461
    %v592 = vpop.f32.mrf.mxu0
    %v593 = vadd.f32 0.0, %v592
    %594 = vdwg.mxu0
    %595 = vmatpush.msra.mxu0 %v534
    %596 = vmatpush.msra.mxu0 %v530
    %597 = vmatpush.msra.mxu0 %v526
    %598 = vmatpush.msra.mxu0 %v522
    %599 = vmatpush.msra.mxu0 %v518
    %600 = vmatpush.msra.mxu0 %v514
    %601 = vmatpush.msra.mxu0 %v510
    %602 = vmatpush.msra.mxu0 %v506
    %603 = vmatpush.msra.mxu0 %v502
    %604 = vmatpush.msra.mxu0 %v498
    %605 = vmatpush.msra.mxu0 %v494
    %606 = vmatpush.msra.mxu0 %v490
    %607 = vmatpush.msra.mxu0 %v486
    %608 = vmatpush.msra.mxu0 %v482
    %609 = vmatpush.msra.mxu0 %v478
    %610 = vmatpush.msra.mxu0 %v474
    %611 = vmatmul.f32.gmra.mxu0 %v461
    %v612 = vpop.f32.mrf.mxu0
    %v613 = vadd.f32 0.0, %v612
    %614 = vdwg.mxu0
    %v615 = vadd.f32 %v467, %v553
    %v616 = vadd.f32 %v468, %v573
    %v617 = vadd.f32 %v469, %v593
    %v618 = vadd.f32 %v470, %v613
    %v619 = vxor.u32 %v615, 2147483648
    %v620 = vmul.f32 %v619, 1.442695
    %v621 = vpow.pop %v620
    %v622 = vadd.f32 %v621, 1.0
    %v623 = vrcp.pop %v622
    %v624 = vmul.f32 %v622, %v623
    %v625 = vsub.f32 1.0, %v624
    %v626 = vmul.f32 %v623, %v625
    %v627 = vadd.f32 %v623, %v626
    %vm628 = vweird.f32 %v622
    %vm629 = vweird.f32 %v623
    %vm630 = vmor %vm628, %vm629
    %v631 = vsel %vm630, %v623, %v627
    %v632 = vand.u32 2147483647, %v622
    %vm633 = vcmp.eq.f32.partialorder %v632, 8.507059e+37
    %v634 = vand.u32 %v622, 2147483648
    %v635 = vor.u32 1.1754944e-38, %v634
    %v636 = vsel %vm633, %v635, %v631
    %v637 = vmul.f32 1.0, %v636
    %v638 = vxor.u32 %v616, 2147483648
    %v639 = vmul.f32 %v638, 1.442695
    %v640 = vpow.pop %v639
    %v641 = vadd.f32 %v640, 1.0
    %v642 = vrcp.pop %v641
    %v643 = vmul.f32 %v641, %v642
    %v644 = vsub.f32 1.0, %v643
    %v645 = vmul.f32 %v642, %v644
    %v646 = vadd.f32 %v642, %v645
    %vm647 = vweird.f32 %v641
    %vm648 = vweird.f32 %v642
    %vm649 = vmor %vm647, %vm648
    %v650 = vsel %vm649, %v642, %v646
    %v651 = vand.u32 2147483647, %v641
    %vm652 = vcmp.eq.f32.partialorder %v651, 8.507059e+37
    %v653 = vand.u32 %v641, 2147483648
    %v654 = vor.u32 1.1754944e-38, %v653
    %v655 = vsel %vm652, %v654, %v650
    %v656 = vmul.f32 1.0, %v655
    %v657 = vtanh.pop %v617
    %v658 = vxor.u32 %v618, 2147483648
    %v659 = vmul.f32 %v658, 1.442695
    %v660 = vpow.pop %v659
    %v661 = vadd.f32 %v660, 1.0
    %v662 = vrcp.pop %v661
    %v663 = vmul.f32 %v661, %v662
    %v664 = vsub.f32 1.0, %v663
    %v665 = vmul.f32 %v662, %v664
    %v666 = vadd.f32 %v662, %v665
    %vm667 = vweird.f32 %v661
    %vm668 = vweird.f32 %v662
    %vm669 = vmor %vm667, %vm668
    %v670 = vsel %vm669, %v662, %v666
    %v671 = vand.u32 2147483647, %v661
    %vm672 = vcmp.eq.f32.partialorder %v671, 8.507059e+37
    %v673 = vand.u32 %v661, 2147483648
    %v674 = vor.u32 1.1754944e-38, %v673
    %v675 = vsel %vm672, %v674, %v670
    %v676 = vmul.f32 1.0, %v675
    %v677 = vmul.f32 %v656, %v462
    %v678 = vmul.f32 %v637, %v657
    %v679 = vadd.f32 %v677, %v678
    %v680 = vtanh.pop %v679
    %v681 = vmul.f32 %v676, %v680
    %v682 = vld [vmem:[#allocation15] sm:$0xff]
    %v683 = vld [vmem:[#allocation15 + $0x8] sm:$0xff]
    %v684 = vld [vmem:[#allocation15 + $0x10] sm:$0xff]
    %v685 = vld [vmem:[#allocation15 + $0x18] sm:$0xff]
    %v686 = vld [vmem:[#allocation15 + $0x20] sm:$0xff]
    %v687 = vld [vmem:[#allocation15 + $0x28] sm:$0xff]
    %v688 = vld [vmem:[#allocation15 + $0x30] sm:$0xff]
    %v689 = vld [vmem:[#allocation15 + $0x38] sm:$0xff]
    %v690 = vld [vmem:[#allocation15 + $0x40] sm:$0xff]
    %v691 = vld [vmem:[#allocation15 + $0x48] sm:$0xff]
    %v692 = vld [vmem:[#allocation15 + $0x50] sm:$0xff]
    %v693 = vld [vmem:[#allocation15 + $0x58] sm:$0xff]
    %v694 = vld [vmem:[#allocation15 + $0x60] sm:$0xff]
    %v695 = vld [vmem:[#allocation15 + $0x68] sm:$0xff]
    %v696 = vld [vmem:[#allocation15 + $0x70] sm:$0xff]
    %v697 = vld [vmem:[#allocation15 + $0x78] sm:$0xff]
    %v698 = vld [vmem:[#allocation15 + $0x80] sm:$0xff]
    %v699 = vld [vmem:[#allocation15 + $0x88] sm:$0xff]
    %v700 = vld [vmem:[#allocation15 + $0x90] sm:$0xff]
    %v701 = vld [vmem:[#allocation15 + $0x98] sm:$0xff]
    %v702 = vld [vmem:[#allocation15 + $0xa0] sm:$0xff]
    %v703 = vld [vmem:[#allocation15 + $0xa8] sm:$0xff]
    %v704 = vld [vmem:[#allocation15 + $0xb0] sm:$0xff]
    %v705 = vld [vmem:[#allocation15 + $0xb8] sm:$0xff]
    %v706 = vld [vmem:[#allocation15 + $0xc0] sm:$0xff]
    %v707 = vld [vmem:[#allocation15 + $0xc8] sm:$0xff]
    %v708 = vld [vmem:[#allocation15 + $0xd0] sm:$0xff]
    %v709 = vld [vmem:[#allocation15 + $0xd8] sm:$0xff]
    %v710 = vld [vmem:[#allocation15 + $0xe0] sm:$0xff]
    %v711 = vld [vmem:[#allocation15 + $0xe8] sm:$0xff]
    %v712 = vld [vmem:[#allocation15 + $0xf0] sm:$0xff]
    %v713 = vld [vmem:[#allocation15 + $0xf8] sm:$0xff]
    %v714 = vld [vmem:[#allocation15 + $0x100] sm:$0xff]
    %v715 = vld [vmem:[#allocation15 + $0x108] sm:$0xff]
    %v716 = vld [vmem:[#allocation15 + $0x110] sm:$0xff]
    %v717 = vld [vmem:[#allocation15 + $0x118] sm:$0xff]
    %v718 = vld [vmem:[#allocation15 + $0x120] sm:$0xff]
    %v719 = vld [vmem:[#allocation15 + $0x128] sm:$0xff]
    %v720 = vld [vmem:[#allocation15 + $0x130] sm:$0xff]
    %v721 = vld [vmem:[#allocation15 + $0x138] sm:$0xff]
    %v722 = vld [vmem:[#allocation15 + $0x140] sm:$0xff]
    %v723 = vld [vmem:[#allocation15 + $0x148] sm:$0xff]
    %v724 = vld [vmem:[#allocation15 + $0x150] sm:$0xff]
    %v725 = vld [vmem:[#allocation15 + $0x158] sm:$0xff]
    %v726 = vld [vmem:[#allocation15 + $0x160] sm:$0xff]
    %v727 = vld [vmem:[#allocation15 + $0x168] sm:$0xff]
    %v728 = vld [vmem:[#allocation15 + $0x170] sm:$0xff]
    %v729 = vld [vmem:[#allocation15 + $0x178] sm:$0xff]
    %v730 = vld [vmem:[#allocation15 + $0x180] sm:$0xff]
    %v731 = vld [vmem:[#allocation15 + $0x188] sm:$0xff]
    %v732 = vld [vmem:[#allocation15 + $0x190] sm:$0xff]
    %v733 = vld [vmem:[#allocation15 + $0x198] sm:$0xff]
    %v734 = vld [vmem:[#allocation15 + $0x1a0] sm:$0xff]
    %v735 = vld [vmem:[#allocation15 + $0x1a8] sm:$0xff]
    %v736 = vld [vmem:[#allocation15 + $0x1b0] sm:$0xff]
    %v737 = vld [vmem:[#allocation15 + $0x1b8] sm:$0xff]
    %v738 = vld [vmem:[#allocation15 + $0x1c0] sm:$0xff]
    %v739 = vld [vmem:[#allocation15 + $0x1c8] sm:$0xff]
    %v740 = vld [vmem:[#allocation15 + $0x1d0] sm:$0xff]
    %v741 = vld [vmem:[#allocation15 + $0x1d8] sm:$0xff]
    %v742 = vld [vmem:[#allocation15 + $0x1e0] sm:$0xff]
    %v743 = vld [vmem:[#allocation15 + $0x1e8] sm:$0xff]
    %v744 = vld [vmem:[#allocation15 + $0x1f0] sm:$0xff]
    %v745 = vld [vmem:[#allocation15 + $0x1f8] sm:$0xff]
    %v746 = vld [vmem:[#allocation15 + $0x200] sm:$0xff]
    %v747 = vld [vmem:[#allocation15 + $0x208] sm:$0xff]
    %v748 = vld [vmem:[#allocation15 + $0x210] sm:$0xff]
    %v749 = vld [vmem:[#allocation15 + $0x218] sm:$0xff]
    %v750 = vld [vmem:[#allocation15 + $0x220] sm:$0xff]
    %v751 = vld [vmem:[#allocation15 + $0x228] sm:$0xff]
    %v752 = vld [vmem:[#allocation15 + $0x230] sm:$0xff]
    %v753 = vld [vmem:[#allocation15 + $0x238] sm:$0xff]
    %v754 = vld [vmem:[#allocation15 + $0x240] sm:$0xff]
    %v755 = vld [vmem:[#allocation15 + $0x248] sm:$0xff]
    %v756 = vld [vmem:[#allocation15 + $0x250] sm:$0xff]
    %v757 = vld [vmem:[#allocation15 + $0x258] sm:$0xff]
    %v758 = vld [vmem:[#allocation15 + $0x260] sm:$0xff]
    %v759 = vld [vmem:[#allocation15 + $0x268] sm:$0xff]
    %v760 = vld [vmem:[#allocation15 + $0x270] sm:$0xff]
    %v761 = vld [vmem:[#allocation15 + $0x278] sm:$0xff]
    %v762 = vld [vmem:[#allocation15 + $0x280] sm:$0xff]
    %v763 = vld [vmem:[#allocation15 + $0x288] sm:$0xff]
    %v764 = vld [vmem:[#allocation15 + $0x290] sm:$0xff]
    %v765 = vld [vmem:[#allocation15 + $0x298] sm:$0xff]
    %v766 = vld [vmem:[#allocation15 + $0x2a0] sm:$0xff]
    %v767 = vld [vmem:[#allocation15 + $0x2a8] sm:$0xff]
    %v768 = vld [vmem:[#allocation15 + $0x2b0] sm:$0xff]
    %v769 = vld [vmem:[#allocation15 + $0x2b8] sm:$0xff]
    %v770 = vld [vmem:[#allocation15 + $0x2c0] sm:$0xff]
    %v771 = vld [vmem:[#allocation15 + $0x2c8] sm:$0xff]
    %v772 = vld [vmem:[#allocation15 + $0x2d0] sm:$0xff]
    %v773 = vld [vmem:[#allocation15 + $0x2d8] sm:$0xff]
    %v774 = vld [vmem:[#allocation15 + $0x2e0] sm:$0xff]
    %v775 = vld [vmem:[#allocation15 + $0x2e8] sm:$0xff]
    %v776 = vld [vmem:[#allocation15 + $0x2f0] sm:$0xff]
    %v777 = vld [vmem:[#allocation15 + $0x2f8] sm:$0xff]
    %v778 = vld [vmem:[#allocation15 + $0x300] sm:$0xff]
    %v779 = vld [vmem:[#allocation15 + $0x308] sm:$0xff]
    %v780 = vld [vmem:[#allocation15 + $0x310] sm:$0xff]
    %v781 = vld [vmem:[#allocation15 + $0x318] sm:$0xff]
    %v782 = vld [vmem:[#allocation15 + $0x320] sm:$0xff]
    %v783 = vld [vmem:[#allocation15 + $0x328] sm:$0xff]
    %v784 = vld [vmem:[#allocation15 + $0x330] sm:$0xff]
    %v785 = vld [vmem:[#allocation15 + $0x338] sm:$0xff]
    %v786 = vld [vmem:[#allocation15 + $0x340] sm:$0xff]
    %v787 = vld [vmem:[#allocation15 + $0x348] sm:$0xff]
    %v788 = vld [vmem:[#allocation15 + $0x350] sm:$0xff]
    %v789 = vld [vmem:[#allocation15 + $0x358] sm:$0xff]
    %v790 = vld [vmem:[#allocation15 + $0x360] sm:$0xff]
    %v791 = vld [vmem:[#allocation15 + $0x368] sm:$0xff]
    %v792 = vld [vmem:[#allocation15 + $0x370] sm:$0xff]
    %v793 = vld [vmem:[#allocation15 + $0x378] sm:$0xff]
    %v794 = vld [vmem:[#allocation15 + $0x380] sm:$0xff]
    %v795 = vld [vmem:[#allocation15 + $0x388] sm:$0xff]
    %v796 = vld [vmem:[#allocation15 + $0x390] sm:$0xff]
    %v797 = vld [vmem:[#allocation15 + $0x398] sm:$0xff]
    %v798 = vld [vmem:[#allocation15 + $0x3a0] sm:$0xff]
    %v799 = vld [vmem:[#allocation15 + $0x3a8] sm:$0xff]
    %v800 = vld [vmem:[#allocation15 + $0x3b0] sm:$0xff]
    %v801 = vld [vmem:[#allocation15 + $0x3b8] sm:$0xff]
    %v802 = vld [vmem:[#allocation15 + $0x3c0] sm:$0xff]
    %v803 = vld [vmem:[#allocation15 + $0x3c8] sm:$0xff]
    %v804 = vld [vmem:[#allocation15 + $0x3d0] sm:$0xff]
    %v805 = vld [vmem:[#allocation15 + $0x3d8] sm:$0xff]
    %v806 = vld [vmem:[#allocation15 + $0x3e0] sm:$0xff]
    %v807 = vld [vmem:[#allocation15 + $0x3e8] sm:$0xff]
    %v808 = vld [vmem:[#allocation15 + $0x3f0] sm:$0xff]
    %v809 = vld [vmem:[#allocation15 + $0x3f8] sm:$0xff]
    %v810 = vld [vmem:[#allocation17] sm:$0xf]
    %v812 = vperm.slane %v810, 0
    %v813 = vperm.slane %v810, 1
    %v814 = vperm.slane %v810, 2
    %v815 = vperm.slane %v810, 3
    %820 = vmatpush.msra.mxu0 %v742
    %821 = vmatpush.msra.mxu0 %v738
    %822 = vmatpush.msra.mxu0 %v734
    %823 = vmatpush.msra.mxu0 %v730
    %824 = vmatpush.msra.mxu0 %v726
    %825 = vmatpush.msra.mxu0 %v722
    %826 = vmatpush.msra.mxu0 %v718
    %827 = vmatpush.msra.mxu0 %v714
    %828 = vmatpush.msra.mxu0 %v710
    %829 = vmatpush.msra.mxu0 %v706
    %830 = vmatpush.msra.mxu0 %v702
    %831 = vmatpush.msra.mxu0 %v698
    %832 = vmatpush.msra.mxu0 %v694
    %833 = vmatpush.msra.mxu0 %v690
    %834 = vmatpush.msra.mxu0 %v686
    %835 = vmatpush.msra.mxu0 %v682
    %836 = vmatmul.f32.gmra.mxu0 %v681
    %v837 = vpop.f32.mrf.mxu0
    %v838 = vadd.f32 %v812, %v837
    %839 = vdwg.mxu0
    %840 = vmatpush.msra.mxu0 %v806
    %841 = vmatpush.msra.mxu0 %v802
    %842 = vmatpush.msra.mxu0 %v798
    %843 = vmatpush.msra.mxu0 %v794
    %844 = vmatpush.msra.mxu0 %v790
    %845 = vmatpush.msra.mxu0 %v786
    %846 = vmatpush.msra.mxu0 %v782
    %847 = vmatpush.msra.mxu0 %v778
    %848 = vmatpush.msra.mxu0 %v774
    %849 = vmatpush.msra.mxu0 %v770
    %850 = vmatpush.msra.mxu0 %v766
    %851 = vmatpush.msra.mxu0 %v762
    %852 = vmatpush.msra.mxu0 %v758
    %853 = vmatpush.msra.mxu0 %v754
    %854 = vmatpush.msra.mxu0 %v750
    %855 = vmatpush.msra.mxu0 %v746
    %856 = vmatmul.f32.gmra.mxu0 %v464
    %v857 = vpop.f32.mrf.mxu0
    %v858 = vadd.f32 %v838, %v857
    %859 = vdwg.mxu0
    %860 = vmatpush.msra.mxu0 %v743
    %861 = vmatpush.msra.mxu0 %v739
    %862 = vmatpush.msra.mxu0 %v735
    %863 = vmatpush.msra.mxu0 %v731
    %864 = vmatpush.msra.mxu0 %v727
    %865 = vmatpush.msra.mxu0 %v723
    %866 = vmatpush.msra.mxu0 %v719
    %867 = vmatpush.msra.mxu0 %v715
    %868 = vmatpush.msra.mxu0 %v711
    %869 = vmatpush.msra.mxu0 %v707
    %870 = vmatpush.msra.mxu0 %v703
    %871 = vmatpush.msra.mxu0 %v699
    %872 = vmatpush.msra.mxu0 %v695
    %873 = vmatpush.msra.mxu0 %v691
    %874 = vmatpush.msra.mxu0 %v687
    %875 = vmatpush.msra.mxu0 %v683
    %876 = vmatmul.f32.gmra.mxu0 %v681
    %v877 = vpop.f32.mrf.mxu0
    %v878 = vadd.f32 %v813, %v877
    %879 = vdwg.mxu0
    %880 = vmatpush.msra.mxu0 %v807
    %881 = vmatpush.msra.mxu0 %v803
    %882 = vmatpush.msra.mxu0 %v799
    %883 = vmatpush.msra.mxu0 %v795
    %884 = vmatpush.msra.mxu0 %v791
    %885 = vmatpush.msra.mxu0 %v787
    %886 = vmatpush.msra.mxu0 %v783
    %887 = vmatpush.msra.mxu0 %v779
    %888 = vmatpush.msra.mxu0 %v775
    %889 = vmatpush.msra.mxu0 %v771
    %890 = vmatpush.msra.mxu0 %v767
    %891 = vmatpush.msra.mxu0 %v763
    %892 = vmatpush.msra.mxu0 %v759
    %893 = vmatpush.msra.mxu0 %v755
    %894 = vmatpush.msra.mxu0 %v751
    %895 = vmatpush.msra.mxu0 %v747
    %896 = vmatmul.f32.gmra.mxu0 %v464
    %v897 = vpop.f32.mrf.mxu0
    %v898 = vadd.f32 %v878, %v897
    %899 = vdwg.mxu0
    %900 = vmatpush.msra.mxu0 %v744
    %901 = vmatpush.msra.mxu0 %v740
    %902 = vmatpush.msra.mxu0 %v736
    %903 = vmatpush.msra.mxu0 %v732
    %904 = vmatpush.msra.mxu0 %v728
    %905 = vmatpush.msra.mxu0 %v724
    %906 = vmatpush.msra.mxu0 %v720
    %907 = vmatpush.msra.mxu0 %v716
    %908 = vmatpush.msra.mxu0 %v712
    %909 = vmatpush.msra.mxu0 %v708
    %910 = vmatpush.msra.mxu0 %v704
    %911 = vmatpush.msra.mxu0 %v700
    %912 = vmatpush.msra.mxu0 %v696
    %913 = vmatpush.msra.mxu0 %v692
    %914 = vmatpush.msra.mxu0 %v688
    %915 = vmatpush.msra.mxu0 %v684
    %916 = vmatmul.f32.gmra.mxu0 %v681
    %v917 = vpop.f32.mrf.mxu0
    %v918 = vadd.f32 %v814, %v917
    %919 = vdwg.mxu0
    %920 = vmatpush.msra.mxu0 %v808
    %921 = vmatpush.msra.mxu0 %v804
    %922 = vmatpush.msra.mxu0 %v800
    %923 = vmatpush.msra.mxu0 %v796
    %924 = vmatpush.msra.mxu0 %v792
    %925 = vmatpush.msra.mxu0 %v788
    %926 = vmatpush.msra.mxu0 %v784
    %927 = vmatpush.msra.mxu0 %v780
    %928 = vmatpush.msra.mxu0 %v776
    %929 = vmatpush.msra.mxu0 %v772
    %930 = vmatpush.msra.mxu0 %v768
    %931 = vmatpush.msra.mxu0 %v764
    %932 = vmatpush.msra.mxu0 %v760
    %933 = vmatpush.msra.mxu0 %v756
    %934 = vmatpush.msra.mxu0 %v752
    %935 = vmatpush.msra.mxu0 %v748
    %936 = vmatmul.f32.gmra.mxu0 %v464
    %v937 = vpop.f32.mrf.mxu0
    %v938 = vadd.f32 %v918, %v937
    %939 = vdwg.mxu0
    %940 = vmatpush.msra.mxu0 %v745
    %941 = vmatpush.msra.mxu0 %v741
    %942 = vmatpush.msra.mxu0 %v737
    %943 = vmatpush.msra.mxu0 %v733
    %944 = vmatpush.msra.mxu0 %v729
    %945 = vmatpush.msra.mxu0 %v725
    %946 = vmatpush.msra.mxu0 %v721
    %947 = vmatpush.msra.mxu0 %v717
    %948 = vmatpush.msra.mxu0 %v713
    %949 = vmatpush.msra.mxu0 %v709
    %950 = vmatpush.msra.mxu0 %v705
    %951 = vmatpush.msra.mxu0 %v701
    %952 = vmatpush.msra.mxu0 %v697
    %953 = vmatpush.msra.mxu0 %v693
    %954 = vmatpush.msra.mxu0 %v689
    %955 = vmatpush.msra.mxu0 %v685
    %956 = vmatmul.f32.gmra.mxu0 %v681
    %v957 = vpop.f32.mrf.mxu0
    %v958 = vadd.f32 %v815, %v957
    %959 = vdwg.mxu0
    %960 = vmatpush.msra.mxu0 %v809
    %961 = vmatpush.msra.mxu0 %v805
    %962 = vmatpush.msra.mxu0 %v801
    %963 = vmatpush.msra.mxu0 %v797
    %964 = vmatpush.msra.mxu0 %v793
    %965 = vmatpush.msra.mxu0 %v789
    %966 = vmatpush.msra.mxu0 %v785
    %967 = vmatpush.msra.mxu0 %v781
    %968 = vmatpush.msra.mxu0 %v777
    %969 = vmatpush.msra.mxu0 %v773
    %970 = vmatpush.msra.mxu0 %v769
    %971 = vmatpush.msra.mxu0 %v765
    %972 = vmatpush.msra.mxu0 %v761
    %973 = vmatpush.msra.mxu0 %v757
    %974 = vmatpush.msra.mxu0 %v753
    %975 = vmatpush.msra.mxu0 %v749
    %976 = vmatmul.f32.gmra.mxu0 %v464
    %v977 = vpop.f32.mrf.mxu0
    %v978 = vadd.f32 %v958, %v977
    %979 = vdwg.mxu0
    %v980 = vxor.u32 %v858, 2147483648
    %v981 = vmul.f32 %v980, 1.442695
    %v982 = vpow.pop %v981
    %v983 = vadd.f32 %v982, 1.0
    %v984 = vrcp.pop %v983
    %v985 = vmul.f32 %v983, %v984
    %v986 = vsub.f32 1.0, %v985
    %v987 = vmul.f32 %v984, %v986
    %v988 = vadd.f32 %v984, %v987
    %vm989 = vweird.f32 %v983
    %vm990 = vweird.f32 %v984
    %vm991 = vmor %vm989, %vm990
    %v992 = vsel %vm991, %v984, %v988
    %v993 = vand.u32 2147483647, %v983
    %vm994 = vcmp.eq.f32.partialorder %v993, 8.507059e+37
    %v995 = vand.u32 %v983, 2147483648
    %v996 = vor.u32 1.1754944e-38, %v995
    %v997 = vsel %vm994, %v996, %v992
    %v998 = vmul.f32 1.0, %v997
    %v999 = vxor.u32 %v898, 2147483648
    %v1000 = vmul.f32 %v999, 1.442695
    %v1001 = vpow.pop %v1000
    %v1002 = vadd.f32 %v1001, 1.0
    %v1003 = vrcp.pop %v1002
    %v1004 = vmul.f32 %v1002, %v1003
    %v1005 = vsub.f32 1.0, %v1004
    %v1006 = vmul.f32 %v1003, %v1005
    %v1007 = vadd.f32 %v1003, %v1006
    %vm1008 = vweird.f32 %v1002
    %vm1009 = vweird.f32 %v1003
    %vm1010 = vmor %vm1008, %vm1009
    %v1011 = vsel %vm1010, %v1003, %v1007
    %v1012 = vand.u32 2147483647, %v1002
    %vm1013 = vcmp.eq.f32.partialorder %v1012, 8.507059e+37
    %v1014 = vand.u32 %v1002, 2147483648
    %v1015 = vor.u32 1.1754944e-38, %v1014
    %v1016 = vsel %vm1013, %v1015, %v1011
    %v1017 = vmul.f32 1.0, %v1016
    %v1018 = vtanh.pop %v938
    %v1019 = vxor.u32 %v978, 2147483648
    %v1020 = vmul.f32 %v1019, 1.442695
    %v1021 = vpow.pop %v1020
    %v1022 = vadd.f32 %v1021, 1.0
    %v1023 = vrcp.pop %v1022
    %v1024 = vmul.f32 %v1022, %v1023
    %v1025 = vsub.f32 1.0, %v1024
    %v1026 = vmul.f32 %v1023, %v1025
    %v1027 = vadd.f32 %v1023, %v1026
    %vm1028 = vweird.f32 %v1022
    %vm1029 = vweird.f32 %v1023
    %vm1030 = vmor %vm1028, %vm1029
    %v1031 = vsel %vm1030, %v1023, %v1027
    %v1032 = vand.u32 2147483647, %v1022
    %vm1033 = vcmp.eq.f32.partialorder %v1032, 8.507059e+37
    %v1034 = vand.u32 %v1022, 2147483648
    %v1035 = vor.u32 1.1754944e-38, %v1034
    %v1036 = vsel %vm1033, %v1035, %v1031
    %v1037 = vmul.f32 1.0, %v1036
    %v1038 = vmul.f32 %v1017, %v466
    %v1039 = vmul.f32 %v998, %v1018
    %v1040 = vadd.f32 %v1038, %v1039
    %v1041 = vtanh.pop %v1040
    %v1042 = vmul.f32 %v1037, %v1041
    %1043 = vst [vmem:[#allocation2] sm:$0xff] %v681
    %1044 = vst [vmem:[#allocation3] sm:$0xff] %v679
    %1045 = vst [vmem:[%s463] sm:$0xff] %v1042
    %1046 = vst [vmem:[%s465] sm:$0xff] %v1040
    %1047 = vst [vmem:[#allocation5] sm:$0xff] %v1042
    %v1048 = vld [vmem:[#allocation2] sm:$0xff]
    %v1049 = vld [vmem:[#allocation3] sm:$0xff]
    %v1050 = vld [vmem:[%s463] sm:$0xff]
    %v1051 = vld [vmem:[%s465] sm:$0xff]
    %s1052 = scalar_lea.vmem [#allocation4], 32
    %v1053 = vld [vmem:[%s1052] sm:$0xff]
    %v1054 = vld [vmem:[%s1052 + $0x8] sm:$0xff]
    %v1055 = vld [vmem:[%s1052 + $0x10] sm:$0xff]
    %v1056 = vld [vmem:[%s1052 + $0x18] sm:$0xff]
    %v1057 = vld [vmem:[#allocation14] sm:$0xff]
    %v1058 = vld [vmem:[#allocation14 + $0x8] sm:$0xff]
    %v1059 = vld [vmem:[#allocation14 + $0x10] sm:$0xff]
    %v1060 = vld [vmem:[#allocation14 + $0x18] sm:$0xff]
    %v1061 = vld [vmem:[#allocation14 + $0x20] sm:$0xff]
    %v1062 = vld [vmem:[#allocation14 + $0x28] sm:$0xff]
    %v1063 = vld [vmem:[#allocation14 + $0x30] sm:$0xff]
    %v1064 = vld [vmem:[#allocation14 + $0x38] sm:$0xff]
    %v1065 = vld [vmem:[#allocation14 + $0x40] sm:$0xff]
    %v1066 = vld [vmem:[#allocation14 + $0x48] sm:$0xff]
    %v1067 = vld [vmem:[#allocation14 + $0x50] sm:$0xff]
    %v1068 = vld [vmem:[#allocation14 + $0x58] sm:$0xff]
    %v1069 = vld [vmem:[#allocation14 + $0x60] sm:$0xff]
    %v1070 = vld [vmem:[#allocation14 + $0x68] sm:$0xff]
    %v1071 = vld [vmem:[#allocation14 + $0x70] sm:$0xff]
    %v1072 = vld [vmem:[#allocation14 + $0x78] sm:$0xff]
    %v1073 = vld [vmem:[#allocation14 + $0x80] sm:$0xff]
    %v1074 = vld [vmem:[#allocation14 + $0x88] sm:$0xff]
    %v1075 = vld [vmem:[#allocation14 + $0x90] sm:$0xff]
    %v1076 = vld [vmem:[#allocation14 + $0x98] sm:$0xff]
    %v1077 = vld [vmem:[#allocation14 + $0xa0] sm:$0xff]
    %v1078 = vld [vmem:[#allocation14 + $0xa8] sm:$0xff]
    %v1079 = vld [vmem:[#allocation14 + $0xb0] sm:$0xff]
    %v1080 = vld [vmem:[#allocation14 + $0xb8] sm:$0xff]
    %v1081 = vld [vmem:[#allocation14 + $0xc0] sm:$0xff]
    %v1082 = vld [vmem:[#allocation14 + $0xc8] sm:$0xff]
    %v1083 = vld [vmem:[#allocation14 + $0xd0] sm:$0xff]
    %v1084 = vld [vmem:[#allocation14 + $0xd8] sm:$0xff]
    %v1085 = vld [vmem:[#allocation14 + $0xe0] sm:$0xff]
    %v1086 = vld [vmem:[#allocation14 + $0xe8] sm:$0xff]
    %v1087 = vld [vmem:[#allocation14 + $0xf0] sm:$0xff]
    %v1088 = vld [vmem:[#allocation14 + $0xf8] sm:$0xff]
    %v1089 = vld [vmem:[#allocation14 + $0x100] sm:$0xff]
    %v1090 = vld [vmem:[#allocation14 + $0x108] sm:$0xff]
    %v1091 = vld [vmem:[#allocation14 + $0x110] sm:$0xff]
    %v1092 = vld [vmem:[#allocation14 + $0x118] sm:$0xff]
    %v1093 = vld [vmem:[#allocation14 + $0x120] sm:$0xff]
    %v1094 = vld [vmem:[#allocation14 + $0x128] sm:$0xff]
    %v1095 = vld [vmem:[#allocation14 + $0x130] sm:$0xff]
    %v1096 = vld [vmem:[#allocation14 + $0x138] sm:$0xff]
    %v1097 = vld [vmem:[#allocation14 + $0x140] sm:$0xff]
    %v1098 = vld [vmem:[#allocation14 + $0x148] sm:$0xff]
    %v1099 = vld [vmem:[#allocation14 + $0x150] sm:$0xff]
    %v1100 = vld [vmem:[#allocation14 + $0x158] sm:$0xff]
    %v1101 = vld [vmem:[#allocation14 + $0x160] sm:$0xff]
    %v1102 = vld [vmem:[#allocation14 + $0x168] sm:$0xff]
    %v1103 = vld [vmem:[#allocation14 + $0x170] sm:$0xff]
    %v1104 = vld [vmem:[#allocation14 + $0x178] sm:$0xff]
    %v1105 = vld [vmem:[#allocation14 + $0x180] sm:$0xff]
    %v1106 = vld [vmem:[#allocation14 + $0x188] sm:$0xff]
    %v1107 = vld [vmem:[#allocation14 + $0x190] sm:$0xff]
    %v1108 = vld [vmem:[#allocation14 + $0x198] sm:$0xff]
    %v1109 = vld [vmem:[#allocation14 + $0x1a0] sm:$0xff]
    %v1110 = vld [vmem:[#allocation14 + $0x1a8] sm:$0xff]
    %v1111 = vld [vmem:[#allocation14 + $0x1b0] sm:$0xff]
    %v1112 = vld [vmem:[#allocation14 + $0x1b8] sm:$0xff]
    %v1113 = vld [vmem:[#allocation14 + $0x1c0] sm:$0xff]
    %v1114 = vld [vmem:[#allocation14 + $0x1c8] sm:$0xff]
    %v1115 = vld [vmem:[#allocation14 + $0x1d0] sm:$0xff]
    %v1116 = vld [vmem:[#allocation14 + $0x1d8] sm:$0xff]
    %v1117 = vld [vmem:[#allocation14 + $0x1e0] sm:$0xff]
    %v1118 = vld [vmem:[#allocation14 + $0x1e8] sm:$0xff]
    %v1119 = vld [vmem:[#allocation14 + $0x1f0] sm:$0xff]
    %v1120 = vld [vmem:[#allocation14 + $0x1f8] sm:$0xff]
    %1121 = vmatpush.msra.mxu0 %v1117
    %1122 = vmatpush.msra.mxu0 %v1113
    %1123 = vmatpush.msra.mxu0 %v1109
    %1124 = vmatpush.msra.mxu0 %v1105
    %1125 = vmatpush.msra.mxu0 %v1101
    %1126 = vmatpush.msra.mxu0 %v1097
    %1127 = vmatpush.msra.mxu0 %v1093
    %1128 = vmatpush.msra.mxu0 %v1089
    %1129 = vmatpush.msra.mxu0 %v1085
    %1130 = vmatpush.msra.mxu0 %v1081
    %1131 = vmatpush.msra.mxu0 %v1077
    %1132 = vmatpush.msra.mxu0 %v1073
    %1133 = vmatpush.msra.mxu0 %v1069
    %1134 = vmatpush.msra.mxu0 %v1065
    %1135 = vmatpush.msra.mxu0 %v1061
    %1136 = vmatpush.msra.mxu0 %v1057
    %1137 = vmatmul.f32.gmra.mxu0 %v1048
    %v1138 = vpop.f32.mrf.mxu0
    %v1139 = vadd.f32 0.0, %v1138
    %1140 = vdwg.mxu0
    %1141 = vmatpush.msra.mxu0 %v1118
    %1142 = vmatpush.msra.mxu0 %v1114
    %1143 = vmatpush.msra.mxu0 %v1110
    %1144 = vmatpush.msra.mxu0 %v1106
    %1145 = vmatpush.msra.mxu0 %v1102
    %1146 = vmatpush.msra.mxu0 %v1098
    %1147 = vmatpush.msra.mxu0 %v1094
    %1148 = vmatpush.msra.mxu0 %v1090
    %1149 = vmatpush.msra.mxu0 %v1086
    %1150 = vmatpush.msra.mxu0 %v1082
    %1151 = vmatpush.msra.mxu0 %v1078
    %1152 = vmatpush.msra.mxu0 %v1074
    %1153 = vmatpush.msra.mxu0 %v1070
    %1154 = vmatpush.msra.mxu0 %v1066
    %1155 = vmatpush.msra.mxu0 %v1062
    %1156 = vmatpush.msra.mxu0 %v1058
    %1157 = vmatmul.f32.gmra.mxu0 %v1048
    %v1158 = vpop.f32.mrf.mxu0
    %v1159 = vadd.f32 0.0, %v1158
    %1160 = vdwg.mxu0
    %1161 = vmatpush.msra.mxu0 %v1119
    %1162 = vmatpush.msra.mxu0 %v1115
    %1163 = vmatpush.msra.mxu0 %v1111
    %1164 = vmatpush.msra.mxu0 %v1107
    %1165 = vmatpush.msra.mxu0 %v1103
    %1166 = vmatpush.msra.mxu0 %v1099
    %1167 = vmatpush.msra.mxu0 %v1095
    %1168 = vmatpush.msra.mxu0 %v1091
    %1169 = vmatpush.msra.mxu0 %v1087
    %1170 = vmatpush.msra.mxu0 %v1083
    %1171 = vmatpush.msra.mxu0 %v1079
    %1172 = vmatpush.msra.mxu0 %v1075
    %1173 = vmatpush.msra.mxu0 %v1071
    %1174 = vmatpush.msra.mxu0 %v1067
    %1175 = vmatpush.msra.mxu0 %v1063
    %1176 = vmatpush.msra.mxu0 %v1059
    %1177 = vmatmul.f32.gmra.mxu0 %v1048
    %v1178 = vpop.f32.mrf.mxu0
    %v1179 = vadd.f32 0.0, %v1178
    %1180 = vdwg.mxu0
    %1181 = vmatpush.msra.mxu0 %v1120
    %1182 = vmatpush.msra.mxu0 %v1116
    %1183 = vmatpush.msra.mxu0 %v1112
    %1184 = vmatpush.msra.mxu0 %v1108
    %1185 = vmatpush.msra.mxu0 %v1104
    %1186 = vmatpush.msra.mxu0 %v1100
    %1187 = vmatpush.msra.mxu0 %v1096
    %1188 = vmatpush.msra.mxu0 %v1092
    %1189 = vmatpush.msra.mxu0 %v1088
    %1190 = vmatpush.msra.mxu0 %v1084
    %1191 = vmatpush.msra.mxu0 %v1080
    %1192 = vmatpush.msra.mxu0 %v1076
    %1193 = vmatpush.msra.mxu0 %v1072
    %1194 = vmatpush.msra.mxu0 %v1068
    %1195 = vmatpush.msra.mxu0 %v1064
    %1196 = vmatpush.msra.mxu0 %v1060
    %1197 = vmatmul.f32.gmra.mxu0 %v1048
    %v1198 = vpop.f32.mrf.mxu0
    %v1199 = vadd.f32 0.0, %v1198
    %1200 = vdwg.mxu0
    %v1201 = vadd.f32 %v1053, %v1139
    %v1202 = vadd.f32 %v1054, %v1159
    %v1203 = vadd.f32 %v1055, %v1179
    %v1204 = vadd.f32 %v1056, %v1199
    %v1205 = vxor.u32 %v1201, 2147483648
    %v1206 = vmul.f32 %v1205, 1.442695
    %v1207 = vpow.pop %v1206
    %v1208 = vadd.f32 %v1207, 1.0
    %v1209 = vrcp.pop %v1208
    %v1210 = vmul.f32 %v1208, %v1209
    %v1211 = vsub.f32 1.0, %v1210
    %v1212 = vmul.f32 %v1209, %v1211
    %v1213 = vadd.f32 %v1209, %v1212
    %vm1214 = vweird.f32 %v1208
    %vm1215 = vweird.f32 %v1209
    %vm1216 = vmor %vm1214, %vm1215
    %v1217 = vsel %vm1216, %v1209, %v1213
    %v1218 = vand.u32 2147483647, %v1208
    %vm1219 = vcmp.eq.f32.partialorder %v1218, 8.507059e+37
    %v1220 = vand.u32 %v1208, 2147483648
    %v1221 = vor.u32 1.1754944e-38, %v1220
    %v1222 = vsel %vm1219, %v1221, %v1217
    %v1223 = vmul.f32 1.0, %v1222
    %v1224 = vxor.u32 %v1202, 2147483648
    %v1225 = vmul.f32 %v1224, 1.442695
    %v1226 = vpow.pop %v1225
    %v1227 = vadd.f32 %v1226, 1.0
    %v1228 = vrcp.pop %v1227
    %v1229 = vmul.f32 %v1227, %v1228
    %v1230 = vsub.f32 1.0, %v1229
    %v1231 = vmul.f32 %v1228, %v1230
    %v1232 = vadd.f32 %v1228, %v1231
    %vm1233 = vweird.f32 %v1227
    %vm1234 = vweird.f32 %v1228
    %vm1235 = vmor %vm1233, %vm1234
    %v1236 = vsel %vm1235, %v1228, %v1232
    %v1237 = vand.u32 2147483647, %v1227
    %vm1238 = vcmp.eq.f32.partialorder %v1237, 8.507059e+37
    %v1239 = vand.u32 %v1227, 2147483648
    %v1240 = vor.u32 1.1754944e-38, %v1239
    %v1241 = vsel %vm1238, %v1240, %v1236
    %v1242 = vmul.f32 1.0, %v1241
    %v1243 = vtanh.pop %v1203
    %v1244 = vxor.u32 %v1204, 2147483648
    %v1245 = vmul.f32 %v1244, 1.442695
    %v1246 = vpow.pop %v1245
    %v1247 = vadd.f32 %v1246, 1.0
    %v1248 = vrcp.pop %v1247
    %v1249 = vmul.f32 %v1247, %v1248
    %v1250 = vsub.f32 1.0, %v1249
    %v1251 = vmul.f32 %v1248, %v1250
    %v1252 = vadd.f32 %v1248, %v1251
    %vm1253 = vweird.f32 %v1247
    %vm1254 = vweird.f32 %v1248
    %vm1255 = vmor %vm1253, %vm1254
    %v1256 = vsel %vm1255, %v1248, %v1252
    %v1257 = vand.u32 2147483647, %v1247
    %vm1258 = vcmp.eq.f32.partialorder %v1257, 8.507059e+37
    %v1259 = vand.u32 %v1247, 2147483648
    %v1260 = vor.u32 1.1754944e-38, %v1259
    %v1261 = vsel %vm1258, %v1260, %v1256
    %v1262 = vmul.f32 1.0, %v1261
    %v1263 = vmul.f32 %v1242, %v1049
    %v1264 = vmul.f32 %v1223, %v1243
    %v1265 = vadd.f32 %v1263, %v1264
    %v1266 = vtanh.pop %v1265
    %v1267 = vmul.f32 %v1262, %v1266
    %v1268 = vld [vmem:[#allocation15] sm:$0xff]
    %v1269 = vld [vmem:[#allocation15 + $0x8] sm:$0xff]
    %v1270 = vld [vmem:[#allocation15 + $0x10] sm:$0xff]
    %v1271 = vld [vmem:[#allocation15 + $0x18] sm:$0xff]
    %v1272 = vld [vmem:[#allocation15 + $0x20] sm:$0xff]
    %v1273 = vld [vmem:[#allocation15 + $0x28] sm:$0xff]
    %v1274 = vld [vmem:[#allocation15 + $0x30] sm:$0xff]
    %v1275 = vld [vmem:[#allocation15 + $0x38] sm:$0xff]
    %v1276 = vld [vmem:[#allocation15 + $0x40] sm:$0xff]
    %v1277 = vld [vmem:[#allocation15 + $0x48] sm:$0xff]
    %v1278 = vld [vmem:[#allocation15 + $0x50] sm:$0xff]
    %v1279 = vld [vmem:[#allocation15 + $0x58] sm:$0xff]
    %v1280 = vld [vmem:[#allocation15 + $0x60] sm:$0xff]
    %v1281 = vld [vmem:[#allocation15 + $0x68] sm:$0xff]
    %v1282 = vld [vmem:[#allocation15 + $0x70] sm:$0xff]
    %v1283 = vld [vmem:[#allocation15 + $0x78] sm:$0xff]
    %v1284 = vld [vmem:[#allocation15 + $0x80] sm:$0xff]
    %v1285 = vld [vmem:[#allocation15 + $0x88] sm:$0xff]
    %v1286 = vld [vmem:[#allocation15 + $0x90] sm:$0xff]
    %v1287 = vld [vmem:[#allocation15 + $0x98] sm:$0xff]
    %v1288 = vld [vmem:[#allocation15 + $0xa0] sm:$0xff]
    %v1289 = vld [vmem:[#allocation15 + $0xa8] sm:$0xff]
    %v1290 = vld [vmem:[#allocation15 + $0xb0] sm:$0xff]
    %v1291 = vld [vmem:[#allocation15 + $0xb8] sm:$0xff]
    %v1292 = vld [vmem:[#allocation15 + $0xc0] sm:$0xff]
    %v1293 = vld [vmem:[#allocation15 + $0xc8] sm:$0xff]
    %v1294 = vld [vmem:[#allocation15 + $0xd0] sm:$0xff]
    %v1295 = vld [vmem:[#allocation15 + $0xd8] sm:$0xff]
    %v1296 = vld [vmem:[#allocation15 + $0xe0] sm:$0xff]
    %v1297 = vld [vmem:[#allocation15 + $0xe8] sm:$0xff]
    %v1298 = vld [vmem:[#allocation15 + $0xf0] sm:$0xff]
    %v1299 = vld [vmem:[#allocation15 + $0xf8] sm:$0xff]
    %v1300 = vld [vmem:[#allocation15 + $0x100] sm:$0xff]
    %v1301 = vld [vmem:[#allocation15 + $0x108] sm:$0xff]
    %v1302 = vld [vmem:[#allocation15 + $0x110] sm:$0xff]
    %v1303 = vld [vmem:[#allocation15 + $0x118] sm:$0xff]
    %v1304 = vld [vmem:[#allocation15 + $0x120] sm:$0xff]
    %v1305 = vld [vmem:[#allocation15 + $0x128] sm:$0xff]
    %v1306 = vld [vmem:[#allocation15 + $0x130] sm:$0xff]
    %v1307 = vld [vmem:[#allocation15 + $0x138] sm:$0xff]
    %v1308 = vld [vmem:[#allocation15 + $0x140] sm:$0xff]
    %v1309 = vld [vmem:[#allocation15 + $0x148] sm:$0xff]
    %v1310 = vld [vmem:[#allocation15 + $0x150] sm:$0xff]
    %v1311 = vld [vmem:[#allocation15 + $0x158] sm:$0xff]
    %v1312 = vld [vmem:[#allocation15 + $0x160] sm:$0xff]
    %v1313 = vld [vmem:[#allocation15 + $0x168] sm:$0xff]
    %v1314 = vld [vmem:[#allocation15 + $0x170] sm:$0xff]
    %v1315 = vld [vmem:[#allocation15 + $0x178] sm:$0xff]
    %v1316 = vld [vmem:[#allocation15 + $0x180] sm:$0xff]
    %v1317 = vld [vmem:[#allocation15 + $0x188] sm:$0xff]
    %v1318 = vld [vmem:[#allocation15 + $0x190] sm:$0xff]
    %v1319 = vld [vmem:[#allocation15 + $0x198] sm:$0xff]
    %v1320 = vld [vmem:[#allocation15 + $0x1a0] sm:$0xff]
    %v1321 = vld [vmem:[#allocation15 + $0x1a8] sm:$0xff]
    %v1322 = vld [vmem:[#allocation15 + $0x1b0] sm:$0xff]
    %v1323 = vld [vmem:[#allocation15 + $0x1b8] sm:$0xff]
    %v1324 = vld [vmem:[#allocation15 + $0x1c0] sm:$0xff]
    %v1325 = vld [vmem:[#allocation15 + $0x1c8] sm:$0xff]
    %v1326 = vld [vmem:[#allocation15 + $0x1d0] sm:$0xff]
    %v1327 = vld [vmem:[#allocation15 + $0x1d8] sm:$0xff]
    %v1328 = vld [vmem:[#allocation15 + $0x1e0] sm:$0xff]
    %v1329 = vld [vmem:[#allocation15 + $0x1e8] sm:$0xff]
    %v1330 = vld [vmem:[#allocation15 + $0x1f0] sm:$0xff]
    %v1331 = vld [vmem:[#allocation15 + $0x1f8] sm:$0xff]
    %v1332 = vld [vmem:[#allocation15 + $0x200] sm:$0xff]
    %v1333 = vld [vmem:[#allocation15 + $0x208] sm:$0xff]
    %v1334 = vld [vmem:[#allocation15 + $0x210] sm:$0xff]
    %v1335 = vld [vmem:[#allocation15 + $0x218] sm:$0xff]
    %v1336 = vld [vmem:[#allocation15 + $0x220] sm:$0xff]
    %v1337 = vld [vmem:[#allocation15 + $0x228] sm:$0xff]
    %v1338 = vld [vmem:[#allocation15 + $0x230] sm:$0xff]
    %v1339 = vld [vmem:[#allocation15 + $0x238] sm:$0xff]
    %v1340 = vld [vmem:[#allocation15 + $0x240] sm:$0xff]
    %v1341 = vld [vmem:[#allocation15 + $0x248] sm:$0xff]
    %v1342 = vld [vmem:[#allocation15 + $0x250] sm:$0xff]
    %v1343 = vld [vmem:[#allocation15 + $0x258] sm:$0xff]
    %v1344 = vld [vmem:[#allocation15 + $0x260] sm:$0xff]
    %v1345 = vld [vmem:[#allocation15 + $0x268] sm:$0xff]
    %v1346 = vld [vmem:[#allocation15 + $0x270] sm:$0xff]
    %v1347 = vld [vmem:[#allocation15 + $0x278] sm:$0xff]
    %v1348 = vld [vmem:[#allocation15 + $0x280] sm:$0xff]
    %v1349 = vld [vmem:[#allocation15 + $0x288] sm:$0xff]
    %v1350 = vld [vmem:[#allocation15 + $0x290] sm:$0xff]
    %v1351 = vld [vmem:[#allocation15 + $0x298] sm:$0xff]
    %v1352 = vld [vmem:[#allocation15 + $0x2a0] sm:$0xff]
    %v1353 = vld [vmem:[#allocation15 + $0x2a8] sm:$0xff]
    %v1354 = vld [vmem:[#allocation15 + $0x2b0] sm:$0xff]
    %v1355 = vld [vmem:[#allocation15 + $0x2b8] sm:$0xff]
    %v1356 = vld [vmem:[#allocation15 + $0x2c0] sm:$0xff]
    %v1357 = vld [vmem:[#allocation15 + $0x2c8] sm:$0xff]
    %v1358 = vld [vmem:[#allocation15 + $0x2d0] sm:$0xff]
    %v1359 = vld [vmem:[#allocation15 + $0x2d8] sm:$0xff]
    %v1360 = vld [vmem:[#allocation15 + $0x2e0] sm:$0xff]
    %v1361 = vld [vmem:[#allocation15 + $0x2e8] sm:$0xff]
    %v1362 = vld [vmem:[#allocation15 + $0x2f0] sm:$0xff]
    %v1363 = vld [vmem:[#allocation15 + $0x2f8] sm:$0xff]
    %v1364 = vld [vmem:[#allocation15 + $0x300] sm:$0xff]
    %v1365 = vld [vmem:[#allocation15 + $0x308] sm:$0xff]
    %v1366 = vld [vmem:[#allocation15 + $0x310] sm:$0xff]
    %v1367 = vld [vmem:[#allocation15 + $0x318] sm:$0xff]
    %v1368 = vld [vmem:[#allocation15 + $0x320] sm:$0xff]
    %v1369 = vld [vmem:[#allocation15 + $0x328] sm:$0xff]
    %v1370 = vld [vmem:[#allocation15 + $0x330] sm:$0xff]
    %v1371 = vld [vmem:[#allocation15 + $0x338] sm:$0xff]
    %v1372 = vld [vmem:[#allocation15 + $0x340] sm:$0xff]
    %v1373 = vld [vmem:[#allocation15 + $0x348] sm:$0xff]
    %v1374 = vld [vmem:[#allocation15 + $0x350] sm:$0xff]
    %v1375 = vld [vmem:[#allocation15 + $0x358] sm:$0xff]
    %v1376 = vld [vmem:[#allocation15 + $0x360] sm:$0xff]
    %v1377 = vld [vmem:[#allocation15 + $0x368] sm:$0xff]
    %v1378 = vld [vmem:[#allocation15 + $0x370] sm:$0xff]
    %v1379 = vld [vmem:[#allocation15 + $0x378] sm:$0xff]
    %v1380 = vld [vmem:[#allocation15 + $0x380] sm:$0xff]
    %v1381 = vld [vmem:[#allocation15 + $0x388] sm:$0xff]
    %v1382 = vld [vmem:[#allocation15 + $0x390] sm:$0xff]
    %v1383 = vld [vmem:[#allocation15 + $0x398] sm:$0xff]
    %v1384 = vld [vmem:[#allocation15 + $0x3a0] sm:$0xff]
    %v1385 = vld [vmem:[#allocation15 + $0x3a8] sm:$0xff]
    %v1386 = vld [vmem:[#allocation15 + $0x3b0] sm:$0xff]
    %v1387 = vld [vmem:[#allocation15 + $0x3b8] sm:$0xff]
    %v1388 = vld [vmem:[#allocation15 + $0x3c0] sm:$0xff]
    %v1389 = vld [vmem:[#allocation15 + $0x3c8] sm:$0xff]
    %v1390 = vld [vmem:[#allocation15 + $0x3d0] sm:$0xff]
    %v1391 = vld [vmem:[#allocation15 + $0x3d8] sm:$0xff]
    %v1392 = vld [vmem:[#allocation15 + $0x3e0] sm:$0xff]
    %v1393 = vld [vmem:[#allocation15 + $0x3e8] sm:$0xff]
    %v1394 = vld [vmem:[#allocation15 + $0x3f0] sm:$0xff]
    %v1395 = vld [vmem:[#allocation15 + $0x3f8] sm:$0xff]
    %v1396 = vld [vmem:[#allocation17] sm:$0xf]
    %v1398 = vperm.slane %v1396, 0
    %v1399 = vperm.slane %v1396, 1
    %v1400 = vperm.slane %v1396, 2
    %v1401 = vperm.slane %v1396, 3
    %1406 = vmatpush.msra.mxu0 %v1328
    %1407 = vmatpush.msra.mxu0 %v1324
    %1408 = vmatpush.msra.mxu0 %v1320
    %1409 = vmatpush.msra.mxu0 %v1316
    %1410 = vmatpush.msra.mxu0 %v1312
    %1411 = vmatpush.msra.mxu0 %v1308
    %1412 = vmatpush.msra.mxu0 %v1304
    %1413 = vmatpush.msra.mxu0 %v1300
    %1414 = vmatpush.msra.mxu0 %v1296
    %1415 = vmatpush.msra.mxu0 %v1292
    %1416 = vmatpush.msra.mxu0 %v1288
    %1417 = vmatpush.msra.mxu0 %v1284
    %1418 = vmatpush.msra.mxu0 %v1280
    %1419 = vmatpush.msra.mxu0 %v1276
    %1420 = vmatpush.msra.mxu0 %v1272
    %1421 = vmatpush.msra.mxu0 %v1268
    %1422 = vmatmul.f32.gmra.mxu0 %v1267
    %v1423 = vpop.f32.mrf.mxu0
    %v1424 = vadd.f32 %v1398, %v1423
    %1425 = vdwg.mxu0
    %1426 = vmatpush.msra.mxu0 %v1392
    %1427 = vmatpush.msra.mxu0 %v1388
    %1428 = vmatpush.msra.mxu0 %v1384
    %1429 = vmatpush.msra.mxu0 %v1380
    %1430 = vmatpush.msra.mxu0 %v1376
    %1431 = vmatpush.msra.mxu0 %v1372
    %1432 = vmatpush.msra.mxu0 %v1368
    %1433 = vmatpush.msra.mxu0 %v1364
    %1434 = vmatpush.msra.mxu0 %v1360
    %1435 = vmatpush.msra.mxu0 %v1356
    %1436 = vmatpush.msra.mxu0 %v1352
    %1437 = vmatpush.msra.mxu0 %v1348
    %1438 = vmatpush.msra.mxu0 %v1344
    %1439 = vmatpush.msra.mxu0 %v1340
    %1440 = vmatpush.msra.mxu0 %v1336
    %1441 = vmatpush.msra.mxu0 %v1332
    %1442 = vmatmul.f32.gmra.mxu0 %v1050
    %v1443 = vpop.f32.mrf.mxu0
    %v1444 = vadd.f32 %v1424, %v1443
    %1445 = vdwg.mxu0
    %1446 = vmatpush.msra.mxu0 %v1329
    %1447 = vmatpush.msra.mxu0 %v1325
    %1448 = vmatpush.msra.mxu0 %v1321
    %1449 = vmatpush.msra.mxu0 %v1317
    %1450 = vmatpush.msra.mxu0 %v1313
    %1451 = vmatpush.msra.mxu0 %v1309
    %1452 = vmatpush.msra.mxu0 %v1305
    %1453 = vmatpush.msra.mxu0 %v1301
    %1454 = vmatpush.msra.mxu0 %v1297
    %1455 = vmatpush.msra.mxu0 %v1293
    %1456 = vmatpush.msra.mxu0 %v1289
    %1457 = vmatpush.msra.mxu0 %v1285
    %1458 = vmatpush.msra.mxu0 %v1281
    %1459 = vmatpush.msra.mxu0 %v1277
    %1460 = vmatpush.msra.mxu0 %v1273
    %1461 = vmatpush.msra.mxu0 %v1269
    %1462 = vmatmul.f32.gmra.mxu0 %v1267
    %v1463 = vpop.f32.mrf.mxu0
    %v1464 = vadd.f32 %v1399, %v1463
    %1465 = vdwg.mxu0
    %1466 = vmatpush.msra.mxu0 %v1393
    %1467 = vmatpush.msra.mxu0 %v1389
    %1468 = vmatpush.msra.mxu0 %v1385
    %1469 = vmatpush.msra.mxu0 %v1381
    %1470 = vmatpush.msra.mxu0 %v1377
    %1471 = vmatpush.msra.mxu0 %v1373
    %1472 = vmatpush.msra.mxu0 %v1369
    %1473 = vmatpush.msra.mxu0 %v1365
    %1474 = vmatpush.msra.mxu0 %v1361
    %1475 = vmatpush.msra.mxu0 %v1357
    %1476 = vmatpush.msra.mxu0 %v1353
    %1477 = vmatpush.msra.mxu0 %v1349
    %1478 = vmatpush.msra.mxu0 %v1345
    %1479 = vmatpush.msra.mxu0 %v1341
    %1480 = vmatpush.msra.mxu0 %v1337
    %1481 = vmatpush.msra.mxu0 %v1333
    %1482 = vmatmul.f32.gmra.mxu0 %v1050
    %v1483 = vpop.f32.mrf.mxu0
    %v1484 = vadd.f32 %v1464, %v1483
    %1485 = vdwg.mxu0
    %1486 = vmatpush.msra.mxu0 %v1330
    %1487 = vmatpush.msra.mxu0 %v1326
    %1488 = vmatpush.msra.mxu0 %v1322
    %1489 = vmatpush.msra.mxu0 %v1318
    %1490 = vmatpush.msra.mxu0 %v1314
    %1491 = vmatpush.msra.mxu0 %v1310
    %1492 = vmatpush.msra.mxu0 %v1306
    %1493 = vmatpush.msra.mxu0 %v1302
    %1494 = vmatpush.msra.mxu0 %v1298
    %1495 = vmatpush.msra.mxu0 %v1294
    %1496 = vmatpush.msra.mxu0 %v1290
    %1497 = vmatpush.msra.mxu0 %v1286
    %1498 = vmatpush.msra.mxu0 %v1282
    %1499 = vmatpush.msra.mxu0 %v1278
    %1500 = vmatpush.msra.mxu0 %v1274
    %1501 = vmatpush.msra.mxu0 %v1270
    %1502 = vmatmul.f32.gmra.mxu0 %v1267
    %v1503 = vpop.f32.mrf.mxu0
    %v1504 = vadd.f32 %v1400, %v1503
    %1505 = vdwg.mxu0
    %1506 = vmatpush.msra.mxu0 %v1394
    %1507 = vmatpush.msra.mxu0 %v1390
    %1508 = vmatpush.msra.mxu0 %v1386
    %1509 = vmatpush.msra.mxu0 %v1382
    %1510 = vmatpush.msra.mxu0 %v1378
    %1511 = vmatpush.msra.mxu0 %v1374
    %1512 = vmatpush.msra.mxu0 %v1370
    %1513 = vmatpush.msra.mxu0 %v1366
    %1514 = vmatpush.msra.mxu0 %v1362
    %1515 = vmatpush.msra.mxu0 %v1358
    %1516 = vmatpush.msra.mxu0 %v1354
    %1517 = vmatpush.msra.mxu0 %v1350
    %1518 = vmatpush.msra.mxu0 %v1346
    %1519 = vmatpush.msra.mxu0 %v1342
    %1520 = vmatpush.msra.mxu0 %v1338
    %1521 = vmatpush.msra.mxu0 %v1334
    %1522 = vmatmul.f32.gmra.mxu0 %v1050
    %v1523 = vpop.f32.mrf.mxu0
    %v1524 = vadd.f32 %v1504, %v1523
    %1525 = vdwg.mxu0
    %1526 = vmatpush.msra.mxu0 %v1331
    %1527 = vmatpush.msra.mxu0 %v1327
    %1528 = vmatpush.msra.mxu0 %v1323
    %1529 = vmatpush.msra.mxu0 %v1319
    %1530 = vmatpush.msra.mxu0 %v1315
    %1531 = vmatpush.msra.mxu0 %v1311
    %1532 = vmatpush.msra.mxu0 %v1307
    %1533 = vmatpush.msra.mxu0 %v1303
    %1534 = vmatpush.msra.mxu0 %v1299
    %1535 = vmatpush.msra.mxu0 %v1295
    %1536 = vmatpush.msra.mxu0 %v1291
    %1537 = vmatpush.msra.mxu0 %v1287
    %1538 = vmatpush.msra.mxu0 %v1283
    %1539 = vmatpush.msra.mxu0 %v1279
    %1540 = vmatpush.msra.mxu0 %v1275
    %1541 = vmatpush.msra.mxu0 %v1271
    %1542 = vmatmul.f32.gmra.mxu0 %v1267
    %v1543 = vpop.f32.mrf.mxu0
    %v1544 = vadd.f32 %v1401, %v1543
    %1545 = vdwg.mxu0
    %1546 = vmatpush.msra.mxu0 %v1395
    %1547 = vmatpush.msra.mxu0 %v1391
    %1548 = vmatpush.msra.mxu0 %v1387
    %1549 = vmatpush.msra.mxu0 %v1383
    %1550 = vmatpush.msra.mxu0 %v1379
    %1551 = vmatpush.msra.mxu0 %v1375
    %1552 = vmatpush.msra.mxu0 %v1371
    %1553 = vmatpush.msra.mxu0 %v1367
    %1554 = vmatpush.msra.mxu0 %v1363
    %1555 = vmatpush.msra.mxu0 %v1359
    %1556 = vmatpush.msra.mxu0 %v1355
    %1557 = vmatpush.msra.mxu0 %v1351
    %1558 = vmatpush.msra.mxu0 %v1347
    %1559 = vmatpush.msra.mxu0 %v1343
    %1560 = vmatpush.msra.mxu0 %v1339
    %1561 = vmatpush.msra.mxu0 %v1335
    %1562 = vmatmul.f32.gmra.mxu0 %v1050
    %v1563 = vpop.f32.mrf.mxu0
    %v1564 = vadd.f32 %v1544, %v1563
    %1565 = vdwg.mxu0
    %v1566 = vxor.u32 %v1444, 2147483648
    %v1567 = vmul.f32 %v1566, 1.442695
    %v1568 = vpow.pop %v1567
    %v1569 = vadd.f32 %v1568, 1.0
    %v1570 = vrcp.pop %v1569
    %v1571 = vmul.f32 %v1569, %v1570
    %v1572 = vsub.f32 1.0, %v1571
    %v1573 = vmul.f32 %v1570, %v1572
    %v1574 = vadd.f32 %v1570, %v1573
    %vm1575 = vweird.f32 %v1569
    %vm1576 = vweird.f32 %v1570
    %vm1577 = vmor %vm1575, %vm1576
    %v1578 = vsel %vm1577, %v1570, %v1574
    %v1579 = vand.u32 2147483647, %v1569
    %vm1580 = vcmp.eq.f32.partialorder %v1579, 8.507059e+37
    %v1581 = vand.u32 %v1569, 2147483648
    %v1582 = vor.u32 1.1754944e-38, %v1581
    %v1583 = vsel %vm1580, %v1582, %v1578
    %v1584 = vmul.f32 1.0, %v1583
    %v1585 = vxor.u32 %v1484, 2147483648
    %v1586 = vmul.f32 %v1585, 1.442695
    %v1587 = vpow.pop %v1586
    %v1588 = vadd.f32 %v1587, 1.0
    %v1589 = vrcp.pop %v1588
    %v1590 = vmul.f32 %v1588, %v1589
    %v1591 = vsub.f32 1.0, %v1590
    %v1592 = vmul.f32 %v1589, %v1591
    %v1593 = vadd.f32 %v1589, %v1592
    %vm1594 = vweird.f32 %v1588
    %vm1595 = vweird.f32 %v1589
    %vm1596 = vmor %vm1594, %vm1595
    %v1597 = vsel %vm1596, %v1589, %v1593
    %v1598 = vand.u32 2147483647, %v1588
    %vm1599 = vcmp.eq.f32.partialorder %v1598, 8.507059e+37
    %v1600 = vand.u32 %v1588, 2147483648
    %v1601 = vor.u32 1.1754944e-38, %v1600
    %v1602 = vsel %vm1599, %v1601, %v1597
    %v1603 = vmul.f32 1.0, %v1602
    %v1604 = vtanh.pop %v1524
    %v1605 = vxor.u32 %v1564, 2147483648
    %v1606 = vmul.f32 %v1605, 1.442695
    %v1607 = vpow.pop %v1606
    %v1608 = vadd.f32 %v1607, 1.0
    %v1609 = vrcp.pop %v1608
    %v1610 = vmul.f32 %v1608, %v1609
    %v1611 = vsub.f32 1.0, %v1610
    %v1612 = vmul.f32 %v1609, %v1611
    %v1613 = vadd.f32 %v1609, %v1612
    %vm1614 = vweird.f32 %v1608
    %vm1615 = vweird.f32 %v1609
    %vm1616 = vmor %vm1614, %vm1615
    %v1617 = vsel %vm1616, %v1609, %v1613
    %v1618 = vand.u32 2147483647, %v1608
    %vm1619 = vcmp.eq.f32.partialorder %v1618, 8.507059e+37
    %v1620 = vand.u32 %v1608, 2147483648
    %v1621 = vor.u32 1.1754944e-38, %v1620
    %v1622 = vsel %vm1619, %v1621, %v1617
    %v1623 = vmul.f32 1.0, %v1622
    %v1624 = vmul.f32 %v1603, %v1051
    %v1625 = vmul.f32 %v1584, %v1604
    %v1626 = vadd.f32 %v1624, %v1625
    %v1627 = vtanh.pop %v1626
    %v1628 = vmul.f32 %v1623, %v1627
    %1629 = vst [vmem:[#allocation2] sm:$0xff] %v1267
    %1630 = vst [vmem:[#allocation3] sm:$0xff] %v1265
    %1631 = vst [vmem:[%s463] sm:$0xff] %v1628
    %1632 = vst [vmem:[%s465] sm:$0xff] %v1626
    %s1633 = scalar_lea.vmem [#allocation5], 8
    %1634 = vst [vmem:[%s1633] sm:$0xff] %v1628
    %v1635 = vld [vmem:[#allocation2] sm:$0xff]
    %v1636 = vld [vmem:[#allocation3] sm:$0xff]
    %v1637 = vld [vmem:[%s463] sm:$0xff]
    %v1638 = vld [vmem:[%s465] sm:$0xff]
    %s1639 = scalar_lea.vmem [#allocation4], 64
    %v1640 = vld [vmem:[%s1639] sm:$0xff]
    %v1641 = vld [vmem:[%s1639 + $0x8] sm:$0xff]
    %v1642 = vld [vmem:[%s1639 + $0x10] sm:$0xff]
    %v1643 = vld [vmem:[%s1639 + $0x18] sm:$0xff]
    %v1644 = vld [vmem:[#allocation14] sm:$0xff]
    %v1645 = vld [vmem:[#allocation14 + $0x8] sm:$0xff]
    %v1646 = vld [vmem:[#allocation14 + $0x10] sm:$0xff]
    %v1647 = vld [vmem:[#allocation14 + $0x18] sm:$0xff]
    %v1648 = vld [vmem:[#allocation14 + $0x20] sm:$0xff]
    %v1649 = vld [vmem:[#allocation14 + $0x28] sm:$0xff]
    %v1650 = vld [vmem:[#allocation14 + $0x30] sm:$0xff]
    %v1651 = vld [vmem:[#allocation14 + $0x38] sm:$0xff]
    %v1652 = vld [vmem:[#allocation14 + $0x40] sm:$0xff]
    %v1653 = vld [vmem:[#allocation14 + $0x48] sm:$0xff]
    %v1654 = vld [vmem:[#allocation14 + $0x50] sm:$0xff]
    %v1655 = vld [vmem:[#allocation14 + $0x58] sm:$0xff]
    %v1656 = vld [vmem:[#allocation14 + $0x60] sm:$0xff]
    %v1657 = vld [vmem:[#allocation14 + $0x68] sm:$0xff]
    %v1658 = vld [vmem:[#allocation14 + $0x70] sm:$0xff]
    %v1659 = vld [vmem:[#allocation14 + $0x78] sm:$0xff]
    %v1660 = vld [vmem:[#allocation14 + $0x80] sm:$0xff]
    %v1661 = vld [vmem:[#allocation14 + $0x88] sm:$0xff]
    %v1662 = vld [vmem:[#allocation14 + $0x90] sm:$0xff]
    %v1663 = vld [vmem:[#allocation14 + $0x98] sm:$0xff]
    %v1664 = vld [vmem:[#allocation14 + $0xa0] sm:$0xff]
    %v1665 = vld [vmem:[#allocation14 + $0xa8] sm:$0xff]
    %v1666 = vld [vmem:[#allocation14 + $0xb0] sm:$0xff]
    %v1667 = vld [vmem:[#allocation14 + $0xb8] sm:$0xff]
    %v1668 = vld [vmem:[#allocation14 + $0xc0] sm:$0xff]
    %v1669 = vld [vmem:[#allocation14 + $0xc8] sm:$0xff]
    %v1670 = vld [vmem:[#allocation14 + $0xd0] sm:$0xff]
    %v1671 = vld [vmem:[#allocation14 + $0xd8] sm:$0xff]
    %v1672 = vld [vmem:[#allocation14 + $0xe0] sm:$0xff]
    %v1673 = vld [vmem:[#allocation14 + $0xe8] sm:$0xff]
    %v1674 = vld [vmem:[#allocation14 + $0xf0] sm:$0xff]
    %v1675 = vld [vmem:[#allocation14 + $0xf8] sm:$0xff]
    %v1676 = vld [vmem:[#allocation14 + $0x100] sm:$0xff]
    %v1677 = vld [vmem:[#allocation14 + $0x108] sm:$0xff]
    %v1678 = vld [vmem:[#allocation14 + $0x110] sm:$0xff]
    %v1679 = vld [vmem:[#allocation14 + $0x118] sm:$0xff]
    %v1680 = vld [vmem:[#allocation14 + $0x120] sm:$0xff]
    %v1681 = vld [vmem:[#allocation14 + $0x128] sm:$0xff]
    %v1682 = vld [vmem:[#allocation14 + $0x130] sm:$0xff]
    %v1683 = vld [vmem:[#allocation14 + $0x138] sm:$0xff]
    %v1684 = vld [vmem:[#allocation14 + $0x140] sm:$0xff]
    %v1685 = vld [vmem:[#allocation14 + $0x148] sm:$0xff]
    %v1686 = vld [vmem:[#allocation14 + $0x150] sm:$0xff]
    %v1687 = vld [vmem:[#allocation14 + $0x158] sm:$0xff]
    %v1688 = vld [vmem:[#allocation14 + $0x160] sm:$0xff]
    %v1689 = vld [vmem:[#allocation14 + $0x168] sm:$0xff]
    %v1690 = vld [vmem:[#allocation14 + $0x170] sm:$0xff]
    %v1691 = vld [vmem:[#allocation14 + $0x178] sm:$0xff]
    %v1692 = vld [vmem:[#allocation14 + $0x180] sm:$0xff]
    %v1693 = vld [vmem:[#allocation14 + $0x188] sm:$0xff]
    %v1694 = vld [vmem:[#allocation14 + $0x190] sm:$0xff]
    %v1695 = vld [vmem:[#allocation14 + $0x198] sm:$0xff]
    %v1696 = vld [vmem:[#allocation14 + $0x1a0] sm:$0xff]
    %v1697 = vld [vmem:[#allocation14 + $0x1a8] sm:$0xff]
    %v1698 = vld [vmem:[#allocation14 + $0x1b0] sm:$0xff]
    %v1699 = vld [vmem:[#allocation14 + $0x1b8] sm:$0xff]
    %v1700 = vld [vmem:[#allocation14 + $0x1c0] sm:$0xff]
    %v1701 = vld [vmem:[#allocation14 + $0x1c8] sm:$0xff]
    %v1702 = vld [vmem:[#allocation14 + $0x1d0] sm:$0xff]
    %v1703 = vld [vmem:[#allocation14 + $0x1d8] sm:$0xff]
    %v1704 = vld [vmem:[#allocation14 + $0x1e0] sm:$0xff]
    %v1705 = vld [vmem:[#allocation14 + $0x1e8] sm:$0xff]
    %v1706 = vld [vmem:[#allocation14 + $0x1f0] sm:$0xff]
    %v1707 = vld [vmem:[#allocation14 + $0x1f8] sm:$0xff]
    %1708 = vmatpush.msra.mxu0 %v1704
    %1709 = vmatpush.msra.mxu0 %v1700
    %1710 = vmatpush.msra.mxu0 %v1696
    %1711 = vmatpush.msra.mxu0 %v1692
    %1712 = vmatpush.msra.mxu0 %v1688
    %1713 = vmatpush.msra.mxu0 %v1684
    %1714 = vmatpush.msra.mxu0 %v1680
    %1715 = vmatpush.msra.mxu0 %v1676
    %1716 = vmatpush.msra.mxu0 %v1672
    %1717 = vmatpush.msra.mxu0 %v1668
    %1718 = vmatpush.msra.mxu0 %v1664
    %1719 = vmatpush.msra.mxu0 %v1660
    %1720 = vmatpush.msra.mxu0 %v1656
    %1721 = vmatpush.msra.mxu0 %v1652
    %1722 = vmatpush.msra.mxu0 %v1648
    %1723 = vmatpush.msra.mxu0 %v1644
    %1724 = vmatmul.f32.gmra.mxu0 %v1635
    %v1725 = vpop.f32.mrf.mxu0
    %v1726 = vadd.f32 0.0, %v1725
    %1727 = vdwg.mxu0
    %1728 = vmatpush.msra.mxu0 %v1705
    %1729 = vmatpush.msra.mxu0 %v1701
    %1730 = vmatpush.msra.mxu0 %v1697
    %1731 = vmatpush.msra.mxu0 %v1693
    %1732 = vmatpush.msra.mxu0 %v1689
    %1733 = vmatpush.msra.mxu0 %v1685
    %1734 = vmatpush.msra.mxu0 %v1681
    %1735 = vmatpush.msra.mxu0 %v1677
    %1736 = vmatpush.msra.mxu0 %v1673
    %1737 = vmatpush.msra.mxu0 %v1669
    %1738 = vmatpush.msra.mxu0 %v1665
    %1739 = vmatpush.msra.mxu0 %v1661
    %1740 = vmatpush.msra.mxu0 %v1657
    %1741 = vmatpush.msra.mxu0 %v1653
    %1742 = vmatpush.msra.mxu0 %v1649
    %1743 = vmatpush.msra.mxu0 %v1645
    %1744 = vmatmul.f32.gmra.mxu0 %v1635
    %v1745 = vpop.f32.mrf.mxu0
    %v1746 = vadd.f32 0.0, %v1745
    %1747 = vdwg.mxu0
    %1748 = vmatpush.msra.mxu0 %v1706
    %1749 = vmatpush.msra.mxu0 %v1702
    %1750 = vmatpush.msra.mxu0 %v1698
    %1751 = vmatpush.msra.mxu0 %v1694
    %1752 = vmatpush.msra.mxu0 %v1690
    %1753 = vmatpush.msra.mxu0 %v1686
    %1754 = vmatpush.msra.mxu0 %v1682
    %1755 = vmatpush.msra.mxu0 %v1678
    %1756 = vmatpush.msra.mxu0 %v1674
    %1757 = vmatpush.msra.mxu0 %v1670
    %1758 = vmatpush.msra.mxu0 %v1666
    %1759 = vmatpush.msra.mxu0 %v1662
    %1760 = vmatpush.msra.mxu0 %v1658
    %1761 = vmatpush.msra.mxu0 %v1654
    %1762 = vmatpush.msra.mxu0 %v1650
    %1763 = vmatpush.msra.mxu0 %v1646
    %1764 = vmatmul.f32.gmra.mxu0 %v1635
    %v1765 = vpop.f32.mrf.mxu0
    %v1766 = vadd.f32 0.0, %v1765
    %1767 = vdwg.mxu0
    %1768 = vmatpush.msra.mxu0 %v1707
    %1769 = vmatpush.msra.mxu0 %v1703
    %1770 = vmatpush.msra.mxu0 %v1699
    %1771 = vmatpush.msra.mxu0 %v1695
    %1772 = vmatpush.msra.mxu0 %v1691
    %1773 = vmatpush.msra.mxu0 %v1687
    %1774 = vmatpush.msra.mxu0 %v1683
    %1775 = vmatpush.msra.mxu0 %v1679
    %1776 = vmatpush.msra.mxu0 %v1675
    %1777 = vmatpush.msra.mxu0 %v1671
    %1778 = vmatpush.msra.mxu0 %v1667
    %1779 = vmatpush.msra.mxu0 %v1663
    %1780 = vmatpush.msra.mxu0 %v1659
    %1781 = vmatpush.msra.mxu0 %v1655
    %1782 = vmatpush.msra.mxu0 %v1651
    %1783 = vmatpush.msra.mxu0 %v1647
    %1784 = vmatmul.f32.gmra.mxu0 %v1635
    %v1785 = vpop.f32.mrf.mxu0
    %v1786 = vadd.f32 0.0, %v1785
    %1787 = vdwg.mxu0
    %v1788 = vadd.f32 %v1640, %v1726
    %v1789 = vadd.f32 %v1641, %v1746
    %v1790 = vadd.f32 %v1642, %v1766
    %v1791 = vadd.f32 %v1643, %v1786
    %v1792 = vxor.u32 %v1788, 2147483648
    %v1793 = vmul.f32 %v1792, 1.442695
    %v1794 = vpow.pop %v1793
    %v1795 = vadd.f32 %v1794, 1.0
    %v1796 = vrcp.pop %v1795
    %v1797 = vmul.f32 %v1795, %v1796
    %v1798 = vsub.f32 1.0, %v1797
    %v1799 = vmul.f32 %v1796, %v1798
    %v1800 = vadd.f32 %v1796, %v1799
    %vm1801 = vweird.f32 %v1795
    %vm1802 = vweird.f32 %v1796
    %vm1803 = vmor %vm1801, %vm1802
    %v1804 = vsel %vm1803, %v1796, %v1800
    %v1805 = vand.u32 2147483647, %v1795
    %vm1806 = vcmp.eq.f32.partialorder %v1805, 8.507059e+37
    %v1807 = vand.u32 %v1795, 2147483648
    %v1808 = vor.u32 1.1754944e-38, %v1807
    %v1809 = vsel %vm1806, %v1808, %v1804
    %v1810 = vmul.f32 1.0, %v1809
    %v1811 = vxor.u32 %v1789, 2147483648
    %v1812 = vmul.f32 %v1811, 1.442695
    %v1813 = vpow.pop %v1812
    %v1814 = vadd.f32 %v1813, 1.0
    %v1815 = vrcp.pop %v1814
    %v1816 = vmul.f32 %v1814, %v1815
    %v1817 = vsub.f32 1.0, %v1816
    %v1818 = vmul.f32 %v1815, %v1817
    %v1819 = vadd.f32 %v1815, %v1818
    %vm1820 = vweird.f32 %v1814
    %vm1821 = vweird.f32 %v1815
    %vm1822 = vmor %vm1820, %vm1821
    %v1823 = vsel %vm1822, %v1815, %v1819
    %v1824 = vand.u32 2147483647, %v1814
    %vm1825 = vcmp.eq.f32.partialorder %v1824, 8.507059e+37
    %v1826 = vand.u32 %v1814, 2147483648
    %v1827 = vor.u32 1.1754944e-38, %v1826
    %v1828 = vsel %vm1825, %v1827, %v1823
    %v1829 = vmul.f32 1.0, %v1828
    %v1830 = vtanh.pop %v1790
    %v1831 = vxor.u32 %v1791, 2147483648
    %v1832 = vmul.f32 %v1831, 1.442695
    %v1833 = vpow.pop %v1832
    %v1834 = vadd.f32 %v1833, 1.0
    %v1835 = vrcp.pop %v1834
    %v1836 = vmul.f32 %v1834, %v1835
    %v1837 = vsub.f32 1.0, %v1836
    %v1838 = vmul.f32 %v1835, %v1837
    %v1839 = vadd.f32 %v1835, %v1838
    %vm1840 = vweird.f32 %v1834
    %vm1841 = vweird.f32 %v1835
    %vm1842 = vmor %vm1840, %vm1841
    %v1843 = vsel %vm1842, %v1835, %v1839
    %v1844 = vand.u32 2147483647, %v1834
    %vm1845 = vcmp.eq.f32.partialorder %v1844, 8.507059e+37
    %v1846 = vand.u32 %v1834, 2147483648
    %v1847 = vor.u32 1.1754944e-38, %v1846
    %v1848 = vsel %vm1845, %v1847, %v1843
    %v1849 = vmul.f32 1.0, %v1848
    %v1850 = vmul.f32 %v1829, %v1636
    %v1851 = vmul.f32 %v1810, %v1830
    %v1852 = vadd.f32 %v1850, %v1851
    %v1853 = vtanh.pop %v1852
    %v1854 = vmul.f32 %v1849, %v1853
    %v1855 = vld [vmem:[#allocation15] sm:$0xff]
    %v1856 = vld [vmem:[#allocation15 + $0x8] sm:$0xff]
    %v1857 = vld [vmem:[#allocation15 + $0x10] sm:$0xff]
    %v1858 = vld [vmem:[#allocation15 + $0x18] sm:$0xff]
    %v1859 = vld [vmem:[#allocation15 + $0x20] sm:$0xff]
    %v1860 = vld [vmem:[#allocation15 + $0x28] sm:$0xff]
    %v1861 = vld [vmem:[#allocation15 + $0x30] sm:$0xff]
    %v1862 = vld [vmem:[#allocation15 + $0x38] sm:$0xff]
    %v1863 = vld [vmem:[#allocation15 + $0x40] sm:$0xff]
    %v1864 = vld [vmem:[#allocation15 + $0x48] sm:$0xff]
    %v1865 = vld [vmem:[#allocation15 + $0x50] sm:$0xff]
    %v1866 = vld [vmem:[#allocation15 + $0x58] sm:$0xff]
    %v1867 = vld [vmem:[#allocation15 + $0x60] sm:$0xff]
    %v1868 = vld [vmem:[#allocation15 + $0x68] sm:$0xff]
    %v1869 = vld [vmem:[#allocation15 + $0x70] sm:$0xff]
    %v1870 = vld [vmem:[#allocation15 + $0x78] sm:$0xff]
    %v1871 = vld [vmem:[#allocation15 + $0x80] sm:$0xff]
    %v1872 = vld [vmem:[#allocation15 + $0x88] sm:$0xff]
    %v1873 = vld [vmem:[#allocation15 + $0x90] sm:$0xff]
    %v1874 = vld [vmem:[#allocation15 + $0x98] sm:$0xff]
    %v1875 = vld [vmem:[#allocation15 + $0xa0] sm:$0xff]
    %v1876 = vld [vmem:[#allocation15 + $0xa8] sm:$0xff]
    %v1877 = vld [vmem:[#allocation15 + $0xb0] sm:$0xff]
    %v1878 = vld [vmem:[#allocation15 + $0xb8] sm:$0xff]
    %v1879 = vld [vmem:[#allocation15 + $0xc0] sm:$0xff]
    %v1880 = vld [vmem:[#allocation15 + $0xc8] sm:$0xff]
    %v1881 = vld [vmem:[#allocation15 + $0xd0] sm:$0xff]
    %v1882 = vld [vmem:[#allocation15 + $0xd8] sm:$0xff]
    %v1883 = vld [vmem:[#allocation15 + $0xe0] sm:$0xff]
    %v1884 = vld [vmem:[#allocation15 + $0xe8] sm:$0xff]
    %v1885 = vld [vmem:[#allocation15 + $0xf0] sm:$0xff]
    %v1886 = vld [vmem:[#allocation15 + $0xf8] sm:$0xff]
    %v1887 = vld [vmem:[#allocation15 + $0x100] sm:$0xff]
    %v1888 = vld [vmem:[#allocation15 + $0x108] sm:$0xff]
    %v1889 = vld [vmem:[#allocation15 + $0x110] sm:$0xff]
    %v1890 = vld [vmem:[#allocation15 + $0x118] sm:$0xff]
    %v1891 = vld [vmem:[#allocation15 + $0x120] sm:$0xff]
    %v1892 = vld [vmem:[#allocation15 + $0x128] sm:$0xff]
    %v1893 = vld [vmem:[#allocation15 + $0x130] sm:$0xff]
    %v1894 = vld [vmem:[#allocation15 + $0x138] sm:$0xff]
    %v1895 = vld [vmem:[#allocation15 + $0x140] sm:$0xff]
    %v1896 = vld [vmem:[#allocation15 + $0x148] sm:$0xff]
    %v1897 = vld [vmem:[#allocation15 + $0x150] sm:$0xff]
    %v1898 = vld [vmem:[#allocation15 + $0x158] sm:$0xff]
    %v1899 = vld [vmem:[#allocation15 + $0x160] sm:$0xff]
    %v1900 = vld [vmem:[#allocation15 + $0x168] sm:$0xff]
    %v1901 = vld [vmem:[#allocation15 + $0x170] sm:$0xff]
    %v1902 = vld [vmem:[#allocation15 + $0x178] sm:$0xff]
    %v1903 = vld [vmem:[#allocation15 + $0x180] sm:$0xff]
    %v1904 = vld [vmem:[#allocation15 + $0x188] sm:$0xff]
    %v1905 = vld [vmem:[#allocation15 + $0x190] sm:$0xff]
    %v1906 = vld [vmem:[#allocation15 + $0x198] sm:$0xff]
    %v1907 = vld [vmem:[#allocation15 + $0x1a0] sm:$0xff]
    %v1908 = vld [vmem:[#allocation15 + $0x1a8] sm:$0xff]
    %v1909 = vld [vmem:[#allocation15 + $0x1b0] sm:$0xff]
    %v1910 = vld [vmem:[#allocation15 + $0x1b8] sm:$0xff]
    %v1911 = vld [vmem:[#allocation15 + $0x1c0] sm:$0xff]
    %v1912 = vld [vmem:[#allocation15 + $0x1c8] sm:$0xff]
    %v1913 = vld [vmem:[#allocation15 + $0x1d0] sm:$0xff]
    %v1914 = vld [vmem:[#allocation15 + $0x1d8] sm:$0xff]
    %v1915 = vld [vmem:[#allocation15 + $0x1e0] sm:$0xff]
    %v1916 = vld [vmem:[#allocation15 + $0x1e8] sm:$0xff]
    %v1917 = vld [vmem:[#allocation15 + $0x1f0] sm:$0xff]
    %v1918 = vld [vmem:[#allocation15 + $0x1f8] sm:$0xff]
    %v1919 = vld [vmem:[#allocation15 + $0x200] sm:$0xff]
    %v1920 = vld [vmem:[#allocation15 + $0x208] sm:$0xff]
    %v1921 = vld [vmem:[#allocation15 + $0x210] sm:$0xff]
    %v1922 = vld [vmem:[#allocation15 + $0x218] sm:$0xff]
    %v1923 = vld [vmem:[#allocation15 + $0x220] sm:$0xff]
    %v1924 = vld [vmem:[#allocation15 + $0x228] sm:$0xff]
    %v1925 = vld [vmem:[#allocation15 + $0x230] sm:$0xff]
    %v1926 = vld [vmem:[#allocation15 + $0x238] sm:$0xff]
    %v1927 = vld [vmem:[#allocation15 + $0x240] sm:$0xff]
    %v1928 = vld [vmem:[#allocation15 + $0x248] sm:$0xff]
    %v1929 = vld [vmem:[#allocation15 + $0x250] sm:$0xff]
    %v1930 = vld [vmem:[#allocation15 + $0x258] sm:$0xff]
    %v1931 = vld [vmem:[#allocation15 + $0x260] sm:$0xff]
    %v1932 = vld [vmem:[#allocation15 + $0x268] sm:$0xff]
    %v1933 = vld [vmem:[#allocation15 + $0x270] sm:$0xff]
    %v1934 = vld [vmem:[#allocation15 + $0x278] sm:$0xff]
    %v1935 = vld [vmem:[#allocation15 + $0x280] sm:$0xff]
    %v1936 = vld [vmem:[#allocation15 + $0x288] sm:$0xff]
    %v1937 = vld [vmem:[#allocation15 + $0x290] sm:$0xff]
    %v1938 = vld [vmem:[#allocation15 + $0x298] sm:$0xff]
    %v1939 = vld [vmem:[#allocation15 + $0x2a0] sm:$0xff]
    %v1940 = vld [vmem:[#allocation15 + $0x2a8] sm:$0xff]
    %v1941 = vld [vmem:[#allocation15 + $0x2b0] sm:$0xff]
    %v1942 = vld [vmem:[#allocation15 + $0x2b8] sm:$0xff]
    %v1943 = vld [vmem:[#allocation15 + $0x2c0] sm:$0xff]
    %v1944 = vld [vmem:[#allocation15 + $0x2c8] sm:$0xff]
    %v1945 = vld [vmem:[#allocation15 + $0x2d0] sm:$0xff]
    %v1946 = vld [vmem:[#allocation15 + $0x2d8] sm:$0xff]
    %v1947 = vld [vmem:[#allocation15 + $0x2e0] sm:$0xff]
    %v1948 = vld [vmem:[#allocation15 + $0x2e8] sm:$0xff]
    %v1949 = vld [vmem:[#allocation15 + $0x2f0] sm:$0xff]
    %v1950 = vld [vmem:[#allocation15 + $0x2f8] sm:$0xff]
    %v1951 = vld [vmem:[#allocation15 + $0x300] sm:$0xff]
    %v1952 = vld [vmem:[#allocation15 + $0x308] sm:$0xff]
    %v1953 = vld [vmem:[#allocation15 + $0x310] sm:$0xff]
    %v1954 = vld [vmem:[#allocation15 + $0x318] sm:$0xff]
    %v1955 = vld [vmem:[#allocation15 + $0x320] sm:$0xff]
    %v1956 = vld [vmem:[#allocation15 + $0x328] sm:$0xff]
    %v1957 = vld [vmem:[#allocation15 + $0x330] sm:$0xff]
    %v1958 = vld [vmem:[#allocation15 + $0x338] sm:$0xff]
    %v1959 = vld [vmem:[#allocation15 + $0x340] sm:$0xff]
    %v1960 = vld [vmem:[#allocation15 + $0x348] sm:$0xff]
    %v1961 = vld [vmem:[#allocation15 + $0x350] sm:$0xff]
    %v1962 = vld [vmem:[#allocation15 + $0x358] sm:$0xff]
    %v1963 = vld [vmem:[#allocation15 + $0x360] sm:$0xff]
    %v1964 = vld [vmem:[#allocation15 + $0x368] sm:$0xff]
    %v1965 = vld [vmem:[#allocation15 + $0x370] sm:$0xff]
    %v1966 = vld [vmem:[#allocation15 + $0x378] sm:$0xff]
    %v1967 = vld [vmem:[#allocation15 + $0x380] sm:$0xff]
    %v1968 = vld [vmem:[#allocation15 + $0x388] sm:$0xff]
    %v1969 = vld [vmem:[#allocation15 + $0x390] sm:$0xff]
    %v1970 = vld [vmem:[#allocation15 + $0x398] sm:$0xff]
    %v1971 = vld [vmem:[#allocation15 + $0x3a0] sm:$0xff]
    %v1972 = vld [vmem:[#allocation15 + $0x3a8] sm:$0xff]
    %v1973 = vld [vmem:[#allocation15 + $0x3b0] sm:$0xff]
    %v1974 = vld [vmem:[#allocation15 + $0x3b8] sm:$0xff]
    %v1975 = vld [vmem:[#allocation15 + $0x3c0] sm:$0xff]
    %v1976 = vld [vmem:[#allocation15 + $0x3c8] sm:$0xff]
    %v1977 = vld [vmem:[#allocation15 + $0x3d0] sm:$0xff]
    %v1978 = vld [vmem:[#allocation15 + $0x3d8] sm:$0xff]
    %v1979 = vld [vmem:[#allocation15 + $0x3e0] sm:$0xff]
    %v1980 = vld [vmem:[#allocation15 + $0x3e8] sm:$0xff]
    %v1981 = vld [vmem:[#allocation15 + $0x3f0] sm:$0xff]
    %v1982 = vld [vmem:[#allocation15 + $0x3f8] sm:$0xff]
    %v1983 = vld [vmem:[#allocation17] sm:$0xf]
    %v1985 = vperm.slane %v1983, 0
    %v1986 = vperm.slane %v1983, 1
    %v1987 = vperm.slane %v1983, 2
    %v1988 = vperm.slane %v1983, 3
    %1993 = vmatpush.msra.mxu0 %v1915
    %1994 = vmatpush.msra.mxu0 %v1911
    %1995 = vmatpush.msra.mxu0 %v1907
    %1996 = vmatpush.msra.mxu0 %v1903
    %1997 = vmatpush.msra.mxu0 %v1899
    %1998 = vmatpush.msra.mxu0 %v1895
    %1999 = vmatpush.msra.mxu0 %v1891
    %2000 = vmatpush.msra.mxu0 %v1887
    %2001 = vmatpush.msra.mxu0 %v1883
    %2002 = vmatpush.msra.mxu0 %v1879
    %2003 = vmatpush.msra.mxu0 %v1875
    %2004 = vmatpush.msra.mxu0 %v1871
    %2005 = vmatpush.msra.mxu0 %v1867
    %2006 = vmatpush.msra.mxu0 %v1863
    %2007 = vmatpush.msra.mxu0 %v1859
    %2008 = vmatpush.msra.mxu0 %v1855
    %2009 = vmatmul.f32.gmra.mxu0 %v1854
    %v2010 = vpop.f32.mrf.mxu0
    %v2011 = vadd.f32 %v1985, %v2010
    %2012 = vdwg.mxu0
    %2013 = vmatpush.msra.mxu0 %v1979
    %2014 = vmatpush.msra.mxu0 %v1975
    %2015 = vmatpush.msra.mxu0 %v1971
    %2016 = vmatpush.msra.mxu0 %v1967
    %2017 = vmatpush.msra.mxu0 %v1963
    %2018 = vmatpush.msra.mxu0 %v1959
    %2019 = vmatpush.msra.mxu0 %v1955
    %2020 = vmatpush.msra.mxu0 %v1951
    %2021 = vmatpush.msra.mxu0 %v1947
    %2022 = vmatpush.msra.mxu0 %v1943
    %2023 = vmatpush.msra.mxu0 %v1939
    %2024 = vmatpush.msra.mxu0 %v1935
    %2025 = vmatpush.msra.mxu0 %v1931
    %2026 = vmatpush.msra.mxu0 %v1927
    %2027 = vmatpush.msra.mxu0 %v1923
    %2028 = vmatpush.msra.mxu0 %v1919
    %2029 = vmatmul.f32.gmra.mxu0 %v1637
    %v2030 = vpop.f32.mrf.mxu0
    %v2031 = vadd.f32 %v2011, %v2030
    %2032 = vdwg.mxu0
    %2033 = vmatpush.msra.mxu0 %v1916
    %2034 = vmatpush.msra.mxu0 %v1912
    %2035 = vmatpush.msra.mxu0 %v1908
    %2036 = vmatpush.msra.mxu0 %v1904
    %2037 = vmatpush.msra.mxu0 %v1900
    %2038 = vmatpush.msra.mxu0 %v1896
    %2039 = vmatpush.msra.mxu0 %v1892
    %2040 = vmatpush.msra.mxu0 %v1888
    %2041 = vmatpush.msra.mxu0 %v1884
    %2042 = vmatpush.msra.mxu0 %v1880
    %2043 = vmatpush.msra.mxu0 %v1876
    %2044 = vmatpush.msra.mxu0 %v1872
    %2045 = vmatpush.msra.mxu0 %v1868
    %2046 = vmatpush.msra.mxu0 %v1864
    %2047 = vmatpush.msra.mxu0 %v1860
    %2048 = vmatpush.msra.mxu0 %v1856
    %2049 = vmatmul.f32.gmra.mxu0 %v1854
    %v2050 = vpop.f32.mrf.mxu0
    %v2051 = vadd.f32 %v1986, %v2050
    %2052 = vdwg.mxu0
    %2053 = vmatpush.msra.mxu0 %v1980
    %2054 = vmatpush.msra.mxu0 %v1976
    %2055 = vmatpush.msra.mxu0 %v1972
    %2056 = vmatpush.msra.mxu0 %v1968
    %2057 = vmatpush.msra.mxu0 %v1964
    %2058 = vmatpush.msra.mxu0 %v1960
    %2059 = vmatpush.msra.mxu0 %v1956
    %2060 = vmatpush.msra.mxu0 %v1952
    %2061 = vmatpush.msra.mxu0 %v1948
    %2062 = vmatpush.msra.mxu0 %v1944
    %2063 = vmatpush.msra.mxu0 %v1940
    %2064 = vmatpush.msra.mxu0 %v1936
    %2065 = vmatpush.msra.mxu0 %v1932
    %2066 = vmatpush.msra.mxu0 %v1928
    %2067 = vmatpush.msra.mxu0 %v1924
    %2068 = vmatpush.msra.mxu0 %v1920
    %2069 = vmatmul.f32.gmra.mxu0 %v1637
    %v2070 = vpop.f32.mrf.mxu0
    %v2071 = vadd.f32 %v2051, %v2070
    %2072 = vdwg.mxu0
    %2073 = vmatpush.msra.mxu0 %v1917
    %2074 = vmatpush.msra.mxu0 %v1913
    %2075 = vmatpush.msra.mxu0 %v1909
    %2076 = vmatpush.msra.mxu0 %v1905
    %2077 = vmatpush.msra.mxu0 %v1901
    %2078 = vmatpush.msra.mxu0 %v1897
    %2079 = vmatpush.msra.mxu0 %v1893
    %2080 = vmatpush.msra.mxu0 %v1889
    %2081 = vmatpush.msra.mxu0 %v1885
    %2082 = vmatpush.msra.mxu0 %v1881
    %2083 = vmatpush.msra.mxu0 %v1877
    %2084 = vmatpush.msra.mxu0 %v1873
    %2085 = vmatpush.msra.mxu0 %v1869
    %2086 = vmatpush.msra.mxu0 %v1865
    %2087 = vmatpush.msra.mxu0 %v1861
    %2088 = vmatpush.msra.mxu0 %v1857
    %2089 = vmatmul.f32.gmra.mxu0 %v1854
    %v2090 = vpop.f32.mrf.mxu0
    %v2091 = vadd.f32 %v1987, %v2090
    %2092 = vdwg.mxu0
    %2093 = vmatpush.msra.mxu0 %v1981
    %2094 = vmatpush.msra.mxu0 %v1977
    %2095 = vmatpush.msra.mxu0 %v1973
    %2096 = vmatpush.msra.mxu0 %v1969
    %2097 = vmatpush.msra.mxu0 %v1965
    %2098 = vmatpush.msra.mxu0 %v1961
    %2099 = vmatpush.msra.mxu0 %v1957
    %2100 = vmatpush.msra.mxu0 %v1953
    %2101 = vmatpush.msra.mxu0 %v1949
    %2102 = vmatpush.msra.mxu0 %v1945
    %2103 = vmatpush.msra.mxu0 %v1941
    %2104 = vmatpush.msra.mxu0 %v1937
    %2105 = vmatpush.msra.mxu0 %v1933
    %2106 = vmatpush.msra.mxu0 %v1929
    %2107 = vmatpush.msra.mxu0 %v1925
    %2108 = vmatpush.msra.mxu0 %v1921
    %2109 = vmatmul.f32.gmra.mxu0 %v1637
    %v2110 = vpop.f32.mrf.mxu0
    %v2111 = vadd.f32 %v2091, %v2110
    %2112 = vdwg.mxu0
    %2113 = vmatpush.msra.mxu0 %v1918
    %2114 = vmatpush.msra.mxu0 %v1914
    %2115 = vmatpush.msra.mxu0 %v1910
    %2116 = vmatpush.msra.mxu0 %v1906
    %2117 = vmatpush.msra.mxu0 %v1902
    %2118 = vmatpush.msra.mxu0 %v1898
    %2119 = vmatpush.msra.mxu0 %v1894
    %2120 = vmatpush.msra.mxu0 %v1890
    %2121 = vmatpush.msra.mxu0 %v1886
    %2122 = vmatpush.msra.mxu0 %v1882
    %2123 = vmatpush.msra.mxu0 %v1878
    %2124 = vmatpush.msra.mxu0 %v1874
    %2125 = vmatpush.msra.mxu0 %v1870
    %2126 = vmatpush.msra.mxu0 %v1866
    %2127 = vmatpush.msra.mxu0 %v1862
    %2128 = vmatpush.msra.mxu0 %v1858
    %2129 = vmatmul.f32.gmra.mxu0 %v1854
    %v2130 = vpop.f32.mrf.mxu0
    %v2131 = vadd.f32 %v1988, %v2130
    %2132 = vdwg.mxu0
    %2133 = vmatpush.msra.mxu0 %v1982
    %2134 = vmatpush.msra.mxu0 %v1978
    %2135 = vmatpush.msra.mxu0 %v1974
    %2136 = vmatpush.msra.mxu0 %v1970
    %2137 = vmatpush.msra.mxu0 %v1966
    %2138 = vmatpush.msra.mxu0 %v1962
    %2139 = vmatpush.msra.mxu0 %v1958
    %2140 = vmatpush.msra.mxu0 %v1954
    %2141 = vmatpush.msra.mxu0 %v1950
    %2142 = vmatpush.msra.mxu0 %v1946
    %2143 = vmatpush.msra.mxu0 %v1942
    %2144 = vmatpush.msra.mxu0 %v1938
    %2145 = vmatpush.msra.mxu0 %v1934
    %2146 = vmatpush.msra.mxu0 %v1930
    %2147 = vmatpush.msra.mxu0 %v1926
    %2148 = vmatpush.msra.mxu0 %v1922
    %2149 = vmatmul.f32.gmra.mxu0 %v1637
    %v2150 = vpop.f32.mrf.mxu0
    %v2151 = vadd.f32 %v2131, %v2150
    %2152 = vdwg.mxu0
    %v2153 = vxor.u32 %v2031, 2147483648
    %v2154 = vmul.f32 %v2153, 1.442695
    %v2155 = vpow.pop %v2154
    %v2156 = vadd.f32 %v2155, 1.0
    %v2157 = vrcp.pop %v2156
    %v2158 = vmul.f32 %v2156, %v2157
    %v2159 = vsub.f32 1.0, %v2158
    %v2160 = vmul.f32 %v2157, %v2159
    %v2161 = vadd.f32 %v2157, %v2160
    %vm2162 = vweird.f32 %v2156
    %vm2163 = vweird.f32 %v2157
    %vm2164 = vmor %vm2162, %vm2163
    %v2165 = vsel %vm2164, %v2157, %v2161
    %v2166 = vand.u32 2147483647, %v2156
    %vm2167 = vcmp.eq.f32.partialorder %v2166, 8.507059e+37
    %v2168 = vand.u32 %v2156, 2147483648
    %v2169 = vor.u32 1.1754944e-38, %v2168
    %v2170 = vsel %vm2167, %v2169, %v2165
    %v2171 = vmul.f32 1.0, %v2170
    %v2172 = vxor.u32 %v2071, 2147483648
    %v2173 = vmul.f32 %v2172, 1.442695
    %v2174 = vpow.pop %v2173
    %v2175 = vadd.f32 %v2174, 1.0
    %v2176 = vrcp.pop %v2175
    %v2177 = vmul.f32 %v2175, %v2176
    %v2178 = vsub.f32 1.0, %v2177
    %v2179 = vmul.f32 %v2176, %v2178
    %v2180 = vadd.f32 %v2176, %v2179
    %vm2181 = vweird.f32 %v2175
    %vm2182 = vweird.f32 %v2176
    %vm2183 = vmor %vm2181, %vm2182
    %v2184 = vsel %vm2183, %v2176, %v2180
    %v2185 = vand.u32 2147483647, %v2175
    %vm2186 = vcmp.eq.f32.partialorder %v2185, 8.507059e+37
    %v2187 = vand.u32 %v2175, 2147483648
    %v2188 = vor.u32 1.1754944e-38, %v2187
    %v2189 = vsel %vm2186, %v2188, %v2184
    %v2190 = vmul.f32 1.0, %v2189
    %v2191 = vtanh.pop %v2111
    %v2192 = vxor.u32 %v2151, 2147483648
    %v2193 = vmul.f32 %v2192, 1.442695
    %v2194 = vpow.pop %v2193
    %v2195 = vadd.f32 %v2194, 1.0
    %v2196 = vrcp.pop %v2195
    %v2197 = vmul.f32 %v2195, %v2196
    %v2198 = vsub.f32 1.0, %v2197
    %v2199 = vmul.f32 %v2196, %v2198
    %v2200 = vadd.f32 %v2196, %v2199
    %vm2201 = vweird.f32 %v2195
    %vm2202 = vweird.f32 %v2196
    %vm2203 = vmor %vm2201, %vm2202
    %v2204 = vsel %vm2203, %v2196, %v2200
    %v2205 = vand.u32 2147483647, %v2195
    %vm2206 = vcmp.eq.f32.partialorder %v2205, 8.507059e+37
    %v2207 = vand.u32 %v2195, 2147483648
    %v2208 = vor.u32 1.1754944e-38, %v2207
    %v2209 = vsel %vm2206, %v2208, %v2204
    %v2210 = vmul.f32 1.0, %v2209
    %v2211 = vmul.f32 %v2190, %v1638
    %v2212 = vmul.f32 %v2171, %v2191
    %v2213 = vadd.f32 %v2211, %v2212
    %v2214 = vtanh.pop %v2213
    %v2215 = vmul.f32 %v2210, %v2214
    %2216 = vst [vmem:[#allocation2] sm:$0xff] %v1854
    %2217 = vst [vmem:[#allocation3] sm:$0xff] %v1852
    %2218 = vst [vmem:[%s463] sm:$0xff] %v2215
    %2219 = vst [vmem:[%s465] sm:$0xff] %v2213
    %s2220 = scalar_lea.vmem [#allocation5], 16
    %2221 = vst [vmem:[%s2220] sm:$0xff] %v2215
    %v2222 = vld [vmem:[#allocation2] sm:$0xff]
    %v2223 = vld [vmem:[#allocation3] sm:$0xff]
    %v2224 = vld [vmem:[%s463] sm:$0xff]
    %v2225 = vld [vmem:[%s465] sm:$0xff]
    %s2226 = scalar_lea.vmem [#allocation4], 96
    %v2227 = vld [vmem:[%s2226] sm:$0xff]
    %v2228 = vld [vmem:[%s2226 + $0x8] sm:$0xff]
    %v2229 = vld [vmem:[%s2226 + $0x10] sm:$0xff]
    %v2230 = vld [vmem:[%s2226 + $0x18] sm:$0xff]
    %v2231 = vld [vmem:[#allocation14] sm:$0xff]
    %v2232 = vld [vmem:[#allocation14 + $0x8] sm:$0xff]
    %v2233 = vld [vmem:[#allocation14 + $0x10] sm:$0xff]
    %v2234 = vld [vmem:[#allocation14 + $0x18] sm:$0xff]
    %v2235 = vld [vmem:[#allocation14 + $0x20] sm:$0xff]
    %v2236 = vld [vmem:[#allocation14 + $0x28] sm:$0xff]
    %v2237 = vld [vmem:[#allocation14 + $0x30] sm:$0xff]
    %v2238 = vld [vmem:[#allocation14 + $0x38] sm:$0xff]
    %v2239 = vld [vmem:[#allocation14 + $0x40] sm:$0xff]
    %v2240 = vld [vmem:[#allocation14 + $0x48] sm:$0xff]
    %v2241 = vld [vmem:[#allocation14 + $0x50] sm:$0xff]
    %v2242 = vld [vmem:[#allocation14 + $0x58] sm:$0xff]
    %v2243 = vld [vmem:[#allocation14 + $0x60] sm:$0xff]
    %v2244 = vld [vmem:[#allocation14 + $0x68] sm:$0xff]
    %v2245 = vld [vmem:[#allocation14 + $0x70] sm:$0xff]
    %v2246 = vld [vmem:[#allocation14 + $0x78] sm:$0xff]
    %v2247 = vld [vmem:[#allocation14 + $0x80] sm:$0xff]
    %v2248 = vld [vmem:[#allocation14 + $0x88] sm:$0xff]
    %v2249 = vld [vmem:[#allocation14 + $0x90] sm:$0xff]
    %v2250 = vld [vmem:[#allocation14 + $0x98] sm:$0xff]
    %v2251 = vld [vmem:[#allocation14 + $0xa0] sm:$0xff]
    %v2252 = vld [vmem:[#allocation14 + $0xa8] sm:$0xff]
    %v2253 = vld [vmem:[#allocation14 + $0xb0] sm:$0xff]
    %v2254 = vld [vmem:[#allocation14 + $0xb8] sm:$0xff]
    %v2255 = vld [vmem:[#allocation14 + $0xc0] sm:$0xff]
    %v2256 = vld [vmem:[#allocation14 + $0xc8] sm:$0xff]
    %v2257 = vld [vmem:[#allocation14 + $0xd0] sm:$0xff]
    %v2258 = vld [vmem:[#allocation14 + $0xd8] sm:$0xff]
    %v2259 = vld [vmem:[#allocation14 + $0xe0] sm:$0xff]
    %v2260 = vld [vmem:[#allocation14 + $0xe8] sm:$0xff]
    %v2261 = vld [vmem:[#allocation14 + $0xf0] sm:$0xff]
    %v2262 = vld [vmem:[#allocation14 + $0xf8] sm:$0xff]
    %v2263 = vld [vmem:[#allocation14 + $0x100] sm:$0xff]
    %v2264 = vld [vmem:[#allocation14 + $0x108] sm:$0xff]
    %v2265 = vld [vmem:[#allocation14 + $0x110] sm:$0xff]
    %v2266 = vld [vmem:[#allocation14 + $0x118] sm:$0xff]
    %v2267 = vld [vmem:[#allocation14 + $0x120] sm:$0xff]
    %v2268 = vld [vmem:[#allocation14 + $0x128] sm:$0xff]
    %v2269 = vld [vmem:[#allocation14 + $0x130] sm:$0xff]
    %v2270 = vld [vmem:[#allocation14 + $0x138] sm:$0xff]
    %v2271 = vld [vmem:[#allocation14 + $0x140] sm:$0xff]
    %v2272 = vld [vmem:[#allocation14 + $0x148] sm:$0xff]
    %v2273 = vld [vmem:[#allocation14 + $0x150] sm:$0xff]
    %v2274 = vld [vmem:[#allocation14 + $0x158] sm:$0xff]
    %v2275 = vld [vmem:[#allocation14 + $0x160] sm:$0xff]
    %v2276 = vld [vmem:[#allocation14 + $0x168] sm:$0xff]
    %v2277 = vld [vmem:[#allocation14 + $0x170] sm:$0xff]
    %v2278 = vld [vmem:[#allocation14 + $0x178] sm:$0xff]
    %v2279 = vld [vmem:[#allocation14 + $0x180] sm:$0xff]
    %v2280 = vld [vmem:[#allocation14 + $0x188] sm:$0xff]
    %v2281 = vld [vmem:[#allocation14 + $0x190] sm:$0xff]
    %v2282 = vld [vmem:[#allocation14 + $0x198] sm:$0xff]
    %v2283 = vld [vmem:[#allocation14 + $0x1a0] sm:$0xff]
    %v2284 = vld [vmem:[#allocation14 + $0x1a8] sm:$0xff]
    %v2285 = vld [vmem:[#allocation14 + $0x1b0] sm:$0xff]
    %v2286 = vld [vmem:[#allocation14 + $0x1b8] sm:$0xff]
    %v2287 = vld [vmem:[#allocation14 + $0x1c0] sm:$0xff]
    %v2288 = vld [vmem:[#allocation14 + $0x1c8] sm:$0xff]
    %v2289 = vld [vmem:[#allocation14 + $0x1d0] sm:$0xff]
    %v2290 = vld [vmem:[#allocation14 + $0x1d8] sm:$0xff]
    %v2291 = vld [vmem:[#allocation14 + $0x1e0] sm:$0xff]
    %v2292 = vld [vmem:[#allocation14 + $0x1e8] sm:$0xff]
    %v2293 = vld [vmem:[#allocation14 + $0x1f0] sm:$0xff]
    %v2294 = vld [vmem:[#allocation14 + $0x1f8] sm:$0xff]
    %2295 = vmatpush.msra.mxu0 %v2291
    %2296 = vmatpush.msra.mxu0 %v2287
    %2297 = vmatpush.msra.mxu0 %v2283
    %2298 = vmatpush.msra.mxu0 %v2279
    %2299 = vmatpush.msra.mxu0 %v2275
    %2300 = vmatpush.msra.mxu0 %v2271
    %2301 = vmatpush.msra.mxu0 %v2267
    %2302 = vmatpush.msra.mxu0 %v2263
    %2303 = vmatpush.msra.mxu0 %v2259
    %2304 = vmatpush.msra.mxu0 %v2255
    %2305 = vmatpush.msra.mxu0 %v2251
    %2306 = vmatpush.msra.mxu0 %v2247
    %2307 = vmatpush.msra.mxu0 %v2243
    %2308 = vmatpush.msra.mxu0 %v2239
    %2309 = vmatpush.msra.mxu0 %v2235
    %2310 = vmatpush.msra.mxu0 %v2231
    %2311 = vmatmul.f32.gmra.mxu0 %v2222
    %v2312 = vpop.f32.mrf.mxu0
    %v2313 = vadd.f32 0.0, %v2312
    %2314 = vdwg.mxu0
    %2315 = vmatpush.msra.mxu0 %v2292
    %2316 = vmatpush.msra.mxu0 %v2288
    %2317 = vmatpush.msra.mxu0 %v2284
    %2318 = vmatpush.msra.mxu0 %v2280
    %2319 = vmatpush.msra.mxu0 %v2276
    %2320 = vmatpush.msra.mxu0 %v2272
    %2321 = vmatpush.msra.mxu0 %v2268
    %2322 = vmatpush.msra.mxu0 %v2264
    %2323 = vmatpush.msra.mxu0 %v2260
    %2324 = vmatpush.msra.mxu0 %v2256
    %2325 = vmatpush.msra.mxu0 %v2252
    %2326 = vmatpush.msra.mxu0 %v2248
    %2327 = vmatpush.msra.mxu0 %v2244
    %2328 = vmatpush.msra.mxu0 %v2240
    %2329 = vmatpush.msra.mxu0 %v2236
    %2330 = vmatpush.msra.mxu0 %v2232
    %2331 = vmatmul.f32.gmra.mxu0 %v2222
    %v2332 = vpop.f32.mrf.mxu0
    %v2333 = vadd.f32 0.0, %v2332
    %2334 = vdwg.mxu0
    %2335 = vmatpush.msra.mxu0 %v2293
    %2336 = vmatpush.msra.mxu0 %v2289
    %2337 = vmatpush.msra.mxu0 %v2285
    %2338 = vmatpush.msra.mxu0 %v2281
    %2339 = vmatpush.msra.mxu0 %v2277
    %2340 = vmatpush.msra.mxu0 %v2273
    %2341 = vmatpush.msra.mxu0 %v2269
    %2342 = vmatpush.msra.mxu0 %v2265
    %2343 = vmatpush.msra.mxu0 %v2261
    %2344 = vmatpush.msra.mxu0 %v2257
    %2345 = vmatpush.msra.mxu0 %v2253
    %2346 = vmatpush.msra.mxu0 %v2249
    %2347 = vmatpush.msra.mxu0 %v2245
    %2348 = vmatpush.msra.mxu0 %v2241
    %2349 = vmatpush.msra.mxu0 %v2237
    %2350 = vmatpush.msra.mxu0 %v2233
    %2351 = vmatmul.f32.gmra.mxu0 %v2222
    %v2352 = vpop.f32.mrf.mxu0
    %v2353 = vadd.f32 0.0, %v2352
    %2354 = vdwg.mxu0
    %2355 = vmatpush.msra.mxu0 %v2294
    %2356 = vmatpush.msra.mxu0 %v2290
    %2357 = vmatpush.msra.mxu0 %v2286
    %2358 = vmatpush.msra.mxu0 %v2282
    %2359 = vmatpush.msra.mxu0 %v2278
    %2360 = vmatpush.msra.mxu0 %v2274
    %2361 = vmatpush.msra.mxu0 %v2270
    %2362 = vmatpush.msra.mxu0 %v2266
    %2363 = vmatpush.msra.mxu0 %v2262
    %2364 = vmatpush.msra.mxu0 %v2258
    %2365 = vmatpush.msra.mxu0 %v2254
    %2366 = vmatpush.msra.mxu0 %v2250
    %2367 = vmatpush.msra.mxu0 %v2246
    %2368 = vmatpush.msra.mxu0 %v2242
    %2369 = vmatpush.msra.mxu0 %v2238
    %2370 = vmatpush.msra.mxu0 %v2234
    %2371 = vmatmul.f32.gmra.mxu0 %v2222
    %v2372 = vpop.f32.mrf.mxu0
    %v2373 = vadd.f32 0.0, %v2372
    %2374 = vdwg.mxu0
    %v2375 = vadd.f32 %v2227, %v2313
    %v2376 = vadd.f32 %v2228, %v2333
    %v2377 = vadd.f32 %v2229, %v2353
    %v2378 = vadd.f32 %v2230, %v2373
    %v2379 = vxor.u32 %v2375, 2147483648
    %v2380 = vmul.f32 %v2379, 1.442695
    %v2381 = vpow.pop %v2380
    %v2382 = vadd.f32 %v2381, 1.0
    %v2383 = vrcp.pop %v2382
    %v2384 = vmul.f32 %v2382, %v2383
    %v2385 = vsub.f32 1.0, %v2384
    %v2386 = vmul.f32 %v2383, %v2385
    %v2387 = vadd.f32 %v2383, %v2386
    %vm2388 = vweird.f32 %v2382
    %vm2389 = vweird.f32 %v2383
    %vm2390 = vmor %vm2388, %vm2389
    %v2391 = vsel %vm2390, %v2383, %v2387
    %v2392 = vand.u32 2147483647, %v2382
    %vm2393 = vcmp.eq.f32.partialorder %v2392, 8.507059e+37
    %v2394 = vand.u32 %v2382, 2147483648
    %v2395 = vor.u32 1.1754944e-38, %v2394
    %v2396 = vsel %vm2393, %v2395, %v2391
    %v2397 = vmul.f32 1.0, %v2396
    %v2398 = vxor.u32 %v2376, 2147483648
    %v2399 = vmul.f32 %v2398, 1.442695
    %v2400 = vpow.pop %v2399
    %v2401 = vadd.f32 %v2400, 1.0
    %v2402 = vrcp.pop %v2401
    %v2403 = vmul.f32 %v2401, %v2402
    %v2404 = vsub.f32 1.0, %v2403
    %v2405 = vmul.f32 %v2402, %v2404
    %v2406 = vadd.f32 %v2402, %v2405
    %vm2407 = vweird.f32 %v2401
    %vm2408 = vweird.f32 %v2402
    %vm2409 = vmor %vm2407, %vm2408
    %v2410 = vsel %vm2409, %v2402, %v2406
    %v2411 = vand.u32 2147483647, %v2401
    %vm2412 = vcmp.eq.f32.partialorder %v2411, 8.507059e+37
    %v2413 = vand.u32 %v2401, 2147483648
    %v2414 = vor.u32 1.1754944e-38, %v2413
    %v2415 = vsel %vm2412, %v2414, %v2410
    %v2416 = vmul.f32 1.0, %v2415
    %v2417 = vtanh.pop %v2377
    %v2418 = vxor.u32 %v2378, 2147483648
    %v2419 = vmul.f32 %v2418, 1.442695
    %v2420 = vpow.pop %v2419
    %v2421 = vadd.f32 %v2420, 1.0
    %v2422 = vrcp.pop %v2421
    %v2423 = vmul.f32 %v2421, %v2422
    %v2424 = vsub.f32 1.0, %v2423
    %v2425 = vmul.f32 %v2422, %v2424
    %v2426 = vadd.f32 %v2422, %v2425
    %vm2427 = vweird.f32 %v2421
    %vm2428 = vweird.f32 %v2422
    %vm2429 = vmor %vm2427, %vm2428
    %v2430 = vsel %vm2429, %v2422, %v2426
    %v2431 = vand.u32 2147483647, %v2421
    %vm2432 = vcmp.eq.f32.partialorder %v2431, 8.507059e+37
    %v2433 = vand.u32 %v2421, 2147483648
    %v2434 = vor.u32 1.1754944e-38, %v2433
    %v2435 = vsel %vm2432, %v2434, %v2430
    %v2436 = vmul.f32 1.0, %v2435
    %v2437 = vmul.f32 %v2416, %v2223
    %v2438 = vmul.f32 %v2397, %v2417
    %v2439 = vadd.f32 %v2437, %v2438
    %v2440 = vtanh.pop %v2439
    %v2441 = vmul.f32 %v2436, %v2440
    %v2442 = vld [vmem:[#allocation15] sm:$0xff]
    %v2443 = vld [vmem:[#allocation15 + $0x8] sm:$0xff]
    %v2444 = vld [vmem:[#allocation15 + $0x10] sm:$0xff]
    %v2445 = vld [vmem:[#allocation15 + $0x18] sm:$0xff]
    %v2446 = vld [vmem:[#allocation15 + $0x20] sm:$0xff]
    %v2447 = vld [vmem:[#allocation15 + $0x28] sm:$0xff]
    %v2448 = vld [vmem:[#allocation15 + $0x30] sm:$0xff]
    %v2449 = vld [vmem:[#allocation15 + $0x38] sm:$0xff]
    %v2450 = vld [vmem:[#allocation15 + $0x40] sm:$0xff]
    %v2451 = vld [vmem:[#allocation15 + $0x48] sm:$0xff]
    %v2452 = vld [vmem:[#allocation15 + $0x50] sm:$0xff]
    %v2453 = vld [vmem:[#allocation15 + $0x58] sm:$0xff]
    %v2454 = vld [vmem:[#allocation15 + $0x60] sm:$0xff]
    %v2455 = vld [vmem:[#allocation15 + $0x68] sm:$0xff]
    %v2456 = vld [vmem:[#allocation15 + $0x70] sm:$0xff]
    %v2457 = vld [vmem:[#allocation15 + $0x78] sm:$0xff]
    %v2458 = vld [vmem:[#allocation15 + $0x80] sm:$0xff]
    %v2459 = vld [vmem:[#allocation15 + $0x88] sm:$0xff]
    %v2460 = vld [vmem:[#allocation15 + $0x90] sm:$0xff]
    %v2461 = vld [vmem:[#allocation15 + $0x98] sm:$0xff]
    %v2462 = vld [vmem:[#allocation15 + $0xa0] sm:$0xff]
    %v2463 = vld [vmem:[#allocation15 + $0xa8] sm:$0xff]
    %v2464 = vld [vmem:[#allocation15 + $0xb0] sm:$0xff]
    %v2465 = vld [vmem:[#allocation15 + $0xb8] sm:$0xff]
    %v2466 = vld [vmem:[#allocation15 + $0xc0] sm:$0xff]
    %v2467 = vld [vmem:[#allocation15 + $0xc8] sm:$0xff]
    %v2468 = vld [vmem:[#allocation15 + $0xd0] sm:$0xff]
    %v2469 = vld [vmem:[#allocation15 + $0xd8] sm:$0xff]
    %v2470 = vld [vmem:[#allocation15 + $0xe0] sm:$0xff]
    %v2471 = vld [vmem:[#allocation15 + $0xe8] sm:$0xff]
    %v2472 = vld [vmem:[#allocation15 + $0xf0] sm:$0xff]
    %v2473 = vld [vmem:[#allocation15 + $0xf8] sm:$0xff]
    %v2474 = vld [vmem:[#allocation15 + $0x100] sm:$0xff]
    %v2475 = vld [vmem:[#allocation15 + $0x108] sm:$0xff]
    %v2476 = vld [vmem:[#allocation15 + $0x110] sm:$0xff]
    %v2477 = vld [vmem:[#allocation15 + $0x118] sm:$0xff]
    %v2478 = vld [vmem:[#allocation15 + $0x120] sm:$0xff]
    %v2479 = vld [vmem:[#allocation15 + $0x128] sm:$0xff]
    %v2480 = vld [vmem:[#allocation15 + $0x130] sm:$0xff]
    %v2481 = vld [vmem:[#allocation15 + $0x138] sm:$0xff]
    %v2482 = vld [vmem:[#allocation15 + $0x140] sm:$0xff]
    %v2483 = vld [vmem:[#allocation15 + $0x148] sm:$0xff]
    %v2484 = vld [vmem:[#allocation15 + $0x150] sm:$0xff]
    %v2485 = vld [vmem:[#allocation15 + $0x158] sm:$0xff]
    %v2486 = vld [vmem:[#allocation15 + $0x160] sm:$0xff]
    %v2487 = vld [vmem:[#allocation15 + $0x168] sm:$0xff]
    %v2488 = vld [vmem:[#allocation15 + $0x170] sm:$0xff]
    %v2489 = vld [vmem:[#allocation15 + $0x178] sm:$0xff]
    %v2490 = vld [vmem:[#allocation15 + $0x180] sm:$0xff]
    %v2491 = vld [vmem:[#allocation15 + $0x188] sm:$0xff]
    %v2492 = vld [vmem:[#allocation15 + $0x190] sm:$0xff]
    %v2493 = vld [vmem:[#allocation15 + $0x198] sm:$0xff]
    %v2494 = vld [vmem:[#allocation15 + $0x1a0] sm:$0xff]
    %v2495 = vld [vmem:[#allocation15 + $0x1a8] sm:$0xff]
    %v2496 = vld [vmem:[#allocation15 + $0x1b0] sm:$0xff]
    %v2497 = vld [vmem:[#allocation15 + $0x1b8] sm:$0xff]
    %v2498 = vld [vmem:[#allocation15 + $0x1c0] sm:$0xff]
    %v2499 = vld [vmem:[#allocation15 + $0x1c8] sm:$0xff]
    %v2500 = vld [vmem:[#allocation15 + $0x1d0] sm:$0xff]
    %v2501 = vld [vmem:[#allocation15 + $0x1d8] sm:$0xff]
    %v2502 = vld [vmem:[#allocation15 + $0x1e0] sm:$0xff]
    %v2503 = vld [vmem:[#allocation15 + $0x1e8] sm:$0xff]
    %v2504 = vld [vmem:[#allocation15 + $0x1f0] sm:$0xff]
    %v2505 = vld [vmem:[#allocation15 + $0x1f8] sm:$0xff]
    %v2506 = vld [vmem:[#allocation15 + $0x200] sm:$0xff]
    %v2507 = vld [vmem:[#allocation15 + $0x208] sm:$0xff]
    %v2508 = vld [vmem:[#allocation15 + $0x210] sm:$0xff]
    %v2509 = vld [vmem:[#allocation15 + $0x218] sm:$0xff]
    %v2510 = vld [vmem:[#allocation15 + $0x220] sm:$0xff]
    %v2511 = vld [vmem:[#allocation15 + $0x228] sm:$0xff]
    %v2512 = vld [vmem:[#allocation15 + $0x230] sm:$0xff]
    %v2513 = vld [vmem:[#allocation15 + $0x238] sm:$0xff]
    %v2514 = vld [vmem:[#allocation15 + $0x240] sm:$0xff]
    %v2515 = vld [vmem:[#allocation15 + $0x248] sm:$0xff]
    %v2516 = vld [vmem:[#allocation15 + $0x250] sm:$0xff]
    %v2517 = vld [vmem:[#allocation15 + $0x258] sm:$0xff]
    %v2518 = vld [vmem:[#allocation15 + $0x260] sm:$0xff]
    %v2519 = vld [vmem:[#allocation15 + $0x268] sm:$0xff]
    %v2520 = vld [vmem:[#allocation15 + $0x270] sm:$0xff]
    %v2521 = vld [vmem:[#allocation15 + $0x278] sm:$0xff]
    %v2522 = vld [vmem:[#allocation15 + $0x280] sm:$0xff]
    %v2523 = vld [vmem:[#allocation15 + $0x288] sm:$0xff]
    %v2524 = vld [vmem:[#allocation15 + $0x290] sm:$0xff]
    %v2525 = vld [vmem:[#allocation15 + $0x298] sm:$0xff]
    %v2526 = vld [vmem:[#allocation15 + $0x2a0] sm:$0xff]
    %v2527 = vld [vmem:[#allocation15 + $0x2a8] sm:$0xff]
    %v2528 = vld [vmem:[#allocation15 + $0x2b0] sm:$0xff]
    %v2529 = vld [vmem:[#allocation15 + $0x2b8] sm:$0xff]
    %v2530 = vld [vmem:[#allocation15 + $0x2c0] sm:$0xff]
    %v2531 = vld [vmem:[#allocation15 + $0x2c8] sm:$0xff]
    %v2532 = vld [vmem:[#allocation15 + $0x2d0] sm:$0xff]
    %v2533 = vld [vmem:[#allocation15 + $0x2d8] sm:$0xff]
    %v2534 = vld [vmem:[#allocation15 + $0x2e0] sm:$0xff]
    %v2535 = vld [vmem:[#allocation15 + $0x2e8] sm:$0xff]
    %v2536 = vld [vmem:[#allocation15 + $0x2f0] sm:$0xff]
    %v2537 = vld [vmem:[#allocation15 + $0x2f8] sm:$0xff]
    %v2538 = vld [vmem:[#allocation15 + $0x300] sm:$0xff]
    %v2539 = vld [vmem:[#allocation15 + $0x308] sm:$0xff]
    %v2540 = vld [vmem:[#allocation15 + $0x310] sm:$0xff]
    %v2541 = vld [vmem:[#allocation15 + $0x318] sm:$0xff]
    %v2542 = vld [vmem:[#allocation15 + $0x320] sm:$0xff]
    %v2543 = vld [vmem:[#allocation15 + $0x328] sm:$0xff]
    %v2544 = vld [vmem:[#allocation15 + $0x330] sm:$0xff]
    %v2545 = vld [vmem:[#allocation15 + $0x338] sm:$0xff]
    %v2546 = vld [vmem:[#allocation15 + $0x340] sm:$0xff]
    %v2547 = vld [vmem:[#allocation15 + $0x348] sm:$0xff]
    %v2548 = vld [vmem:[#allocation15 + $0x350] sm:$0xff]
    %v2549 = vld [vmem:[#allocation15 + $0x358] sm:$0xff]
    %v2550 = vld [vmem:[#allocation15 + $0x360] sm:$0xff]
    %v2551 = vld [vmem:[#allocation15 + $0x368] sm:$0xff]
    %v2552 = vld [vmem:[#allocation15 + $0x370] sm:$0xff]
    %v2553 = vld [vmem:[#allocation15 + $0x378] sm:$0xff]
    %v2554 = vld [vmem:[#allocation15 + $0x380] sm:$0xff]
    %v2555 = vld [vmem:[#allocation15 + $0x388] sm:$0xff]
    %v2556 = vld [vmem:[#allocation15 + $0x390] sm:$0xff]
    %v2557 = vld [vmem:[#allocation15 + $0x398] sm:$0xff]
    %v2558 = vld [vmem:[#allocation15 + $0x3a0] sm:$0xff]
    %v2559 = vld [vmem:[#allocation15 + $0x3a8] sm:$0xff]
    %v2560 = vld [vmem:[#allocation15 + $0x3b0] sm:$0xff]
    %v2561 = vld [vmem:[#allocation15 + $0x3b8] sm:$0xff]
    %v2562 = vld [vmem:[#allocation15 + $0x3c0] sm:$0xff]
    %v2563 = vld [vmem:[#allocation15 + $0x3c8] sm:$0xff]
    %v2564 = vld [vmem:[#allocation15 + $0x3d0] sm:$0xff]
    %v2565 = vld [vmem:[#allocation15 + $0x3d8] sm:$0xff]
    %v2566 = vld [vmem:[#allocation15 + $0x3e0] sm:$0xff]
    %v2567 = vld [vmem:[#allocation15 + $0x3e8] sm:$0xff]
    %v2568 = vld [vmem:[#allocation15 + $0x3f0] sm:$0xff]
    %v2569 = vld [vmem:[#allocation15 + $0x3f8] sm:$0xff]
    %v2570 = vld [vmem:[#allocation17] sm:$0xf]
    %v2572 = vperm.slane %v2570, 0
    %v2573 = vperm.slane %v2570, 1
    %v2574 = vperm.slane %v2570, 2
    %v2575 = vperm.slane %v2570, 3
    %2580 = vmatpush.msra.mxu0 %v2502
    %2581 = vmatpush.msra.mxu0 %v2498
    %2582 = vmatpush.msra.mxu0 %v2494
    %2583 = vmatpush.msra.mxu0 %v2490
    %2584 = vmatpush.msra.mxu0 %v2486
    %2585 = vmatpush.msra.mxu0 %v2482
    %2586 = vmatpush.msra.mxu0 %v2478
    %2587 = vmatpush.msra.mxu0 %v2474
    %2588 = vmatpush.msra.mxu0 %v2470
    %2589 = vmatpush.msra.mxu0 %v2466
    %2590 = vmatpush.msra.mxu0 %v2462
    %2591 = vmatpush.msra.mxu0 %v2458
    %2592 = vmatpush.msra.mxu0 %v2454
    %2593 = vmatpush.msra.mxu0 %v2450
    %2594 = vmatpush.msra.mxu0 %v2446
    %2595 = vmatpush.msra.mxu0 %v2442
    %2596 = vmatmul.f32.gmra.mxu0 %v2441
    %v2597 = vpop.f32.mrf.mxu0
    %v2598 = vadd.f32 %v2572, %v2597
    %2599 = vdwg.mxu0
    %2600 = vmatpush.msra.mxu0 %v2566
    %2601 = vmatpush.msra.mxu0 %v2562
    %2602 = vmatpush.msra.mxu0 %v2558
    %2603 = vmatpush.msra.mxu0 %v2554
    %2604 = vmatpush.msra.mxu0 %v2550
    %2605 = vmatpush.msra.mxu0 %v2546
    %2606 = vmatpush.msra.mxu0 %v2542
    %2607 = vmatpush.msra.mxu0 %v2538
    %2608 = vmatpush.msra.mxu0 %v2534
    %2609 = vmatpush.msra.mxu0 %v2530
    %2610 = vmatpush.msra.mxu0 %v2526
    %2611 = vmatpush.msra.mxu0 %v2522
    %2612 = vmatpush.msra.mxu0 %v2518
    %2613 = vmatpush.msra.mxu0 %v2514
    %2614 = vmatpush.msra.mxu0 %v2510
    %2615 = vmatpush.msra.mxu0 %v2506
    %2616 = vmatmul.f32.gmra.mxu0 %v2224
    %v2617 = vpop.f32.mrf.mxu0
    %v2618 = vadd.f32 %v2598, %v2617
    %2619 = vdwg.mxu0
    %2620 = vmatpush.msra.mxu0 %v2503
    %2621 = vmatpush.msra.mxu0 %v2499
    %2622 = vmatpush.msra.mxu0 %v2495
    %2623 = vmatpush.msra.mxu0 %v2491
    %2624 = vmatpush.msra.mxu0 %v2487
    %2625 = vmatpush.msra.mxu0 %v2483
    %2626 = vmatpush.msra.mxu0 %v2479
    %2627 = vmatpush.msra.mxu0 %v2475
    %2628 = vmatpush.msra.mxu0 %v2471
    %2629 = vmatpush.msra.mxu0 %v2467
    %2630 = vmatpush.msra.mxu0 %v2463
    %2631 = vmatpush.msra.mxu0 %v2459
    %2632 = vmatpush.msra.mxu0 %v2455
    %2633 = vmatpush.msra.mxu0 %v2451
    %2634 = vmatpush.msra.mxu0 %v2447
    %2635 = vmatpush.msra.mxu0 %v2443
    %2636 = vmatmul.f32.gmra.mxu0 %v2441
    %v2637 = vpop.f32.mrf.mxu0
    %v2638 = vadd.f32 %v2573, %v2637
    %2639 = vdwg.mxu0
    %2640 = vmatpush.msra.mxu0 %v2567
    %2641 = vmatpush.msra.mxu0 %v2563
    %2642 = vmatpush.msra.mxu0 %v2559
    %2643 = vmatpush.msra.mxu0 %v2555
    %2644 = vmatpush.msra.mxu0 %v2551
    %2645 = vmatpush.msra.mxu0 %v2547
    %2646 = vmatpush.msra.mxu0 %v2543
    %2647 = vmatpush.msra.mxu0 %v2539
    %2648 = vmatpush.msra.mxu0 %v2535
    %2649 = vmatpush.msra.mxu0 %v2531
    %2650 = vmatpush.msra.mxu0 %v2527
    %2651 = vmatpush.msra.mxu0 %v2523
    %2652 = vmatpush.msra.mxu0 %v2519
    %2653 = vmatpush.msra.mxu0 %v2515
    %2654 = vmatpush.msra.mxu0 %v2511
    %2655 = vmatpush.msra.mxu0 %v2507
    %2656 = vmatmul.f32.gmra.mxu0 %v2224
    %v2657 = vpop.f32.mrf.mxu0
    %v2658 = vadd.f32 %v2638, %v2657
    %2659 = vdwg.mxu0
    %2660 = vmatpush.msra.mxu0 %v2504
    %2661 = vmatpush.msra.mxu0 %v2500
    %2662 = vmatpush.msra.mxu0 %v2496
    %2663 = vmatpush.msra.mxu0 %v2492
    %2664 = vmatpush.msra.mxu0 %v2488
    %2665 = vmatpush.msra.mxu0 %v2484
    %2666 = vmatpush.msra.mxu0 %v2480
    %2667 = vmatpush.msra.mxu0 %v2476
    %2668 = vmatpush.msra.mxu0 %v2472
    %2669 = vmatpush.msra.mxu0 %v2468
    %2670 = vmatpush.msra.mxu0 %v2464
    %2671 = vmatpush.msra.mxu0 %v2460
    %2672 = vmatpush.msra.mxu0 %v2456
    %2673 = vmatpush.msra.mxu0 %v2452
    %2674 = vmatpush.msra.mxu0 %v2448
    %2675 = vmatpush.msra.mxu0 %v2444
    %2676 = vmatmul.f32.gmra.mxu0 %v2441
    %v2677 = vpop.f32.mrf.mxu0
    %v2678 = vadd.f32 %v2574, %v2677
    %2679 = vdwg.mxu0
    %2680 = vmatpush.msra.mxu0 %v2568
    %2681 = vmatpush.msra.mxu0 %v2564
    %2682 = vmatpush.msra.mxu0 %v2560
    %2683 = vmatpush.msra.mxu0 %v2556
    %2684 = vmatpush.msra.mxu0 %v2552
    %2685 = vmatpush.msra.mxu0 %v2548
    %2686 = vmatpush.msra.mxu0 %v2544
    %2687 = vmatpush.msra.mxu0 %v2540
    %2688 = vmatpush.msra.mxu0 %v2536
    %2689 = vmatpush.msra.mxu0 %v2532
    %2690 = vmatpush.msra.mxu0 %v2528
    %2691 = vmatpush.msra.mxu0 %v2524
    %2692 = vmatpush.msra.mxu0 %v2520
    %2693 = vmatpush.msra.mxu0 %v2516
    %2694 = vmatpush.msra.mxu0 %v2512
    %2695 = vmatpush.msra.mxu0 %v2508
    %2696 = vmatmul.f32.gmra.mxu0 %v2224
    %v2697 = vpop.f32.mrf.mxu0
    %v2698 = vadd.f32 %v2678, %v2697
    %2699 = vdwg.mxu0
    %2700 = vmatpush.msra.mxu0 %v2505
    %2701 = vmatpush.msra.mxu0 %v2501
    %2702 = vmatpush.msra.mxu0 %v2497
    %2703 = vmatpush.msra.mxu0 %v2493
    %2704 = vmatpush.msra.mxu0 %v2489
    %2705 = vmatpush.msra.mxu0 %v2485
    %2706 = vmatpush.msra.mxu0 %v2481
    %2707 = vmatpush.msra.mxu0 %v2477
    %2708 = vmatpush.msra.mxu0 %v2473
    %2709 = vmatpush.msra.mxu0 %v2469
    %2710 = vmatpush.msra.mxu0 %v2465
    %2711 = vmatpush.msra.mxu0 %v2461
    %2712 = vmatpush.msra.mxu0 %v2457
    %2713 = vmatpush.msra.mxu0 %v2453
    %2714 = vmatpush.msra.mxu0 %v2449
    %2715 = vmatpush.msra.mxu0 %v2445
    %2716 = vmatmul.f32.gmra.mxu0 %v2441
    %v2717 = vpop.f32.mrf.mxu0
    %v2718 = vadd.f32 %v2575, %v2717
    %2719 = vdwg.mxu0
    %2720 = vmatpush.msra.mxu0 %v2569
    %2721 = vmatpush.msra.mxu0 %v2565
    %2722 = vmatpush.msra.mxu0 %v2561
    %2723 = vmatpush.msra.mxu0 %v2557
    %2724 = vmatpush.msra.mxu0 %v2553
    %2725 = vmatpush.msra.mxu0 %v2549
    %2726 = vmatpush.msra.mxu0 %v2545
    %2727 = vmatpush.msra.mxu0 %v2541
    %2728 = vmatpush.msra.mxu0 %v2537
    %2729 = vmatpush.msra.mxu0 %v2533
    %2730 = vmatpush.msra.mxu0 %v2529
    %2731 = vmatpush.msra.mxu0 %v2525
    %2732 = vmatpush.msra.mxu0 %v2521
    %2733 = vmatpush.msra.mxu0 %v2517
    %2734 = vmatpush.msra.mxu0 %v2513
    %2735 = vmatpush.msra.mxu0 %v2509
    %2736 = vmatmul.f32.gmra.mxu0 %v2224
    %v2737 = vpop.f32.mrf.mxu0
    %v2738 = vadd.f32 %v2718, %v2737
    %2739 = vdwg.mxu0
    %v2740 = vxor.u32 %v2618, 2147483648
    %v2741 = vmul.f32 %v2740, 1.442695
    %v2742 = vpow.pop %v2741
    %v2743 = vadd.f32 %v2742, 1.0
    %v2744 = vrcp.pop %v2743
    %v2745 = vmul.f32 %v2743, %v2744
    %v2746 = vsub.f32 1.0, %v2745
    %v2747 = vmul.f32 %v2744, %v2746
    %v2748 = vadd.f32 %v2744, %v2747
    %vm2749 = vweird.f32 %v2743
    %vm2750 = vweird.f32 %v2744
    %vm2751 = vmor %vm2749, %vm2750
    %v2752 = vsel %vm2751, %v2744, %v2748
    %v2753 = vand.u32 2147483647, %v2743
    %vm2754 = vcmp.eq.f32.partialorder %v2753, 8.507059e+37
    %v2755 = vand.u32 %v2743, 2147483648
    %v2756 = vor.u32 1.1754944e-38, %v2755
    %v2757 = vsel %vm2754, %v2756, %v2752
    %v2758 = vmul.f32 1.0, %v2757
    %v2759 = vxor.u32 %v2658, 2147483648
    %v2760 = vmul.f32 %v2759, 1.442695
    %v2761 = vpow.pop %v2760
    %v2762 = vadd.f32 %v2761, 1.0
    %v2763 = vrcp.pop %v2762
    %v2764 = vmul.f32 %v2762, %v2763
    %v2765 = vsub.f32 1.0, %v2764
    %v2766 = vmul.f32 %v2763, %v2765
    %v2767 = vadd.f32 %v2763, %v2766
    %vm2768 = vweird.f32 %v2762
    %vm2769 = vweird.f32 %v2763
    %vm2770 = vmor %vm2768, %vm2769
    %v2771 = vsel %vm2770, %v2763, %v2767
    %v2772 = vand.u32 2147483647, %v2762
    %vm2773 = vcmp.eq.f32.partialorder %v2772, 8.507059e+37
    %v2774 = vand.u32 %v2762, 2147483648
    %v2775 = vor.u32 1.1754944e-38, %v2774
    %v2776 = vsel %vm2773, %v2775, %v2771
    %v2777 = vmul.f32 1.0, %v2776
    %v2778 = vtanh.pop %v2698
    %v2779 = vxor.u32 %v2738, 2147483648
    %v2780 = vmul.f32 %v2779, 1.442695
    %v2781 = vpow.pop %v2780
    %v2782 = vadd.f32 %v2781, 1.0
    %v2783 = vrcp.pop %v2782
    %v2784 = vmul.f32 %v2782, %v2783
    %v2785 = vsub.f32 1.0, %v2784
    %v2786 = vmul.f32 %v2783, %v2785
    %v2787 = vadd.f32 %v2783, %v2786
    %vm2788 = vweird.f32 %v2782
    %vm2789 = vweird.f32 %v2783
    %vm2790 = vmor %vm2788, %vm2789
    %v2791 = vsel %vm2790, %v2783, %v2787
    %v2792 = vand.u32 2147483647, %v2782
    %vm2793 = vcmp.eq.f32.partialorder %v2792, 8.507059e+37
    %v2794 = vand.u32 %v2782, 2147483648
    %v2795 = vor.u32 1.1754944e-38, %v2794
    %v2796 = vsel %vm2793, %v2795, %v2791
    %v2797 = vmul.f32 1.0, %v2796
    %v2798 = vmul.f32 %v2777, %v2225
    %v2799 = vmul.f32 %v2758, %v2778
    %v2800 = vadd.f32 %v2798, %v2799
    %v2801 = vtanh.pop %v2800
    %v2802 = vmul.f32 %v2797, %v2801
    %2803 = vst [vmem:[#allocation2] sm:$0xff] %v2441
    %2804 = vst [vmem:[#allocation3] sm:$0xff] %v2439
    %2805 = vst [vmem:[%s463] sm:$0xff] %v2802
    %2806 = vst [vmem:[%s465] sm:$0xff] %v2800
    %s2807 = scalar_lea.vmem [#allocation5], 24
    %2808 = vst [vmem:[%s2807] sm:$0xff] %v2802
    %v2809 = vld [vmem:[#allocation2] sm:$0xff]
    %v2810 = vld [vmem:[#allocation3] sm:$0xff]
    %v2811 = vld [vmem:[%s463] sm:$0xff]
    %v2812 = vld [vmem:[%s465] sm:$0xff]
    %s2813 = scalar_lea.vmem [#allocation4], 128
    %v2814 = vld [vmem:[%s2813] sm:$0xff]
    %v2815 = vld [vmem:[%s2813 + $0x8] sm:$0xff]
    %v2816 = vld [vmem:[%s2813 + $0x10] sm:$0xff]
    %v2817 = vld [vmem:[%s2813 + $0x18] sm:$0xff]
    %v2818 = vld [vmem:[#allocation14] sm:$0xff]
    %v2819 = vld [vmem:[#allocation14 + $0x8] sm:$0xff]
    %v2820 = vld [vmem:[#allocation14 + $0x10] sm:$0xff]
    %v2821 = vld [vmem:[#allocation14 + $0x18] sm:$0xff]
    %v2822 = vld [vmem:[#allocation14 + $0x20] sm:$0xff]
    %v2823 = vld [vmem:[#allocation14 + $0x28] sm:$0xff]
    %v2824 = vld [vmem:[#allocation14 + $0x30] sm:$0xff]
    %v2825 = vld [vmem:[#allocation14 + $0x38] sm:$0xff]
    %v2826 = vld [vmem:[#allocation14 + $0x40] sm:$0xff]
    %v2827 = vld [vmem:[#allocation14 + $0x48] sm:$0xff]
    %v2828 = vld [vmem:[#allocation14 + $0x50] sm:$0xff]
    %v2829 = vld [vmem:[#allocation14 + $0x58] sm:$0xff]
    %v2830 = vld [vmem:[#allocation14 + $0x60] sm:$0xff]
    %v2831 = vld [vmem:[#allocation14 + $0x68] sm:$0xff]
    %v2832 = vld [vmem:[#allocation14 + $0x70] sm:$0xff]
    %v2833 = vld [vmem:[#allocation14 + $0x78] sm:$0xff]
    %v2834 = vld [vmem:[#allocation14 + $0x80] sm:$0xff]
    %v2835 = vld [vmem:[#allocation14 + $0x88] sm:$0xff]
    %v2836 = vld [vmem:[#allocation14 + $0x90] sm:$0xff]
    %v2837 = vld [vmem:[#allocation14 + $0x98] sm:$0xff]
    %v2838 = vld [vmem:[#allocation14 + $0xa0] sm:$0xff]
    %v2839 = vld [vmem:[#allocation14 + $0xa8] sm:$0xff]
    %v2840 = vld [vmem:[#allocation14 + $0xb0] sm:$0xff]
    %v2841 = vld [vmem:[#allocation14 + $0xb8] sm:$0xff]
    %v2842 = vld [vmem:[#allocation14 + $0xc0] sm:$0xff]
    %v2843 = vld [vmem:[#allocation14 + $0xc8] sm:$0xff]
    %v2844 = vld [vmem:[#allocation14 + $0xd0] sm:$0xff]
    %v2845 = vld [vmem:[#allocation14 + $0xd8] sm:$0xff]
    %v2846 = vld [vmem:[#allocation14 + $0xe0] sm:$0xff]
    %v2847 = vld [vmem:[#allocation14 + $0xe8] sm:$0xff]
    %v2848 = vld [vmem:[#allocation14 + $0xf0] sm:$0xff]
    %v2849 = vld [vmem:[#allocation14 + $0xf8] sm:$0xff]
    %v2850 = vld [vmem:[#allocation14 + $0x100] sm:$0xff]
    %v2851 = vld [vmem:[#allocation14 + $0x108] sm:$0xff]
    %v2852 = vld [vmem:[#allocation14 + $0x110] sm:$0xff]
    %v2853 = vld [vmem:[#allocation14 + $0x118] sm:$0xff]
    %v2854 = vld [vmem:[#allocation14 + $0x120] sm:$0xff]
    %v2855 = vld [vmem:[#allocation14 + $0x128] sm:$0xff]
    %v2856 = vld [vmem:[#allocation14 + $0x130] sm:$0xff]
    %v2857 = vld [vmem:[#allocation14 + $0x138] sm:$0xff]
    %v2858 = vld [vmem:[#allocation14 + $0x140] sm:$0xff]
    %v2859 = vld [vmem:[#allocation14 + $0x148] sm:$0xff]
    %v2860 = vld [vmem:[#allocation14 + $0x150] sm:$0xff]
    %v2861 = vld [vmem:[#allocation14 + $0x158] sm:$0xff]
    %v2862 = vld [vmem:[#allocation14 + $0x160] sm:$0xff]
    %v2863 = vld [vmem:[#allocation14 + $0x168] sm:$0xff]
    %v2864 = vld [vmem:[#allocation14 + $0x170] sm:$0xff]
    %v2865 = vld [vmem:[#allocation14 + $0x178] sm:$0xff]
    %v2866 = vld [vmem:[#allocation14 + $0x180] sm:$0xff]
    %v2867 = vld [vmem:[#allocation14 + $0x188] sm:$0xff]
    %v2868 = vld [vmem:[#allocation14 + $0x190] sm:$0xff]
    %v2869 = vld [vmem:[#allocation14 + $0x198] sm:$0xff]
    %v2870 = vld [vmem:[#allocation14 + $0x1a0] sm:$0xff]
    %v2871 = vld [vmem:[#allocation14 + $0x1a8] sm:$0xff]
    %v2872 = vld [vmem:[#allocation14 + $0x1b0] sm:$0xff]
    %v2873 = vld [vmem:[#allocation14 + $0x1b8] sm:$0xff]
    %v2874 = vld [vmem:[#allocation14 + $0x1c0] sm:$0xff]
    %v2875 = vld [vmem:[#allocation14 + $0x1c8] sm:$0xff]
    %v2876 = vld [vmem:[#allocation14 + $0x1d0] sm:$0xff]
    %v2877 = vld [vmem:[#allocation14 + $0x1d8] sm:$0xff]
    %v2878 = vld [vmem:[#allocation14 + $0x1e0] sm:$0xff]
    %v2879 = vld [vmem:[#allocation14 + $0x1e8] sm:$0xff]
    %v2880 = vld [vmem:[#allocation14 + $0x1f0] sm:$0xff]
    %v2881 = vld [vmem:[#allocation14 + $0x1f8] sm:$0xff]
    %2882 = vmatpush.msra.mxu0 %v2878
    %2883 = vmatpush.msra.mxu0 %v2874
    %2884 = vmatpush.msra.mxu0 %v2870
    %2885 = vmatpush.msra.mxu0 %v2866
    %2886 = vmatpush.msra.mxu0 %v2862
    %2887 = vmatpush.msra.mxu0 %v2858
    %2888 = vmatpush.msra.mxu0 %v2854
    %2889 = vmatpush.msra.mxu0 %v2850
    %2890 = vmatpush.msra.mxu0 %v2846
    %2891 = vmatpush.msra.mxu0 %v2842
    %2892 = vmatpush.msra.mxu0 %v2838
    %2893 = vmatpush.msra.mxu0 %v2834
    %2894 = vmatpush.msra.mxu0 %v2830
    %2895 = vmatpush.msra.mxu0 %v2826
    %2896 = vmatpush.msra.mxu0 %v2822
    %2897 = vmatpush.msra.mxu0 %v2818
    %2898 = vmatmul.f32.gmra.mxu0 %v2809
    %v2899 = vpop.f32.mrf.mxu0
    %v2900 = vadd.f32 0.0, %v2899
    %2901 = vdwg.mxu0
    %2902 = vmatpush.msra.mxu0 %v2879
    %2903 = vmatpush.msra.mxu0 %v2875
    %2904 = vmatpush.msra.mxu0 %v2871
    %2905 = vmatpush.msra.mxu0 %v2867
    %2906 = vmatpush.msra.mxu0 %v2863
    %2907 = vmatpush.msra.mxu0 %v2859
    %2908 = vmatpush.msra.mxu0 %v2855
    %2909 = vmatpush.msra.mxu0 %v2851
    %2910 = vmatpush.msra.mxu0 %v2847
    %2911 = vmatpush.msra.mxu0 %v2843
    %2912 = vmatpush.msra.mxu0 %v2839
    %2913 = vmatpush.msra.mxu0 %v2835
    %2914 = vmatpush.msra.mxu0 %v2831
    %2915 = vmatpush.msra.mxu0 %v2827
    %2916 = vmatpush.msra.mxu0 %v2823
    %2917 = vmatpush.msra.mxu0 %v2819
    %2918 = vmatmul.f32.gmra.mxu0 %v2809
    %v2919 = vpop.f32.mrf.mxu0
    %v2920 = vadd.f32 0.0, %v2919
    %2921 = vdwg.mxu0
    %2922 = vmatpush.msra.mxu0 %v2880
    %2923 = vmatpush.msra.mxu0 %v2876
    %2924 = vmatpush.msra.mxu0 %v2872
    %2925 = vmatpush.msra.mxu0 %v2868
    %2926 = vmatpush.msra.mxu0 %v2864
    %2927 = vmatpush.msra.mxu0 %v2860
    %2928 = vmatpush.msra.mxu0 %v2856
    %2929 = vmatpush.msra.mxu0 %v2852
    %2930 = vmatpush.msra.mxu0 %v2848
    %2931 = vmatpush.msra.mxu0 %v2844
    %2932 = vmatpush.msra.mxu0 %v2840
    %2933 = vmatpush.msra.mxu0 %v2836
    %2934 = vmatpush.msra.mxu0 %v2832
    %2935 = vmatpush.msra.mxu0 %v2828
    %2936 = vmatpush.msra.mxu0 %v2824
    %2937 = vmatpush.msra.mxu0 %v2820
    %2938 = vmatmul.f32.gmra.mxu0 %v2809
    %v2939 = vpop.f32.mrf.mxu0
    %v2940 = vadd.f32 0.0, %v2939
    %2941 = vdwg.mxu0
    %2942 = vmatpush.msra.mxu0 %v2881
    %2943 = vmatpush.msra.mxu0 %v2877
    %2944 = vmatpush.msra.mxu0 %v2873
    %2945 = vmatpush.msra.mxu0 %v2869
    %2946 = vmatpush.msra.mxu0 %v2865
    %2947 = vmatpush.msra.mxu0 %v2861
    %2948 = vmatpush.msra.mxu0 %v2857
    %2949 = vmatpush.msra.mxu0 %v2853
    %2950 = vmatpush.msra.mxu0 %v2849
    %2951 = vmatpush.msra.mxu0 %v2845
    %2952 = vmatpush.msra.mxu0 %v2841
    %2953 = vmatpush.msra.mxu0 %v2837
    %2954 = vmatpush.msra.mxu0 %v2833
    %2955 = vmatpush.msra.mxu0 %v2829
    %2956 = vmatpush.msra.mxu0 %v2825
    %2957 = vmatpush.msra.mxu0 %v2821
    %2958 = vmatmul.f32.gmra.mxu0 %v2809
    %v2959 = vpop.f32.mrf.mxu0
    %v2960 = vadd.f32 0.0, %v2959
    %2961 = vdwg.mxu0
    %v2962 = vadd.f32 %v2814, %v2900
    %v2963 = vadd.f32 %v2815, %v2920
    %v2964 = vadd.f32 %v2816, %v2940
    %v2965 = vadd.f32 %v2817, %v2960
    %v2966 = vxor.u32 %v2962, 2147483648
    %v2967 = vmul.f32 %v2966, 1.442695
    %v2968 = vpow.pop %v2967
    %v2969 = vadd.f32 %v2968, 1.0
    %v2970 = vrcp.pop %v2969
    %v2971 = vmul.f32 %v2969, %v2970
    %v2972 = vsub.f32 1.0, %v2971
    %v2973 = vmul.f32 %v2970, %v2972
    %v2974 = vadd.f32 %v2970, %v2973
    %vm2975 = vweird.f32 %v2969
    %vm2976 = vweird.f32 %v2970
    %vm2977 = vmor %vm2975, %vm2976
    %v2978 = vsel %vm2977, %v2970, %v2974
    %v2979 = vand.u32 2147483647, %v2969
    %vm2980 = vcmp.eq.f32.partialorder %v2979, 8.507059e+37
    %v2981 = vand.u32 %v2969, 2147483648
    %v2982 = vor.u32 1.1754944e-38, %v2981
    %v2983 = vsel %vm2980, %v2982, %v2978
    %v2984 = vmul.f32 1.0, %v2983
    %v2985 = vxor.u32 %v2963, 2147483648
    %v2986 = vmul.f32 %v2985, 1.442695
    %v2987 = vpow.pop %v2986
    %v2988 = vadd.f32 %v2987, 1.0
    %v2989 = vrcp.pop %v2988
    %v2990 = vmul.f32 %v2988, %v2989
    %v2991 = vsub.f32 1.0, %v2990
    %v2992 = vmul.f32 %v2989, %v2991
    %v2993 = vadd.f32 %v2989, %v2992
    %vm2994 = vweird.f32 %v2988
    %vm2995 = vweird.f32 %v2989
    %vm2996 = vmor %vm2994, %vm2995
    %v2997 = vsel %vm2996, %v2989, %v2993
    %v2998 = vand.u32 2147483647, %v2988
    %vm2999 = vcmp.eq.f32.partialorder %v2998, 8.507059e+37
    %v3000 = vand.u32 %v2988, 2147483648
    %v3001 = vor.u32 1.1754944e-38, %v3000
    %v3002 = vsel %vm2999, %v3001, %v2997
    %v3003 = vmul.f32 1.0, %v3002
    %v3004 = vtanh.pop %v2964
    %v3005 = vxor.u32 %v2965, 2147483648
    %v3006 = vmul.f32 %v3005, 1.442695
    %v3007 = vpow.pop %v3006
    %v3008 = vadd.f32 %v3007, 1.0
    %v3009 = vrcp.pop %v3008
    %v3010 = vmul.f32 %v3008, %v3009
    %v3011 = vsub.f32 1.0, %v3010
    %v3012 = vmul.f32 %v3009, %v3011
    %v3013 = vadd.f32 %v3009, %v3012
    %vm3014 = vweird.f32 %v3008
    %vm3015 = vweird.f32 %v3009
    %vm3016 = vmor %vm3014, %vm3015
    %v3017 = vsel %vm3016, %v3009, %v3013
    %v3018 = vand.u32 2147483647, %v3008
    %vm3019 = vcmp.eq.f32.partialorder %v3018, 8.507059e+37
    %v3020 = vand.u32 %v3008, 2147483648
    %v3021 = vor.u32 1.1754944e-38, %v3020
    %v3022 = vsel %vm3019, %v3021, %v3017
    %v3023 = vmul.f32 1.0, %v3022
    %v3024 = vmul.f32 %v3003, %v2810
    %v3025 = vmul.f32 %v2984, %v3004
    %v3026 = vadd.f32 %v3024, %v3025
    %v3027 = vtanh.pop %v3026
    %v3028 = vmul.f32 %v3023, %v3027
    %v3029 = vld [vmem:[#allocation15] sm:$0xff]
    %v3030 = vld [vmem:[#allocation15 + $0x8] sm:$0xff]
    %v3031 = vld [vmem:[#allocation15 + $0x10] sm:$0xff]
    %v3032 = vld [vmem:[#allocation15 + $0x18] sm:$0xff]
    %v3033 = vld [vmem:[#allocation15 + $0x20] sm:$0xff]
    %v3034 = vld [vmem:[#allocation15 + $0x28] sm:$0xff]
    %v3035 = vld [vmem:[#allocation15 + $0x30] sm:$0xff]
    %v3036 = vld [vmem:[#allocation15 + $0x38] sm:$0xff]
    %v3037 = vld [vmem:[#allocation15 + $0x40] sm:$0xff]
    %v3038 = vld [vmem:[#allocation15 + $0x48] sm:$0xff]
    %v3039 = vld [vmem:[#allocation15 + $0x50] sm:$0xff]
    %v3040 = vld [vmem:[#allocation15 + $0x58] sm:$0xff]
    %v3041 = vld [vmem:[#allocation15 + $0x60] sm:$0xff]
    %v3042 = vld [vmem:[#allocation15 + $0x68] sm:$0xff]
    %v3043 = vld [vmem:[#allocation15 + $0x70] sm:$0xff]
    %v3044 = vld [vmem:[#allocation15 + $0x78] sm:$0xff]
    %v3045 = vld [vmem:[#allocation15 + $0x80] sm:$0xff]
    %v3046 = vld [vmem:[#allocation15 + $0x88] sm:$0xff]
    %v3047 = vld [vmem:[#allocation15 + $0x90] sm:$0xff]
    %v3048 = vld [vmem:[#allocation15 + $0x98] sm:$0xff]
    %v3049 = vld [vmem:[#allocation15 + $0xa0] sm:$0xff]
    %v3050 = vld [vmem:[#allocation15 + $0xa8] sm:$0xff]
    %v3051 = vld [vmem:[#allocation15 + $0xb0] sm:$0xff]
    %v3052 = vld [vmem:[#allocation15 + $0xb8] sm:$0xff]
    %v3053 = vld [vmem:[#allocation15 + $0xc0] sm:$0xff]
    %v3054 = vld [vmem:[#allocation15 + $0xc8] sm:$0xff]
    %v3055 = vld [vmem:[#allocation15 + $0xd0] sm:$0xff]
    %v3056 = vld [vmem:[#allocation15 + $0xd8] sm:$0xff]
    %v3057 = vld [vmem:[#allocation15 + $0xe0] sm:$0xff]
    %v3058 = vld [vmem:[#allocation15 + $0xe8] sm:$0xff]
    %v3059 = vld [vmem:[#allocation15 + $0xf0] sm:$0xff]
    %v3060 = vld [vmem:[#allocation15 + $0xf8] sm:$0xff]
    %v3061 = vld [vmem:[#allocation15 + $0x100] sm:$0xff]
    %v3062 = vld [vmem:[#allocation15 + $0x108] sm:$0xff]
    %v3063 = vld [vmem:[#allocation15 + $0x110] sm:$0xff]
    %v3064 = vld [vmem:[#allocation15 + $0x118] sm:$0xff]
    %v3065 = vld [vmem:[#allocation15 + $0x120] sm:$0xff]
    %v3066 = vld [vmem:[#allocation15 + $0x128] sm:$0xff]
    %v3067 = vld [vmem:[#allocation15 + $0x130] sm:$0xff]
    %v3068 = vld [vmem:[#allocation15 + $0x138] sm:$0xff]
    %v3069 = vld [vmem:[#allocation15 + $0x140] sm:$0xff]
    %v3070 = vld [vmem:[#allocation15 + $0x148] sm:$0xff]
    %v3071 = vld [vmem:[#allocation15 + $0x150] sm:$0xff]
    %v3072 = vld [vmem:[#allocation15 + $0x158] sm:$0xff]
    %v3073 = vld [vmem:[#allocation15 + $0x160] sm:$0xff]
    %v3074 = vld [vmem:[#allocation15 + $0x168] sm:$0xff]
    %v3075 = vld [vmem:[#allocation15 + $0x170] sm:$0xff]
    %v3076 = vld [vmem:[#allocation15 + $0x178] sm:$0xff]
    %v3077 = vld [vmem:[#allocation15 + $0x180] sm:$0xff]
    %v3078 = vld [vmem:[#allocation15 + $0x188] sm:$0xff]
    %v3079 = vld [vmem:[#allocation15 + $0x190] sm:$0xff]
    %v3080 = vld [vmem:[#allocation15 + $0x198] sm:$0xff]
    %v3081 = vld [vmem:[#allocation15 + $0x1a0] sm:$0xff]
    %v3082 = vld [vmem:[#allocation15 + $0x1a8] sm:$0xff]
    %v3083 = vld [vmem:[#allocation15 + $0x1b0] sm:$0xff]
    %v3084 = vld [vmem:[#allocation15 + $0x1b8] sm:$0xff]
    %v3085 = vld [vmem:[#allocation15 + $0x1c0] sm:$0xff]
    %v3086 = vld [vmem:[#allocation15 + $0x1c8] sm:$0xff]
    %v3087 = vld [vmem:[#allocation15 + $0x1d0] sm:$0xff]
    %v3088 = vld [vmem:[#allocation15 + $0x1d8] sm:$0xff]
    %v3089 = vld [vmem:[#allocation15 + $0x1e0] sm:$0xff]
    %v3090 = vld [vmem:[#allocation15 + $0x1e8] sm:$0xff]
    %v3091 = vld [vmem:[#allocation15 + $0x1f0] sm:$0xff]
    %v3092 = vld [vmem:[#allocation15 + $0x1f8] sm:$0xff]
    %v3093 = vld [vmem:[#allocation15 + $0x200] sm:$0xff]
    %v3094 = vld [vmem:[#allocation15 + $0x208] sm:$0xff]
    %v3095 = vld [vmem:[#allocation15 + $0x210] sm:$0xff]
    %v3096 = vld [vmem:[#allocation15 + $0x218] sm:$0xff]
    %v3097 = vld [vmem:[#allocation15 + $0x220] sm:$0xff]
    %v3098 = vld [vmem:[#allocation15 + $0x228] sm:$0xff]
    %v3099 = vld [vmem:[#allocation15 + $0x230] sm:$0xff]
    %v3100 = vld [vmem:[#allocation15 + $0x238] sm:$0xff]
    %v3101 = vld [vmem:[#allocation15 + $0x240] sm:$0xff]
    %v3102 = vld [vmem:[#allocation15 + $0x248] sm:$0xff]
    %v3103 = vld [vmem:[#allocation15 + $0x250] sm:$0xff]
    %v3104 = vld [vmem:[#allocation15 + $0x258] sm:$0xff]
    %v3105 = vld [vmem:[#allocation15 + $0x260] sm:$0xff]
    %v3106 = vld [vmem:[#allocation15 + $0x268] sm:$0xff]
    %v3107 = vld [vmem:[#allocation15 + $0x270] sm:$0xff]
    %v3108 = vld [vmem:[#allocation15 + $0x278] sm:$0xff]
    %v3109 = vld [vmem:[#allocation15 + $0x280] sm:$0xff]
    %v3110 = vld [vmem:[#allocation15 + $0x288] sm:$0xff]
    %v3111 = vld [vmem:[#allocation15 + $0x290] sm:$0xff]
    %v3112 = vld [vmem:[#allocation15 + $0x298] sm:$0xff]
    %v3113 = vld [vmem:[#allocation15 + $0x2a0] sm:$0xff]
    %v3114 = vld [vmem:[#allocation15 + $0x2a8] sm:$0xff]
    %v3115 = vld [vmem:[#allocation15 + $0x2b0] sm:$0xff]
    %v3116 = vld [vmem:[#allocation15 + $0x2b8] sm:$0xff]
    %v3117 = vld [vmem:[#allocation15 + $0x2c0] sm:$0xff]
    %v3118 = vld [vmem:[#allocation15 + $0x2c8] sm:$0xff]
    %v3119 = vld [vmem:[#allocation15 + $0x2d0] sm:$0xff]
    %v3120 = vld [vmem:[#allocation15 + $0x2d8] sm:$0xff]
    %v3121 = vld [vmem:[#allocation15 + $0x2e0] sm:$0xff]
    %v3122 = vld [vmem:[#allocation15 + $0x2e8] sm:$0xff]
    %v3123 = vld [vmem:[#allocation15 + $0x2f0] sm:$0xff]
    %v3124 = vld [vmem:[#allocation15 + $0x2f8] sm:$0xff]
    %v3125 = vld [vmem:[#allocation15 + $0x300] sm:$0xff]
    %v3126 = vld [vmem:[#allocation15 + $0x308] sm:$0xff]
    %v3127 = vld [vmem:[#allocation15 + $0x310] sm:$0xff]
    %v3128 = vld [vmem:[#allocation15 + $0x318] sm:$0xff]
    %v3129 = vld [vmem:[#allocation15 + $0x320] sm:$0xff]
    %v3130 = vld [vmem:[#allocation15 + $0x328] sm:$0xff]
    %v3131 = vld [vmem:[#allocation15 + $0x330] sm:$0xff]
    %v3132 = vld [vmem:[#allocation15 + $0x338] sm:$0xff]
    %v3133 = vld [vmem:[#allocation15 + $0x340] sm:$0xff]
    %v3134 = vld [vmem:[#allocation15 + $0x348] sm:$0xff]
    %v3135 = vld [vmem:[#allocation15 + $0x350] sm:$0xff]
    %v3136 = vld [vmem:[#allocation15 + $0x358] sm:$0xff]
    %v3137 = vld [vmem:[#allocation15 + $0x360] sm:$0xff]
    %v3138 = vld [vmem:[#allocation15 + $0x368] sm:$0xff]
    %v3139 = vld [vmem:[#allocation15 + $0x370] sm:$0xff]
    %v3140 = vld [vmem:[#allocation15 + $0x378] sm:$0xff]
    %v3141 = vld [vmem:[#allocation15 + $0x380] sm:$0xff]
    %v3142 = vld [vmem:[#allocation15 + $0x388] sm:$0xff]
    %v3143 = vld [vmem:[#allocation15 + $0x390] sm:$0xff]
    %v3144 = vld [vmem:[#allocation15 + $0x398] sm:$0xff]
    %v3145 = vld [vmem:[#allocation15 + $0x3a0] sm:$0xff]
    %v3146 = vld [vmem:[#allocation15 + $0x3a8] sm:$0xff]
    %v3147 = vld [vmem:[#allocation15 + $0x3b0] sm:$0xff]
    %v3148 = vld [vmem:[#allocation15 + $0x3b8] sm:$0xff]
    %v3149 = vld [vmem:[#allocation15 + $0x3c0] sm:$0xff]
    %v3150 = vld [vmem:[#allocation15 + $0x3c8] sm:$0xff]
    %v3151 = vld [vmem:[#allocation15 + $0x3d0] sm:$0xff]
    %v3152 = vld [vmem:[#allocation15 + $0x3d8] sm:$0xff]
    %v3153 = vld [vmem:[#allocation15 + $0x3e0] sm:$0xff]
    %v3154 = vld [vmem:[#allocation15 + $0x3e8] sm:$0xff]
    %v3155 = vld [vmem:[#allocation15 + $0x3f0] sm:$0xff]
    %v3156 = vld [vmem:[#allocation15 + $0x3f8] sm:$0xff]
    %v3157 = vld [vmem:[#allocation17] sm:$0xf]
    %v3159 = vperm.slane %v3157, 0
    %v3160 = vperm.slane %v3157, 1
    %v3161 = vperm.slane %v3157, 2
    %v3162 = vperm.slane %v3157, 3
    %3167 = vmatpush.msra.mxu0 %v3089
    %3168 = vmatpush.msra.mxu0 %v3085
    %3169 = vmatpush.msra.mxu0 %v3081
    %3170 = vmatpush.msra.mxu0 %v3077
    %3171 = vmatpush.msra.mxu0 %v3073
    %3172 = vmatpush.msra.mxu0 %v3069
    %3173 = vmatpush.msra.mxu0 %v3065
    %3174 = vmatpush.msra.mxu0 %v3061
    %3175 = vmatpush.msra.mxu0 %v3057
    %3176 = vmatpush.msra.mxu0 %v3053
    %3177 = vmatpush.msra.mxu0 %v3049
    %3178 = vmatpush.msra.mxu0 %v3045
    %3179 = vmatpush.msra.mxu0 %v3041
    %3180 = vmatpush.msra.mxu0 %v3037
    %3181 = vmatpush.msra.mxu0 %v3033
    %3182 = vmatpush.msra.mxu0 %v3029
    %3183 = vmatmul.f32.gmra.mxu0 %v3028
    %v3184 = vpop.f32.mrf.mxu0
    %v3185 = vadd.f32 %v3159, %v3184
    %3186 = vdwg.mxu0
    %3187 = vmatpush.msra.mxu0 %v3153
    %3188 = vmatpush.msra.mxu0 %v3149
    %3189 = vmatpush.msra.mxu0 %v3145
    %3190 = vmatpush.msra.mxu0 %v3141
    %3191 = vmatpush.msra.mxu0 %v3137
    %3192 = vmatpush.msra.mxu0 %v3133
    %3193 = vmatpush.msra.mxu0 %v3129
    %3194 = vmatpush.msra.mxu0 %v3125
    %3195 = vmatpush.msra.mxu0 %v3121
    %3196 = vmatpush.msra.mxu0 %v3117
    %3197 = vmatpush.msra.mxu0 %v3113
    %3198 = vmatpush.msra.mxu0 %v3109
    %3199 = vmatpush.msra.mxu0 %v3105
    %3200 = vmatpush.msra.mxu0 %v3101
    %3201 = vmatpush.msra.mxu0 %v3097
    %3202 = vmatpush.msra.mxu0 %v3093
    %3203 = vmatmul.f32.gmra.mxu0 %v2811
    %v3204 = vpop.f32.mrf.mxu0
    %v3205 = vadd.f32 %v3185, %v3204
    %3206 = vdwg.mxu0
    %3207 = vmatpush.msra.mxu0 %v3090
    %3208 = vmatpush.msra.mxu0 %v3086
    %3209 = vmatpush.msra.mxu0 %v3082
    %3210 = vmatpush.msra.mxu0 %v3078
    %3211 = vmatpush.msra.mxu0 %v3074
    %3212 = vmatpush.msra.mxu0 %v3070
    %3213 = vmatpush.msra.mxu0 %v3066
    %3214 = vmatpush.msra.mxu0 %v3062
    %3215 = vmatpush.msra.mxu0 %v3058
    %3216 = vmatpush.msra.mxu0 %v3054
    %3217 = vmatpush.msra.mxu0 %v3050
    %3218 = vmatpush.msra.mxu0 %v3046
    %3219 = vmatpush.msra.mxu0 %v3042
    %3220 = vmatpush.msra.mxu0 %v3038
    %3221 = vmatpush.msra.mxu0 %v3034
    %3222 = vmatpush.msra.mxu0 %v3030
    %3223 = vmatmul.f32.gmra.mxu0 %v3028
    %v3224 = vpop.f32.mrf.mxu0
    %v3225 = vadd.f32 %v3160, %v3224
    %3226 = vdwg.mxu0
    %3227 = vmatpush.msra.mxu0 %v3154
    %3228 = vmatpush.msra.mxu0 %v3150
    %3229 = vmatpush.msra.mxu0 %v3146
    %3230 = vmatpush.msra.mxu0 %v3142
    %3231 = vmatpush.msra.mxu0 %v3138
    %3232 = vmatpush.msra.mxu0 %v3134
    %3233 = vmatpush.msra.mxu0 %v3130
    %3234 = vmatpush.msra.mxu0 %v3126
    %3235 = vmatpush.msra.mxu0 %v3122
    %3236 = vmatpush.msra.mxu0 %v3118
    %3237 = vmatpush.msra.mxu0 %v3114
    %3238 = vmatpush.msra.mxu0 %v3110
    %3239 = vmatpush.msra.mxu0 %v3106
    %3240 = vmatpush.msra.mxu0 %v3102
    %3241 = vmatpush.msra.mxu0 %v3098
    %3242 = vmatpush.msra.mxu0 %v3094
    %3243 = vmatmul.f32.gmra.mxu0 %v2811
    %v3244 = vpop.f32.mrf.mxu0
    %v3245 = vadd.f32 %v3225, %v3244
    %3246 = vdwg.mxu0
    %3247 = vmatpush.msra.mxu0 %v3091
    %3248 = vmatpush.msra.mxu0 %v3087
    %3249 = vmatpush.msra.mxu0 %v3083
    %3250 = vmatpush.msra.mxu0 %v3079
    %3251 = vmatpush.msra.mxu0 %v3075
    %3252 = vmatpush.msra.mxu0 %v3071
    %3253 = vmatpush.msra.mxu0 %v3067
    %3254 = vmatpush.msra.mxu0 %v3063
    %3255 = vmatpush.msra.mxu0 %v3059
    %3256 = vmatpush.msra.mxu0 %v3055
    %3257 = vmatpush.msra.mxu0 %v3051
    %3258 = vmatpush.msra.mxu0 %v3047
    %3259 = vmatpush.msra.mxu0 %v3043
    %3260 = vmatpush.msra.mxu0 %v3039
    %3261 = vmatpush.msra.mxu0 %v3035
    %3262 = vmatpush.msra.mxu0 %v3031
    %3263 = vmatmul.f32.gmra.mxu0 %v3028
    %v3264 = vpop.f32.mrf.mxu0
    %v3265 = vadd.f32 %v3161, %v3264
    %3266 = vdwg.mxu0
    %3267 = vmatpush.msra.mxu0 %v3155
    %3268 = vmatpush.msra.mxu0 %v3151
    %3269 = vmatpush.msra.mxu0 %v3147
    %3270 = vmatpush.msra.mxu0 %v3143
    %3271 = vmatpush.msra.mxu0 %v3139
    %3272 = vmatpush.msra.mxu0 %v3135
    %3273 = vmatpush.msra.mxu0 %v3131
    %3274 = vmatpush.msra.mxu0 %v3127
    %3275 = vmatpush.msra.mxu0 %v3123
    %3276 = vmatpush.msra.mxu0 %v3119
    %3277 = vmatpush.msra.mxu0 %v3115
    %3278 = vmatpush.msra.mxu0 %v3111
    %3279 = vmatpush.msra.mxu0 %v3107
    %3280 = vmatpush.msra.mxu0 %v3103
    %3281 = vmatpush.msra.mxu0 %v3099
    %3282 = vmatpush.msra.mxu0 %v3095
    %3283 = vmatmul.f32.gmra.mxu0 %v2811
    %v3284 = vpop.f32.mrf.mxu0
    %v3285 = vadd.f32 %v3265, %v3284
    %3286 = vdwg.mxu0
    %3287 = vmatpush.msra.mxu0 %v3092
    %3288 = vmatpush.msra.mxu0 %v3088
    %3289 = vmatpush.msra.mxu0 %v3084
    %3290 = vmatpush.msra.mxu0 %v3080
    %3291 = vmatpush.msra.mxu0 %v3076
    %3292 = vmatpush.msra.mxu0 %v3072
    %3293 = vmatpush.msra.mxu0 %v3068
    %3294 = vmatpush.msra.mxu0 %v3064
    %3295 = vmatpush.msra.mxu0 %v3060
    %3296 = vmatpush.msra.mxu0 %v3056
    %3297 = vmatpush.msra.mxu0 %v3052
    %3298 = vmatpush.msra.mxu0 %v3048
    %3299 = vmatpush.msra.mxu0 %v3044
    %3300 = vmatpush.msra.mxu0 %v3040
    %3301 = vmatpush.msra.mxu0 %v3036
    %3302 = vmatpush.msra.mxu0 %v3032
    %3303 = vmatmul.f32.gmra.mxu0 %v3028
    %v3304 = vpop.f32.mrf.mxu0
    %v3305 = vadd.f32 %v3162, %v3304
    %3306 = vdwg.mxu0
    %3307 = vmatpush.msra.mxu0 %v3156
    %3308 = vmatpush.msra.mxu0 %v3152
    %3309 = vmatpush.msra.mxu0 %v3148
    %3310 = vmatpush.msra.mxu0 %v3144
    %3311 = vmatpush.msra.mxu0 %v3140
    %3312 = vmatpush.msra.mxu0 %v3136
    %3313 = vmatpush.msra.mxu0 %v3132
    %3314 = vmatpush.msra.mxu0 %v3128
    %3315 = vmatpush.msra.mxu0 %v3124
    %3316 = vmatpush.msra.mxu0 %v3120
    %3317 = vmatpush.msra.mxu0 %v3116
    %3318 = vmatpush.msra.mxu0 %v3112
    %3319 = vmatpush.msra.mxu0 %v3108
    %3320 = vmatpush.msra.mxu0 %v3104
    %3321 = vmatpush.msra.mxu0 %v3100
    %3322 = vmatpush.msra.mxu0 %v3096
    %3323 = vmatmul.f32.gmra.mxu0 %v2811
    %v3324 = vpop.f32.mrf.mxu0
    %v3325 = vadd.f32 %v3305, %v3324
    %3326 = vdwg.mxu0
    %v3327 = vxor.u32 %v3205, 2147483648
    %v3328 = vmul.f32 %v3327, 1.442695
    %v3329 = vpow.pop %v3328
    %v3330 = vadd.f32 %v3329, 1.0
    %v3331 = vrcp.pop %v3330
    %v3332 = vmul.f32 %v3330, %v3331
    %v3333 = vsub.f32 1.0, %v3332
    %v3334 = vmul.f32 %v3331, %v3333
    %v3335 = vadd.f32 %v3331, %v3334
    %vm3336 = vweird.f32 %v3330
    %vm3337 = vweird.f32 %v3331
    %vm3338 = vmor %vm3336, %vm3337
    %v3339 = vsel %vm3338, %v3331, %v3335
    %v3340 = vand.u32 2147483647, %v3330
    %vm3341 = vcmp.eq.f32.partialorder %v3340, 8.507059e+37
    %v3342 = vand.u32 %v3330, 2147483648
    %v3343 = vor.u32 1.1754944e-38, %v3342
    %v3344 = vsel %vm3341, %v3343, %v3339
    %v3345 = vmul.f32 1.0, %v3344
    %v3346 = vxor.u32 %v3245, 2147483648
    %v3347 = vmul.f32 %v3346, 1.442695
    %v3348 = vpow.pop %v3347
    %v3349 = vadd.f32 %v3348, 1.0
    %v3350 = vrcp.pop %v3349
    %v3351 = vmul.f32 %v3349, %v3350
    %v3352 = vsub.f32 1.0, %v3351
    %v3353 = vmul.f32 %v3350, %v3352
    %v3354 = vadd.f32 %v3350, %v3353
    %vm3355 = vweird.f32 %v3349
    %vm3356 = vweird.f32 %v3350
    %vm3357 = vmor %vm3355, %vm3356
    %v3358 = vsel %vm3357, %v3350, %v3354
    %v3359 = vand.u32 2147483647, %v3349
    %vm3360 = vcmp.eq.f32.partialorder %v3359, 8.507059e+37
    %v3361 = vand.u32 %v3349, 2147483648
    %v3362 = vor.u32 1.1754944e-38, %v3361
    %v3363 = vsel %vm3360, %v3362, %v3358
    %v3364 = vmul.f32 1.0, %v3363
    %v3365 = vtanh.pop %v3285
    %v3366 = vxor.u32 %v3325, 2147483648
    %v3367 = vmul.f32 %v3366, 1.442695
    %v3368 = vpow.pop %v3367
    %v3369 = vadd.f32 %v3368, 1.0
    %v3370 = vrcp.pop %v3369
    %v3371 = vmul.f32 %v3369, %v3370
    %v3372 = vsub.f32 1.0, %v3371
    %v3373 = vmul.f32 %v3370, %v3372
    %v3374 = vadd.f32 %v3370, %v3373
    %vm3375 = vweird.f32 %v3369
    %vm3376 = vweird.f32 %v3370
    %vm3377 = vmor %vm3375, %vm3376
    %v3378 = vsel %vm3377, %v3370, %v3374
    %v3379 = vand.u32 2147483647, %v3369
    %vm3380 = vcmp.eq.f32.partialorder %v3379, 8.507059e+37
    %v3381 = vand.u32 %v3369, 2147483648
    %v3382 = vor.u32 1.1754944e-38, %v3381
    %v3383 = vsel %vm3380, %v3382, %v3378
    %v3384 = vmul.f32 1.0, %v3383
    %v3385 = vmul.f32 %v3364, %v2812
    %v3386 = vmul.f32 %v3345, %v3365
    %v3387 = vadd.f32 %v3385, %v3386
    %v3388 = vtanh.pop %v3387
    %v3389 = vmul.f32 %v3384, %v3388
    %3390 = vst [vmem:[#allocation2] sm:$0xff] %v3028
    %3391 = vst [vmem:[#allocation3] sm:$0xff] %v3026
    %3392 = vst [vmem:[%s463] sm:$0xff] %v3389
    %3393 = vst [vmem:[%s465] sm:$0xff] %v3387
    %s3394 = scalar_lea.vmem [#allocation5], 32
    %3395 = vst [vmem:[%s3394] sm:$0xff] %v3389
    %v3396 = vld [vmem:[#allocation2] sm:$0xff]
    %v3397 = vld [vmem:[#allocation3] sm:$0xff]
    %v3398 = vld [vmem:[%s463] sm:$0xff]
    %v3399 = vld [vmem:[%s465] sm:$0xff]
    %s3400 = scalar_lea.vmem [#allocation4], 160
    %v3401 = vld [vmem:[%s3400] sm:$0xff]
    %v3402 = vld [vmem:[%s3400 + $0x8] sm:$0xff]
    %v3403 = vld [vmem:[%s3400 + $0x10] sm:$0xff]
    %v3404 = vld [vmem:[%s3400 + $0x18] sm:$0xff]
    %v3405 = vld [vmem:[#allocation14] sm:$0xff]
    %v3406 = vld [vmem:[#allocation14 + $0x8] sm:$0xff]
    %v3407 = vld [vmem:[#allocation14 + $0x10] sm:$0xff]
    %v3408 = vld [vmem:[#allocation14 + $0x18] sm:$0xff]
    %v3409 = vld [vmem:[#allocation14 + $0x20] sm:$0xff]
    %v3410 = vld [vmem:[#allocation14 + $0x28] sm:$0xff]
    %v3411 = vld [vmem:[#allocation14 + $0x30] sm:$0xff]
    %v3412 = vld [vmem:[#allocation14 + $0x38] sm:$0xff]
    %v3413 = vld [vmem:[#allocation14 + $0x40] sm:$0xff]
    %v3414 = vld [vmem:[#allocation14 + $0x48] sm:$0xff]
    %v3415 = vld [vmem:[#allocation14 + $0x50] sm:$0xff]
    %v3416 = vld [vmem:[#allocation14 + $0x58] sm:$0xff]
    %v3417 = vld [vmem:[#allocation14 + $0x60] sm:$0xff]
    %v3418 = vld [vmem:[#allocation14 + $0x68] sm:$0xff]
    %v3419 = vld [vmem:[#allocation14 + $0x70] sm:$0xff]
    %v3420 = vld [vmem:[#allocation14 + $0x78] sm:$0xff]
    %v3421 = vld [vmem:[#allocation14 + $0x80] sm:$0xff]
    %v3422 = vld [vmem:[#allocation14 + $0x88] sm:$0xff]
    %v3423 = vld [vmem:[#allocation14 + $0x90] sm:$0xff]
    %v3424 = vld [vmem:[#allocation14 + $0x98] sm:$0xff]
    %v3425 = vld [vmem:[#allocation14 + $0xa0] sm:$0xff]
    %v3426 = vld [vmem:[#allocation14 + $0xa8] sm:$0xff]
    %v3427 = vld [vmem:[#allocation14 + $0xb0] sm:$0xff]
    %v3428 = vld [vmem:[#allocation14 + $0xb8] sm:$0xff]
    %v3429 = vld [vmem:[#allocation14 + $0xc0] sm:$0xff]
    %v3430 = vld [vmem:[#allocation14 + $0xc8] sm:$0xff]
    %v3431 = vld [vmem:[#allocation14 + $0xd0] sm:$0xff]
    %v3432 = vld [vmem:[#allocation14 + $0xd8] sm:$0xff]
    %v3433 = vld [vmem:[#allocation14 + $0xe0] sm:$0xff]
    %v3434 = vld [vmem:[#allocation14 + $0xe8] sm:$0xff]
    %v3435 = vld [vmem:[#allocation14 + $0xf0] sm:$0xff]
    %v3436 = vld [vmem:[#allocation14 + $0xf8] sm:$0xff]
    %v3437 = vld [vmem:[#allocation14 + $0x100] sm:$0xff]
    %v3438 = vld [vmem:[#allocation14 + $0x108] sm:$0xff]
    %v3439 = vld [vmem:[#allocation14 + $0x110] sm:$0xff]
    %v3440 = vld [vmem:[#allocation14 + $0x118] sm:$0xff]
    %v3441 = vld [vmem:[#allocation14 + $0x120] sm:$0xff]
    %v3442 = vld [vmem:[#allocation14 + $0x128] sm:$0xff]
    %v3443 = vld [vmem:[#allocation14 + $0x130] sm:$0xff]
    %v3444 = vld [vmem:[#allocation14 + $0x138] sm:$0xff]
    %v3445 = vld [vmem:[#allocation14 + $0x140] sm:$0xff]
    %v3446 = vld [vmem:[#allocation14 + $0x148] sm:$0xff]
    %v3447 = vld [vmem:[#allocation14 + $0x150] sm:$0xff]
    %v3448 = vld [vmem:[#allocation14 + $0x158] sm:$0xff]
    %v3449 = vld [vmem:[#allocation14 + $0x160] sm:$0xff]
    %v3450 = vld [vmem:[#allocation14 + $0x168] sm:$0xff]
    %v3451 = vld [vmem:[#allocation14 + $0x170] sm:$0xff]
    %v3452 = vld [vmem:[#allocation14 + $0x178] sm:$0xff]
    %v3453 = vld [vmem:[#allocation14 + $0x180] sm:$0xff]
    %v3454 = vld [vmem:[#allocation14 + $0x188] sm:$0xff]
    %v3455 = vld [vmem:[#allocation14 + $0x190] sm:$0xff]
    %v3456 = vld [vmem:[#allocation14 + $0x198] sm:$0xff]
    %v3457 = vld [vmem:[#allocation14 + $0x1a0] sm:$0xff]
    %v3458 = vld [vmem:[#allocation14 + $0x1a8] sm:$0xff]
    %v3459 = vld [vmem:[#allocation14 + $0x1b0] sm:$0xff]
    %v3460 = vld [vmem:[#allocation14 + $0x1b8] sm:$0xff]
    %v3461 = vld [vmem:[#allocation14 + $0x1c0] sm:$0xff]
    %v3462 = vld [vmem:[#allocation14 + $0x1c8] sm:$0xff]
    %v3463 = vld [vmem:[#allocation14 + $0x1d0] sm:$0xff]
    %v3464 = vld [vmem:[#allocation14 + $0x1d8] sm:$0xff]
    %v3465 = vld [vmem:[#allocation14 + $0x1e0] sm:$0xff]
    %v3466 = vld [vmem:[#allocation14 + $0x1e8] sm:$0xff]
    %v3467 = vld [vmem:[#allocation14 + $0x1f0] sm:$0xff]
    %v3468 = vld [vmem:[#allocation14 + $0x1f8] sm:$0xff]
    %3469 = vmatpush.msra.mxu0 %v3465
    %3470 = vmatpush.msra.mxu0 %v3461
    %3471 = vmatpush.msra.mxu0 %v3457
    %3472 = vmatpush.msra.mxu0 %v3453
    %3473 = vmatpush.msra.mxu0 %v3449
    %3474 = vmatpush.msra.mxu0 %v3445
    %3475 = vmatpush.msra.mxu0 %v3441
    %3476 = vmatpush.msra.mxu0 %v3437
    %3477 = vmatpush.msra.mxu0 %v3433
    %3478 = vmatpush.msra.mxu0 %v3429
    %3479 = vmatpush.msra.mxu0 %v3425
    %3480 = vmatpush.msra.mxu0 %v3421
    %3481 = vmatpush.msra.mxu0 %v3417
    %3482 = vmatpush.msra.mxu0 %v3413
    %3483 = vmatpush.msra.mxu0 %v3409
    %3484 = vmatpush.msra.mxu0 %v3405
    %3485 = vmatmul.f32.gmra.mxu0 %v3396
    %v3486 = vpop.f32.mrf.mxu0
    %v3487 = vadd.f32 0.0, %v3486
    %3488 = vdwg.mxu0
    %3489 = vmatpush.msra.mxu0 %v3466
    %3490 = vmatpush.msra.mxu0 %v3462
    %3491 = vmatpush.msra.mxu0 %v3458
    %3492 = vmatpush.msra.mxu0 %v3454
    %3493 = vmatpush.msra.mxu0 %v3450
    %3494 = vmatpush.msra.mxu0 %v3446
    %3495 = vmatpush.msra.mxu0 %v3442
    %3496 = vmatpush.msra.mxu0 %v3438
    %3497 = vmatpush.msra.mxu0 %v3434
    %3498 = vmatpush.msra.mxu0 %v3430
    %3499 = vmatpush.msra.mxu0 %v3426
    %3500 = vmatpush.msra.mxu0 %v3422
    %3501 = vmatpush.msra.mxu0 %v3418
    %3502 = vmatpush.msra.mxu0 %v3414
    %3503 = vmatpush.msra.mxu0 %v3410
    %3504 = vmatpush.msra.mxu0 %v3406
    %3505 = vmatmul.f32.gmra.mxu0 %v3396
    %v3506 = vpop.f32.mrf.mxu0
    %v3507 = vadd.f32 0.0, %v3506
    %3508 = vdwg.mxu0
    %3509 = vmatpush.msra.mxu0 %v3467
    %3510 = vmatpush.msra.mxu0 %v3463
    %3511 = vmatpush.msra.mxu0 %v3459
    %3512 = vmatpush.msra.mxu0 %v3455
    %3513 = vmatpush.msra.mxu0 %v3451
    %3514 = vmatpush.msra.mxu0 %v3447
    %3515 = vmatpush.msra.mxu0 %v3443
    %3516 = vmatpush.msra.mxu0 %v3439
    %3517 = vmatpush.msra.mxu0 %v3435
    %3518 = vmatpush.msra.mxu0 %v3431
    %3519 = vmatpush.msra.mxu0 %v3427
    %3520 = vmatpush.msra.mxu0 %v3423
    %3521 = vmatpush.msra.mxu0 %v3419
    %3522 = vmatpush.msra.mxu0 %v3415
    %3523 = vmatpush.msra.mxu0 %v3411
    %3524 = vmatpush.msra.mxu0 %v3407
    %3525 = vmatmul.f32.gmra.mxu0 %v3396
    %v3526 = vpop.f32.mrf.mxu0
    %v3527 = vadd.f32 0.0, %v3526
    %3528 = vdwg.mxu0
    %3529 = vmatpush.msra.mxu0 %v3468
    %3530 = vmatpush.msra.mxu0 %v3464
    %3531 = vmatpush.msra.mxu0 %v3460
    %3532 = vmatpush.msra.mxu0 %v3456
    %3533 = vmatpush.msra.mxu0 %v3452
    %3534 = vmatpush.msra.mxu0 %v3448
    %3535 = vmatpush.msra.mxu0 %v3444
    %3536 = vmatpush.msra.mxu0 %v3440
    %3537 = vmatpush.msra.mxu0 %v3436
    %3538 = vmatpush.msra.mxu0 %v3432
    %3539 = vmatpush.msra.mxu0 %v3428
    %3540 = vmatpush.msra.mxu0 %v3424
    %3541 = vmatpush.msra.mxu0 %v3420
    %3542 = vmatpush.msra.mxu0 %v3416
    %3543 = vmatpush.msra.mxu0 %v3412
    %3544 = vmatpush.msra.mxu0 %v3408
    %3545 = vmatmul.f32.gmra.mxu0 %v3396
    %v3546 = vpop.f32.mrf.mxu0
    %v3547 = vadd.f32 0.0, %v3546
    %3548 = vdwg.mxu0
    %v3549 = vadd.f32 %v3401, %v3487
    %v3550 = vadd.f32 %v3402, %v3507
    %v3551 = vadd.f32 %v3403, %v3527
    %v3552 = vadd.f32 %v3404, %v3547
    %v3553 = vxor.u32 %v3549, 2147483648
    %v3554 = vmul.f32 %v3553, 1.442695
    %v3555 = vpow.pop %v3554
    %v3556 = vadd.f32 %v3555, 1.0
    %v3557 = vrcp.pop %v3556
    %v3558 = vmul.f32 %v3556, %v3557
    %v3559 = vsub.f32 1.0, %v3558
    %v3560 = vmul.f32 %v3557, %v3559
    %v3561 = vadd.f32 %v3557, %v3560
    %vm3562 = vweird.f32 %v3556
    %vm3563 = vweird.f32 %v3557
    %vm3564 = vmor %vm3562, %vm3563
    %v3565 = vsel %vm3564, %v3557, %v3561
    %v3566 = vand.u32 2147483647, %v3556
    %vm3567 = vcmp.eq.f32.partialorder %v3566, 8.507059e+37
    %v3568 = vand.u32 %v3556, 2147483648
    %v3569 = vor.u32 1.1754944e-38, %v3568
    %v3570 = vsel %vm3567, %v3569, %v3565
    %v3571 = vmul.f32 1.0, %v3570
    %v3572 = vxor.u32 %v3550, 2147483648
    %v3573 = vmul.f32 %v3572, 1.442695
    %v3574 = vpow.pop %v3573
    %v3575 = vadd.f32 %v3574, 1.0
    %v3576 = vrcp.pop %v3575
    %v3577 = vmul.f32 %v3575, %v3576
    %v3578 = vsub.f32 1.0, %v3577
    %v3579 = vmul.f32 %v3576, %v3578
    %v3580 = vadd.f32 %v3576, %v3579
    %vm3581 = vweird.f32 %v3575
    %vm3582 = vweird.f32 %v3576
    %vm3583 = vmor %vm3581, %vm3582
    %v3584 = vsel %vm3583, %v3576, %v3580
    %v3585 = vand.u32 2147483647, %v3575
    %vm3586 = vcmp.eq.f32.partialorder %v3585, 8.507059e+37
    %v3587 = vand.u32 %v3575, 2147483648
    %v3588 = vor.u32 1.1754944e-38, %v3587
    %v3589 = vsel %vm3586, %v3588, %v3584
    %v3590 = vmul.f32 1.0, %v3589
    %v3591 = vtanh.pop %v3551
    %v3592 = vxor.u32 %v3552, 2147483648
    %v3593 = vmul.f32 %v3592, 1.442695
    %v3594 = vpow.pop %v3593
    %v3595 = vadd.f32 %v3594, 1.0
    %v3596 = vrcp.pop %v3595
    %v3597 = vmul.f32 %v3595, %v3596
    %v3598 = vsub.f32 1.0, %v3597
    %v3599 = vmul.f32 %v3596, %v3598
    %v3600 = vadd.f32 %v3596, %v3599
    %vm3601 = vweird.f32 %v3595
    %vm3602 = vweird.f32 %v3596
    %vm3603 = vmor %vm3601, %vm3602
    %v3604 = vsel %vm3603, %v3596, %v3600
    %v3605 = vand.u32 2147483647, %v3595
    %vm3606 = vcmp.eq.f32.partialorder %v3605, 8.507059e+37
    %v3607 = vand.u32 %v3595, 2147483648
    %v3608 = vor.u32 1.1754944e-38, %v3607
    %v3609 = vsel %vm3606, %v3608, %v3604
    %v3610 = vmul.f32 1.0, %v3609
    %v3611 = vmul.f32 %v3590, %v3397
    %v3612 = vmul.f32 %v3571, %v3591
    %v3613 = vadd.f32 %v3611, %v3612
    %v3614 = vtanh.pop %v3613
    %v3615 = vmul.f32 %v3610, %v3614
    %v3616 = vld [vmem:[#allocation15] sm:$0xff]
    %v3617 = vld [vmem:[#allocation15 + $0x8] sm:$0xff]
    %v3618 = vld [vmem:[#allocation15 + $0x10] sm:$0xff]
    %v3619 = vld [vmem:[#allocation15 + $0x18] sm:$0xff]
    %v3620 = vld [vmem:[#allocation15 + $0x20] sm:$0xff]
    %v3621 = vld [vmem:[#allocation15 + $0x28] sm:$0xff]
    %v3622 = vld [vmem:[#allocation15 + $0x30] sm:$0xff]
    %v3623 = vld [vmem:[#allocation15 + $0x38] sm:$0xff]
    %v3624 = vld [vmem:[#allocation15 + $0x40] sm:$0xff]
    %v3625 = vld [vmem:[#allocation15 + $0x48] sm:$0xff]
    %v3626 = vld [vmem:[#allocation15 + $0x50] sm:$0xff]
    %v3627 = vld [vmem:[#allocation15 + $0x58] sm:$0xff]
    %v3628 = vld [vmem:[#allocation15 + $0x60] sm:$0xff]
    %v3629 = vld [vmem:[#allocation15 + $0x68] sm:$0xff]
    %v3630 = vld [vmem:[#allocation15 + $0x70] sm:$0xff]
    %v3631 = vld [vmem:[#allocation15 + $0x78] sm:$0xff]
    %v3632 = vld [vmem:[#allocation15 + $0x80] sm:$0xff]
    %v3633 = vld [vmem:[#allocation15 + $0x88] sm:$0xff]
    %v3634 = vld [vmem:[#allocation15 + $0x90] sm:$0xff]
    %v3635 = vld [vmem:[#allocation15 + $0x98] sm:$0xff]
    %v3636 = vld [vmem:[#allocation15 + $0xa0] sm:$0xff]
    %v3637 = vld [vmem:[#allocation15 + $0xa8] sm:$0xff]
    %v3638 = vld [vmem:[#allocation15 + $0xb0] sm:$0xff]
    %v3639 = vld [vmem:[#allocation15 + $0xb8] sm:$0xff]
    %v3640 = vld [vmem:[#allocation15 + $0xc0] sm:$0xff]
    %v3641 = vld [vmem:[#allocation15 + $0xc8] sm:$0xff]
    %v3642 = vld [vmem:[#allocation15 + $0xd0] sm:$0xff]
    %v3643 = vld [vmem:[#allocation15 + $0xd8] sm:$0xff]
    %v3644 = vld [vmem:[#allocation15 + $0xe0] sm:$0xff]
    %v3645 = vld [vmem:[#allocation15 + $0xe8] sm:$0xff]
    %v3646 = vld [vmem:[#allocation15 + $0xf0] sm:$0xff]
    %v3647 = vld [vmem:[#allocation15 + $0xf8] sm:$0xff]
    %v3648 = vld [vmem:[#allocation15 + $0x100] sm:$0xff]
    %v3649 = vld [vmem:[#allocation15 + $0x108] sm:$0xff]
    %v3650 = vld [vmem:[#allocation15 + $0x110] sm:$0xff]
    %v3651 = vld [vmem:[#allocation15 + $0x118] sm:$0xff]
    %v3652 = vld [vmem:[#allocation15 + $0x120] sm:$0xff]
    %v3653 = vld [vmem:[#allocation15 + $0x128] sm:$0xff]
    %v3654 = vld [vmem:[#allocation15 + $0x130] sm:$0xff]
    %v3655 = vld [vmem:[#allocation15 + $0x138] sm:$0xff]
    %v3656 = vld [vmem:[#allocation15 + $0x140] sm:$0xff]
    %v3657 = vld [vmem:[#allocation15 + $0x148] sm:$0xff]
    %v3658 = vld [vmem:[#allocation15 + $0x150] sm:$0xff]
    %v3659 = vld [vmem:[#allocation15 + $0x158] sm:$0xff]
    %v3660 = vld [vmem:[#allocation15 + $0x160] sm:$0xff]
    %v3661 = vld [vmem:[#allocation15 + $0x168] sm:$0xff]
    %v3662 = vld [vmem:[#allocation15 + $0x170] sm:$0xff]
    %v3663 = vld [vmem:[#allocation15 + $0x178] sm:$0xff]
    %v3664 = vld [vmem:[#allocation15 + $0x180] sm:$0xff]
    %v3665 = vld [vmem:[#allocation15 + $0x188] sm:$0xff]
    %v3666 = vld [vmem:[#allocation15 + $0x190] sm:$0xff]
    %v3667 = vld [vmem:[#allocation15 + $0x198] sm:$0xff]
    %v3668 = vld [vmem:[#allocation15 + $0x1a0] sm:$0xff]
    %v3669 = vld [vmem:[#allocation15 + $0x1a8] sm:$0xff]
    %v3670 = vld [vmem:[#allocation15 + $0x1b0] sm:$0xff]
    %v3671 = vld [vmem:[#allocation15 + $0x1b8] sm:$0xff]
    %v3672 = vld [vmem:[#allocation15 + $0x1c0] sm:$0xff]
    %v3673 = vld [vmem:[#allocation15 + $0x1c8] sm:$0xff]
    %v3674 = vld [vmem:[#allocation15 + $0x1d0] sm:$0xff]
    %v3675 = vld [vmem:[#allocation15 + $0x1d8] sm:$0xff]
    %v3676 = vld [vmem:[#allocation15 + $0x1e0] sm:$0xff]
    %v3677 = vld [vmem:[#allocation15 + $0x1e8] sm:$0xff]
    %v3678 = vld [vmem:[#allocation15 + $0x1f0] sm:$0xff]
    %v3679 = vld [vmem:[#allocation15 + $0x1f8] sm:$0xff]
    %v3680 = vld [vmem:[#allocation15 + $0x200] sm:$0xff]
    %v3681 = vld [vmem:[#allocation15 + $0x208] sm:$0xff]
    %v3682 = vld [vmem:[#allocation15 + $0x210] sm:$0xff]
    %v3683 = vld [vmem:[#allocation15 + $0x218] sm:$0xff]
    %v3684 = vld [vmem:[#allocation15 + $0x220] sm:$0xff]
    %v3685 = vld [vmem:[#allocation15 + $0x228] sm:$0xff]
    %v3686 = vld [vmem:[#allocation15 + $0x230] sm:$0xff]
    %v3687 = vld [vmem:[#allocation15 + $0x238] sm:$0xff]
    %v3688 = vld [vmem:[#allocation15 + $0x240] sm:$0xff]
    %v3689 = vld [vmem:[#allocation15 + $0x248] sm:$0xff]
    %v3690 = vld [vmem:[#allocation15 + $0x250] sm:$0xff]
    %v3691 = vld [vmem:[#allocation15 + $0x258] sm:$0xff]
    %v3692 = vld [vmem:[#allocation15 + $0x260] sm:$0xff]
    %v3693 = vld [vmem:[#allocation15 + $0x268] sm:$0xff]
    %v3694 = vld [vmem:[#allocation15 + $0x270] sm:$0xff]
    %v3695 = vld [vmem:[#allocation15 + $0x278] sm:$0xff]
    %v3696 = vld [vmem:[#allocation15 + $0x280] sm:$0xff]
    %v3697 = vld [vmem:[#allocation15 + $0x288] sm:$0xff]
    %v3698 = vld [vmem:[#allocation15 + $0x290] sm:$0xff]
    %v3699 = vld [vmem:[#allocation15 + $0x298] sm:$0xff]
    %v3700 = vld [vmem:[#allocation15 + $0x2a0] sm:$0xff]
    %v3701 = vld [vmem:[#allocation15 + $0x2a8] sm:$0xff]
    %v3702 = vld [vmem:[#allocation15 + $0x2b0] sm:$0xff]
    %v3703 = vld [vmem:[#allocation15 + $0x2b8] sm:$0xff]
    %v3704 = vld [vmem:[#allocation15 + $0x2c0] sm:$0xff]
    %v3705 = vld [vmem:[#allocation15 + $0x2c8] sm:$0xff]
    %v3706 = vld [vmem:[#allocation15 + $0x2d0] sm:$0xff]
    %v3707 = vld [vmem:[#allocation15 + $0x2d8] sm:$0xff]
    %v3708 = vld [vmem:[#allocation15 + $0x2e0] sm:$0xff]
    %v3709 = vld [vmem:[#allocation15 + $0x2e8] sm:$0xff]
    %v3710 = vld [vmem:[#allocation15 + $0x2f0] sm:$0xff]
    %v3711 = vld [vmem:[#allocation15 + $0x2f8] sm:$0xff]
    %v3712 = vld [vmem:[#allocation15 + $0x300] sm:$0xff]
    %v3713 = vld [vmem:[#allocation15 + $0x308] sm:$0xff]
    %v3714 = vld [vmem:[#allocation15 + $0x310] sm:$0xff]
    %v3715 = vld [vmem:[#allocation15 + $0x318] sm:$0xff]
    %v3716 = vld [vmem:[#allocation15 + $0x320] sm:$0xff]
    %v3717 = vld [vmem:[#allocation15 + $0x328] sm:$0xff]
    %v3718 = vld [vmem:[#allocation15 + $0x330] sm:$0xff]
    %v3719 = vld [vmem:[#allocation15 + $0x338] sm:$0xff]
    %v3720 = vld [vmem:[#allocation15 + $0x340] sm:$0xff]
    %v3721 = vld [vmem:[#allocation15 + $0x348] sm:$0xff]
    %v3722 = vld [vmem:[#allocation15 + $0x350] sm:$0xff]
    %v3723 = vld [vmem:[#allocation15 + $0x358] sm:$0xff]
    %v3724 = vld [vmem:[#allocation15 + $0x360] sm:$0xff]
    %v3725 = vld [vmem:[#allocation15 + $0x368] sm:$0xff]
    %v3726 = vld [vmem:[#allocation15 + $0x370] sm:$0xff]
    %v3727 = vld [vmem:[#allocation15 + $0x378] sm:$0xff]
    %v3728 = vld [vmem:[#allocation15 + $0x380] sm:$0xff]
    %v3729 = vld [vmem:[#allocation15 + $0x388] sm:$0xff]
    %v3730 = vld [vmem:[#allocation15 + $0x390] sm:$0xff]
    %v3731 = vld [vmem:[#allocation15 + $0x398] sm:$0xff]
    %v3732 = vld [vmem:[#allocation15 + $0x3a0] sm:$0xff]
    %v3733 = vld [vmem:[#allocation15 + $0x3a8] sm:$0xff]
    %v3734 = vld [vmem:[#allocation15 + $0x3b0] sm:$0xff]
    %v3735 = vld [vmem:[#allocation15 + $0x3b8] sm:$0xff]
    %v3736 = vld [vmem:[#allocation15 + $0x3c0] sm:$0xff]
    %v3737 = vld [vmem:[#allocation15 + $0x3c8] sm:$0xff]
    %v3738 = vld [vmem:[#allocation15 + $0x3d0] sm:$0xff]
    %v3739 = vld [vmem:[#allocation15 + $0x3d8] sm:$0xff]
    %v3740 = vld [vmem:[#allocation15 + $0x3e0] sm:$0xff]
    %v3741 = vld [vmem:[#allocation15 + $0x3e8] sm:$0xff]
    %v3742 = vld [vmem:[#allocation15 + $0x3f0] sm:$0xff]
    %v3743 = vld [vmem:[#allocation15 + $0x3f8] sm:$0xff]
    %v3744 = vld [vmem:[#allocation17] sm:$0xf]
    %v3746 = vperm.slane %v3744, 0
    %v3747 = vperm.slane %v3744, 1
    %v3748 = vperm.slane %v3744, 2
    %v3749 = vperm.slane %v3744, 3
    %3754 = vmatpush.msra.mxu0 %v3676
    %3755 = vmatpush.msra.mxu0 %v3672
    %3756 = vmatpush.msra.mxu0 %v3668
    %3757 = vmatpush.msra.mxu0 %v3664
    %3758 = vmatpush.msra.mxu0 %v3660
    %3759 = vmatpush.msra.mxu0 %v3656
    %3760 = vmatpush.msra.mxu0 %v3652
    %3761 = vmatpush.msra.mxu0 %v3648
    %3762 = vmatpush.msra.mxu0 %v3644
    %3763 = vmatpush.msra.mxu0 %v3640
    %3764 = vmatpush.msra.mxu0 %v3636
    %3765 = vmatpush.msra.mxu0 %v3632
    %3766 = vmatpush.msra.mxu0 %v3628
    %3767 = vmatpush.msra.mxu0 %v3624
    %3768 = vmatpush.msra.mxu0 %v3620
    %3769 = vmatpush.msra.mxu0 %v3616
    %3770 = vmatmul.f32.gmra.mxu0 %v3615
    %v3771 = vpop.f32.mrf.mxu0
    %v3772 = vadd.f32 %v3746, %v3771
    %3773 = vdwg.mxu0
    %3774 = vmatpush.msra.mxu0 %v3740
    %3775 = vmatpush.msra.mxu0 %v3736
    %3776 = vmatpush.msra.mxu0 %v3732
    %3777 = vmatpush.msra.mxu0 %v3728
    %3778 = vmatpush.msra.mxu0 %v3724
    %3779 = vmatpush.msra.mxu0 %v3720
    %3780 = vmatpush.msra.mxu0 %v3716
    %3781 = vmatpush.msra.mxu0 %v3712
    %3782 = vmatpush.msra.mxu0 %v3708
    %3783 = vmatpush.msra.mxu0 %v3704
    %3784 = vmatpush.msra.mxu0 %v3700
    %3785 = vmatpush.msra.mxu0 %v3696
    %3786 = vmatpush.msra.mxu0 %v3692
    %3787 = vmatpush.msra.mxu0 %v3688
    %3788 = vmatpush.msra.mxu0 %v3684
    %3789 = vmatpush.msra.mxu0 %v3680
    %3790 = vmatmul.f32.gmra.mxu0 %v3398
    %v3791 = vpop.f32.mrf.mxu0
    %v3792 = vadd.f32 %v3772, %v3791
    %3793 = vdwg.mxu0
    %3794 = vmatpush.msra.mxu0 %v3677
    %3795 = vmatpush.msra.mxu0 %v3673
    %3796 = vmatpush.msra.mxu0 %v3669
    %3797 = vmatpush.msra.mxu0 %v3665
    %3798 = vmatpush.msra.mxu0 %v3661
    %3799 = vmatpush.msra.mxu0 %v3657
    %3800 = vmatpush.msra.mxu0 %v3653
    %3801 = vmatpush.msra.mxu0 %v3649
    %3802 = vmatpush.msra.mxu0 %v3645
    %3803 = vmatpush.msra.mxu0 %v3641
    %3804 = vmatpush.msra.mxu0 %v3637
    %3805 = vmatpush.msra.mxu0 %v3633
    %3806 = vmatpush.msra.mxu0 %v3629
    %3807 = vmatpush.msra.mxu0 %v3625
    %3808 = vmatpush.msra.mxu0 %v3621
    %3809 = vmatpush.msra.mxu0 %v3617
    %3810 = vmatmul.f32.gmra.mxu0 %v3615
    %v3811 = vpop.f32.mrf.mxu0
    %v3812 = vadd.f32 %v3747, %v3811
    %3813 = vdwg.mxu0
    %3814 = vmatpush.msra.mxu0 %v3741
    %3815 = vmatpush.msra.mxu0 %v3737
    %3816 = vmatpush.msra.mxu0 %v3733
    %3817 = vmatpush.msra.mxu0 %v3729
    %3818 = vmatpush.msra.mxu0 %v3725
    %3819 = vmatpush.msra.mxu0 %v3721
    %3820 = vmatpush.msra.mxu0 %v3717
    %3821 = vmatpush.msra.mxu0 %v3713
    %3822 = vmatpush.msra.mxu0 %v3709
    %3823 = vmatpush.msra.mxu0 %v3705
    %3824 = vmatpush.msra.mxu0 %v3701
    %3825 = vmatpush.msra.mxu0 %v3697
    %3826 = vmatpush.msra.mxu0 %v3693
    %3827 = vmatpush.msra.mxu0 %v3689
    %3828 = vmatpush.msra.mxu0 %v3685
    %3829 = vmatpush.msra.mxu0 %v3681
    %3830 = vmatmul.f32.gmra.mxu0 %v3398
    %v3831 = vpop.f32.mrf.mxu0
    %v3832 = vadd.f32 %v3812, %v3831
    %3833 = vdwg.mxu0
    %3834 = vmatpush.msra.mxu0 %v3678
    %3835 = vmatpush.msra.mxu0 %v3674
    %3836 = vmatpush.msra.mxu0 %v3670
    %3837 = vmatpush.msra.mxu0 %v3666
    %3838 = vmatpush.msra.mxu0 %v3662
    %3839 = vmatpush.msra.mxu0 %v3658
    %3840 = vmatpush.msra.mxu0 %v3654
    %3841 = vmatpush.msra.mxu0 %v3650
    %3842 = vmatpush.msra.mxu0 %v3646
    %3843 = vmatpush.msra.mxu0 %v3642
    %3844 = vmatpush.msra.mxu0 %v3638
    %3845 = vmatpush.msra.mxu0 %v3634
    %3846 = vmatpush.msra.mxu0 %v3630
    %3847 = vmatpush.msra.mxu0 %v3626
    %3848 = vmatpush.msra.mxu0 %v3622
    %3849 = vmatpush.msra.mxu0 %v3618
    %3850 = vmatmul.f32.gmra.mxu0 %v3615
    %v3851 = vpop.f32.mrf.mxu0
    %v3852 = vadd.f32 %v3748, %v3851
    %3853 = vdwg.mxu0
    %3854 = vmatpush.msra.mxu0 %v3742
    %3855 = vmatpush.msra.mxu0 %v3738
    %3856 = vmatpush.msra.mxu0 %v3734
    %3857 = vmatpush.msra.mxu0 %v3730
    %3858 = vmatpush.msra.mxu0 %v3726
    %3859 = vmatpush.msra.mxu0 %v3722
    %3860 = vmatpush.msra.mxu0 %v3718
    %3861 = vmatpush.msra.mxu0 %v3714
    %3862 = vmatpush.msra.mxu0 %v3710
    %3863 = vmatpush.msra.mxu0 %v3706
    %3864 = vmatpush.msra.mxu0 %v3702
    %3865 = vmatpush.msra.mxu0 %v3698
    %3866 = vmatpush.msra.mxu0 %v3694
    %3867 = vmatpush.msra.mxu0 %v3690
    %3868 = vmatpush.msra.mxu0 %v3686
    %3869 = vmatpush.msra.mxu0 %v3682
    %3870 = vmatmul.f32.gmra.mxu0 %v3398
    %v3871 = vpop.f32.mrf.mxu0
    %v3872 = vadd.f32 %v3852, %v3871
    %3873 = vdwg.mxu0
    %3874 = vmatpush.msra.mxu0 %v3679
    %3875 = vmatpush.msra.mxu0 %v3675
    %3876 = vmatpush.msra.mxu0 %v3671
    %3877 = vmatpush.msra.mxu0 %v3667
    %3878 = vmatpush.msra.mxu0 %v3663
    %3879 = vmatpush.msra.mxu0 %v3659
    %3880 = vmatpush.msra.mxu0 %v3655
    %3881 = vmatpush.msra.mxu0 %v3651
    %3882 = vmatpush.msra.mxu0 %v3647
    %3883 = vmatpush.msra.mxu0 %v3643
    %3884 = vmatpush.msra.mxu0 %v3639
    %3885 = vmatpush.msra.mxu0 %v3635
    %3886 = vmatpush.msra.mxu0 %v3631
    %3887 = vmatpush.msra.mxu0 %v3627
    %3888 = vmatpush.msra.mxu0 %v3623
    %3889 = vmatpush.msra.mxu0 %v3619
    %3890 = vmatmul.f32.gmra.mxu0 %v3615
    %v3891 = vpop.f32.mrf.mxu0
    %v3892 = vadd.f32 %v3749, %v3891
    %3893 = vdwg.mxu0
    %3894 = vmatpush.msra.mxu0 %v3743
    %3895 = vmatpush.msra.mxu0 %v3739
    %3896 = vmatpush.msra.mxu0 %v3735
    %3897 = vmatpush.msra.mxu0 %v3731
    %3898 = vmatpush.msra.mxu0 %v3727
    %3899 = vmatpush.msra.mxu0 %v3723
    %3900 = vmatpush.msra.mxu0 %v3719
    %3901 = vmatpush.msra.mxu0 %v3715
    %3902 = vmatpush.msra.mxu0 %v3711
    %3903 = vmatpush.msra.mxu0 %v3707
    %3904 = vmatpush.msra.mxu0 %v3703
    %3905 = vmatpush.msra.mxu0 %v3699
    %3906 = vmatpush.msra.mxu0 %v3695
    %3907 = vmatpush.msra.mxu0 %v3691
    %3908 = vmatpush.msra.mxu0 %v3687
    %3909 = vmatpush.msra.mxu0 %v3683
    %3910 = vmatmul.f32.gmra.mxu0 %v3398
    %v3911 = vpop.f32.mrf.mxu0
    %v3912 = vadd.f32 %v3892, %v3911
    %3913 = vdwg.mxu0
    %v3914 = vxor.u32 %v3792, 2147483648
    %v3915 = vmul.f32 %v3914, 1.442695
    %v3916 = vpow.pop %v3915
    %v3917 = vadd.f32 %v3916, 1.0
    %v3918 = vrcp.pop %v3917
    %v3919 = vmul.f32 %v3917, %v3918
    %v3920 = vsub.f32 1.0, %v3919
    %v3921 = vmul.f32 %v3918, %v3920
    %v3922 = vadd.f32 %v3918, %v3921
    %vm3923 = vweird.f32 %v3917
    %vm3924 = vweird.f32 %v3918
    %vm3925 = vmor %vm3923, %vm3924
    %v3926 = vsel %vm3925, %v3918, %v3922
    %v3927 = vand.u32 2147483647, %v3917
    %vm3928 = vcmp.eq.f32.partialorder %v3927, 8.507059e+37
    %v3929 = vand.u32 %v3917, 2147483648
    %v3930 = vor.u32 1.1754944e-38, %v3929
    %v3931 = vsel %vm3928, %v3930, %v3926
    %v3932 = vmul.f32 1.0, %v3931
    %v3933 = vxor.u32 %v3832, 2147483648
    %v3934 = vmul.f32 %v3933, 1.442695
    %v3935 = vpow.pop %v3934
    %v3936 = vadd.f32 %v3935, 1.0
    %v3937 = vrcp.pop %v3936
    %v3938 = vmul.f32 %v3936, %v3937
    %v3939 = vsub.f32 1.0, %v3938
    %v3940 = vmul.f32 %v3937, %v3939
    %v3941 = vadd.f32 %v3937, %v3940
    %vm3942 = vweird.f32 %v3936
    %vm3943 = vweird.f32 %v3937
    %vm3944 = vmor %vm3942, %vm3943
    %v3945 = vsel %vm3944, %v3937, %v3941
    %v3946 = vand.u32 2147483647, %v3936
    %vm3947 = vcmp.eq.f32.partialorder %v3946, 8.507059e+37
    %v3948 = vand.u32 %v3936, 2147483648
    %v3949 = vor.u32 1.1754944e-38, %v3948
    %v3950 = vsel %vm3947, %v3949, %v3945
    %v3951 = vmul.f32 1.0, %v3950
    %v3952 = vtanh.pop %v3872
    %v3953 = vxor.u32 %v3912, 2147483648
    %v3954 = vmul.f32 %v3953, 1.442695
    %v3955 = vpow.pop %v3954
    %v3956 = vadd.f32 %v3955, 1.0
    %v3957 = vrcp.pop %v3956
    %v3958 = vmul.f32 %v3956, %v3957
    %v3959 = vsub.f32 1.0, %v3958
    %v3960 = vmul.f32 %v3957, %v3959
    %v3961 = vadd.f32 %v3957, %v3960
    %vm3962 = vweird.f32 %v3956
    %vm3963 = vweird.f32 %v3957
    %vm3964 = vmor %vm3962, %vm3963
    %v3965 = vsel %vm3964, %v3957, %v3961
    %v3966 = vand.u32 2147483647, %v3956
    %vm3967 = vcmp.eq.f32.partialorder %v3966, 8.507059e+37
    %v3968 = vand.u32 %v3956, 2147483648
    %v3969 = vor.u32 1.1754944e-38, %v3968
    %v3970 = vsel %vm3967, %v3969, %v3965
    %v3971 = vmul.f32 1.0, %v3970
    %v3972 = vmul.f32 %v3951, %v3399
    %v3973 = vmul.f32 %v3932, %v3952
    %v3974 = vadd.f32 %v3972, %v3973
    %v3975 = vtanh.pop %v3974
    %v3976 = vmul.f32 %v3971, %v3975
    %3977 = vst [vmem:[#allocation2] sm:$0xff] %v3615
    %3978 = vst [vmem:[#allocation3] sm:$0xff] %v3613
    %3979 = vst [vmem:[%s463] sm:$0xff] %v3976
    %3980 = vst [vmem:[%s465] sm:$0xff] %v3974
    %s3981 = scalar_lea.vmem [#allocation5], 40
    %3982 = vst [vmem:[%s3981] sm:$0xff] %v3976
    %v3983 = vld [vmem:[#allocation2] sm:$0xff]
    %v3984 = vld [vmem:[#allocation3] sm:$0xff]
    %v3985 = vld [vmem:[%s463] sm:$0xff]
    %v3986 = vld [vmem:[%s465] sm:$0xff]
    %s3987 = scalar_lea.vmem [#allocation4], 192
    %v3988 = vld [vmem:[%s3987] sm:$0xff]
    %v3989 = vld [vmem:[%s3987 + $0x8] sm:$0xff]
    %v3990 = vld [vmem:[%s3987 + $0x10] sm:$0xff]
    %v3991 = vld [vmem:[%s3987 + $0x18] sm:$0xff]
    %v3992 = vld [vmem:[#allocation14] sm:$0xff]
    %v3993 = vld [vmem:[#allocation14 + $0x8] sm:$0xff]
    %v3994 = vld [vmem:[#allocation14 + $0x10] sm:$0xff]
    %v3995 = vld [vmem:[#allocation14 + $0x18] sm:$0xff]
    %v3996 = vld [vmem:[#allocation14 + $0x20] sm:$0xff]
    %v3997 = vld [vmem:[#allocation14 + $0x28] sm:$0xff]
    %v3998 = vld [vmem:[#allocation14 + $0x30] sm:$0xff]
    %v3999 = vld [vmem:[#allocation14 + $0x38] sm:$0xff]
    %v4000 = vld [vmem:[#allocation14 + $0x40] sm:$0xff]
    %v4001 = vld [vmem:[#allocation14 + $0x48] sm:$0xff]
    %v4002 = vld [vmem:[#allocation14 + $0x50] sm:$0xff]
    %v4003 = vld [vmem:[#allocation14 + $0x58] sm:$0xff]
    %v4004 = vld [vmem:[#allocation14 + $0x60] sm:$0xff]
    %v4005 = vld [vmem:[#allocation14 + $0x68] sm:$0xff]
    %v4006 = vld [vmem:[#allocation14 + $0x70] sm:$0xff]
    %v4007 = vld [vmem:[#allocation14 + $0x78] sm:$0xff]
    %v4008 = vld [vmem:[#allocation14 + $0x80] sm:$0xff]
    %v4009 = vld [vmem:[#allocation14 + $0x88] sm:$0xff]
    %v4010 = vld [vmem:[#allocation14 + $0x90] sm:$0xff]
    %v4011 = vld [vmem:[#allocation14 + $0x98] sm:$0xff]
    %v4012 = vld [vmem:[#allocation14 + $0xa0] sm:$0xff]
    %v4013 = vld [vmem:[#allocation14 + $0xa8] sm:$0xff]
    %v4014 = vld [vmem:[#allocation14 + $0xb0] sm:$0xff]
    %v4015 = vld [vmem:[#allocation14 + $0xb8] sm:$0xff]
    %v4016 = vld [vmem:[#allocation14 + $0xc0] sm:$0xff]
    %v4017 = vld [vmem:[#allocation14 + $0xc8] sm:$0xff]
    %v4018 = vld [vmem:[#allocation14 + $0xd0] sm:$0xff]
    %v4019 = vld [vmem:[#allocation14 + $0xd8] sm:$0xff]
    %v4020 = vld [vmem:[#allocation14 + $0xe0] sm:$0xff]
    %v4021 = vld [vmem:[#allocation14 + $0xe8] sm:$0xff]
    %v4022 = vld [vmem:[#allocation14 + $0xf0] sm:$0xff]
    %v4023 = vld [vmem:[#allocation14 + $0xf8] sm:$0xff]
    %v4024 = vld [vmem:[#allocation14 + $0x100] sm:$0xff]
    %v4025 = vld [vmem:[#allocation14 + $0x108] sm:$0xff]
    %v4026 = vld [vmem:[#allocation14 + $0x110] sm:$0xff]
    %v4027 = vld [vmem:[#allocation14 + $0x118] sm:$0xff]
    %v4028 = vld [vmem:[#allocation14 + $0x120] sm:$0xff]
    %v4029 = vld [vmem:[#allocation14 + $0x128] sm:$0xff]
    %v4030 = vld [vmem:[#allocation14 + $0x130] sm:$0xff]
    %v4031 = vld [vmem:[#allocation14 + $0x138] sm:$0xff]
    %v4032 = vld [vmem:[#allocation14 + $0x140] sm:$0xff]
    %v4033 = vld [vmem:[#allocation14 + $0x148] sm:$0xff]
    %v4034 = vld [vmem:[#allocation14 + $0x150] sm:$0xff]
    %v4035 = vld [vmem:[#allocation14 + $0x158] sm:$0xff]
    %v4036 = vld [vmem:[#allocation14 + $0x160] sm:$0xff]
    %v4037 = vld [vmem:[#allocation14 + $0x168] sm:$0xff]
    %v4038 = vld [vmem:[#allocation14 + $0x170] sm:$0xff]
    %v4039 = vld [vmem:[#allocation14 + $0x178] sm:$0xff]
    %v4040 = vld [vmem:[#allocation14 + $0x180] sm:$0xff]
    %v4041 = vld [vmem:[#allocation14 + $0x188] sm:$0xff]
    %v4042 = vld [vmem:[#allocation14 + $0x190] sm:$0xff]
    %v4043 = vld [vmem:[#allocation14 + $0x198] sm:$0xff]
    %v4044 = vld [vmem:[#allocation14 + $0x1a0] sm:$0xff]
    %v4045 = vld [vmem:[#allocation14 + $0x1a8] sm:$0xff]
    %v4046 = vld [vmem:[#allocation14 + $0x1b0] sm:$0xff]
    %v4047 = vld [vmem:[#allocation14 + $0x1b8] sm:$0xff]
    %v4048 = vld [vmem:[#allocation14 + $0x1c0] sm:$0xff]
    %v4049 = vld [vmem:[#allocation14 + $0x1c8] sm:$0xff]
    %v4050 = vld [vmem:[#allocation14 + $0x1d0] sm:$0xff]
    %v4051 = vld [vmem:[#allocation14 + $0x1d8] sm:$0xff]
    %v4052 = vld [vmem:[#allocation14 + $0x1e0] sm:$0xff]
    %v4053 = vld [vmem:[#allocation14 + $0x1e8] sm:$0xff]
    %v4054 = vld [vmem:[#allocation14 + $0x1f0] sm:$0xff]
    %v4055 = vld [vmem:[#allocation14 + $0x1f8] sm:$0xff]
    %4056 = vmatpush.msra.mxu0 %v4052
    %4057 = vmatpush.msra.mxu0 %v4048
    %4058 = vmatpush.msra.mxu0 %v4044
    %4059 = vmatpush.msra.mxu0 %v4040
    %4060 = vmatpush.msra.mxu0 %v4036
    %4061 = vmatpush.msra.mxu0 %v4032
    %4062 = vmatpush.msra.mxu0 %v4028
    %4063 = vmatpush.msra.mxu0 %v4024
    %4064 = vmatpush.msra.mxu0 %v4020
    %4065 = vmatpush.msra.mxu0 %v4016
    %4066 = vmatpush.msra.mxu0 %v4012
    %4067 = vmatpush.msra.mxu0 %v4008
    %4068 = vmatpush.msra.mxu0 %v4004
    %4069 = vmatpush.msra.mxu0 %v4000
    %4070 = vmatpush.msra.mxu0 %v3996
    %4071 = vmatpush.msra.mxu0 %v3992
    %4072 = vmatmul.f32.gmra.mxu0 %v3983
    %v4073 = vpop.f32.mrf.mxu0
    %v4074 = vadd.f32 0.0, %v4073
    %4075 = vdwg.mxu0
    %4076 = vmatpush.msra.mxu0 %v4053
    %4077 = vmatpush.msra.mxu0 %v4049
    %4078 = vmatpush.msra.mxu0 %v4045
    %4079 = vmatpush.msra.mxu0 %v4041
    %4080 = vmatpush.msra.mxu0 %v4037
    %4081 = vmatpush.msra.mxu0 %v4033
    %4082 = vmatpush.msra.mxu0 %v4029
    %4083 = vmatpush.msra.mxu0 %v4025
    %4084 = vmatpush.msra.mxu0 %v4021
    %4085 = vmatpush.msra.mxu0 %v4017
    %4086 = vmatpush.msra.mxu0 %v4013
    %4087 = vmatpush.msra.mxu0 %v4009
    %4088 = vmatpush.msra.mxu0 %v4005
    %4089 = vmatpush.msra.mxu0 %v4001
    %4090 = vmatpush.msra.mxu0 %v3997
    %4091 = vmatpush.msra.mxu0 %v3993
    %4092 = vmatmul.f32.gmra.mxu0 %v3983
    %v4093 = vpop.f32.mrf.mxu0
    %v4094 = vadd.f32 0.0, %v4093
    %4095 = vdwg.mxu0
    %4096 = vmatpush.msra.mxu0 %v4054
    %4097 = vmatpush.msra.mxu0 %v4050
    %4098 = vmatpush.msra.mxu0 %v4046
    %4099 = vmatpush.msra.mxu0 %v4042
    %4100 = vmatpush.msra.mxu0 %v4038
    %4101 = vmatpush.msra.mxu0 %v4034
    %4102 = vmatpush.msra.mxu0 %v4030
    %4103 = vmatpush.msra.mxu0 %v4026
    %4104 = vmatpush.msra.mxu0 %v4022
    %4105 = vmatpush.msra.mxu0 %v4018
    %4106 = vmatpush.msra.mxu0 %v4014
    %4107 = vmatpush.msra.mxu0 %v4010
    %4108 = vmatpush.msra.mxu0 %v4006
    %4109 = vmatpush.msra.mxu0 %v4002
    %4110 = vmatpush.msra.mxu0 %v3998
    %4111 = vmatpush.msra.mxu0 %v3994
    %4112 = vmatmul.f32.gmra.mxu0 %v3983
    %v4113 = vpop.f32.mrf.mxu0
    %v4114 = vadd.f32 0.0, %v4113
    %4115 = vdwg.mxu0
    %4116 = vmatpush.msra.mxu0 %v4055
    %4117 = vmatpush.msra.mxu0 %v4051
    %4118 = vmatpush.msra.mxu0 %v4047
    %4119 = vmatpush.msra.mxu0 %v4043
    %4120 = vmatpush.msra.mxu0 %v4039
    %4121 = vmatpush.msra.mxu0 %v4035
    %4122 = vmatpush.msra.mxu0 %v4031
    %4123 = vmatpush.msra.mxu0 %v4027
    %4124 = vmatpush.msra.mxu0 %v4023
    %4125 = vmatpush.msra.mxu0 %v4019
    %4126 = vmatpush.msra.mxu0 %v4015
    %4127 = vmatpush.msra.mxu0 %v4011
    %4128 = vmatpush.msra.mxu0 %v4007
    %4129 = vmatpush.msra.mxu0 %v4003
    %4130 = vmatpush.msra.mxu0 %v3999
    %4131 = vmatpush.msra.mxu0 %v3995
    %4132 = vmatmul.f32.gmra.mxu0 %v3983
    %v4133 = vpop.f32.mrf.mxu0
    %v4134 = vadd.f32 0.0, %v4133
    %4135 = vdwg.mxu0
    %v4136 = vadd.f32 %v3988, %v4074
    %v4137 = vadd.f32 %v3989, %v4094
    %v4138 = vadd.f32 %v3990, %v4114
    %v4139 = vadd.f32 %v3991, %v4134
    %v4140 = vxor.u32 %v4136, 2147483648
    %v4141 = vmul.f32 %v4140, 1.442695
    %v4142 = vpow.pop %v4141
    %v4143 = vadd.f32 %v4142, 1.0
    %v4144 = vrcp.pop %v4143
    %v4145 = vmul.f32 %v4143, %v4144
    %v4146 = vsub.f32 1.0, %v4145
    %v4147 = vmul.f32 %v4144, %v4146
    %v4148 = vadd.f32 %v4144, %v4147
    %vm4149 = vweird.f32 %v4143
    %vm4150 = vweird.f32 %v4144
    %vm4151 = vmor %vm4149, %vm4150
    %v4152 = vsel %vm4151, %v4144, %v4148
    %v4153 = vand.u32 2147483647, %v4143
    %vm4154 = vcmp.eq.f32.partialorder %v4153, 8.507059e+37
    %v4155 = vand.u32 %v4143, 2147483648
    %v4156 = vor.u32 1.1754944e-38, %v4155
    %v4157 = vsel %vm4154, %v4156, %v4152
    %v4158 = vmul.f32 1.0, %v4157
    %v4159 = vxor.u32 %v4137, 2147483648
    %v4160 = vmul.f32 %v4159, 1.442695
    %v4161 = vpow.pop %v4160
    %v4162 = vadd.f32 %v4161, 1.0
    %v4163 = vrcp.pop %v4162
    %v4164 = vmul.f32 %v4162, %v4163
    %v4165 = vsub.f32 1.0, %v4164
    %v4166 = vmul.f32 %v4163, %v4165
    %v4167 = vadd.f32 %v4163, %v4166
    %vm4168 = vweird.f32 %v4162
    %vm4169 = vweird.f32 %v4163
    %vm4170 = vmor %vm4168, %vm4169
    %v4171 = vsel %vm4170, %v4163, %v4167
    %v4172 = vand.u32 2147483647, %v4162
    %vm4173 = vcmp.eq.f32.partialorder %v4172, 8.507059e+37
    %v4174 = vand.u32 %v4162, 2147483648
    %v4175 = vor.u32 1.1754944e-38, %v4174
    %v4176 = vsel %vm4173, %v4175, %v4171
    %v4177 = vmul.f32 1.0, %v4176
    %v4178 = vtanh.pop %v4138
    %v4179 = vxor.u32 %v4139, 2147483648
    %v4180 = vmul.f32 %v4179, 1.442695
    %v4181 = vpow.pop %v4180
    %v4182 = vadd.f32 %v4181, 1.0
    %v4183 = vrcp.pop %v4182
    %v4184 = vmul.f32 %v4182, %v4183
    %v4185 = vsub.f32 1.0, %v4184
    %v4186 = vmul.f32 %v4183, %v4185
    %v4187 = vadd.f32 %v4183, %v4186
    %vm4188 = vweird.f32 %v4182
    %vm4189 = vweird.f32 %v4183
    %vm4190 = vmor %vm4188, %vm4189
    %v4191 = vsel %vm4190, %v4183, %v4187
    %v4192 = vand.u32 2147483647, %v4182
    %vm4193 = vcmp.eq.f32.partialorder %v4192, 8.507059e+37
    %v4194 = vand.u32 %v4182, 2147483648
    %v4195 = vor.u32 1.1754944e-38, %v4194
    %v4196 = vsel %vm4193, %v4195, %v4191
    %v4197 = vmul.f32 1.0, %v4196
    %v4198 = vmul.f32 %v4177, %v3984
    %v4199 = vmul.f32 %v4158, %v4178
    %v4200 = vadd.f32 %v4198, %v4199
    %v4201 = vtanh.pop %v4200
    %v4202 = vmul.f32 %v4197, %v4201
    %v4203 = vld [vmem:[#allocation15] sm:$0xff]
    %v4204 = vld [vmem:[#allocation15 + $0x8] sm:$0xff]
    %v4205 = vld [vmem:[#allocation15 + $0x10] sm:$0xff]
    %v4206 = vld [vmem:[#allocation15 + $0x18] sm:$0xff]
    %v4207 = vld [vmem:[#allocation15 + $0x20] sm:$0xff]
    %v4208 = vld [vmem:[#allocation15 + $0x28] sm:$0xff]
    %v4209 = vld [vmem:[#allocation15 + $0x30] sm:$0xff]
    %v4210 = vld [vmem:[#allocation15 + $0x38] sm:$0xff]
    %v4211 = vld [vmem:[#allocation15 + $0x40] sm:$0xff]
    %v4212 = vld [vmem:[#allocation15 + $0x48] sm:$0xff]
    %v4213 = vld [vmem:[#allocation15 + $0x50] sm:$0xff]
    %v4214 = vld [vmem:[#allocation15 + $0x58] sm:$0xff]
    %v4215 = vld [vmem:[#allocation15 + $0x60] sm:$0xff]
    %v4216 = vld [vmem:[#allocation15 + $0x68] sm:$0xff]
    %v4217 = vld [vmem:[#allocation15 + $0x70] sm:$0xff]
    %v4218 = vld [vmem:[#allocation15 + $0x78] sm:$0xff]
    %v4219 = vld [vmem:[#allocation15 + $0x80] sm:$0xff]
    %v4220 = vld [vmem:[#allocation15 + $0x88] sm:$0xff]
    %v4221 = vld [vmem:[#allocation15 + $0x90] sm:$0xff]
    %v4222 = vld [vmem:[#allocation15 + $0x98] sm:$0xff]
    %v4223 = vld [vmem:[#allocation15 + $0xa0] sm:$0xff]
    %v4224 = vld [vmem:[#allocation15 + $0xa8] sm:$0xff]
    %v4225 = vld [vmem:[#allocation15 + $0xb0] sm:$0xff]
    %v4226 = vld [vmem:[#allocation15 + $0xb8] sm:$0xff]
    %v4227 = vld [vmem:[#allocation15 + $0xc0] sm:$0xff]
    %v4228 = vld [vmem:[#allocation15 + $0xc8] sm:$0xff]
    %v4229 = vld [vmem:[#allocation15 + $0xd0] sm:$0xff]
    %v4230 = vld [vmem:[#allocation15 + $0xd8] sm:$0xff]
    %v4231 = vld [vmem:[#allocation15 + $0xe0] sm:$0xff]
    %v4232 = vld [vmem:[#allocation15 + $0xe8] sm:$0xff]
    %v4233 = vld [vmem:[#allocation15 + $0xf0] sm:$0xff]
    %v4234 = vld [vmem:[#allocation15 + $0xf8] sm:$0xff]
    %v4235 = vld [vmem:[#allocation15 + $0x100] sm:$0xff]
    %v4236 = vld [vmem:[#allocation15 + $0x108] sm:$0xff]
    %v4237 = vld [vmem:[#allocation15 + $0x110] sm:$0xff]
    %v4238 = vld [vmem:[#allocation15 + $0x118] sm:$0xff]
    %v4239 = vld [vmem:[#allocation15 + $0x120] sm:$0xff]
    %v4240 = vld [vmem:[#allocation15 + $0x128] sm:$0xff]
    %v4241 = vld [vmem:[#allocation15 + $0x130] sm:$0xff]
    %v4242 = vld [vmem:[#allocation15 + $0x138] sm:$0xff]
    %v4243 = vld [vmem:[#allocation15 + $0x140] sm:$0xff]
    %v4244 = vld [vmem:[#allocation15 + $0x148] sm:$0xff]
    %v4245 = vld [vmem:[#allocation15 + $0x150] sm:$0xff]
    %v4246 = vld [vmem:[#allocation15 + $0x158] sm:$0xff]
    %v4247 = vld [vmem:[#allocation15 + $0x160] sm:$0xff]
    %v4248 = vld [vmem:[#allocation15 + $0x168] sm:$0xff]
    %v4249 = vld [vmem:[#allocation15 + $0x170] sm:$0xff]
    %v4250 = vld [vmem:[#allocation15 + $0x178] sm:$0xff]
    %v4251 = vld [vmem:[#allocation15 + $0x180] sm:$0xff]
    %v4252 = vld [vmem:[#allocation15 + $0x188] sm:$0xff]
    %v4253 = vld [vmem:[#allocation15 + $0x190] sm:$0xff]
    %v4254 = vld [vmem:[#allocation15 + $0x198] sm:$0xff]
    %v4255 = vld [vmem:[#allocation15 + $0x1a0] sm:$0xff]
    %v4256 = vld [vmem:[#allocation15 + $0x1a8] sm:$0xff]
    %v4257 = vld [vmem:[#allocation15 + $0x1b0] sm:$0xff]
    %v4258 = vld [vmem:[#allocation15 + $0x1b8] sm:$0xff]
    %v4259 = vld [vmem:[#allocation15 + $0x1c0] sm:$0xff]
    %v4260 = vld [vmem:[#allocation15 + $0x1c8] sm:$0xff]
    %v4261 = vld [vmem:[#allocation15 + $0x1d0] sm:$0xff]
    %v4262 = vld [vmem:[#allocation15 + $0x1d8] sm:$0xff]
    %v4263 = vld [vmem:[#allocation15 + $0x1e0] sm:$0xff]
    %v4264 = vld [vmem:[#allocation15 + $0x1e8] sm:$0xff]
    %v4265 = vld [vmem:[#allocation15 + $0x1f0] sm:$0xff]
    %v4266 = vld [vmem:[#allocation15 + $0x1f8] sm:$0xff]
    %v4267 = vld [vmem:[#allocation15 + $0x200] sm:$0xff]
    %v4268 = vld [vmem:[#allocation15 + $0x208] sm:$0xff]
    %v4269 = vld [vmem:[#allocation15 + $0x210] sm:$0xff]
    %v4270 = vld [vmem:[#allocation15 + $0x218] sm:$0xff]
    %v4271 = vld [vmem:[#allocation15 + $0x220] sm:$0xff]
    %v4272 = vld [vmem:[#allocation15 + $0x228] sm:$0xff]
    %v4273 = vld [vmem:[#allocation15 + $0x230] sm:$0xff]
    %v4274 = vld [vmem:[#allocation15 + $0x238] sm:$0xff]
    %v4275 = vld [vmem:[#allocation15 + $0x240] sm:$0xff]
    %v4276 = vld [vmem:[#allocation15 + $0x248] sm:$0xff]
    %v4277 = vld [vmem:[#allocation15 + $0x250] sm:$0xff]
    %v4278 = vld [vmem:[#allocation15 + $0x258] sm:$0xff]
    %v4279 = vld [vmem:[#allocation15 + $0x260] sm:$0xff]
    %v4280 = vld [vmem:[#allocation15 + $0x268] sm:$0xff]
    %v4281 = vld [vmem:[#allocation15 + $0x270] sm:$0xff]
    %v4282 = vld [vmem:[#allocation15 + $0x278] sm:$0xff]
    %v4283 = vld [vmem:[#allocation15 + $0x280] sm:$0xff]
    %v4284 = vld [vmem:[#allocation15 + $0x288] sm:$0xff]
    %v4285 = vld [vmem:[#allocation15 + $0x290] sm:$0xff]
    %v4286 = vld [vmem:[#allocation15 + $0x298] sm:$0xff]
    %v4287 = vld [vmem:[#allocation15 + $0x2a0] sm:$0xff]
    %v4288 = vld [vmem:[#allocation15 + $0x2a8] sm:$0xff]
    %v4289 = vld [vmem:[#allocation15 + $0x2b0] sm:$0xff]
    %v4290 = vld [vmem:[#allocation15 + $0x2b8] sm:$0xff]
    %v4291 = vld [vmem:[#allocation15 + $0x2c0] sm:$0xff]
    %v4292 = vld [vmem:[#allocation15 + $0x2c8] sm:$0xff]
    %v4293 = vld [vmem:[#allocation15 + $0x2d0] sm:$0xff]
    %v4294 = vld [vmem:[#allocation15 + $0x2d8] sm:$0xff]
    %v4295 = vld [vmem:[#allocation15 + $0x2e0] sm:$0xff]
    %v4296 = vld [vmem:[#allocation15 + $0x2e8] sm:$0xff]
    %v4297 = vld [vmem:[#allocation15 + $0x2f0] sm:$0xff]
    %v4298 = vld [vmem:[#allocation15 + $0x2f8] sm:$0xff]
    %v4299 = vld [vmem:[#allocation15 + $0x300] sm:$0xff]
    %v4300 = vld [vmem:[#allocation15 + $0x308] sm:$0xff]
    %v4301 = vld [vmem:[#allocation15 + $0x310] sm:$0xff]
    %v4302 = vld [vmem:[#allocation15 + $0x318] sm:$0xff]
    %v4303 = vld [vmem:[#allocation15 + $0x320] sm:$0xff]
    %v4304 = vld [vmem:[#allocation15 + $0x328] sm:$0xff]
    %v4305 = vld [vmem:[#allocation15 + $0x330] sm:$0xff]
    %v4306 = vld [vmem:[#allocation15 + $0x338] sm:$0xff]
    %v4307 = vld [vmem:[#allocation15 + $0x340] sm:$0xff]
    %v4308 = vld [vmem:[#allocation15 + $0x348] sm:$0xff]
    %v4309 = vld [vmem:[#allocation15 + $0x350] sm:$0xff]
    %v4310 = vld [vmem:[#allocation15 + $0x358] sm:$0xff]
    %v4311 = vld [vmem:[#allocation15 + $0x360] sm:$0xff]
    %v4312 = vld [vmem:[#allocation15 + $0x368] sm:$0xff]
    %v4313 = vld [vmem:[#allocation15 + $0x370] sm:$0xff]
    %v4314 = vld [vmem:[#allocation15 + $0x378] sm:$0xff]
    %v4315 = vld [vmem:[#allocation15 + $0x380] sm:$0xff]
    %v4316 = vld [vmem:[#allocation15 + $0x388] sm:$0xff]
    %v4317 = vld [vmem:[#allocation15 + $0x390] sm:$0xff]
    %v4318 = vld [vmem:[#allocation15 + $0x398] sm:$0xff]
    %v4319 = vld [vmem:[#allocation15 + $0x3a0] sm:$0xff]
    %v4320 = vld [vmem:[#allocation15 + $0x3a8] sm:$0xff]
    %v4321 = vld [vmem:[#allocation15 + $0x3b0] sm:$0xff]
    %v4322 = vld [vmem:[#allocation15 + $0x3b8] sm:$0xff]
    %v4323 = vld [vmem:[#allocation15 + $0x3c0] sm:$0xff]
    %v4324 = vld [vmem:[#allocation15 + $0x3c8] sm:$0xff]
    %v4325 = vld [vmem:[#allocation15 + $0x3d0] sm:$0xff]
    %v4326 = vld [vmem:[#allocation15 + $0x3d8] sm:$0xff]
    %v4327 = vld [vmem:[#allocation15 + $0x3e0] sm:$0xff]
    %v4328 = vld [vmem:[#allocation15 + $0x3e8] sm:$0xff]
    %v4329 = vld [vmem:[#allocation15 + $0x3f0] sm:$0xff]
    %v4330 = vld [vmem:[#allocation15 + $0x3f8] sm:$0xff]
    %v4331 = vld [vmem:[#allocation17] sm:$0xf]
    %v4333 = vperm.slane %v4331, 0
    %v4334 = vperm.slane %v4331, 1
    %v4335 = vperm.slane %v4331, 2
    %v4336 = vperm.slane %v4331, 3
    %4341 = vmatpush.msra.mxu0 %v4263
    %4342 = vmatpush.msra.mxu0 %v4259
    %4343 = vmatpush.msra.mxu0 %v4255
    %4344 = vmatpush.msra.mxu0 %v4251
    %4345 = vmatpush.msra.mxu0 %v4247
    %4346 = vmatpush.msra.mxu0 %v4243
    %4347 = vmatpush.msra.mxu0 %v4239
    %4348 = vmatpush.msra.mxu0 %v4235
    %4349 = vmatpush.msra.mxu0 %v4231
    %4350 = vmatpush.msra.mxu0 %v4227
    %4351 = vmatpush.msra.mxu0 %v4223
    %4352 = vmatpush.msra.mxu0 %v4219
    %4353 = vmatpush.msra.mxu0 %v4215
    %4354 = vmatpush.msra.mxu0 %v4211
    %4355 = vmatpush.msra.mxu0 %v4207
    %4356 = vmatpush.msra.mxu0 %v4203
    %4357 = vmatmul.f32.gmra.mxu0 %v4202
    %v4358 = vpop.f32.mrf.mxu0
    %v4359 = vadd.f32 %v4333, %v4358
    %4360 = vdwg.mxu0
    %4361 = vmatpush.msra.mxu0 %v4327
    %4362 = vmatpush.msra.mxu0 %v4323
    %4363 = vmatpush.msra.mxu0 %v4319
    %4364 = vmatpush.msra.mxu0 %v4315
    %4365 = vmatpush.msra.mxu0 %v4311
    %4366 = vmatpush.msra.mxu0 %v4307
    %4367 = vmatpush.msra.mxu0 %v4303
    %4368 = vmatpush.msra.mxu0 %v4299
    %4369 = vmatpush.msra.mxu0 %v4295
    %4370 = vmatpush.msra.mxu0 %v4291
    %4371 = vmatpush.msra.mxu0 %v4287
    %4372 = vmatpush.msra.mxu0 %v4283
    %4373 = vmatpush.msra.mxu0 %v4279
    %4374 = vmatpush.msra.mxu0 %v4275
    %4375 = vmatpush.msra.mxu0 %v4271
    %4376 = vmatpush.msra.mxu0 %v4267
    %4377 = vmatmul.f32.gmra.mxu0 %v3985
    %v4378 = vpop.f32.mrf.mxu0
    %v4379 = vadd.f32 %v4359, %v4378
    %4380 = vdwg.mxu0
    %4381 = vmatpush.msra.mxu0 %v4264
    %4382 = vmatpush.msra.mxu0 %v4260
    %4383 = vmatpush.msra.mxu0 %v4256
    %4384 = vmatpush.msra.mxu0 %v4252
    %4385 = vmatpush.msra.mxu0 %v4248
    %4386 = vmatpush.msra.mxu0 %v4244
    %4387 = vmatpush.msra.mxu0 %v4240
    %4388 = vmatpush.msra.mxu0 %v4236
    %4389 = vmatpush.msra.mxu0 %v4232
    %4390 = vmatpush.msra.mxu0 %v4228
    %4391 = vmatpush.msra.mxu0 %v4224
    %4392 = vmatpush.msra.mxu0 %v4220
    %4393 = vmatpush.msra.mxu0 %v4216
    %4394 = vmatpush.msra.mxu0 %v4212
    %4395 = vmatpush.msra.mxu0 %v4208
    %4396 = vmatpush.msra.mxu0 %v4204
    %4397 = vmatmul.f32.gmra.mxu0 %v4202
    %v4398 = vpop.f32.mrf.mxu0
    %v4399 = vadd.f32 %v4334, %v4398
    %4400 = vdwg.mxu0
    %4401 = vmatpush.msra.mxu0 %v4328
    %4402 = vmatpush.msra.mxu0 %v4324
    %4403 = vmatpush.msra.mxu0 %v4320
    %4404 = vmatpush.msra.mxu0 %v4316
    %4405 = vmatpush.msra.mxu0 %v4312
    %4406 = vmatpush.msra.mxu0 %v4308
    %4407 = vmatpush.msra.mxu0 %v4304
    %4408 = vmatpush.msra.mxu0 %v4300
    %4409 = vmatpush.msra.mxu0 %v4296
    %4410 = vmatpush.msra.mxu0 %v4292
    %4411 = vmatpush.msra.mxu0 %v4288
    %4412 = vmatpush.msra.mxu0 %v4284
    %4413 = vmatpush.msra.mxu0 %v4280
    %4414 = vmatpush.msra.mxu0 %v4276
    %4415 = vmatpush.msra.mxu0 %v4272
    %4416 = vmatpush.msra.mxu0 %v4268
    %4417 = vmatmul.f32.gmra.mxu0 %v3985
    %v4418 = vpop.f32.mrf.mxu0
    %v4419 = vadd.f32 %v4399, %v4418
    %4420 = vdwg.mxu0
    %4421 = vmatpush.msra.mxu0 %v4265
    %4422 = vmatpush.msra.mxu0 %v4261
    %4423 = vmatpush.msra.mxu0 %v4257
    %4424 = vmatpush.msra.mxu0 %v4253
    %4425 = vmatpush.msra.mxu0 %v4249
    %4426 = vmatpush.msra.mxu0 %v4245
    %4427 = vmatpush.msra.mxu0 %v4241
    %4428 = vmatpush.msra.mxu0 %v4237
    %4429 = vmatpush.msra.mxu0 %v4233
    %4430 = vmatpush.msra.mxu0 %v4229
    %4431 = vmatpush.msra.mxu0 %v4225
    %4432 = vmatpush.msra.mxu0 %v4221
    %4433 = vmatpush.msra.mxu0 %v4217
    %4434 = vmatpush.msra.mxu0 %v4213
    %4435 = vmatpush.msra.mxu0 %v4209
    %4436 = vmatpush.msra.mxu0 %v4205
    %4437 = vmatmul.f32.gmra.mxu0 %v4202
    %v4438 = vpop.f32.mrf.mxu0
    %v4439 = vadd.f32 %v4335, %v4438
    %4440 = vdwg.mxu0
    %4441 = vmatpush.msra.mxu0 %v4329
    %4442 = vmatpush.msra.mxu0 %v4325
    %4443 = vmatpush.msra.mxu0 %v4321
    %4444 = vmatpush.msra.mxu0 %v4317
    %4445 = vmatpush.msra.mxu0 %v4313
    %4446 = vmatpush.msra.mxu0 %v4309
    %4447 = vmatpush.msra.mxu0 %v4305
    %4448 = vmatpush.msra.mxu0 %v4301
    %4449 = vmatpush.msra.mxu0 %v4297
    %4450 = vmatpush.msra.mxu0 %v4293
    %4451 = vmatpush.msra.mxu0 %v4289
    %4452 = vmatpush.msra.mxu0 %v4285
    %4453 = vmatpush.msra.mxu0 %v4281
    %4454 = vmatpush.msra.mxu0 %v4277
    %4455 = vmatpush.msra.mxu0 %v4273
    %4456 = vmatpush.msra.mxu0 %v4269
    %4457 = vmatmul.f32.gmra.mxu0 %v3985
    %v4458 = vpop.f32.mrf.mxu0
    %v4459 = vadd.f32 %v4439, %v4458
    %4460 = vdwg.mxu0
    %4461 = vmatpush.msra.mxu0 %v4266
    %4462 = vmatpush.msra.mxu0 %v4262
    %4463 = vmatpush.msra.mxu0 %v4258
    %4464 = vmatpush.msra.mxu0 %v4254
    %4465 = vmatpush.msra.mxu0 %v4250
    %4466 = vmatpush.msra.mxu0 %v4246
    %4467 = vmatpush.msra.mxu0 %v4242
    %4468 = vmatpush.msra.mxu0 %v4238
    %4469 = vmatpush.msra.mxu0 %v4234
    %4470 = vmatpush.msra.mxu0 %v4230
    %4471 = vmatpush.msra.mxu0 %v4226
    %4472 = vmatpush.msra.mxu0 %v4222
    %4473 = vmatpush.msra.mxu0 %v4218
    %4474 = vmatpush.msra.mxu0 %v4214
    %4475 = vmatpush.msra.mxu0 %v4210
    %4476 = vmatpush.msra.mxu0 %v4206
    %4477 = vmatmul.f32.gmra.mxu0 %v4202
    %v4478 = vpop.f32.mrf.mxu0
    %v4479 = vadd.f32 %v4336, %v4478
    %4480 = vdwg.mxu0
    %4481 = vmatpush.msra.mxu0 %v4330
    %4482 = vmatpush.msra.mxu0 %v4326
    %4483 = vmatpush.msra.mxu0 %v4322
    %4484 = vmatpush.msra.mxu0 %v4318
    %4485 = vmatpush.msra.mxu0 %v4314
    %4486 = vmatpush.msra.mxu0 %v4310
    %4487 = vmatpush.msra.mxu0 %v4306
    %4488 = vmatpush.msra.mxu0 %v4302
    %4489 = vmatpush.msra.mxu0 %v4298
    %4490 = vmatpush.msra.mxu0 %v4294
    %4491 = vmatpush.msra.mxu0 %v4290
    %4492 = vmatpush.msra.mxu0 %v4286
    %4493 = vmatpush.msra.mxu0 %v4282
    %4494 = vmatpush.msra.mxu0 %v4278
    %4495 = vmatpush.msra.mxu0 %v4274
    %4496 = vmatpush.msra.mxu0 %v4270
    %4497 = vmatmul.f32.gmra.mxu0 %v3985
    %v4498 = vpop.f32.mrf.mxu0
    %v4499 = vadd.f32 %v4479, %v4498
    %4500 = vdwg.mxu0
    %v4501 = vxor.u32 %v4379, 2147483648
    %v4502 = vmul.f32 %v4501, 1.442695
    %v4503 = vpow.pop %v4502
    %v4504 = vadd.f32 %v4503, 1.0
    %v4505 = vrcp.pop %v4504
    %v4506 = vmul.f32 %v4504, %v4505
    %v4507 = vsub.f32 1.0, %v4506
    %v4508 = vmul.f32 %v4505, %v4507
    %v4509 = vadd.f32 %v4505, %v4508
    %vm4510 = vweird.f32 %v4504
    %vm4511 = vweird.f32 %v4505
    %vm4512 = vmor %vm4510, %vm4511
    %v4513 = vsel %vm4512, %v4505, %v4509
    %v4514 = vand.u32 2147483647, %v4504
    %vm4515 = vcmp.eq.f32.partialorder %v4514, 8.507059e+37
    %v4516 = vand.u32 %v4504, 2147483648
    %v4517 = vor.u32 1.1754944e-38, %v4516
    %v4518 = vsel %vm4515, %v4517, %v4513
    %v4519 = vmul.f32 1.0, %v4518
    %v4520 = vxor.u32 %v4419, 2147483648
    %v4521 = vmul.f32 %v4520, 1.442695
    %v4522 = vpow.pop %v4521
    %v4523 = vadd.f32 %v4522, 1.0
    %v4524 = vrcp.pop %v4523
    %v4525 = vmul.f32 %v4523, %v4524
    %v4526 = vsub.f32 1.0, %v4525
    %v4527 = vmul.f32 %v4524, %v4526
    %v4528 = vadd.f32 %v4524, %v4527
    %vm4529 = vweird.f32 %v4523
    %vm4530 = vweird.f32 %v4524
    %vm4531 = vmor %vm4529, %vm4530
    %v4532 = vsel %vm4531, %v4524, %v4528
    %v4533 = vand.u32 2147483647, %v4523
    %vm4534 = vcmp.eq.f32.partialorder %v4533, 8.507059e+37
    %v4535 = vand.u32 %v4523, 2147483648
    %v4536 = vor.u32 1.1754944e-38, %v4535
    %v4537 = vsel %vm4534, %v4536, %v4532
    %v4538 = vmul.f32 1.0, %v4537
    %v4539 = vtanh.pop %v4459
    %v4540 = vxor.u32 %v4499, 2147483648
    %v4541 = vmul.f32 %v4540, 1.442695
    %v4542 = vpow.pop %v4541
    %v4543 = vadd.f32 %v4542, 1.0
    %v4544 = vrcp.pop %v4543
    %v4545 = vmul.f32 %v4543, %v4544
    %v4546 = vsub.f32 1.0, %v4545
    %v4547 = vmul.f32 %v4544, %v4546
    %v4548 = vadd.f32 %v4544, %v4547
    %vm4549 = vweird.f32 %v4543
    %vm4550 = vweird.f32 %v4544
    %vm4551 = vmor %vm4549, %vm4550
    %v4552 = vsel %vm4551, %v4544, %v4548
    %v4553 = vand.u32 2147483647, %v4543
    %vm4554 = vcmp.eq.f32.partialorder %v4553, 8.507059e+37
    %v4555 = vand.u32 %v4543, 2147483648
    %v4556 = vor.u32 1.1754944e-38, %v4555
    %v4557 = vsel %vm4554, %v4556, %v4552
    %v4558 = vmul.f32 1.0, %v4557
    %v4559 = vmul.f32 %v4538, %v3986
    %v4560 = vmul.f32 %v4519, %v4539
    %v4561 = vadd.f32 %v4559, %v4560
    %v4562 = vtanh.pop %v4561
    %v4563 = vmul.f32 %v4558, %v4562
    %4564 = vst [vmem:[#allocation2] sm:$0xff] %v4202
    %4565 = vst [vmem:[#allocation3] sm:$0xff] %v4200
    %4566 = vst [vmem:[%s463] sm:$0xff] %v4563
    %4567 = vst [vmem:[%s465] sm:$0xff] %v4561
    %s4568 = scalar_lea.vmem [#allocation5], 48
    %4569 = vst [vmem:[%s4568] sm:$0xff] %v4563
    %v4570 = vld [vmem:[#allocation2] sm:$0xff]
    %v4571 = vld [vmem:[#allocation3] sm:$0xff]
    %v4572 = vld [vmem:[%s463] sm:$0xff]
    %v4573 = vld [vmem:[%s465] sm:$0xff]
    %s4574 = scalar_lea.vmem [#allocation4], 224
    %v4575 = vld [vmem:[%s4574] sm:$0xff]
    %v4576 = vld [vmem:[%s4574 + $0x8] sm:$0xff]
    %v4577 = vld [vmem:[%s4574 + $0x10] sm:$0xff]
    %v4578 = vld [vmem:[%s4574 + $0x18] sm:$0xff]
    %v4579 = vld [vmem:[#allocation14] sm:$0xff]
    %v4580 = vld [vmem:[#allocation14 + $0x8] sm:$0xff]
    %v4581 = vld [vmem:[#allocation14 + $0x10] sm:$0xff]
    %v4582 = vld [vmem:[#allocation14 + $0x18] sm:$0xff]
    %v4583 = vld [vmem:[#allocation14 + $0x20] sm:$0xff]
    %v4584 = vld [vmem:[#allocation14 + $0x28] sm:$0xff]
    %v4585 = vld [vmem:[#allocation14 + $0x30] sm:$0xff]
    %v4586 = vld [vmem:[#allocation14 + $0x38] sm:$0xff]
    %v4587 = vld [vmem:[#allocation14 + $0x40] sm:$0xff]
    %v4588 = vld [vmem:[#allocation14 + $0x48] sm:$0xff]
    %v4589 = vld [vmem:[#allocation14 + $0x50] sm:$0xff]
    %v4590 = vld [vmem:[#allocation14 + $0x58] sm:$0xff]
    %v4591 = vld [vmem:[#allocation14 + $0x60] sm:$0xff]
    %v4592 = vld [vmem:[#allocation14 + $0x68] sm:$0xff]
    %v4593 = vld [vmem:[#allocation14 + $0x70] sm:$0xff]
    %v4594 = vld [vmem:[#allocation14 + $0x78] sm:$0xff]
    %v4595 = vld [vmem:[#allocation14 + $0x80] sm:$0xff]
    %v4596 = vld [vmem:[#allocation14 + $0x88] sm:$0xff]
    %v4597 = vld [vmem:[#allocation14 + $0x90] sm:$0xff]
    %v4598 = vld [vmem:[#allocation14 + $0x98] sm:$0xff]
    %v4599 = vld [vmem:[#allocation14 + $0xa0] sm:$0xff]
    %v4600 = vld [vmem:[#allocation14 + $0xa8] sm:$0xff]
    %v4601 = vld [vmem:[#allocation14 + $0xb0] sm:$0xff]
    %v4602 = vld [vmem:[#allocation14 + $0xb8] sm:$0xff]
    %v4603 = vld [vmem:[#allocation14 + $0xc0] sm:$0xff]
    %v4604 = vld [vmem:[#allocation14 + $0xc8] sm:$0xff]
    %v4605 = vld [vmem:[#allocation14 + $0xd0] sm:$0xff]
    %v4606 = vld [vmem:[#allocation14 + $0xd8] sm:$0xff]
    %v4607 = vld [vmem:[#allocation14 + $0xe0] sm:$0xff]
    %v4608 = vld [vmem:[#allocation14 + $0xe8] sm:$0xff]
    %v4609 = vld [vmem:[#allocation14 + $0xf0] sm:$0xff]
    %v4610 = vld [vmem:[#allocation14 + $0xf8] sm:$0xff]
    %v4611 = vld [vmem:[#allocation14 + $0x100] sm:$0xff]
    %v4612 = vld [vmem:[#allocation14 + $0x108] sm:$0xff]
    %v4613 = vld [vmem:[#allocation14 + $0x110] sm:$0xff]
    %v4614 = vld [vmem:[#allocation14 + $0x118] sm:$0xff]
    %v4615 = vld [vmem:[#allocation14 + $0x120] sm:$0xff]
    %v4616 = vld [vmem:[#allocation14 + $0x128] sm:$0xff]
    %v4617 = vld [vmem:[#allocation14 + $0x130] sm:$0xff]
    %v4618 = vld [vmem:[#allocation14 + $0x138] sm:$0xff]
    %v4619 = vld [vmem:[#allocation14 + $0x140] sm:$0xff]
    %v4620 = vld [vmem:[#allocation14 + $0x148] sm:$0xff]
    %v4621 = vld [vmem:[#allocation14 + $0x150] sm:$0xff]
    %v4622 = vld [vmem:[#allocation14 + $0x158] sm:$0xff]
    %v4623 = vld [vmem:[#allocation14 + $0x160] sm:$0xff]
    %v4624 = vld [vmem:[#allocation14 + $0x168] sm:$0xff]
    %v4625 = vld [vmem:[#allocation14 + $0x170] sm:$0xff]
    %v4626 = vld [vmem:[#allocation14 + $0x178] sm:$0xff]
    %v4627 = vld [vmem:[#allocation14 + $0x180] sm:$0xff]
    %v4628 = vld [vmem:[#allocation14 + $0x188] sm:$0xff]
    %v4629 = vld [vmem:[#allocation14 + $0x190] sm:$0xff]
    %v4630 = vld [vmem:[#allocation14 + $0x198] sm:$0xff]
    %v4631 = vld [vmem:[#allocation14 + $0x1a0] sm:$0xff]
    %v4632 = vld [vmem:[#allocation14 + $0x1a8] sm:$0xff]
    %v4633 = vld [vmem:[#allocation14 + $0x1b0] sm:$0xff]
    %v4634 = vld [vmem:[#allocation14 + $0x1b8] sm:$0xff]
    %v4635 = vld [vmem:[#allocation14 + $0x1c0] sm:$0xff]
    %v4636 = vld [vmem:[#allocation14 + $0x1c8] sm:$0xff]
    %v4637 = vld [vmem:[#allocation14 + $0x1d0] sm:$0xff]
    %v4638 = vld [vmem:[#allocation14 + $0x1d8] sm:$0xff]
    %v4639 = vld [vmem:[#allocation14 + $0x1e0] sm:$0xff]
    %v4640 = vld [vmem:[#allocation14 + $0x1e8] sm:$0xff]
    %v4641 = vld [vmem:[#allocation14 + $0x1f0] sm:$0xff]
    %v4642 = vld [vmem:[#allocation14 + $0x1f8] sm:$0xff]
    %4643 = vmatpush.msra.mxu0 %v4639
    %4644 = vmatpush.msra.mxu0 %v4635
    %4645 = vmatpush.msra.mxu0 %v4631
    %4646 = vmatpush.msra.mxu0 %v4627
    %4647 = vmatpush.msra.mxu0 %v4623
    %4648 = vmatpush.msra.mxu0 %v4619
    %4649 = vmatpush.msra.mxu0 %v4615
    %4650 = vmatpush.msra.mxu0 %v4611
    %4651 = vmatpush.msra.mxu0 %v4607
    %4652 = vmatpush.msra.mxu0 %v4603
    %4653 = vmatpush.msra.mxu0 %v4599
    %4654 = vmatpush.msra.mxu0 %v4595
    %4655 = vmatpush.msra.mxu0 %v4591
    %4656 = vmatpush.msra.mxu0 %v4587
    %4657 = vmatpush.msra.mxu0 %v4583
    %4658 = vmatpush.msra.mxu0 %v4579
    %4659 = vmatmul.f32.gmra.mxu0 %v4570
    %v4660 = vpop.f32.mrf.mxu0
    %v4661 = vadd.f32 0.0, %v4660
    %4662 = vdwg.mxu0
    %4663 = vmatpush.msra.mxu0 %v4640
    %4664 = vmatpush.msra.mxu0 %v4636
    %4665 = vmatpush.msra.mxu0 %v4632
    %4666 = vmatpush.msra.mxu0 %v4628
    %4667 = vmatpush.msra.mxu0 %v4624
    %4668 = vmatpush.msra.mxu0 %v4620
    %4669 = vmatpush.msra.mxu0 %v4616
    %4670 = vmatpush.msra.mxu0 %v4612
    %4671 = vmatpush.msra.mxu0 %v4608
    %4672 = vmatpush.msra.mxu0 %v4604
    %4673 = vmatpush.msra.mxu0 %v4600
    %4674 = vmatpush.msra.mxu0 %v4596
    %4675 = vmatpush.msra.mxu0 %v4592
    %4676 = vmatpush.msra.mxu0 %v4588
    %4677 = vmatpush.msra.mxu0 %v4584
    %4678 = vmatpush.msra.mxu0 %v4580
    %4679 = vmatmul.f32.gmra.mxu0 %v4570
    %v4680 = vpop.f32.mrf.mxu0
    %v4681 = vadd.f32 0.0, %v4680
    %4682 = vdwg.mxu0
    %4683 = vmatpush.msra.mxu0 %v4641
    %4684 = vmatpush.msra.mxu0 %v4637
    %4685 = vmatpush.msra.mxu0 %v4633
    %4686 = vmatpush.msra.mxu0 %v4629
    %4687 = vmatpush.msra.mxu0 %v4625
    %4688 = vmatpush.msra.mxu0 %v4621
    %4689 = vmatpush.msra.mxu0 %v4617
    %4690 = vmatpush.msra.mxu0 %v4613
    %4691 = vmatpush.msra.mxu0 %v4609
    %4692 = vmatpush.msra.mxu0 %v4605
    %4693 = vmatpush.msra.mxu0 %v4601
    %4694 = vmatpush.msra.mxu0 %v4597
    %4695 = vmatpush.msra.mxu0 %v4593
    %4696 = vmatpush.msra.mxu0 %v4589
    %4697 = vmatpush.msra.mxu0 %v4585
    %4698 = vmatpush.msra.mxu0 %v4581
    %4699 = vmatmul.f32.gmra.mxu0 %v4570
    %v4700 = vpop.f32.mrf.mxu0
    %v4701 = vadd.f32 0.0, %v4700
    %4702 = vdwg.mxu0
    %4703 = vmatpush.msra.mxu0 %v4642
    %4704 = vmatpush.msra.mxu0 %v4638
    %4705 = vmatpush.msra.mxu0 %v4634
    %4706 = vmatpush.msra.mxu0 %v4630
    %4707 = vmatpush.msra.mxu0 %v4626
    %4708 = vmatpush.msra.mxu0 %v4622
    %4709 = vmatpush.msra.mxu0 %v4618
    %4710 = vmatpush.msra.mxu0 %v4614
    %4711 = vmatpush.msra.mxu0 %v4610
    %4712 = vmatpush.msra.mxu0 %v4606
    %4713 = vmatpush.msra.mxu0 %v4602
    %4714 = vmatpush.msra.mxu0 %v4598
    %4715 = vmatpush.msra.mxu0 %v4594
    %4716 = vmatpush.msra.mxu0 %v4590
    %4717 = vmatpush.msra.mxu0 %v4586
    %4718 = vmatpush.msra.mxu0 %v4582
    %4719 = vmatmul.f32.gmra.mxu0 %v4570
    %v4720 = vpop.f32.mrf.mxu0
    %v4721 = vadd.f32 0.0, %v4720
    %4722 = vdwg.mxu0
    %v4723 = vadd.f32 %v4575, %v4661
    %v4724 = vadd.f32 %v4576, %v4681
    %v4725 = vadd.f32 %v4577, %v4701
    %v4726 = vadd.f32 %v4578, %v4721
    %v4727 = vxor.u32 %v4723, 2147483648
    %v4728 = vmul.f32 %v4727, 1.442695
    %v4729 = vpow.pop %v4728
    %v4730 = vadd.f32 %v4729, 1.0
    %v4731 = vrcp.pop %v4730
    %v4732 = vmul.f32 %v4730, %v4731
    %v4733 = vsub.f32 1.0, %v4732
    %v4734 = vmul.f32 %v4731, %v4733
    %v4735 = vadd.f32 %v4731, %v4734
    %vm4736 = vweird.f32 %v4730
    %vm4737 = vweird.f32 %v4731
    %vm4738 = vmor %vm4736, %vm4737
    %v4739 = vsel %vm4738, %v4731, %v4735
    %v4740 = vand.u32 2147483647, %v4730
    %vm4741 = vcmp.eq.f32.partialorder %v4740, 8.507059e+37
    %v4742 = vand.u32 %v4730, 2147483648
    %v4743 = vor.u32 1.1754944e-38, %v4742
    %v4744 = vsel %vm4741, %v4743, %v4739
    %v4745 = vmul.f32 1.0, %v4744
    %v4746 = vxor.u32 %v4724, 2147483648
    %v4747 = vmul.f32 %v4746, 1.442695
    %v4748 = vpow.pop %v4747
    %v4749 = vadd.f32 %v4748, 1.0
    %v4750 = vrcp.pop %v4749
    %v4751 = vmul.f32 %v4749, %v4750
    %v4752 = vsub.f32 1.0, %v4751
    %v4753 = vmul.f32 %v4750, %v4752
    %v4754 = vadd.f32 %v4750, %v4753
    %vm4755 = vweird.f32 %v4749
    %vm4756 = vweird.f32 %v4750
    %vm4757 = vmor %vm4755, %vm4756
    %v4758 = vsel %vm4757, %v4750, %v4754
    %v4759 = vand.u32 2147483647, %v4749
    %vm4760 = vcmp.eq.f32.partialorder %v4759, 8.507059e+37
    %v4761 = vand.u32 %v4749, 2147483648
    %v4762 = vor.u32 1.1754944e-38, %v4761
    %v4763 = vsel %vm4760, %v4762, %v4758
    %v4764 = vmul.f32 1.0, %v4763
    %v4765 = vtanh.pop %v4725
    %v4766 = vxor.u32 %v4726, 2147483648
    %v4767 = vmul.f32 %v4766, 1.442695
    %v4768 = vpow.pop %v4767
    %v4769 = vadd.f32 %v4768, 1.0
    %v4770 = vrcp.pop %v4769
    %v4771 = vmul.f32 %v4769, %v4770
    %v4772 = vsub.f32 1.0, %v4771
    %v4773 = vmul.f32 %v4770, %v4772
    %v4774 = vadd.f32 %v4770, %v4773
    %vm4775 = vweird.f32 %v4769
    %vm4776 = vweird.f32 %v4770
    %vm4777 = vmor %vm4775, %vm4776
    %v4778 = vsel %vm4777, %v4770, %v4774
    %v4779 = vand.u32 2147483647, %v4769
    %vm4780 = vcmp.eq.f32.partialorder %v4779, 8.507059e+37
    %v4781 = vand.u32 %v4769, 2147483648
    %v4782 = vor.u32 1.1754944e-38, %v4781
    %v4783 = vsel %vm4780, %v4782, %v4778
    %v4784 = vmul.f32 1.0, %v4783
    %v4785 = vmul.f32 %v4764, %v4571
    %v4786 = vmul.f32 %v4745, %v4765
    %v4787 = vadd.f32 %v4785, %v4786
    %v4788 = vtanh.pop %v4787
    %v4789 = vmul.f32 %v4784, %v4788
    %v4790 = vld [vmem:[#allocation15] sm:$0xff]
    %v4791 = vld [vmem:[#allocation15 + $0x8] sm:$0xff]
    %v4792 = vld [vmem:[#allocation15 + $0x10] sm:$0xff]
    %v4793 = vld [vmem:[#allocation15 + $0x18] sm:$0xff]
    %v4794 = vld [vmem:[#allocation15 + $0x20] sm:$0xff]
    %v4795 = vld [vmem:[#allocation15 + $0x28] sm:$0xff]
    %v4796 = vld [vmem:[#allocation15 + $0x30] sm:$0xff]
    %v4797 = vld [vmem:[#allocation15 + $0x38] sm:$0xff]
    %v4798 = vld [vmem:[#allocation15 + $0x40] sm:$0xff]
    %v4799 = vld [vmem:[#allocation15 + $0x48] sm:$0xff]
    %v4800 = vld [vmem:[#allocation15 + $0x50] sm:$0xff]
    %v4801 = vld [vmem:[#allocation15 + $0x58] sm:$0xff]
    %v4802 = vld [vmem:[#allocation15 + $0x60] sm:$0xff]
    %v4803 = vld [vmem:[#allocation15 + $0x68] sm:$0xff]
    %v4804 = vld [vmem:[#allocation15 + $0x70] sm:$0xff]
    %v4805 = vld [vmem:[#allocation15 + $0x78] sm:$0xff]
    %v4806 = vld [vmem:[#allocation15 + $0x80] sm:$0xff]
    %v4807 = vld [vmem:[#allocation15 + $0x88] sm:$0xff]
    %v4808 = vld [vmem:[#allocation15 + $0x90] sm:$0xff]
    %v4809 = vld [vmem:[#allocation15 + $0x98] sm:$0xff]
    %v4810 = vld [vmem:[#allocation15 + $0xa0] sm:$0xff]
    %v4811 = vld [vmem:[#allocation15 + $0xa8] sm:$0xff]
    %v4812 = vld [vmem:[#allocation15 + $0xb0] sm:$0xff]
    %v4813 = vld [vmem:[#allocation15 + $0xb8] sm:$0xff]
    %v4814 = vld [vmem:[#allocation15 + $0xc0] sm:$0xff]
    %v4815 = vld [vmem:[#allocation15 + $0xc8] sm:$0xff]
    %v4816 = vld [vmem:[#allocation15 + $0xd0] sm:$0xff]
    %v4817 = vld [vmem:[#allocation15 + $0xd8] sm:$0xff]
    %v4818 = vld [vmem:[#allocation15 + $0xe0] sm:$0xff]
    %v4819 = vld [vmem:[#allocation15 + $0xe8] sm:$0xff]
    %v4820 = vld [vmem:[#allocation15 + $0xf0] sm:$0xff]
    %v4821 = vld [vmem:[#allocation15 + $0xf8] sm:$0xff]
    %v4822 = vld [vmem:[#allocation15 + $0x100] sm:$0xff]
    %v4823 = vld [vmem:[#allocation15 + $0x108] sm:$0xff]
    %v4824 = vld [vmem:[#allocation15 + $0x110] sm:$0xff]
    %v4825 = vld [vmem:[#allocation15 + $0x118] sm:$0xff]
    %v4826 = vld [vmem:[#allocation15 + $0x120] sm:$0xff]
    %v4827 = vld [vmem:[#allocation15 + $0x128] sm:$0xff]
    %v4828 = vld [vmem:[#allocation15 + $0x130] sm:$0xff]
    %v4829 = vld [vmem:[#allocation15 + $0x138] sm:$0xff]
    %v4830 = vld [vmem:[#allocation15 + $0x140] sm:$0xff]
    %v4831 = vld [vmem:[#allocation15 + $0x148] sm:$0xff]
    %v4832 = vld [vmem:[#allocation15 + $0x150] sm:$0xff]
    %v4833 = vld [vmem:[#allocation15 + $0x158] sm:$0xff]
    %v4834 = vld [vmem:[#allocation15 + $0x160] sm:$0xff]
    %v4835 = vld [vmem:[#allocation15 + $0x168] sm:$0xff]
    %v4836 = vld [vmem:[#allocation15 + $0x170] sm:$0xff]
    %v4837 = vld [vmem:[#allocation15 + $0x178] sm:$0xff]
    %v4838 = vld [vmem:[#allocation15 + $0x180] sm:$0xff]
    %v4839 = vld [vmem:[#allocation15 + $0x188] sm:$0xff]
    %v4840 = vld [vmem:[#allocation15 + $0x190] sm:$0xff]
    %v4841 = vld [vmem:[#allocation15 + $0x198] sm:$0xff]
    %v4842 = vld [vmem:[#allocation15 + $0x1a0] sm:$0xff]
    %v4843 = vld [vmem:[#allocation15 + $0x1a8] sm:$0xff]
    %v4844 = vld [vmem:[#allocation15 + $0x1b0] sm:$0xff]
    %v4845 = vld [vmem:[#allocation15 + $0x1b8] sm:$0xff]
    %v4846 = vld [vmem:[#allocation15 + $0x1c0] sm:$0xff]
    %v4847 = vld [vmem:[#allocation15 + $0x1c8] sm:$0xff]
    %v4848 = vld [vmem:[#allocation15 + $0x1d0] sm:$0xff]
    %v4849 = vld [vmem:[#allocation15 + $0x1d8] sm:$0xff]
    %v4850 = vld [vmem:[#allocation15 + $0x1e0] sm:$0xff]
    %v4851 = vld [vmem:[#allocation15 + $0x1e8] sm:$0xff]
    %v4852 = vld [vmem:[#allocation15 + $0x1f0] sm:$0xff]
    %v4853 = vld [vmem:[#allocation15 + $0x1f8] sm:$0xff]
    %v4854 = vld [vmem:[#allocation15 + $0x200] sm:$0xff]
    %v4855 = vld [vmem:[#allocation15 + $0x208] sm:$0xff]
    %v4856 = vld [vmem:[#allocation15 + $0x210] sm:$0xff]
    %v4857 = vld [vmem:[#allocation15 + $0x218] sm:$0xff]
    %v4858 = vld [vmem:[#allocation15 + $0x220] sm:$0xff]
    %v4859 = vld [vmem:[#allocation15 + $0x228] sm:$0xff]
    %v4860 = vld [vmem:[#allocation15 + $0x230] sm:$0xff]
    %v4861 = vld [vmem:[#allocation15 + $0x238] sm:$0xff]
    %v4862 = vld [vmem:[#allocation15 + $0x240] sm:$0xff]
    %v4863 = vld [vmem:[#allocation15 + $0x248] sm:$0xff]
    %v4864 = vld [vmem:[#allocation15 + $0x250] sm:$0xff]
    %v4865 = vld [vmem:[#allocation15 + $0x258] sm:$0xff]
    %v4866 = vld [vmem:[#allocation15 + $0x260] sm:$0xff]
    %v4867 = vld [vmem:[#allocation15 + $0x268] sm:$0xff]
    %v4868 = vld [vmem:[#allocation15 + $0x270] sm:$0xff]
    %v4869 = vld [vmem:[#allocation15 + $0x278] sm:$0xff]
    %v4870 = vld [vmem:[#allocation15 + $0x280] sm:$0xff]
    %v4871 = vld [vmem:[#allocation15 + $0x288] sm:$0xff]
    %v4872 = vld [vmem:[#allocation15 + $0x290] sm:$0xff]
    %v4873 = vld [vmem:[#allocation15 + $0x298] sm:$0xff]
    %v4874 = vld [vmem:[#allocation15 + $0x2a0] sm:$0xff]
    %v4875 = vld [vmem:[#allocation15 + $0x2a8] sm:$0xff]
    %v4876 = vld [vmem:[#allocation15 + $0x2b0] sm:$0xff]
    %v4877 = vld [vmem:[#allocation15 + $0x2b8] sm:$0xff]
    %v4878 = vld [vmem:[#allocation15 + $0x2c0] sm:$0xff]
    %v4879 = vld [vmem:[#allocation15 + $0x2c8] sm:$0xff]
    %v4880 = vld [vmem:[#allocation15 + $0x2d0] sm:$0xff]
    %v4881 = vld [vmem:[#allocation15 + $0x2d8] sm:$0xff]
    %v4882 = vld [vmem:[#allocation15 + $0x2e0] sm:$0xff]
    %v4883 = vld [vmem:[#allocation15 + $0x2e8] sm:$0xff]
    %v4884 = vld [vmem:[#allocation15 + $0x2f0] sm:$0xff]
    %v4885 = vld [vmem:[#allocation15 + $0x2f8] sm:$0xff]
    %v4886 = vld [vmem:[#allocation15 + $0x300] sm:$0xff]
    %v4887 = vld [vmem:[#allocation15 + $0x308] sm:$0xff]
    %v4888 = vld [vmem:[#allocation15 + $0x310] sm:$0xff]
    %v4889 = vld [vmem:[#allocation15 + $0x318] sm:$0xff]
    %v4890 = vld [vmem:[#allocation15 + $0x320] sm:$0xff]
    %v4891 = vld [vmem:[#allocation15 + $0x328] sm:$0xff]
    %v4892 = vld [vmem:[#allocation15 + $0x330] sm:$0xff]
    %v4893 = vld [vmem:[#allocation15 + $0x338] sm:$0xff]
    %v4894 = vld [vmem:[#allocation15 + $0x340] sm:$0xff]
    %v4895 = vld [vmem:[#allocation15 + $0x348] sm:$0xff]
    %v4896 = vld [vmem:[#allocation15 + $0x350] sm:$0xff]
    %v4897 = vld [vmem:[#allocation15 + $0x358] sm:$0xff]
    %v4898 = vld [vmem:[#allocation15 + $0x360] sm:$0xff]
    %v4899 = vld [vmem:[#allocation15 + $0x368] sm:$0xff]
    %v4900 = vld [vmem:[#allocation15 + $0x370] sm:$0xff]
    %v4901 = vld [vmem:[#allocation15 + $0x378] sm:$0xff]
    %v4902 = vld [vmem:[#allocation15 + $0x380] sm:$0xff]
    %v4903 = vld [vmem:[#allocation15 + $0x388] sm:$0xff]
    %v4904 = vld [vmem:[#allocation15 + $0x390] sm:$0xff]
    %v4905 = vld [vmem:[#allocation15 + $0x398] sm:$0xff]
    %v4906 = vld [vmem:[#allocation15 + $0x3a0] sm:$0xff]
    %v4907 = vld [vmem:[#allocation15 + $0x3a8] sm:$0xff]
    %v4908 = vld [vmem:[#allocation15 + $0x3b0] sm:$0xff]
    %v4909 = vld [vmem:[#allocation15 + $0x3b8] sm:$0xff]
    %v4910 = vld [vmem:[#allocation15 + $0x3c0] sm:$0xff]
    %v4911 = vld [vmem:[#allocation15 + $0x3c8] sm:$0xff]
    %v4912 = vld [vmem:[#allocation15 + $0x3d0] sm:$0xff]
    %v4913 = vld [vmem:[#allocation15 + $0x3d8] sm:$0xff]
    %v4914 = vld [vmem:[#allocation15 + $0x3e0] sm:$0xff]
    %v4915 = vld [vmem:[#allocation15 + $0x3e8] sm:$0xff]
    %v4916 = vld [vmem:[#allocation15 + $0x3f0] sm:$0xff]
    %v4917 = vld [vmem:[#allocation15 + $0x3f8] sm:$0xff]
    %v4918 = vld [vmem:[#allocation17] sm:$0xf]
    %v4920 = vperm.slane %v4918, 0
    %v4921 = vperm.slane %v4918, 1
    %v4922 = vperm.slane %v4918, 2
    %v4923 = vperm.slane %v4918, 3
    %4928 = vmatpush.msra.mxu0 %v4850
    %4929 = vmatpush.msra.mxu0 %v4846
    %4930 = vmatpush.msra.mxu0 %v4842
    %4931 = vmatpush.msra.mxu0 %v4838
    %4932 = vmatpush.msra.mxu0 %v4834
    %4933 = vmatpush.msra.mxu0 %v4830
    %4934 = vmatpush.msra.mxu0 %v4826
    %4935 = vmatpush.msra.mxu0 %v4822
    %4936 = vmatpush.msra.mxu0 %v4818
    %4937 = vmatpush.msra.mxu0 %v4814
    %4938 = vmatpush.msra.mxu0 %v4810
    %4939 = vmatpush.msra.mxu0 %v4806
    %4940 = vmatpush.msra.mxu0 %v4802
    %4941 = vmatpush.msra.mxu0 %v4798
    %4942 = vmatpush.msra.mxu0 %v4794
    %4943 = vmatpush.msra.mxu0 %v4790
    %4944 = vmatmul.f32.gmra.mxu0 %v4789
    %v4945 = vpop.f32.mrf.mxu0
    %v4946 = vadd.f32 %v4920, %v4945
    %4947 = vdwg.mxu0
    %4948 = vmatpush.msra.mxu0 %v4914
    %4949 = vmatpush.msra.mxu0 %v4910
    %4950 = vmatpush.msra.mxu0 %v4906
    %4951 = vmatpush.msra.mxu0 %v4902
    %4952 = vmatpush.msra.mxu0 %v4898
    %4953 = vmatpush.msra.mxu0 %v4894
    %4954 = vmatpush.msra.mxu0 %v4890
    %4955 = vmatpush.msra.mxu0 %v4886
    %4956 = vmatpush.msra.mxu0 %v4882
    %4957 = vmatpush.msra.mxu0 %v4878
    %4958 = vmatpush.msra.mxu0 %v4874
    %4959 = vmatpush.msra.mxu0 %v4870
    %4960 = vmatpush.msra.mxu0 %v4866
    %4961 = vmatpush.msra.mxu0 %v4862
    %4962 = vmatpush.msra.mxu0 %v4858
    %4963 = vmatpush.msra.mxu0 %v4854
    %4964 = vmatmul.f32.gmra.mxu0 %v4572
    %v4965 = vpop.f32.mrf.mxu0
    %v4966 = vadd.f32 %v4946, %v4965
    %4967 = vdwg.mxu0
    %4968 = vmatpush.msra.mxu0 %v4851
    %4969 = vmatpush.msra.mxu0 %v4847
    %4970 = vmatpush.msra.mxu0 %v4843
    %4971 = vmatpush.msra.mxu0 %v4839
    %4972 = vmatpush.msra.mxu0 %v4835
    %4973 = vmatpush.msra.mxu0 %v4831
    %4974 = vmatpush.msra.mxu0 %v4827
    %4975 = vmatpush.msra.mxu0 %v4823
    %4976 = vmatpush.msra.mxu0 %v4819
    %4977 = vmatpush.msra.mxu0 %v4815
    %4978 = vmatpush.msra.mxu0 %v4811
    %4979 = vmatpush.msra.mxu0 %v4807
    %4980 = vmatpush.msra.mxu0 %v4803
    %4981 = vmatpush.msra.mxu0 %v4799
    %4982 = vmatpush.msra.mxu0 %v4795
    %4983 = vmatpush.msra.mxu0 %v4791
    %4984 = vmatmul.f32.gmra.mxu0 %v4789
    %v4985 = vpop.f32.mrf.mxu0
    %v4986 = vadd.f32 %v4921, %v4985
    %4987 = vdwg.mxu0
    %4988 = vmatpush.msra.mxu0 %v4915
    %4989 = vmatpush.msra.mxu0 %v4911
    %4990 = vmatpush.msra.mxu0 %v4907
    %4991 = vmatpush.msra.mxu0 %v4903
    %4992 = vmatpush.msra.mxu0 %v4899
    %4993 = vmatpush.msra.mxu0 %v4895
    %4994 = vmatpush.msra.mxu0 %v4891
    %4995 = vmatpush.msra.mxu0 %v4887
    %4996 = vmatpush.msra.mxu0 %v4883
    %4997 = vmatpush.msra.mxu0 %v4879
    %4998 = vmatpush.msra.mxu0 %v4875
    %4999 = vmatpush.msra.mxu0 %v4871
    %5000 = vmatpush.msra.mxu0 %v4867
    %5001 = vmatpush.msra.mxu0 %v4863
    %5002 = vmatpush.msra.mxu0 %v4859
    %5003 = vmatpush.msra.mxu0 %v4855
    %5004 = vmatmul.f32.gmra.mxu0 %v4572
    %v5005 = vpop.f32.mrf.mxu0
    %v5006 = vadd.f32 %v4986, %v5005
    %5007 = vdwg.mxu0
    %5008 = vmatpush.msra.mxu0 %v4852
    %5009 = vmatpush.msra.mxu0 %v4848
    %5010 = vmatpush.msra.mxu0 %v4844
    %5011 = vmatpush.msra.mxu0 %v4840
    %5012 = vmatpush.msra.mxu0 %v4836
    %5013 = vmatpush.msra.mxu0 %v4832
    %5014 = vmatpush.msra.mxu0 %v4828
    %5015 = vmatpush.msra.mxu0 %v4824
    %5016 = vmatpush.msra.mxu0 %v4820
    %5017 = vmatpush.msra.mxu0 %v4816
    %5018 = vmatpush.msra.mxu0 %v4812
    %5019 = vmatpush.msra.mxu0 %v4808
    %5020 = vmatpush.msra.mxu0 %v4804
    %5021 = vmatpush.msra.mxu0 %v4800
    %5022 = vmatpush.msra.mxu0 %v4796
    %5023 = vmatpush.msra.mxu0 %v4792
    %5024 = vmatmul.f32.gmra.mxu0 %v4789
    %v5025 = vpop.f32.mrf.mxu0
    %v5026 = vadd.f32 %v4922, %v5025
    %5027 = vdwg.mxu0
    %5028 = vmatpush.msra.mxu0 %v4916
    %5029 = vmatpush.msra.mxu0 %v4912
    %5030 = vmatpush.msra.mxu0 %v4908
    %5031 = vmatpush.msra.mxu0 %v4904
    %5032 = vmatpush.msra.mxu0 %v4900
    %5033 = vmatpush.msra.mxu0 %v4896
    %5034 = vmatpush.msra.mxu0 %v4892
    %5035 = vmatpush.msra.mxu0 %v4888
    %5036 = vmatpush.msra.mxu0 %v4884
    %5037 = vmatpush.msra.mxu0 %v4880
    %5038 = vmatpush.msra.mxu0 %v4876
    %5039 = vmatpush.msra.mxu0 %v4872
    %5040 = vmatpush.msra.mxu0 %v4868
    %5041 = vmatpush.msra.mxu0 %v4864
    %5042 = vmatpush.msra.mxu0 %v4860
    %5043 = vmatpush.msra.mxu0 %v4856
    %5044 = vmatmul.f32.gmra.mxu0 %v4572
    %v5045 = vpop.f32.mrf.mxu0
    %v5046 = vadd.f32 %v5026, %v5045
    %5047 = vdwg.mxu0
    %5048 = vmatpush.msra.mxu0 %v4853
    %5049 = vmatpush.msra.mxu0 %v4849
    %5050 = vmatpush.msra.mxu0 %v4845
    %5051 = vmatpush.msra.mxu0 %v4841
    %5052 = vmatpush.msra.mxu0 %v4837
    %5053 = vmatpush.msra.mxu0 %v4833
    %5054 = vmatpush.msra.mxu0 %v4829
    %5055 = vmatpush.msra.mxu0 %v4825
    %5056 = vmatpush.msra.mxu0 %v4821
    %5057 = vmatpush.msra.mxu0 %v4817
    %5058 = vmatpush.msra.mxu0 %v4813
    %5059 = vmatpush.msra.mxu0 %v4809
    %5060 = vmatpush.msra.mxu0 %v4805
    %5061 = vmatpush.msra.mxu0 %v4801
    %5062 = vmatpush.msra.mxu0 %v4797
    %5063 = vmatpush.msra.mxu0 %v4793
    %5064 = vmatmul.f32.gmra.mxu0 %v4789
    %v5065 = vpop.f32.mrf.mxu0
    %v5066 = vadd.f32 %v4923, %v5065
    %5067 = vdwg.mxu0
    %5068 = vmatpush.msra.mxu0 %v4917
    %5069 = vmatpush.msra.mxu0 %v4913
    %5070 = vmatpush.msra.mxu0 %v4909
    %5071 = vmatpush.msra.mxu0 %v4905
    %5072 = vmatpush.msra.mxu0 %v4901
    %5073 = vmatpush.msra.mxu0 %v4897
    %5074 = vmatpush.msra.mxu0 %v4893
    %5075 = vmatpush.msra.mxu0 %v4889
    %5076 = vmatpush.msra.mxu0 %v4885
    %5077 = vmatpush.msra.mxu0 %v4881
    %5078 = vmatpush.msra.mxu0 %v4877
    %5079 = vmatpush.msra.mxu0 %v4873
    %5080 = vmatpush.msra.mxu0 %v4869
    %5081 = vmatpush.msra.mxu0 %v4865
    %5082 = vmatpush.msra.mxu0 %v4861
    %5083 = vmatpush.msra.mxu0 %v4857
    %5084 = vmatmul.f32.gmra.mxu0 %v4572
    %v5085 = vpop.f32.mrf.mxu0
    %v5086 = vadd.f32 %v5066, %v5085
    %5087 = vdwg.mxu0
    %v5088 = vxor.u32 %v4966, 2147483648
    %v5089 = vmul.f32 %v5088, 1.442695
    %v5090 = vpow.pop %v5089
    %v5091 = vadd.f32 %v5090, 1.0
    %v5092 = vrcp.pop %v5091
    %v5093 = vmul.f32 %v5091, %v5092
    %v5094 = vsub.f32 1.0, %v5093
    %v5095 = vmul.f32 %v5092, %v5094
    %v5096 = vadd.f32 %v5092, %v5095
    %vm5097 = vweird.f32 %v5091
    %vm5098 = vweird.f32 %v5092
    %vm5099 = vmor %vm5097, %vm5098
    %v5100 = vsel %vm5099, %v5092, %v5096
    %v5101 = vand.u32 2147483647, %v5091
    %vm5102 = vcmp.eq.f32.partialorder %v5101, 8.507059e+37
    %v5103 = vand.u32 %v5091, 2147483648
    %v5104 = vor.u32 1.1754944e-38, %v5103
    %v5105 = vsel %vm5102, %v5104, %v5100
    %v5106 = vmul.f32 1.0, %v5105
    %v5107 = vxor.u32 %v5006, 2147483648
    %v5108 = vmul.f32 %v5107, 1.442695
    %v5109 = vpow.pop %v5108
    %v5110 = vadd.f32 %v5109, 1.0
    %v5111 = vrcp.pop %v5110
    %v5112 = vmul.f32 %v5110, %v5111
    %v5113 = vsub.f32 1.0, %v5112
    %v5114 = vmul.f32 %v5111, %v5113
    %v5115 = vadd.f32 %v5111, %v5114
    %vm5116 = vweird.f32 %v5110
    %vm5117 = vweird.f32 %v5111
    %vm5118 = vmor %vm5116, %vm5117
    %v5119 = vsel %vm5118, %v5111, %v5115
    %v5120 = vand.u32 2147483647, %v5110
    %vm5121 = vcmp.eq.f32.partialorder %v5120, 8.507059e+37
    %v5122 = vand.u32 %v5110, 2147483648
    %v5123 = vor.u32 1.1754944e-38, %v5122
    %v5124 = vsel %vm5121, %v5123, %v5119
    %v5125 = vmul.f32 1.0, %v5124
    %v5126 = vtanh.pop %v5046
    %v5127 = vxor.u32 %v5086, 2147483648
    %v5128 = vmul.f32 %v5127, 1.442695
    %v5129 = vpow.pop %v5128
    %v5130 = vadd.f32 %v5129, 1.0
    %v5131 = vrcp.pop %v5130
    %v5132 = vmul.f32 %v5130, %v5131
    %v5133 = vsub.f32 1.0, %v5132
    %v5134 = vmul.f32 %v5131, %v5133
    %v5135 = vadd.f32 %v5131, %v5134
    %vm5136 = vweird.f32 %v5130
    %vm5137 = vweird.f32 %v5131
    %vm5138 = vmor %vm5136, %vm5137
    %v5139 = vsel %vm5138, %v5131, %v5135
    %v5140 = vand.u32 2147483647, %v5130
    %vm5141 = vcmp.eq.f32.partialorder %v5140, 8.507059e+37
    %v5142 = vand.u32 %v5130, 2147483648
    %v5143 = vor.u32 1.1754944e-38, %v5142
    %v5144 = vsel %vm5141, %v5143, %v5139
    %v5145 = vmul.f32 1.0, %v5144
    %v5146 = vmul.f32 %v5125, %v4573
    %v5147 = vmul.f32 %v5106, %v5126
    %v5148 = vadd.f32 %v5146, %v5147
    %v5149 = vtanh.pop %v5148
    %v5150 = vmul.f32 %v5145, %v5149
    %5151 = vst [vmem:[#allocation2] sm:$0xff] %v4789
    %5152 = vst [vmem:[#allocation3] sm:$0xff] %v4787
    %5153 = vst [vmem:[%s463] sm:$0xff] %v5150
    %5154 = vst [vmem:[%s465] sm:$0xff] %v5148
    %s5155 = scalar_lea.vmem [#allocation5], 56
    %5156 = vst [vmem:[%s5155] sm:$0xff] %v5150
    %v5157 = vld [vmem:[#allocation5] sm:$0xff]
    %v5158 = vld [vmem:[#allocation5 + $0x8] sm:$0xff]
    %v5159 = vld [vmem:[#allocation5 + $0x10] sm:$0xff]
    %v5160 = vld [vmem:[#allocation5 + $0x18] sm:$0xff]
    %v5161 = vld [vmem:[#allocation5 + $0x20] sm:$0xff]
    %v5162 = vld [vmem:[#allocation5 + $0x28] sm:$0xff]
    %v5163 = vld [vmem:[#allocation5 + $0x30] sm:$0xff]
    %v5164 = vld [vmem:[#allocation5 + $0x38] sm:$0xff]
    %v5165 = vld [vmem:[#allocation18] sm:$0xff]
    %v5166 = vld [vmem:[#allocation18 + $0x8] sm:$0xff]
    %v5167 = vld [vmem:[#allocation18 + $0x10] sm:$0xff]
    %v5168 = vld [vmem:[#allocation18 + $0x18] sm:$0xff]
    %v5169 = vld [vmem:[#allocation18 + $0x20] sm:$0xff]
    %v5170 = vld [vmem:[#allocation18 + $0x28] sm:$0xff]
    %v5171 = vld [vmem:[#allocation18 + $0x30] sm:$0xff]
    %v5172 = vld [vmem:[#allocation18 + $0x38] sm:$0xff]
    %v5173 = vld [vmem:[#allocation18 + $0x40] sm:$0xff]
    %v5174 = vld [vmem:[#allocation18 + $0x48] sm:$0xff]
    %v5175 = vld [vmem:[#allocation18 + $0x50] sm:$0xff]
    %v5176 = vld [vmem:[#allocation18 + $0x58] sm:$0xff]
    %v5177 = vld [vmem:[#allocation18 + $0x60] sm:$0xff]
    %v5178 = vld [vmem:[#allocation18 + $0x68] sm:$0xff]
    %v5179 = vld [vmem:[#allocation18 + $0x70] sm:$0xff]
    %v5180 = vld [vmem:[#allocation18 + $0x78] sm:$0xff]
    %v5181 = vld [vmem:[%s9] sm:$0x1]
    %v5183 = vperm.slane %v5181, 0
    %5185 = vmatpush.msra.mxu0 %v5180
    %5186 = vmatpush.msra.mxu0 %v5179
    %5187 = vmatpush.msra.mxu0 %v5178
    %5188 = vmatpush.msra.mxu0 %v5177
    %5189 = vmatpush.msra.mxu0 %v5176
    %5190 = vmatpush.msra.mxu0 %v5175
    %5191 = vmatpush.msra.mxu0 %v5174
    %5192 = vmatpush.msra.mxu0 %v5173
    %5193 = vmatpush.msra.mxu0 %v5172
    %5194 = vmatpush.msra.mxu0 %v5171
    %5195 = vmatpush.msra.mxu0 %v5170
    %5196 = vmatpush.msra.mxu0 %v5169
    %5197 = vmatpush.msra.mxu0 %v5168
    %5198 = vmatpush.msra.mxu0 %v5167
    %5199 = vmatpush.msra.mxu0 %v5166
    %5200 = vmatpush.msra.mxu0 %v5165
    %5201 = vmatmul.f32.gmra.mxu0 %v5157
    %v5202 = vpop.f32.mrf.mxu0
    %v5203 = vadd.f32 %v5183, %v5202
    %5204 = vmatmul.f32.gmra.mxu0 %v5158
    %v5205 = vpop.f32.mrf.mxu0
    %v5206 = vadd.f32 %v5183, %v5205
    %5207 = vmatmul.f32.gmra.mxu0 %v5159
    %v5208 = vpop.f32.mrf.mxu0
    %v5209 = vadd.f32 %v5183, %v5208
    %5210 = vmatmul.f32.gmra.mxu0 %v5160
    %v5211 = vpop.f32.mrf.mxu0
    %v5212 = vadd.f32 %v5183, %v5211
    %5213 = vmatmul.f32.gmra.mxu0 %v5161
    %v5214 = vpop.f32.mrf.mxu0
    %v5215 = vadd.f32 %v5183, %v5214
    %5216 = vmatmul.f32.gmra.mxu0 %v5162
    %v5217 = vpop.f32.mrf.mxu0
    %v5218 = vadd.f32 %v5183, %v5217
    %5219 = vmatmul.f32.gmra.mxu0 %v5163
    %v5220 = vpop.f32.mrf.mxu0
    %v5221 = vadd.f32 %v5183, %v5220
    %5222 = vmatmul.f32.gmra.mxu0 %v5164
    %v5223 = vpop.f32.mrf.mxu0
    %v5224 = vadd.f32 %v5183, %v5223
    %5225 = vdwg.mxu0
    %5226 = vst [vmem:[#allocation20] sm:$0xff] %v5203
    %5227 = vst [vmem:[#allocation20 + $0x8] sm:$0xff] %v5206
    %5228 = vst [vmem:[#allocation20 + $0x10] sm:$0xff] %v5209
    %5229 = vst [vmem:[#allocation20 + $0x18] sm:$0xff] %v5212
    %5230 = vst [vmem:[#allocation20 + $0x20] sm:$0xff] %v5215
    %5231 = vst [vmem:[#allocation20 + $0x28] sm:$0xff] %v5218
    %5232 = vst [vmem:[#allocation20 + $0x30] sm:$0xff] %v5221
    %5233 = vst [vmem:[#allocation20 + $0x38] sm:$0xff] %v5224
    %v5234 = vld [vmem:[#allocation2] sm:$0xff]
    %v5235 = vld [vmem:[#allocation2 + $0x8] sm:$0xff]
    %5236 = vst [vmem:[#allocation21] sm:$0xff] %v5234
    %5237 = vst [vmem:[#allocation21 + $0x8] sm:$0xff] %v5235
    %v5238 = vld [vmem:[#allocation3] sm:$0xff]
    %v5239 = vld [vmem:[#allocation3 + $0x8] sm:$0xff]
    %5240 = vst [vmem:[#allocation23] sm:$0xff] %v5238
    %5241 = vst [vmem:[#allocation23 + $0x8] sm:$0xff] %v5239
    // Predicated region
    $region78: #{tpu_custom_call.1} parent=1 // pred_check
      _
    $region79: #{tpu_custom_call.1} parent=1 // pred_check_branch
      %5243 = sbr.rel (0) target = $region81
    $region80: #{tpu_custom_call.1} parent=1 // pred_region
      %5245 = vsyncadd [#allocation8], 0
      %s5246 = sshll.u32 [#allocation20], 4
      %s5247 = int_to_ptr.vmem [resolvable:$true] %s5246
      %s5248 = sshll.u32 %s10, 4
      %s5249 = int_to_ptr.hbm [resolvable:$true] %s5248
      %5254 = dma.vmem_to_hbm [thread:$0]  %s5247, 1024, %s5249, [#allocation8], 128, 128, 8
    $region81: #{tpu_custom_call.1} parent=1 // pred_fallthru
      _
    // Predicated region
    $region82: #{tpu_custom_call.1} parent=1 // pred_check
      _
    $region83: #{tpu_custom_call.1} parent=1 // pred_check_branch
      %5256 = sbr.rel (0) target = $region85
    $region84: #{tpu_custom_call.1} parent=1 // pred_region
      %5258 = vsyncadd [#allocation22], 0
      %s5259 = sshll.u32 [#allocation21], 4
      %s5260 = int_to_ptr.vmem [resolvable:$true] %s5259
      %s5261 = sshll.u32 %s11, 4
      %s5262 = int_to_ptr.hbm [resolvable:$true] %s5261
      %5267 = dma.vmem_to_hbm [thread:$0]  %s5260, 256, %s5262, [#allocation22], 128, 128, 8
    $region85: #{tpu_custom_call.1} parent=1 // pred_fallthru
      _
    // Predicated region
    $region86: #{tpu_custom_call.1} parent=1 // pred_check
      _
    $region87: #{tpu_custom_call.1} parent=1 // pred_check_branch
      %5269 = sbr.rel (0) target = $region89
    $region88: #{tpu_custom_call.1} parent=1 // pred_region
      %5271 = vsyncadd [#allocation22], 0
      %s5272 = sshll.u32 [#allocation23], 4
      %s5273 = int_to_ptr.vmem [resolvable:$true] %s5272
      %s5274 = sshll.u32 %s12, 4
      %s5275 = int_to_ptr.hbm [resolvable:$true] %s5274
      %5280 = dma.vmem_to_hbm [thread:$0]  %s5273, 256, %s5275, [#allocation22], 128, 128, 8
    $region89: #{tpu_custom_call.1} parent=1 // pred_fallthru
      _
    // Predicated region
    $region90: #{tpu_custom_call.1} parent=1 // pred_check
      _
    $region91: #{tpu_custom_call.1} parent=1 // pred_check_branch
      %5282 = sbr.rel (0) target = $region93
    $region92: #{tpu_custom_call.1} parent=1 // pred_region
      %5284 = dma.done [#allocation8], 1024
    $region93: #{tpu_custom_call.1} parent=1 // pred_fallthru
      _
    // Predicated region
    $region94: #{tpu_custom_call.1} parent=1 // pred_check
      _
    $region95: #{tpu_custom_call.1} parent=1 // pred_check_branch
      %5286 = sbr.rel (0) target = $region97
    $region96: #{tpu_custom_call.1} parent=1 // pred_region
      %5288 = dma.done [#allocation22], 256
    $region97: #{tpu_custom_call.1} parent=1 // pred_fallthru
      _
    // Predicated region
    $region98: #{tpu_custom_call.1} parent=1 // pred_check
      _
    $region99: #{tpu_custom_call.1} parent=1 // pred_check_branch
      %5290 = sbr.rel (0) target = $region101
    $region100: #{tpu_custom_call.1} parent=1 // pred_region
      %5292 = dma.done [#allocation22], 256
    $region101: #{tpu_custom_call.1} parent=1 // pred_fallthru
      _
    %5293 = vsyncpa [#allocation7], 1
    %5294 = vsyncpa [#allocation10], 1
    %5295 = vsyncpa [#allocation13], 1
    %5296 = vsyncpa [#allocation16], 1
    %5297 = vsyncpa [#allocation19], 1
    %5298 = vsyncpa [#allocation8], 1
    %5299 = vsyncpa [#allocation22], 1

</llo_original>
